<compile_context>
chip_gen: v7x
topology: tpu7x:2x2x1
jax: 0.10.0
libtpu: 0.0.40
codegen_flags: <defaults>
</compile_context>

<pallas_src>
import functools

import numpy as np
import jax
import jax.numpy as jnp
from jax.experimental import pallas as pl
from jax.experimental.pallas import tpu as pltpu


# ----------------------------------------------------------------------------
# sin/cos positional embedding (matches the PyTorch reference, done in numpy)
# ----------------------------------------------------------------------------
def get_1d_sincos_pos_embed_from_grid(embed_dim, pos):
    assert embed_dim % 2 == 0
    omega = np.arange(embed_dim // 2, dtype=np.float64)
    omega /= embed_dim / 2.0
    omega = 1.0 / 10000 ** omega
    pos = pos.reshape(-1).astype(np.float64)
    out = np.einsum("m,d->md", pos, omega)
    return np.concatenate([np.sin(out), np.cos(out)], axis=1)


def get_2d_sincos_pos_embed(embed_dim, grid_size):
    assert embed_dim % 2 == 0
    grid_h = np.arange(grid_size, dtype=np.float32)
    grid_w = np.arange(grid_size, dtype=np.float32)
    grid = np.meshgrid(grid_w, grid_h, indexing="ij")
    grid = np.stack(grid, axis=0).reshape([2, 1, grid_size, grid_size])
    emb_h = get_1d_sincos_pos_embed_from_grid(embed_dim // 2, grid[0])
    emb_w = get_1d_sincos_pos_embed_from_grid(embed_dim // 2, grid[1])
    return np.concatenate([emb_h, emb_w], axis=1)  # (grid_size**2, embed_dim)


# ----------------------------------------------------------------------------
# Pallas kernel: full DiT block stack.  One batch tile per "parallel" grid
# step, layers iterated on the inner "arbitrary" axis; x resident in VMEM.
# ----------------------------------------------------------------------------
def dit_stack_kernel(x_ref, mod_ref,
                     w_qkv_ref, b_qkv_ref,
                     w_proj_ref, b_proj_ref,
                     w_fc1_ref, b_fc1_ref,
                     w_fc2_ref, b_fc2_ref,
                     out_ref,
                     x_scr, attn_scr,
                     *, num_heads, gelu_bf16=True, eps=1e-6):
    l = pl.program_id(1)                       # layer index (innermost)

    B, S, H = x_scr.shape
    hd = H // num_heads
    M = B * S
    bf16 = jnp.bfloat16

    # First layer for this batch tile: pull x into the resident VMEM scratch.
    @pl.when(l == 0)
    def _():
        x_scr[...] = x_ref[...]

    x = x_scr[...]                             # (B, S, H) f32 residual stream

    # Precomputed adaLN modulation for this layer / this batch tile only.
    mod = mod_ref[0, 0]                        # (B, 6H) f32

    def chunk(j):                              # (B, 1, H): broadcast over S
        return mod[:, j * H:(j + 1) * H][:, None, :]

    shift_msa, scale_msa, gate_msa = chunk(0), chunk(1), chunk(2)
    shift_mlp, scale_mlp, gate_mlp = chunk(3), chunk(4), chunk(5)

    def layernorm(v):                          # elementwise_affine=False
        mu = jnp.mean(v, axis=-1, keepdims=True)
        var = jnp.mean(jnp.square(v - mu), axis=-1, keepdims=True)
        return (v - mu) * jax.lax.rsqrt(var + eps)

    # ----- attention branch -----
    xm = layernorm(x) * (1.0 + scale_msa) + shift_msa              # (B,S,H) f32
    qkv = jnp.dot(xm.reshape(M, H).astype(bf16), w_qkv_ref[0],
                  preferred_element_type=jnp.float32) + b_qkv_ref[0]   # (M,3H) f32

    # NOTE: 1/sqrt(head_dim) is folded into the q columns of w_qkv/b_qkv in the
    # wrapper, so no per-head scaling here.
    if hd % 128 == 0:
        # Lane-aligned per-head path: each head's output is written straight
        # into the (M, H) scratch at lane offset h*hd (no concat relayout).
        for h in range(num_heads):
            qh = qkv[:, h * hd:(h + 1) * hd].astype(bf16).reshape(B, S, hd)
            kh = qkv[:, H + h * hd:H + (h + 1) * hd].astype(bf16).reshape(B, S, hd)
            vh = qkv[:, 2 * H + h * hd:2 * H + (h + 1) * hd].astype(bf16).reshape(B, S, hd)
            s = jnp.einsum("bqd,bkd->bqk", qh, kh,
                           preferred_element_type=jnp.float32)      # (B,S,S) f32
            s = s - jnp.max(s, axis=-1, keepdims=True)
            p = jnp.exp(s)
            p = p * pl.reciprocal(jnp.sum(p, axis=-1, keepdims=True), approx=True)
            o = jnp.einsum("bqk,bkd->bqd", p.astype(bf16), vh,
                           preferred_element_type=jnp.float32)      # (B,S,hd)
            attn_scr[:, h * hd:(h + 1) * hd] = o.reshape(M, hd)
        attn_in = attn_scr[...]
    else:
        # General path (head_dim not a multiple of 128): batch over heads in
        # one einsum instead of per-head lane slices (avoids masked relayouts).
        qkvh = qkv.reshape(B, S, 3, num_heads, hd)
        qh = qkvh[:, :, 0].astype(bf16)
        kh = qkvh[:, :, 1].astype(bf16)
        vh = qkvh[:, :, 2].astype(bf16)
        s = jnp.einsum("bqnd,bknd->bnqk", qh, kh,
                       preferred_element_type=jnp.float32)
        s = s - jnp.max(s, axis=-1, keepdims=True)
        p = jnp.exp(s)
        p = p * pl.reciprocal(jnp.sum(p, axis=-1, keepdims=True), approx=True)
        o = jnp.einsum("bnqk,bknd->bqnd", p.astype(bf16), vh,
                       preferred_element_type=jnp.float32)
        attn_in = o.reshape(M, H)

    attn = jnp.dot(attn_in.astype(bf16), w_proj_ref[0],
                   preferred_element_type=jnp.float32) + b_proj_ref[0]  # (M,H) f32
    x = x + gate_msa * attn.reshape(B, S, H)

    # ----- MLP branch -----
    xm2 = layernorm(x) * (1.0 + scale_mlp) + shift_mlp
    h1 = jnp.dot(xm2.reshape(M, H).astype(bf16), w_fc1_ref[0],
                 preferred_element_type=jnp.float32) + b_fc1_ref[0]     # (M,Hm) f32
    if gelu_bf16:
        h1 = jax.nn.gelu(h1.astype(bf16), approximate=True)  # bf16 EUP (v6e/v7x)
    else:
        h1 = jax.nn.gelu(h1, approximate=True).astype(bf16)  # keep f32 math (v5e)
    y = jnp.dot(h1, w_fc2_ref[0],
                preferred_element_type=jnp.float32) + b_fc2_ref[0]      # (M,H) f32
    x = x + gate_mlp * y.reshape(B, S, H)

    x_scr[...] = x                              # stays resident for next layer

    @pl.when(l == pl.num_programs(1) - 1)
    def _():
        out_ref[...] = x


# ----------------------------------------------------------------------------
# Generation-aware VMEM budgeting + batch-tile heuristic
# ----------------------------------------------------------------------------
def _vmem_capacity_bytes():
    try:
        return int(pltpu.get_tpu_info().vmem_capacity_bytes)
    except Exception:
        return 64 << 20   # conservative fallback (v7x per-TC VMEM)


def _vmem_estimate(b_tile, S, H, Hm):
    bf, f = 2, 4
    M = b_tile * S
    weights = 2 * bf * (H * 3 * H + H * H + H * Hm + Hm * H)   # bf16, dbl-buffered
    xio = 2 * 2 * f * M * H                                    # x in + out blocks
    modb = 2 * f * b_tile * 6 * H                              # adaLN tile
    scratch = 2 * f * M * H                                    # x_scr + attn_scr
    inter = f * M * (3 * H + Hm + 2 * S)                       # live intermediates
    return weights + xio + modb + scratch + inter


def dit_forward_pallas(x, t, pos_embed, params, num_heads, *,
                       b_tile=None, gelu_bf16=True):
    """x: (N, S, H) f32, t: (N, H) f32, params: depth-stacked arrays."""
    N, S, H = x.shape
    depth = params["w_qkv"].shape[0]
    Hm = params["w_fc1"].shape[2]
    hd = H // num_heads

    vmem_cap = _vmem_capacity_bytes()
    vmem_budget = int(0.85 * vmem_cap)          # headroom for Mosaic scratch

    if b_tile is None:
        # Target M = b_tile*S ~ 1024 rows per step so each re-streamed weight
        # byte feeds >= ~620-680 MXU FLOPs (compute-bound on v6e/v7x); cap
        # b_tile <= N//2 so nb >= 2 and the "parallel" batch axis shards across
        # both v7x TensorCores.  Bounded by the VMEM budget.
        target_rows = 1024
        max_bt = max(1, N // 2)
        b_tile = 1
        while (b_tile * 2 <= max_bt and N % (b_tile * 2) == 0
               and b_tile * S < target_rows
               and _vmem_estimate(b_tile * 2, S, H, Hm) + (8 << 20) < vmem_budget):
            b_tile *= 2
    assert N % b_tile == 0
    nb = N // b_tile

    x = (x + pos_embed).astype(jnp.float32)

    # Fold 1/sqrt(head_dim) into the q columns of w_qkv / b_qkv (one-time
    # transform: removes num_heads VALU passes over (M, hd) per layer).
    scale = float(1.0 / np.sqrt(hd))
    w_qkv = params["w_qkv"].astype(jnp.float32)
    w_qkv = jnp.concatenate([w_qkv[:, :, :H] * scale, w_qkv[:, :, H:]],
                            axis=2).astype(jnp.bfloat16)
    b_qkv = params["b_qkv"].astype(jnp.float32)
    b_qkv = jnp.concatenate([b_qkv[:, :, :H] * scale, b_qkv[:, :, H:]], axis=2)

    # adaLN modulation hoisted out of the kernel (one (N,H)@(H,6H) matmul per
    # layer here) and reshaped so each grid step DMAs only its own batch tile.
    c_silu = (t * jax.nn.sigmoid(t)).astype(jnp.float32)
    mod = jnp.einsum("nh,dhk->dnk", c_silu, params["w_ada"].astype(jnp.float32))
    mod = mod + params["b_ada"].astype(jnp.float32)[:, None, :]    # (depth, N, 6H)
    mod = mod.reshape(depth, nb, b_tile, 6 * H)

    kernel = functools.partial(dit_stack_kernel, num_heads=num_heads,
                               gelu_bf16=gelu_bf16)

    def wspec(r, c):
        return pl.BlockSpec((1, r, c), lambda i, l: (l, 0, 0))

    est = _vmem_estimate(b_tile, S, H, Hm)
    vmem_limit = int(min(max(est + (16 << 20), 32 << 20), vmem_budget))

    return pl.pallas_call(
        kernel,
        out_shape=jax.ShapeDtypeStruct((N, S, H), jnp.float32),
        grid=(nb, depth),
        in_specs=[
            pl.BlockSpec((b_tile, S, H), lambda i, l: (i, 0, 0)),          # x (read at l==0)
            pl.BlockSpec((1, 1, b_tile, 6 * H), lambda i, l: (l, i, 0, 0)),  # adaLN tile
            wspec(H, 3 * H), wspec(1, 3 * H),                              # qkv
            wspec(H, H), wspec(1, H),                                      # attn proj
            wspec(H, Hm), wspec(1, Hm),                                    # mlp fc1
            wspec(Hm, H), wspec(1, H),                                     # mlp fc2
        ],
        out_specs=pl.BlockSpec((b_tile, S, H), lambda i, l: (i, 0, 0)),
        scratch_shapes=[
            pltpu.VMEM((b_tile, S, H), jnp.float32),      # resident residual stream
            pltpu.VMEM((b_tile * S, H), jnp.float32),     # attention head outputs
        ],
        compiler_params=pltpu.CompilerParams(
            dimension_semantics=("parallel", "arbitrary"),
            vmem_limit_bytes=vmem_limit),
    )(x, mod,
      w_qkv, b_qkv, params["w_proj"], params["b_proj"],
      params["w_fc1"], params["b_fc1"], params["w_fc2"], params["b_fc2"])


# ----------------------------------------------------------------------------
# Pure-JAX reference (for correctness check); uses the same bf16 weights.
# ----------------------------------------------------------------------------
def dit_block_ref(x, t, p, num_heads):
    N, S, H = x.shape
    hd = H // num_heads
    w_qkv = p["w_qkv"].astype(jnp.float32)
    w_proj = p["w_proj"].astype(jnp.float32)
    w_fc1 = p["w_fc1"].astype(jnp.float32)
    w_fc2 = p["w_fc2"].astype(jnp.float32)

    c = t * jax.nn.sigmoid(t)
    mod = c @ p["w_ada"] + p["b_ada"]
    sm, cm, gm, sp, cp, gp = jnp.split(mod, 6, axis=1)

    def ln(v):
        mu = v.mean(-1, keepdims=True)
        var = ((v - mu) ** 2).mean(-1, keepdims=True)
        return (v - mu) * jax.lax.rsqrt(var + 1e-6)

    xm = ln(x) * (1 + cm[:, None]) + sm[:, None]
    qkv = xm @ w_qkv + p["b_qkv"]
    q, k, v = jnp.split(qkv, 3, axis=-1)
    q = q.reshape(N, S, num_heads, hd).transpose(0, 2, 1, 3)
    k = k.reshape(N, S, num_heads, hd).transpose(0, 2, 1, 3)
    v = v.reshape(N, S, num_heads, hd).transpose(0, 2, 1, 3)
    s = jnp.einsum("bhqd,bhkd->bhqk", q, k) * float(1.0 / np.sqrt(hd))
    a = jnp.einsum("bhqk,bhkd->bhqd", jax.nn.softmax(s, axis=-1), v)
    a = a.transpose(0, 2, 1, 3).reshape(N, S, H)
    a = a @ w_proj + p["b_proj"]
    x = x + gm[:, None] * a
    xm2 = ln(x) * (1 + cp[:, None]) + sp[:, None]
    h1 = jax.nn.gelu(xm2 @ w_fc1 + p["b_fc1"], approximate=True)
    m = h1 @ w_fc2 + p["b_fc2"]
    return x + gp[:, None] * m


def dit_forward_ref(x, t, pos_embed, blocks, num_heads):
    x = x + pos_embed
    for p in blocks:
        x = dit_block_ref(x, t, p, num_heads)
    return x


# ----------------------------------------------------------------------------
# Deterministic parameter init (matmul weights stored in bf16)
# ----------------------------------------------------------------------------
def xavier(key, fan_in, fan_out):
    limit = float(np.sqrt(6.0 / (fan_in + fan_out)))
    return jax.random.uniform(key, (fan_in, fan_out), jnp.float32, -limit, limit)


def make_block_params(key, H, Hm):
    ks = jax.random.split(key, 10)
    return {
        # adaLN (reference zero-inits; small non-zero so gates are active)
        "w_ada": 0.02 * jax.random.normal(ks[0], (H, 6 * H), jnp.float32),
        "b_ada": 0.02 * jax.random.normal(ks[1], (6 * H,), jnp.float32),
        # matmul weights in bf16 (MXU-native, halves DMA / VMEM residency)
        "w_qkv": xavier(ks[2], H, 3 * H).astype(jnp.bfloat16),
        "b_qkv": 0.01 * jax.random.normal(ks[3], (1, 3 * H), jnp.float32),
        "w_proj": xavier(ks[4], H, H).astype(jnp.bfloat16),
        "b_proj": 0.01 * jax.random.normal(ks[5], (1, H), jnp.float32),
        "w_fc1": xavier(ks[6], H, Hm).astype(jnp.bfloat16),
        "b_fc1": 0.01 * jax.random.normal(ks[7], (1, Hm), jnp.float32),
        "w_fc2": xavier(ks[8], Hm, H).astype(jnp.bfloat16),
        "b_fc2": 0.01 * jax.random.normal(ks[9], (1, H), jnp.float32),
    }


def stack_block_params(blocks):
    return {k: jnp.stack([b[k] for b in blocks], axis=0) for k in blocks[0]}


if __name__ == "__main__":
    # Small DiT: batch=2, 16x16 grid -> 256 patches, hidden=256, 2 blocks,
    # 2 heads (head_dim = 128, lane-aligned).
    N, grid_size, H, depth, num_heads = 2, 16, 256, 2, 2
    S = grid_size * grid_size
    Hm = int(H * 4.0)

    key = jax.random.PRNGKey(0)
    kx, kt, kp = jax.random.split(key, 3)
    x = jax.random.normal(kx, (N, S, H), jnp.float32)
    t = jax.random.normal(kt, (N, H), jnp.float32)

    pos_embed = jnp.asarray(
        get_2d_sincos_pos_embed(H, grid_size), dtype=jnp.float32)[None]  # (1,S,H)

    block_keys = jax.random.split(kp, depth)
    blocks = [make_block_params(block_keys[i], H, Hm) for i in range(depth)]
    params = stack_block_params(blocks)

    out = jax.block_until_ready(
        dit_forward_pallas(x, t, pos_embed, params, num_heads))

    ref = jax.block_until_ready(
        dit_forward_ref(x, t, pos_embed, blocks, num_heads))
    np.testing.assert_allclose(np.asarray(out), np.asarray(ref),
                               rtol=3e-2, atol=3e-2)

    print("KERNEL_OK")
</pallas_src>

<mosaic_0001>
module attributes {stable_mosaic.version = 11 : i64} {
  func.func @dit_stack_kernel(%arg0: i32, %arg1: i32, %arg2: memref<1x256x256xf32, #tpu.memory_space<vmem>>, %arg3: memref<1x1x1x1536xf32, #tpu.memory_space<vmem>>, %arg4: memref<1x256x768xbf16, #tpu.memory_space<vmem>>, %arg5: memref<1x1x768xf32, #tpu.memory_space<vmem>>, %arg6: memref<1x256x256xbf16, #tpu.memory_space<vmem>>, %arg7: memref<1x1x256xf32, #tpu.memory_space<vmem>>, %arg8: memref<1x256x1024xbf16, #tpu.memory_space<vmem>>, %arg9: memref<1x1x1024xf32, #tpu.memory_space<vmem>>, %arg10: memref<1x1024x256xbf16, #tpu.memory_space<vmem>>, %arg11: memref<1x1x256xf32, #tpu.memory_space<vmem>>, %arg12: memref<1x256x256xf32, #tpu.memory_space<vmem>>, %arg13: memref<1x256x256xf32, #tpu.memory_space<vmem>>, %arg14: memref<256x256xf32, #tpu.memory_space<vmem>>) attributes {dimension_semantics = [#tpu.dimension_semantics<parallel>, #tpu.dimension_semantics<arbitrary>], iteration_bounds = array<i64: 2, 2>, scalar_prefetch = 0 : i64, scratch_operands = 2 : i64, tpu.core_type = #tpu.core_type<tc>, window_params = [{transform_indices = @transform_0, window_bounds = array<i64: 1, 256, 256>}, {transform_indices = @transform_1, window_bounds = array<i64: 1, 1, 1, 1536>}, {transform_indices = @transform_2, window_bounds = array<i64: 1, 256, 768>}, {transform_indices = @transform_3, window_bounds = array<i64: 1, 1, 768>}, {transform_indices = @transform_4, window_bounds = array<i64: 1, 256, 256>}, {transform_indices = @transform_5, window_bounds = array<i64: 1, 1, 256>}, {transform_indices = @transform_6, window_bounds = array<i64: 1, 256, 1024>}, {transform_indices = @transform_7, window_bounds = array<i64: 1, 1, 1024>}, {transform_indices = @transform_8, window_bounds = array<i64: 1, 1024, 256>}, {transform_indices = @transform_9, window_bounds = array<i64: 1, 1, 256>}, {transform_indices = @transform_10, window_bounds = array<i64: 1, 256, 256>}]} {
    %c0_i32 = arith.constant 0 : i32
    %0 = arith.cmpi eq, %arg1, %c0_i32 : i32
    %1 = arith.extui %0 : i1 to i32
    %c0_i32_0 = arith.constant 0 : i32
    %2 = arith.cmpi ne, %1, %c0_i32_0 : i32
    scf.if %2 {
      %c0_67 = arith.constant 0 : index
      %c0_68 = arith.constant 0 : index
      %c0_69 = arith.constant 0 : index
      %174 = vector.load %arg2[%c0_67, %c0_68, %c0_69] : memref<1x256x256xf32, #tpu.memory_space<vmem>>, vector<1x256x256xf32>
      %c0_70 = arith.constant 0 : index
      %c0_71 = arith.constant 0 : index
      %c0_72 = arith.constant 0 : index
      %175 = vector.load %arg13[%c0_70, %c0_71, %c0_72] : memref<1x256x256xf32, #tpu.memory_space<vmem>>, vector<1x256x256xf32>
      tpu.vector_store %arg13[%c0_70, %c0_71, %c0_72], %174 {strides = array<i32>} : memref<1x256x256xf32, #tpu.memory_space<vmem>>, vector<1x256x256xf32>,
    } else {
    }
    %c0 = arith.constant 0 : index
    %c0_1 = arith.constant 0 : index
    %c0_2 = arith.constant 0 : index
    %3 = vector.load %arg13[%c0, %c0_1, %c0_2] : memref<1x256x256xf32, #tpu.memory_space<vmem>>, vector<1x256x256xf32>
    %c0_3 = arith.constant 0 : index
    %c0_4 = arith.constant 0 : index
    %c0_5 = arith.constant 0 : index
    %c0_6 = arith.constant 0 : index
    %4 = vector.load %arg3[%c0_3, %c0_4, %c0_5, %c0_6] : memref<1x1x1x1536xf32, #tpu.memory_space<vmem>>, vector<1x1x1x1536xf32>
    %5 = vector.shape_cast %4 : vector<1x1x1x1536xf32> to vector<1x1536xf32>
    %6 = vector.extract_strided_slice %5 {offsets = [0, 0], sizes = [1, 256], strides = [1, 1]} : vector<1x1536xf32> to vector<1x256xf32>
    %7 = vector.shape_cast %6 : vector<1x256xf32> to vector<1x1x256xf32>
    %8 = vector.extract_strided_slice %5 {offsets = [0, 256], sizes = [1, 256], strides = [1, 1]} : vector<1x1536xf32> to vector<1x256xf32>
    %9 = vector.shape_cast %8 : vector<1x256xf32> to vector<1x1x256xf32>
    %10 = vector.extract_strided_slice %5 {offsets = [0, 512], sizes = [1, 256], strides = [1, 1]} : vector<1x1536xf32> to vector<1x256xf32>
    %11 = vector.shape_cast %10 : vector<1x256xf32> to vector<1x1x256xf32>
    %12 = vector.extract_strided_slice %5 {offsets = [0, 768], sizes = [1, 256], strides = [1, 1]} : vector<1x1536xf32> to vector<1x256xf32>
    %13 = vector.shape_cast %12 : vector<1x256xf32> to vector<1x1x256xf32>
    %14 = vector.extract_strided_slice %5 {offsets = [0, 1024], sizes = [1, 256], strides = [1, 1]} : vector<1x1536xf32> to vector<1x256xf32>
    %15 = vector.shape_cast %14 : vector<1x256xf32> to vector<1x1x256xf32>
    %16 = vector.extract_strided_slice %5 {offsets = [0, 1280], sizes = [1, 256], strides = [1, 1]} : vector<1x1536xf32> to vector<1x256xf32>
    %17 = vector.shape_cast %16 : vector<1x256xf32> to vector<1x1x256xf32>
    %cst = arith.constant dense<0.000000e+00> : vector<1x256xf32>
    %18 = vector.multi_reduction <add>, %3, %cst [2] : vector<1x256x256xf32> to vector<1x256xf32>
    %19 = vector.shape_cast %18 : vector<1x256xf32> to vector<1x256x1xf32>
    %cst_7 = arith.constant 2.560000e+02 : f32
    %20 = vector.broadcast %cst_7 : f32 to vector<1x256x1xf32>
    %21 = arith.divf %19, %20 : vector<1x256x1xf32>
    %22 = vector.broadcast %21 : vector<1x256x1xf32> to vector<1x256x256xf32>
    %23 = arith.subf %3, %22 : vector<1x256x256xf32>
    %24 = arith.mulf %23, %23 : vector<1x256x256xf32>
    %cst_8 = arith.constant dense<0.000000e+00> : vector<1x256xf32>
    %25 = vector.multi_reduction <add>, %24, %cst_8 [2] : vector<1x256x256xf32> to vector<1x256xf32>
    %26 = vector.shape_cast %25 : vector<1x256xf32> to vector<1x256x1xf32>
    %cst_9 = arith.constant 2.560000e+02 : f32
    %27 = vector.broadcast %cst_9 : f32 to vector<1x256x1xf32>
    %28 = arith.divf %26, %27 : vector<1x256x1xf32>
    %29 = vector.broadcast %21 : vector<1x256x1xf32> to vector<1x256x256xf32>
    %30 = arith.subf %3, %29 : vector<1x256x256xf32>
    %cst_10 = arith.constant 9.99999997E-7 : f32
    %31 = vector.broadcast %cst_10 : f32 to vector<1x256x1xf32>
    %32 = arith.addf %28, %31 : vector<1x256x1xf32>
    %33 = math.rsqrt %32 : vector<1x256x1xf32>
    %34 = vector.broadcast %33 : vector<1x256x1xf32> to vector<1x256x256xf32>
    %35 = arith.mulf %30, %34 : vector<1x256x256xf32>
    %cst_11 = arith.constant 1.000000e+00 : f32
    %36 = vector.broadcast %cst_11 : f32 to vector<1x1x256xf32>
    %37 = arith.addf %36, %9 : vector<1x1x256xf32>
    %38 = vector.broadcast %37 : vector<1x1x256xf32> to vector<1x256x256xf32>
    %39 = arith.mulf %35, %38 : vector<1x256x256xf32>
    %40 = vector.broadcast %7 : vector<1x1x256xf32> to vector<1x256x256xf32>
    %41 = arith.addf %39, %40 : vector<1x256x256xf32>
    %42 = vector.shape_cast %41 : vector<1x256x256xf32> to vector<256x256xf32>
    %43 = arith.truncf %42 : vector<256x256xf32> to vector<256x256xbf16>
    %c0_12 = arith.constant 0 : index
    %c0_13 = arith.constant 0 : index
    %c0_14 = arith.constant 0 : index
    %44 = vector.load %arg4[%c0_12, %c0_13, %c0_14] : memref<1x256x768xbf16, #tpu.memory_space<vmem>>, vector<1x256x768xbf16>
    %45 = vector.shape_cast %44 : vector<1x256x768xbf16> to vector<256x768xbf16>
    %cst_15 = arith.constant dense<0.000000e+00> : vector<256x768xf32>
    %46 = tpu.matmul %43, %45, %cst_15 {dimension_numbers = #tpu.dot_dimension_numbers<[1], [0], [0], [1], [0, 0, 1, 1], [], []>} : vector<256x256xbf16>, vector<256x768xbf16>, vector<256x768xf32> -> vector<256x768xf32>
    %c0_16 = arith.constant 0 : index
    %c0_17 = arith.constant 0 : index
    %c0_18 = arith.constant 0 : index
    %47 = vector.load %arg5[%c0_16, %c0_17, %c0_18] : memref<1x1x768xf32, #tpu.memory_space<vmem>>, vector<1x1x768xf32>
    %48 = vector.shape_cast %47 : vector<1x1x768xf32> to vector<1x768xf32>
    %49 = vector.broadcast %48 : vector<1x768xf32> to vector<256x768xf32>
    %50 = arith.addf %46, %49 : vector<256x768xf32>
    %51 = vector.extract_strided_slice %50 {offsets = [0, 0], sizes = [256, 128], strides = [1, 1]} : vector<256x768xf32> to vector<256x128xf32>
    %52 = arith.truncf %51 : vector<256x128xf32> to vector<256x128xbf16>
    %53 = vector.shape_cast %52 : vector<256x128xbf16> to vector<1x256x128xbf16>
    %54 = vector.extract_strided_slice %50 {offsets = [0, 256], sizes = [256, 128], strides = [1, 1]} : vector<256x768xf32> to vector<256x128xf32>
    %55 = arith.truncf %54 : vector<256x128xf32> to vector<256x128xbf16>
    %56 = vector.shape_cast %55 : vector<256x128xbf16> to vector<1x256x128xbf16>
    %57 = vector.extract_strided_slice %50 {offsets = [0, 512], sizes = [256, 128], strides = [1, 1]} : vector<256x768xf32> to vector<256x128xf32>
    %58 = arith.truncf %57 : vector<256x128xf32> to vector<256x128xbf16>
    %59 = vector.shape_cast %58 : vector<256x128xbf16> to vector<1x256x128xbf16>
    "tpu.trace_start"() <{level = 10 : i32, message = "bqd,bkd->bqk"}> : () -> ()
    %cst_19 = arith.constant dense<0.000000e+00> : vector<1x256x256xf32>
    %60 = tpu.matmul %53, %56, %cst_19 {dimension_numbers = #tpu.dot_dimension_numbers<[2], [2], [1], [1], [0, 0, 0, 1, 1, 1], [0], [0]>} : vector<1x256x128xbf16>, vector<1x256x128xbf16>, vector<1x256x256xf32> -> vector<1x256x256xf32>
    "tpu.trace_stop"() : () -> ()
    %cst_20 = arith.constant dense<0xFF800000> : vector<1x256xf32>
    %61 = vector.multi_reduction <maximumf>, %60, %cst_20 [2] : vector<1x256x256xf32> to vector<1x256xf32>
    %62 = vector.shape_cast %61 : vector<1x256xf32> to vector<1x256x1xf32>
    %63 = vector.broadcast %62 : vector<1x256x1xf32> to vector<1x256x256xf32>
    %64 = arith.subf %60, %63 : vector<1x256x256xf32>
    %65 = math.exp %64 : vector<1x256x256xf32>
    %cst_21 = arith.constant dense<0.000000e+00> : vector<1x256xf32>
    %66 = vector.multi_reduction <add>, %65, %cst_21 [2] : vector<1x256x256xf32> to vector<1x256xf32>
    %67 = vector.shape_cast %66 : vector<1x256xf32> to vector<1x256x1xf32>
    %68 = tpu.reciprocal %67 {approx = true} : vector<1x256x1xf32> -> vector<1x256x1xf32>
    %69 = vector.broadcast %68 : vector<1x256x1xf32> to vector<1x256x256xf32>
    %70 = arith.mulf %65, %69 : vector<1x256x256xf32>
    %71 = arith.truncf %70 : vector<1x256x256xf32> to vector<1x256x256xbf16>
    "tpu.trace_start"() <{level = 10 : i32, message = "bqk,bkd->bqd"}> : () -> ()
    %cst_22 = arith.constant dense<0.000000e+00> : vector<1x256x128xf32>
    %72 = tpu.matmul %71, %59, %cst_22 {dimension_numbers = #tpu.dot_dimension_numbers<[2], [1], [1], [2], [0, 0, 0, 1, 1, 2], [0], [0]>} : vector<1x256x256xbf16>, vector<1x256x128xbf16>, vector<1x256x128xf32> -> vector<1x256x128xf32>
    "tpu.trace_stop"() : () -> ()
    %73 = vector.shape_cast %72 : vector<1x256x128xf32> to vector<256x128xf32>
    %c0_23 = arith.constant 0 : index
    %c0_24 = arith.constant 0 : index
    %74 = vector.load %arg14[%c0_23, %c0_24] : memref<256x256xf32, #tpu.memory_space<vmem>>, vector<256x128xf32>
    tpu.vector_store %arg14[%c0_23, %c0_24], %73 {strides = array<i32>} : memref<256x256xf32, #tpu.memory_space<vmem>>, vector<256x128xf32>,
    %75 = vector.extract_strided_slice %50 {offsets = [0, 128], sizes = [256, 128], strides = [1, 1]} : vector<256x768xf32> to vector<256x128xf32>
    %76 = arith.truncf %75 : vector<256x128xf32> to vector<256x128xbf16>
    %77 = vector.shape_cast %76 : vector<256x128xbf16> to vector<1x256x128xbf16>
    %78 = vector.extract_strided_slice %50 {offsets = [0, 384], sizes = [256, 128], strides = [1, 1]} : vector<256x768xf32> to vector<256x128xf32>
    %79 = arith.truncf %78 : vector<256x128xf32> to vector<256x128xbf16>
    %80 = vector.shape_cast %79 : vector<256x128xbf16> to vector<1x256x128xbf16>
    %81 = vector.extract_strided_slice %50 {offsets = [0, 640], sizes = [256, 128], strides = [1, 1]} : vector<256x768xf32> to vector<256x128xf32>
    %82 = arith.truncf %81 : vector<256x128xf32> to vector<256x128xbf16>
    %83 = vector.shape_cast %82 : vector<256x128xbf16> to vector<1x256x128xbf16>
    "tpu.trace_start"() <{level = 10 : i32, message = "bqd,bkd->bqk"}> : () -> ()
    %cst_25 = arith.constant dense<0.000000e+00> : vector<1x256x256xf32>
    %84 = tpu.matmul %77, %80, %cst_25 {dimension_numbers = #tpu.dot_dimension_numbers<[2], [2], [1], [1], [0, 0, 0, 1, 1, 1], [0], [0]>} : vector<1x256x128xbf16>, vector<1x256x128xbf16>, vector<1x256x256xf32> -> vector<1x256x256xf32>
    "tpu.trace_stop"() : () -> ()
    %cst_26 = arith.constant dense<0xFF800000> : vector<1x256xf32>
    %85 = vector.multi_reduction <maximumf>, %84, %cst_26 [2] : vector<1x256x256xf32> to vector<1x256xf32>
    %86 = vector.shape_cast %85 : vector<1x256xf32> to vector<1x256x1xf32>
    %87 = vector.broadcast %86 : vector<1x256x1xf32> to vector<1x256x256xf32>
    %88 = arith.subf %84, %87 : vector<1x256x256xf32>
    %89 = math.exp %88 : vector<1x256x256xf32>
    %cst_27 = arith.constant dense<0.000000e+00> : vector<1x256xf32>
    %90 = vector.multi_reduction <add>, %89, %cst_27 [2] : vector<1x256x256xf32> to vector<1x256xf32>
    %91 = vector.shape_cast %90 : vector<1x256xf32> to vector<1x256x1xf32>
    %92 = tpu.reciprocal %91 {approx = true} : vector<1x256x1xf32> -> vector<1x256x1xf32>
    %93 = vector.broadcast %92 : vector<1x256x1xf32> to vector<1x256x256xf32>
    %94 = arith.mulf %89, %93 : vector<1x256x256xf32>
    %95 = arith.truncf %94 : vector<1x256x256xf32> to vector<1x256x256xbf16>
    "tpu.trace_start"() <{level = 10 : i32, message = "bqk,bkd->bqd"}> : () -> ()
    %cst_28 = arith.constant dense<0.000000e+00> : vector<1x256x128xf32>
    %96 = tpu.matmul %95, %83, %cst_28 {dimension_numbers = #tpu.dot_dimension_numbers<[2], [1], [1], [2], [0, 0, 0, 1, 1, 2], [0], [0]>} : vector<1x256x256xbf16>, vector<1x256x128xbf16>, vector<1x256x128xf32> -> vector<1x256x128xf32>
    "tpu.trace_stop"() : () -> ()
    %97 = vector.shape_cast %96 : vector<1x256x128xf32> to vector<256x128xf32>
    %c0_29 = arith.constant 0 : index
    %c128 = arith.constant 128 : index
    %98 = vector.load %arg14[%c0_29, %c128] : memref<256x256xf32, #tpu.memory_space<vmem>>, vector<256x128xf32>
    tpu.vector_store %arg14[%c0_29, %c128], %97 {strides = array<i32>} : memref<256x256xf32, #tpu.memory_space<vmem>>, vector<256x128xf32>,
    %c0_30 = arith.constant 0 : index
    %c0_31 = arith.constant 0 : index
    %99 = vector.load %arg14[%c0_30, %c0_31] : memref<256x256xf32, #tpu.memory_space<vmem>>, vector<256x256xf32>
    %100 = arith.truncf %99 : vector<256x256xf32> to vector<256x256xbf16>
    %c0_32 = arith.constant 0 : index
    %c0_33 = arith.constant 0 : index
    %c0_34 = arith.constant 0 : index
    %101 = vector.load %arg6[%c0_32, %c0_33, %c0_34] : memref<1x256x256xbf16, #tpu.memory_space<vmem>>, vector<1x256x256xbf16>
    %102 = vector.shape_cast %101 : vector<1x256x256xbf16> to vector<256x256xbf16>
    %cst_35 = arith.constant dense<0.000000e+00> : vector<256x256xf32>
    %103 = tpu.matmul %100, %102, %cst_35 {dimension_numbers = #tpu.dot_dimension_numbers<[1], [0], [0], [1], [0, 0, 1, 1], [], []>} : vector<256x256xbf16>, vector<256x256xbf16>, vector<256x256xf32> -> vector<256x256xf32>
    %c0_36 = arith.constant 0 : index
    %c0_37 = arith.constant 0 : index
    %c0_38 = arith.constant 0 : index
    %104 = vector.load %arg7[%c0_36, %c0_37, %c0_38] : memref<1x1x256xf32, #tpu.memory_space<vmem>>, vector<1x1x256xf32>
    %105 = vector.shape_cast %104 : vector<1x1x256xf32> to vector<1x256xf32>
    %106 = vector.broadcast %105 : vector<1x256xf32> to vector<256x256xf32>
    %107 = arith.addf %103, %106 : vector<256x256xf32>
    %108 = vector.shape_cast %107 : vector<256x256xf32> to vector<1x256x256xf32>
    %109 = vector.broadcast %11 : vector<1x1x256xf32> to vector<1x256x256xf32>
    %110 = arith.mulf %109, %108 : vector<1x256x256xf32>
    %111 = arith.addf %3, %110 : vector<1x256x256xf32>
    %cst_39 = arith.constant dense<0.000000e+00> : vector<1x256xf32>
    %112 = vector.multi_reduction <add>, %111, %cst_39 [2] : vector<1x256x256xf32> to vector<1x256xf32>
    %113 = vector.shape_cast %112 : vector<1x256xf32> to vector<1x256x1xf32>
    %cst_40 = arith.constant 2.560000e+02 : f32
    %114 = vector.broadcast %cst_40 : f32 to vector<1x256x1xf32>
    %115 = arith.divf %113, %114 : vector<1x256x1xf32>
    %116 = vector.broadcast %115 : vector<1x256x1xf32> to vector<1x256x256xf32>
    %117 = arith.subf %111, %116 : vector<1x256x256xf32>
    %118 = arith.mulf %117, %117 : vector<1x256x256xf32>
    %cst_41 = arith.constant dense<0.000000e+00> : vector<1x256xf32>
    %119 = vector.multi_reduction <add>, %118, %cst_41 [2] : vector<1x256x256xf32> to vector<1x256xf32>
    %120 = vector.shape_cast %119 : vector<1x256xf32> to vector<1x256x1xf32>
    %cst_42 = arith.constant 2.560000e+02 : f32
    %121 = vector.broadcast %cst_42 : f32 to vector<1x256x1xf32>
    %122 = arith.divf %120, %121 : vector<1x256x1xf32>
    %123 = vector.broadcast %115 : vector<1x256x1xf32> to vector<1x256x256xf32>
    %124 = arith.subf %111, %123 : vector<1x256x256xf32>
    %cst_43 = arith.constant 9.99999997E-7 : f32
    %125 = vector.broadcast %cst_43 : f32 to vector<1x256x1xf32>
    %126 = arith.addf %122, %125 : vector<1x256x1xf32>
    %127 = math.rsqrt %126 : vector<1x256x1xf32>
    %128 = vector.broadcast %127 : vector<1x256x1xf32> to vector<1x256x256xf32>
    %129 = arith.mulf %124, %128 : vector<1x256x256xf32>
    %cst_44 = arith.constant 1.000000e+00 : f32
    %130 = vector.broadcast %cst_44 : f32 to vector<1x1x256xf32>
    %131 = arith.addf %130, %15 : vector<1x1x256xf32>
    %132 = vector.broadcast %131 : vector<1x1x256xf32> to vector<1x256x256xf32>
    %133 = arith.mulf %129, %132 : vector<1x256x256xf32>
    %134 = vector.broadcast %13 : vector<1x1x256xf32> to vector<1x256x256xf32>
    %135 = arith.addf %133, %134 : vector<1x256x256xf32>
    %136 = vector.shape_cast %135 : vector<1x256x256xf32> to vector<256x256xf32>
    %137 = arith.truncf %136 : vector<256x256xf32> to vector<256x256xbf16>
    %c0_45 = arith.constant 0 : index
    %c0_46 = arith.constant 0 : index
    %c0_47 = arith.constant 0 : index
    %138 = vector.load %arg8[%c0_45, %c0_46, %c0_47] : memref<1x256x1024xbf16, #tpu.memory_space<vmem>>, vector<1x256x1024xbf16>
    %139 = vector.shape_cast %138 : vector<1x256x1024xbf16> to vector<256x1024xbf16>
    %cst_48 = arith.constant dense<0.000000e+00> : vector<256x1024xf32>
    %140 = tpu.matmul %137, %139, %cst_48 {dimension_numbers = #tpu.dot_dimension_numbers<[1], [0], [0], [1], [0, 0, 1, 1], [], []>} : vector<256x256xbf16>, vector<256x1024xbf16>, vector<256x1024xf32> -> vector<256x1024xf32>
    %c0_49 = arith.constant 0 : index
    %c0_50 = arith.constant 0 : index
    %c0_51 = arith.constant 0 : index
    %141 = vector.load %arg9[%c0_49, %c0_50, %c0_51] : memref<1x1x1024xf32, #tpu.memory_space<vmem>>, vector<1x1x1024xf32>
    %142 = vector.shape_cast %141 : vector<1x1x1024xf32> to vector<1x1024xf32>
    %143 = vector.broadcast %142 : vector<1x1024xf32> to vector<256x1024xf32>
    %144 = arith.addf %140, %143 : vector<256x1024xf32>
    %145 = arith.truncf %144 : vector<256x1024xf32> to vector<256x1024xbf16>
    %146 = arith.mulf %145, %145 : vector<256x1024xbf16>
    %147 = arith.mulf %145, %146 : vector<256x1024xbf16>
    %cst_52 = arith.constant 4.467770e-02 : bf16
    %148 = vector.broadcast %cst_52 : bf16 to vector<256x1024xbf16>
    %149 = arith.mulf %148, %147 : vector<256x1024xbf16>
    %150 = arith.addf %145, %149 : vector<256x1024xbf16>
    %cst_53 = arith.constant 7.968750e-01 : bf16
    %151 = vector.broadcast %cst_53 : bf16 to vector<256x1024xbf16>
    %152 = arith.mulf %151, %150 : vector<256x1024xbf16>
    %153 = math.tanh %152 : vector<256x1024xbf16>
    %cst_54 = arith.constant 1.000000e+00 : bf16
    %154 = vector.broadcast %cst_54 : bf16 to vector<256x1024xbf16>
    %155 = arith.addf %154, %153 : vector<256x1024xbf16>
    %cst_55 = arith.constant 5.000000e-01 : bf16
    %156 = vector.broadcast %cst_55 : bf16 to vector<256x1024xbf16>
    %157 = arith.mulf %156, %155 : vector<256x1024xbf16>
    %158 = arith.mulf %145, %157 : vector<256x1024xbf16>
    %c0_56 = arith.constant 0 : index
    %c0_57 = arith.constant 0 : index
    %c0_58 = arith.constant 0 : index
    %159 = vector.load %arg10[%c0_56, %c0_57, %c0_58] : memref<1x1024x256xbf16, #tpu.memory_space<vmem>>, vector<1x1024x256xbf16>
    %160 = vector.shape_cast %159 : vector<1x1024x256xbf16> to vector<1024x256xbf16>
    %cst_59 = arith.constant dense<0.000000e+00> : vector<256x256xf32>
    %161 = tpu.matmul %158, %160, %cst_59 {dimension_numbers = #tpu.dot_dimension_numbers<[1], [0], [0], [1], [0, 0, 1, 1], [], []>} : vector<256x1024xbf16>, vector<1024x256xbf16>, vector<256x256xf32> -> vector<256x256xf32>
    %c0_60 = arith.constant 0 : index
    %c0_61 = arith.constant 0 : index
    %c0_62 = arith.constant 0 : index
    %162 = vector.load %arg11[%c0_60, %c0_61, %c0_62] : memref<1x1x256xf32, #tpu.memory_space<vmem>>, vector<1x1x256xf32>
    %163 = vector.shape_cast %162 : vector<1x1x256xf32> to vector<1x256xf32>
    %164 = vector.broadcast %163 : vector<1x256xf32> to vector<256x256xf32>
    %165 = arith.addf %161, %164 : vector<256x256xf32>
    %166 = vector.shape_cast %165 : vector<256x256xf32> to vector<1x256x256xf32>
    %167 = vector.broadcast %17 : vector<1x1x256xf32> to vector<1x256x256xf32>
    %168 = arith.mulf %167, %166 : vector<1x256x256xf32>
    %169 = arith.addf %111, %168 : vector<1x256x256xf32>
    %c0_63 = arith.constant 0 : index
    %c0_64 = arith.constant 0 : index
    %c0_65 = arith.constant 0 : index
    %170 = vector.load %arg13[%c0_63, %c0_64, %c0_65] : memref<1x256x256xf32, #tpu.memory_space<vmem>>, vector<1x256x256xf32>
    tpu.vector_store %arg13[%c0_63, %c0_64, %c0_65], %169 {strides = array<i32>} : memref<1x256x256xf32, #tpu.memory_space<vmem>>, vector<1x256x256xf32>,
    %c1_i32 = arith.constant 1 : i32
    %171 = arith.cmpi eq, %arg1, %c1_i32 : i32
    %172 = arith.extui %171 : i1 to i32
    %c0_i32_66 = arith.constant 0 : i32
    %173 = arith.cmpi ne, %172, %c0_i32_66 : i32
    scf.if %173 {
      %c0_67 = arith.constant 0 : index
      %c0_68 = arith.constant 0 : index
      %c0_69 = arith.constant 0 : index
      %174 = vector.load %arg12[%c0_67, %c0_68, %c0_69] : memref<1x256x256xf32, #tpu.memory_space<vmem>>, vector<1x256x256xf32>
      tpu.vector_store %arg12[%c0_67, %c0_68, %c0_69], %169 {strides = array<i32>} : memref<1x256x256xf32, #tpu.memory_space<vmem>>, vector<1x256x256xf32>,
    } else {
    }
    return
  }
  func.func @transform_0(%arg0: i32, %arg1: i32) -> (i32, i32, i32) {
    %c0_i32 = arith.constant 0 : i32
    %c0_i32_0 = arith.constant 0 : i32
    %c0_i32_1 = arith.constant 0 : i32
    return %arg0, %c0_i32, %c0_i32_0 : i32, i32, i32
  }
  func.func @transform_1(%arg0: i32, %arg1: i32) -> (i32, i32, i32, i32) {
    %c0_i32 = arith.constant 0 : i32
    %c0_i32_0 = arith.constant 0 : i32
    %c0_i32_1 = arith.constant 0 : i32
    return %arg1, %arg0, %c0_i32, %c0_i32_0 : i32, i32, i32, i32
  }
  func.func @transform_2(%arg0: i32, %arg1: i32) -> (i32, i32, i32) {
    %c0_i32 = arith.constant 0 : i32
    %c0_i32_0 = arith.constant 0 : i32
    %c0_i32_1 = arith.constant 0 : i32
    return %arg1, %c0_i32, %c0_i32_0 : i32, i32, i32
  }
  func.func @transform_3(%arg0: i32, %arg1: i32) -> (i32, i32, i32) {
    %c0_i32 = arith.constant 0 : i32
    %c0_i32_0 = arith.constant 0 : i32
    %c0_i32_1 = arith.constant 0 : i32
    return %arg1, %c0_i32, %c0_i32_0 : i32, i32, i32
  }
  func.func @transform_4(%arg0: i32, %arg1: i32) -> (i32, i32, i32) {
    %c0_i32 = arith.constant 0 : i32
    %c0_i32_0 = arith.constant 0 : i32
    %c0_i32_1 = arith.constant 0 : i32
    return %arg1, %c0_i32, %c0_i32_0 : i32, i32, i32
  }
  func.func @transform_5(%arg0: i32, %arg1: i32) -> (i32, i32, i32) {
    %c0_i32 = arith.constant 0 : i32
    %c0_i32_0 = arith.constant 0 : i32
    %c0_i32_1 = arith.constant 0 : i32
    return %arg1, %c0_i32, %c0_i32_0 : i32, i32, i32
  }
  func.func @transform_6(%arg0: i32, %arg1: i32) -> (i32, i32, i32) {
    %c0_i32 = arith.constant 0 : i32
    %c0_i32_0 = arith.constant 0 : i32
    %c0_i32_1 = arith.constant 0 : i32
    return %arg1, %c0_i32, %c0_i32_0 : i32, i32, i32
  }
  func.func @transform_7(%arg0: i32, %arg1: i32) -> (i32, i32, i32) {
    %c0_i32 = arith.constant 0 : i32
    %c0_i32_0 = arith.constant 0 : i32
    %c0_i32_1 = arith.constant 0 : i32
    return %arg1, %c0_i32, %c0_i32_0 : i32, i32, i32
  }
  func.func @transform_8(%arg0: i32, %arg1: i32) -> (i32, i32, i32) {
    %c0_i32 = arith.constant 0 : i32
    %c0_i32_0 = arith.constant 0 : i32
    %c0_i32_1 = arith.constant 0 : i32
    return %arg1, %c0_i32, %c0_i32_0 : i32, i32, i32
  }
  func.func @transform_9(%arg0: i32, %arg1: i32) -> (i32, i32, i32) {
    %c0_i32 = arith.constant 0 : i32
    %c0_i32_0 = arith.constant 0 : i32
    %c0_i32_1 = arith.constant 0 : i32
    return %arg1, %c0_i32, %c0_i32_0 : i32, i32, i32
  }
  func.func @transform_10(%arg0: i32, %arg1: i32) -> (i32, i32, i32) {
    %c0_i32 = arith.constant 0 : i32
    %c0_i32_0 = arith.constant 0 : i32
    %c0_i32_1 = arith.constant 0 : i32
    return %arg0, %c0_i32, %c0_i32_0 : i32, i32, i32
  }
}

</mosaic_0001>

<llo_original>
// kernel: tpu_custom_call.1
$region0: #{tpu_custom_call.1}
  #allocation0 [shape = 'u32[]', space=smem, size = 0x4, offset = 0x4, fixed_abs, tag = 'smem constant byte address 0x4 - core index']
  #allocation1 [shape = 'u32[144,128]{1,0:T(1,128)}', space=vmem, size = 0x12000, scoped, tag = 'internal scratch']
  #allocation2 [shape = 'f32[1,256,256]{2,1,0:T(8,128)}', space=vmem, size = 0x40000, scoped, tag = 'scratch operand']
  #allocation3 [shape = 'f32[256,256]{1,0:T(8,128)}', space=vmem, size = 0x40000, scoped, tag = 'scratch operand']
  %s0 = inlined_call_operand.hbm [shape: f32[2,256,256], index: 0, kind: input, shape index: {}]
  %s1 = inlined_call_operand.hbm [shape: f32[2,2,1,1536], index: 1, kind: input, shape index: {}]
  %s2 = inlined_call_operand.hbm [shape: bf16[2,256,768], index: 2, kind: input, shape index: {}]
  %s3 = inlined_call_operand.hbm [shape: f32[2,1,768], index: 3, kind: input, shape index: {}]
  %s4 = inlined_call_operand.hbm [shape: bf16[2,256,256], index: 4, kind: input, shape index: {}]
  %s5 = inlined_call_operand.vmem [shape: f32[2,1,256], index: 5, kind: input, shape index: {}]
  %s6 = inlined_call_operand.hbm [shape: bf16[2,256,1024], index: 6, kind: input, shape index: {}]
  %s7 = inlined_call_operand.vmem [shape: f32[2,1,1024], index: 7, kind: input, shape index: {}]
  %s8 = inlined_call_operand.hbm [shape: bf16[2,1024,256], index: 8, kind: input, shape index: {}]
  %s9 = inlined_call_operand.vmem [shape: f32[2,1,256], index: 9, kind: input, shape index: {}]
  %s10 = inlined_call_operand.hbm [shape: f32[2,256,256], index: 10, kind: output, shape index: {}]
  %s11 = sld [smem:[#allocation0]]
  $region109: #{tpu_custom_call.1} parent=0
    _
  %s13 = ssub.s32 1, %s11
  %s14 = scalar_select 0, %s13, %s11
  $region1: #{tpu_custom_call.1} parent=0
    #allocation4 [shape = 'u8[524288]{0}', space=vmem, size = 0x80000, scoped, tag = 'input window, operand 0']
    #allocation5 [shape = 's32[2]{0}', space=sflag, size = 0x8, scoped, tag = 'scoped memory for tpu_custom_call.1']
    #allocation6 [shape = 's32[2]{0}', space=sflag, size = 0x8, scoped, tag = 'scoped memory for tpu_custom_call.1']
    #allocation7 [shape = 'u8[12288]{0}', space=vmem, size = 0x3000, scoped, tag = 'input window, operand 1']
    #allocation8 [shape = 's32[2]{0}', space=sflag, size = 0x8, scoped, tag = 'scoped memory for tpu_custom_call.1']
    #allocation9 [shape = 'u8[786432]{0}', space=vmem, size = 0xc0000, scoped, tag = 'input window, operand 2']
    #allocation10 [shape = 'u8[6144]{0}', space=vmem, size = 0x1800, scoped, tag = 'input window, operand 3']
    #allocation11 [shape = 's32[2]{0}', space=sflag, size = 0x8, scoped, tag = 'scoped memory for tpu_custom_call.1']
    #allocation12 [shape = 'u8[262144]{0}', space=vmem, size = 0x40000, scoped, tag = 'input window, operand 4']
    #allocation13 [shape = 'u8[1048576]{0}', space=vmem, size = 0x100000, scoped, tag = 'input window, operand 6']
    #allocation14 [shape = 's32[2]{0}', space=sflag, size = 0x8, scoped, tag = 'scoped memory for tpu_custom_call.1']
    #allocation15 [shape = 'u8[1048576]{0}', space=vmem, size = 0x100000, scoped, tag = 'input window, operand 8']
    #allocation16 [shape = 'u8[524288]{0}', space=vmem, size = 0x80000, scoped, tag = 'output window, operand 0']
    %15 = vsyncpa [#allocation5], 0
    %s16 = scalar_lea.sflag [#allocation5], 1
    %17 = vsyncpa %s16, 0
    %18 = vsyncpa [#allocation8], 0
    %s19 = scalar_lea.sflag [#allocation8], 1
    %20 = vsyncpa %s19, 0
    %21 = vsyncpa [#allocation11], 0
    %s22 = scalar_lea.sflag [#allocation11], 1
    %23 = vsyncpa %s22, 0
    %24 = vsyncpa [#allocation14], 0
    %s25 = scalar_lea.sflag [#allocation14], 1
    %26 = vsyncpa %s25, 0
    %27 = vsyncpa [#allocation6], 0
    %s28 = scalar_lea.sflag [#allocation6], 1
    %29 = vsyncpa %s28, 0
    loop: start=0, step=1, limit=6
    $region2: #{tpu_custom_call.1} parent=1 // loop_pre_header
      _
    $region3: #{tpu_custom_call.1} parent=1 // loop_header
      %s31 = sphi 0, %s35
      %p32 = scmp.ge.s32.totalorder %s31, 6
      %s38 = sphi 0, %s50
      %s39 = sphi 0, %s46
      %s40 = sphi 0, %s38
      %s41 = sphi 0, %s39
      %s42 = sphi 0, %s40
      %s43 = sphi 0, %s41
      %s53 = sphi 0, %s55
      %s56 = sphi 0, %s53
      %s57 = sphi 0, %s56
      %s73 = sphi 0, %s57
      %s81 = sphi 0, %s83
      %s84 = sphi 0, %s81
      %s85 = sphi 0, %s84
      %s101 = sphi 0, %s85
      %s107 = sphi 0, %s109
      %s110 = sphi 0, %s107
      %s111 = sphi 0, %s110
      %s127 = sphi 0, %s111
      %s133 = sphi 0, %s135
      %s136 = sphi 0, %s133
      %s137 = sphi 0, %s136
      %s153 = sphi 0, %s137
      %s159 = sphi 0, %s161
      %s162 = sphi 0, %s159
      %s163 = sphi 0, %s162
      %s179 = sphi 0, %s163
      %s185 = sphi 0, %s187
      %s188 = sphi 0, %s185
      %s189 = sphi 0, %s188
      %s205 = sphi 0, %s189
      %s211 = sphi 0, %s213
      %s214 = sphi 0, %s211
      %s215 = sphi 0, %s214
      %s231 = sphi 0, %s215
      %s237 = sphi 0, %s239
      %s240 = sphi 0, %s237
      %s241 = sphi 0, %s240
      %s257 = sphi 0, %s241
      %s263 = sphi 0, %s265
      %s266 = sphi 0, %s263
      %s267 = sphi 0, %s266
      %s283 = sphi 0, %s267
      %s289 = sphi 0, %s291
      %s292 = sphi 0, %s289
      %s293 = sphi 0, %s292
      %s309 = sphi 0, %s293
      %s315 = sphi 0, %s317
      %s318 = sphi 0, %s315
      %s319 = sphi 0, %s318
      %s335 = sphi 0, %s319
    $region4: #{tpu_custom_call.1} parent=1 // loop_header_branch
      %34 = sbr.rel (%p32) target = $region8
    $region5: #{tpu_custom_call.1} parent=1 // loop_body
      %s36 = ssub.s32 %s31, 1
      %s37 = ssub.s32 %s31, 2
      %s44 = sadd.s32 1, %s39
      %p45 = scmp.ge.s32.totalorder %s44, 2
      %s46 = scalar_select %p45, 0, %s44
      %s47 = sadd.s32 1, %s38
      %s48 = scalar_select %p45, %s47, %s38
      %p49 = scmp.ge.s32.totalorder %s48, 2
      %s50 = scalar_select %p49, 0, %s48
      %s51 = ssub.s32 %s38, %s50
      %p52 = scmp.eq.s32.totalorder %s51, 0
      %s54 = sadd.s32 %s53, 1
      %s55 = scalar_select %p52, %s53, %s54
      %p58 = pneg %p52
      %p59 = scmp.eq.s32.totalorder %s31, 3
      %p60 = por %p58, %p59
      %p61 = scmp.ne.s32.totalorder %s53, %s56
      %p62 = scmp.eq.s32.totalorder %s31, 0
      %p63 = por %p61, %p62
      %p64 = scmp.ne.s32.totalorder %s53, %s56
      %p65 = scmp.eq.s32.totalorder %s36, 3
      %p66 = por %p64, %p65
      %p67 = scmp.ne.s32.totalorder %s56, %s57
      %p68 = scmp.eq.s32.totalorder %s36, 0
      %p69 = por %p67, %p68
      %p70 = scmp.ne.s32.totalorder %s56, %s57
      %p71 = scmp.eq.s32.totalorder %s37, 3
      %p72 = por %p70, %p71
      %p74 = scmp.ne.s32.totalorder %s57, %s73
      %p75 = scmp.eq.s32.totalorder %s37, 0
      %p76 = por %p74, %p75
      %s77 = ssub.s32 %s39, %s46
      %s78 = ssub.s32 %s38, %s50
      %s79 = sor.u32 %s77, %s78
      %p80 = scmp.eq.s32.totalorder %s79, 0
      %s82 = sadd.s32 %s81, 1
      %s83 = scalar_select %p80, %s81, %s82
      %p86 = pneg %p80
      %p87 = scmp.eq.s32.totalorder %s31, 3
      %p88 = por %p86, %p87
      %p89 = scmp.ne.s32.totalorder %s81, %s84
      %p90 = scmp.eq.s32.totalorder %s31, 0
      %p91 = por %p89, %p90
      %p92 = scmp.ne.s32.totalorder %s81, %s84
      %p93 = scmp.eq.s32.totalorder %s36, 3
      %p94 = por %p92, %p93
      %p95 = scmp.ne.s32.totalorder %s84, %s85
      %p96 = scmp.eq.s32.totalorder %s36, 0
      %p97 = por %p95, %p96
      %p98 = scmp.ne.s32.totalorder %s84, %s85
      %p99 = scmp.eq.s32.totalorder %s37, 3
      %p100 = por %p98, %p99
      %p102 = scmp.ne.s32.totalorder %s85, %s101
      %p103 = scmp.eq.s32.totalorder %s37, 0
      %p104 = por %p102, %p103
      %s105 = ssub.s32 %s39, %s46
      %p106 = scmp.eq.s32.totalorder %s105, 0
      %s108 = sadd.s32 %s107, 1
      %s109 = scalar_select %p106, %s107, %s108
      %p112 = pneg %p106
      %p113 = scmp.eq.s32.totalorder %s31, 3
      %p114 = por %p112, %p113
      %p115 = scmp.ne.s32.totalorder %s107, %s110
      %p116 = scmp.eq.s32.totalorder %s31, 0
      %p117 = por %p115, %p116
      %p118 = scmp.ne.s32.totalorder %s107, %s110
      %p119 = scmp.eq.s32.totalorder %s36, 3
      %p120 = por %p118, %p119
      %p121 = scmp.ne.s32.totalorder %s110, %s111
      %p122 = scmp.eq.s32.totalorder %s36, 0
      %p123 = por %p121, %p122
      %p124 = scmp.ne.s32.totalorder %s110, %s111
      %p125 = scmp.eq.s32.totalorder %s37, 3
      %p126 = por %p124, %p125
      %p128 = scmp.ne.s32.totalorder %s111, %s127
      %p129 = scmp.eq.s32.totalorder %s37, 0
      %p130 = por %p128, %p129
      %s131 = ssub.s32 %s39, %s46
      %p132 = scmp.eq.s32.totalorder %s131, 0
      %s134 = sadd.s32 %s133, 1
      %s135 = scalar_select %p132, %s133, %s134
      %p138 = pneg %p132
      %p139 = scmp.eq.s32.totalorder %s31, 3
      %p140 = por %p138, %p139
      %p141 = scmp.ne.s32.totalorder %s133, %s136
      %p142 = scmp.eq.s32.totalorder %s31, 0
      %p143 = por %p141, %p142
      %p144 = scmp.ne.s32.totalorder %s133, %s136
      %p145 = scmp.eq.s32.totalorder %s36, 3
      %p146 = por %p144, %p145
      %p147 = scmp.ne.s32.totalorder %s136, %s137
      %p148 = scmp.eq.s32.totalorder %s36, 0
      %p149 = por %p147, %p148
      %p150 = scmp.ne.s32.totalorder %s136, %s137
      %p151 = scmp.eq.s32.totalorder %s37, 3
      %p152 = por %p150, %p151
      %p154 = scmp.ne.s32.totalorder %s137, %s153
      %p155 = scmp.eq.s32.totalorder %s37, 0
      %p156 = por %p154, %p155
      %s157 = ssub.s32 %s39, %s46
      %p158 = scmp.eq.s32.totalorder %s157, 0
      %s160 = sadd.s32 %s159, 1
      %s161 = scalar_select %p158, %s159, %s160
      %p164 = pneg %p158
      %p165 = scmp.eq.s32.totalorder %s31, 3
      %p166 = por %p164, %p165
      %p167 = scmp.ne.s32.totalorder %s159, %s162
      %p168 = scmp.eq.s32.totalorder %s31, 0
      %p169 = por %p167, %p168
      %p170 = scmp.ne.s32.totalorder %s159, %s162
      %p171 = scmp.eq.s32.totalorder %s36, 3
      %p172 = por %p170, %p171
      %p173 = scmp.ne.s32.totalorder %s162, %s163
      %p174 = scmp.eq.s32.totalorder %s36, 0
      %p175 = por %p173, %p174
      %p176 = scmp.ne.s32.totalorder %s162, %s163
      %p177 = scmp.eq.s32.totalorder %s37, 3
      %p178 = por %p176, %p177
      %p180 = scmp.ne.s32.totalorder %s163, %s179
      %p181 = scmp.eq.s32.totalorder %s37, 0
      %p182 = por %p180, %p181
      %s183 = ssub.s32 %s39, %s46
      %p184 = scmp.eq.s32.totalorder %s183, 0
      %s186 = sadd.s32 %s185, 1
      %s187 = scalar_select %p184, %s185, %s186
      %p190 = pneg %p184
      %p191 = scmp.eq.s32.totalorder %s31, 3
      %p192 = por %p190, %p191
      %p193 = scmp.ne.s32.totalorder %s185, %s188
      %p194 = scmp.eq.s32.totalorder %s31, 0
      %p195 = por %p193, %p194
      %p196 = scmp.ne.s32.totalorder %s185, %s188
      %p197 = scmp.eq.s32.totalorder %s36, 3
      %p198 = por %p196, %p197
      %p199 = scmp.ne.s32.totalorder %s188, %s189
      %p200 = scmp.eq.s32.totalorder %s36, 0
      %p201 = por %p199, %p200
      %p202 = scmp.ne.s32.totalorder %s188, %s189
      %p203 = scmp.eq.s32.totalorder %s37, 3
      %p204 = por %p202, %p203
      %p206 = scmp.ne.s32.totalorder %s189, %s205
      %p207 = scmp.eq.s32.totalorder %s37, 0
      %p208 = por %p206, %p207
      %s209 = ssub.s32 %s39, %s46
      %p210 = scmp.eq.s32.totalorder %s209, 0
      %s212 = sadd.s32 %s211, 1
      %s213 = scalar_select %p210, %s211, %s212
      %p216 = pneg %p210
      %p217 = scmp.eq.s32.totalorder %s31, 3
      %p218 = por %p216, %p217
      %p219 = scmp.ne.s32.totalorder %s211, %s214
      %p220 = scmp.eq.s32.totalorder %s31, 0
      %p221 = por %p219, %p220
      %p222 = scmp.ne.s32.totalorder %s211, %s214
      %p223 = scmp.eq.s32.totalorder %s36, 3
      %p224 = por %p222, %p223
      %p225 = scmp.ne.s32.totalorder %s214, %s215
      %p226 = scmp.eq.s32.totalorder %s36, 0
      %p227 = por %p225, %p226
      %p228 = scmp.ne.s32.totalorder %s214, %s215
      %p229 = scmp.eq.s32.totalorder %s37, 3
      %p230 = por %p228, %p229
      %p232 = scmp.ne.s32.totalorder %s215, %s231
      %p233 = scmp.eq.s32.totalorder %s37, 0
      %p234 = por %p232, %p233
      %s235 = ssub.s32 %s39, %s46
      %p236 = scmp.eq.s32.totalorder %s235, 0
      %s238 = sadd.s32 %s237, 1
      %s239 = scalar_select %p236, %s237, %s238
      %p242 = pneg %p236
      %p243 = scmp.eq.s32.totalorder %s31, 3
      %p244 = por %p242, %p243
      %p245 = scmp.ne.s32.totalorder %s237, %s240
      %p246 = scmp.eq.s32.totalorder %s31, 0
      %p247 = por %p245, %p246
      %p248 = scmp.ne.s32.totalorder %s237, %s240
      %p249 = scmp.eq.s32.totalorder %s36, 3
      %p250 = por %p248, %p249
      %p251 = scmp.ne.s32.totalorder %s240, %s241
      %p252 = scmp.eq.s32.totalorder %s36, 0
      %p253 = por %p251, %p252
      %p254 = scmp.ne.s32.totalorder %s240, %s241
      %p255 = scmp.eq.s32.totalorder %s37, 3
      %p256 = por %p254, %p255
      %p258 = scmp.ne.s32.totalorder %s241, %s257
      %p259 = scmp.eq.s32.totalorder %s37, 0
      %p260 = por %p258, %p259
      %s261 = ssub.s32 %s39, %s46
      %p262 = scmp.eq.s32.totalorder %s261, 0
      %s264 = sadd.s32 %s263, 1
      %s265 = scalar_select %p262, %s263, %s264
      %p268 = pneg %p262
      %p269 = scmp.eq.s32.totalorder %s31, 3
      %p270 = por %p268, %p269
      %p271 = scmp.ne.s32.totalorder %s263, %s266
      %p272 = scmp.eq.s32.totalorder %s31, 0
      %p273 = por %p271, %p272
      %p274 = scmp.ne.s32.totalorder %s263, %s266
      %p275 = scmp.eq.s32.totalorder %s36, 3
      %p276 = por %p274, %p275
      %p277 = scmp.ne.s32.totalorder %s266, %s267
      %p278 = scmp.eq.s32.totalorder %s36, 0
      %p279 = por %p277, %p278
      %p280 = scmp.ne.s32.totalorder %s266, %s267
      %p281 = scmp.eq.s32.totalorder %s37, 3
      %p282 = por %p280, %p281
      %p284 = scmp.ne.s32.totalorder %s267, %s283
      %p285 = scmp.eq.s32.totalorder %s37, 0
      %p286 = por %p284, %p285
      %s287 = ssub.s32 %s39, %s46
      %p288 = scmp.eq.s32.totalorder %s287, 0
      %s290 = sadd.s32 %s289, 1
      %s291 = scalar_select %p288, %s289, %s290
      %p294 = pneg %p288
      %p295 = scmp.eq.s32.totalorder %s31, 3
      %p296 = por %p294, %p295
      %p297 = scmp.ne.s32.totalorder %s289, %s292
      %p298 = scmp.eq.s32.totalorder %s31, 0
      %p299 = por %p297, %p298
      %p300 = scmp.ne.s32.totalorder %s289, %s292
      %p301 = scmp.eq.s32.totalorder %s36, 3
      %p302 = por %p300, %p301
      %p303 = scmp.ne.s32.totalorder %s292, %s293
      %p304 = scmp.eq.s32.totalorder %s36, 0
      %p305 = por %p303, %p304
      %p306 = scmp.ne.s32.totalorder %s292, %s293
      %p307 = scmp.eq.s32.totalorder %s37, 3
      %p308 = por %p306, %p307
      %p310 = scmp.ne.s32.totalorder %s293, %s309
      %p311 = scmp.eq.s32.totalorder %s37, 0
      %p312 = por %p310, %p311
      %s313 = ssub.s32 %s38, %s50
      %p314 = scmp.eq.s32.totalorder %s313, 0
      %s316 = sadd.s32 %s315, 1
      %s317 = scalar_select %p314, %s315, %s316
      %p320 = pneg %p314
      %p321 = scmp.eq.s32.totalorder %s31, 3
      %p322 = por %p320, %p321
      %p323 = scmp.ne.s32.totalorder %s315, %s318
      %p324 = scmp.eq.s32.totalorder %s31, 0
      %p325 = por %p323, %p324
      %p326 = scmp.ne.s32.totalorder %s315, %s318
      %p327 = scmp.eq.s32.totalorder %s36, 3
      %p328 = por %p326, %p327
      %p329 = scmp.ne.s32.totalorder %s318, %s319
      %p330 = scmp.eq.s32.totalorder %s36, 0
      %p331 = por %p329, %p330
      %p332 = scmp.ne.s32.totalorder %s318, %s319
      %p333 = scmp.eq.s32.totalorder %s37, 3
      %p334 = por %p332, %p333
      %p336 = scmp.ne.s32.totalorder %s319, %s335
      %p337 = scmp.eq.s32.totalorder %s37, 0
      %p338 = por %p336, %p337
      %p339 = scmp.le.s32.totalorder 1, %s31
      %p340 = scmp.lt.s32.totalorder %s31, 5
      %p341 = pnand %p339, %p340
      %p342 = pneg %p341
      // Predicated region
      $region9: #{tpu_custom_call.1} parent=5 // pred_check
        _
      $region10: #{tpu_custom_call.1} parent=5 // pred_check_branch
        %344 = sbr.rel (%p341) target = $region12
      $region11: #{tpu_custom_call.1} parent=5 // pred_region
        %s345 = ssub.s32 %s31, 1
      $region12: #{tpu_custom_call.1} parent=5 // pred_fallthru
        _
      %p346 = scmp.lt.s32.totalorder %s31, 4
      // Predicated region
      $region13: #{tpu_custom_call.1} parent=5 // pred_check
        %p347 = pneg %p346
      $region14: #{tpu_custom_call.1} parent=5 // pred_check_branch
        %349 = sbr.rel (%p347) target = $region16
      $region15: #{tpu_custom_call.1} parent=5 // pred_region
        // Predicated region
        $region17: #{tpu_custom_call.1} parent=15 // pred_check
          %p350 = pneg %p63
        $region18: #{tpu_custom_call.1} parent=15 // pred_check_branch
          %352 = sbr.rel (%p350) target = $region20
        $region19: #{tpu_custom_call.1} parent=15 // pred_region
          %s353 = sand.u32 %s53, 1
          %s354 = scalar_lea.sflag [#allocation5], %s353
          %s355 = sand.u32 %s53, 1
          %s356 = smul.addr %s355, 512
          %s357 = scalar_lea.vmem [#allocation4], %s356
          %s359 = ssub.s32 8192, 8192
          %360 = vsyncadd %s354, %s359
          %s361 = smul.addr %s38, 64
          %s362 = smul.addr %s361, 128
          %s363 = scalar_lea.hbm %s0, %s362
          %s364 = sshll.u32 %s357, 4
          %s365 = int_to_ptr.vmem [resolvable:$true] %s364
          %370 = dma.hbm_to_vmem [thread:$0]  %s363, 8192, %s365, %s354, 256, 256, 16
        $region20: #{tpu_custom_call.1} parent=15 // pred_fallthru
          _
        // Predicated region
        $region21: #{tpu_custom_call.1} parent=15 // pred_check
          %p371 = pneg %p91
        $region22: #{tpu_custom_call.1} parent=15 // pred_check_branch
          %373 = sbr.rel (%p371) target = $region24
        $region23: #{tpu_custom_call.1} parent=15 // pred_region
          %s374 = sand.u32 %s31, 1
          %s375 = scalar_lea.sflag [#allocation8], %s374
          %s376 = sand.u32 %s81, 1
          %s377 = smul.addr %s376, 12
          %s378 = scalar_lea.vmem [#allocation7], %s377
          %s380 = ssub.s32 192, 192
          %381 = vsyncadd %s375, %s380
          %s382 = smul.addr %s38, 12
          %s383 = smul.addr %s39, 24
          %s384 = sadd.s32 %s382, %s383
          %s385 = smul.addr %s384, 16
          %s386 = scalar_lea.hbm %s1, %s385
          %s388 = sshll.u32 %s378, 4
          %s389 = int_to_ptr.vmem [resolvable:$true] %s388
          %391 = dma.hbm_to_vmem [thread:$0]  %s386, 192, %s389, %s375
        $region24: #{tpu_custom_call.1} parent=15 // pred_fallthru
          _
        // Predicated region
        $region25: #{tpu_custom_call.1} parent=15 // pred_check
          %p392 = pneg %p117
        $region26: #{tpu_custom_call.1} parent=15 // pred_check_branch
          %394 = sbr.rel (%p392) target = $region28
        $region27: #{tpu_custom_call.1} parent=15 // pred_region
          %s395 = sand.u32 %s31, 1
          %s396 = scalar_lea.sflag [#allocation8], %s395
          %s397 = sand.u32 %s107, 1
          %s398 = smul.addr %s397, 768
          %s399 = scalar_lea.vmem [#allocation9], %s398
          %s401 = ssub.s32 12288, 12288
          %402 = vsyncadd %s396, %s401
          %s403 = smul.addr %s39, 192
          %s404 = smul.addr %s403, 64
          %s405 = scalar_lea.hbm %s2, %s404
          %s406 = sshll.u32 %s399, 4
          %s407 = int_to_ptr.vmem [resolvable:$true] %s406
          %412 = dma.hbm_to_vmem [thread:$0]  %s405, 12288, %s407, %s396, 384, 384, 24
        $region28: #{tpu_custom_call.1} parent=15 // pred_fallthru
          _
        // Predicated region
        $region29: #{tpu_custom_call.1} parent=15 // pred_check
          %p413 = pneg %p143
        $region30: #{tpu_custom_call.1} parent=15 // pred_check_branch
          %415 = sbr.rel (%p413) target = $region32
        $region31: #{tpu_custom_call.1} parent=15 // pred_region
          %s416 = sand.u32 %s31, 1
          %s417 = scalar_lea.sflag [#allocation11], %s416
          %s418 = sand.u32 %s133, 1
          %s419 = smul.addr %s418, 6
          %s420 = scalar_lea.vmem [#allocation10], %s419
          %s422 = ssub.s32 96, 96
          %423 = vsyncadd %s417, %s422
          %s424 = smul.addr %s39, 6
          %s425 = smul.addr %s424, 16
          %s426 = scalar_lea.hbm %s3, %s425
          %s428 = sshll.u32 %s420, 4
          %s429 = int_to_ptr.vmem [resolvable:$true] %s428
          %431 = dma.hbm_to_vmem [thread:$0]  %s426, 96, %s429, %s417
        $region32: #{tpu_custom_call.1} parent=15 // pred_fallthru
          _
        // Predicated region
        $region33: #{tpu_custom_call.1} parent=15 // pred_check
          %p432 = pneg %p169
        $region34: #{tpu_custom_call.1} parent=15 // pred_check_branch
          %434 = sbr.rel (%p432) target = $region36
        $region35: #{tpu_custom_call.1} parent=15 // pred_region
          %s435 = sand.u32 %s31, 1
          %s436 = scalar_lea.sflag [#allocation11], %s435
          %s437 = sand.u32 %s159, 1
          %s438 = smul.addr %s437, 256
          %s439 = scalar_lea.vmem [#allocation12], %s438
          %s441 = ssub.s32 4096, 4096
          %442 = vsyncadd %s436, %s441
          %s443 = smul.addr %s39, 64
          %s444 = smul.addr %s443, 64
          %s445 = scalar_lea.hbm %s4, %s444
          %s446 = sshll.u32 %s439, 4
          %s447 = int_to_ptr.vmem [resolvable:$true] %s446
          %452 = dma.hbm_to_vmem [thread:$0]  %s445, 4096, %s447, %s436, 128, 128, 8
        $region36: #{tpu_custom_call.1} parent=15 // pred_fallthru
          _
        // Predicated region
        $region37: #{tpu_custom_call.1} parent=15 // pred_check
          %p453 = pneg %p195
        $region38: #{tpu_custom_call.1} parent=15 // pred_check_branch
          %455 = sbr.rel (%p453) target = $region40
        $region39: #{tpu_custom_call.1} parent=15 // pred_region
          %p456 = scmp.lt.s32.totalorder %s39, 1
          %s457 = scalar_select %p456, %s39, 1
          %s458 = smul.addr %s457, 2
          %s459 = scalar_lea.vmem %s5, %s458
        $region40: #{tpu_custom_call.1} parent=15 // pred_fallthru
          _
        // Predicated region
        $region41: #{tpu_custom_call.1} parent=15 // pred_check
          %p460 = pneg %p221
        $region42: #{tpu_custom_call.1} parent=15 // pred_check_branch
          %462 = sbr.rel (%p460) target = $region44
        $region43: #{tpu_custom_call.1} parent=15 // pred_region
          %s463 = sand.u32 %s31, 1
          %s464 = scalar_lea.sflag [#allocation14], %s463
          %s465 = sand.u32 %s211, 1
          %s466 = smul.addr %s465, 1024
          %s467 = scalar_lea.vmem [#allocation13], %s466
          %s469 = ssub.s32 16384, 16384
          %470 = vsyncadd %s464, %s469
          %s471 = smul.addr %s39, 256
          %s472 = smul.addr %s471, 64
          %s473 = scalar_lea.hbm %s6, %s472
          %s474 = sshll.u32 %s467, 4
          %s475 = int_to_ptr.vmem [resolvable:$true] %s474
          %480 = dma.hbm_to_vmem [thread:$0]  %s473, 16384, %s475, %s464, 512, 512, 32
        $region44: #{tpu_custom_call.1} parent=15 // pred_fallthru
          _
        // Predicated region
        $region45: #{tpu_custom_call.1} parent=15 // pred_check
          %p481 = pneg %p247
        $region46: #{tpu_custom_call.1} parent=15 // pred_check_branch
          %483 = sbr.rel (%p481) target = $region48
        $region47: #{tpu_custom_call.1} parent=15 // pred_region
          %p484 = scmp.lt.s32.totalorder %s39, 1
          %s485 = scalar_select %p484, %s39, 1
          %s486 = smul.addr %s485, 8
          %s487 = scalar_lea.vmem %s7, %s486
        $region48: #{tpu_custom_call.1} parent=15 // pred_fallthru
          _
        // Predicated region
        $region49: #{tpu_custom_call.1} parent=15 // pred_check
          %p488 = pneg %p273
        $region50: #{tpu_custom_call.1} parent=15 // pred_check_branch
          %490 = sbr.rel (%p488) target = $region52
        $region51: #{tpu_custom_call.1} parent=15 // pred_region
          %s491 = sand.u32 %s31, 1
          %s492 = scalar_lea.sflag [#allocation14], %s491
          %s493 = sand.u32 %s263, 1
          %s494 = smul.addr %s493, 1024
          %s495 = scalar_lea.vmem [#allocation15], %s494
          %s497 = ssub.s32 16384, 16384
          %498 = vsyncadd %s492, %s497
          %s499 = smul.addr %s39, 256
          %s500 = smul.addr %s499, 64
          %s501 = scalar_lea.hbm %s8, %s500
          %s502 = sshll.u32 %s495, 4
          %s503 = int_to_ptr.vmem [resolvable:$true] %s502
          %508 = dma.hbm_to_vmem [thread:$0]  %s501, 16384, %s503, %s492, 128, 128, 8
        $region52: #{tpu_custom_call.1} parent=15 // pred_fallthru
          _
        // Predicated region
        $region53: #{tpu_custom_call.1} parent=15 // pred_check
          %p509 = pneg %p299
        $region54: #{tpu_custom_call.1} parent=15 // pred_check_branch
          %511 = sbr.rel (%p509) target = $region56
        $region55: #{tpu_custom_call.1} parent=15 // pred_region
          %p512 = scmp.lt.s32.totalorder %s39, 1
          %s513 = scalar_select %p512, %s39, 1
          %s514 = smul.addr %s513, 2
          %s515 = scalar_lea.vmem %s9, %s514
        $region56: #{tpu_custom_call.1} parent=15 // pred_fallthru
          _
      $region16: #{tpu_custom_call.1} parent=5 // pred_fallthru
        _
      %p516 = scmp.le.s32.totalorder 1, %s31
      %p517 = scmp.lt.s32.totalorder %s31, 5
      %p518 = pnand %p516, %p517
      %p519 = pneg %p518
      // Predicated region
      $region57: #{tpu_custom_call.1} parent=5 // pred_check
        _
      $region58: #{tpu_custom_call.1} parent=5 // pred_check_branch
        %521 = sbr.rel (%p518) target = $region60
      $region59: #{tpu_custom_call.1} parent=5 // pred_region
        %s522 = ssub.s32 %s31, 1
        %s523 = sand.u32 %s56, 1
        %s524 = scalar_lea.sflag [#allocation5], %s523
        %s525 = sand.u32 %s56, 1
        %s526 = smul.addr %s525, 512
        %s527 = scalar_lea.vmem [#allocation4], %s526
        // Predicated region
        $region61: #{tpu_custom_call.1} parent=59 // pred_check
          %p528 = pneg %p69
        $region62: #{tpu_custom_call.1} parent=59 // pred_check_branch
          %530 = sbr.rel (%p528) target = $region64
        $region63: #{tpu_custom_call.1} parent=59 // pred_region
          %531 = dma.done %s524, 8192
        $region64: #{tpu_custom_call.1} parent=59 // pred_fallthru
          _
        %s532 = sand.u32 %s36, 1
        %s533 = scalar_lea.sflag [#allocation8], %s532
        %s534 = sand.u32 %s84, 1
        %s535 = smul.addr %s534, 12
        %s536 = scalar_lea.vmem [#allocation7], %s535
        // Predicated region
        $region65: #{tpu_custom_call.1} parent=59 // pred_check
          %p537 = pneg %p97
        $region66: #{tpu_custom_call.1} parent=59 // pred_check_branch
          %539 = sbr.rel (%p537) target = $region68
        $region67: #{tpu_custom_call.1} parent=59 // pred_region
          %540 = dma.done %s533, 192
        $region68: #{tpu_custom_call.1} parent=59 // pred_fallthru
          _
        %s541 = sand.u32 %s36, 1
        %s542 = scalar_lea.sflag [#allocation8], %s541
        %s543 = sand.u32 %s110, 1
        %s544 = smul.addr %s543, 768
        %s545 = scalar_lea.vmem [#allocation9], %s544
        // Predicated region
        $region69: #{tpu_custom_call.1} parent=59 // pred_check
          %p546 = pneg %p123
        $region70: #{tpu_custom_call.1} parent=59 // pred_check_branch
          %548 = sbr.rel (%p546) target = $region72
        $region71: #{tpu_custom_call.1} parent=59 // pred_region
          %549 = dma.done %s542, 12288
        $region72: #{tpu_custom_call.1} parent=59 // pred_fallthru
          _
        %s550 = sand.u32 %s36, 1
        %s551 = scalar_lea.sflag [#allocation11], %s550
        %s552 = sand.u32 %s136, 1
        %s553 = smul.addr %s552, 6
        %s554 = scalar_lea.vmem [#allocation10], %s553
        // Predicated region
        $region73: #{tpu_custom_call.1} parent=59 // pred_check
          %p555 = pneg %p149
        $region74: #{tpu_custom_call.1} parent=59 // pred_check_branch
          %557 = sbr.rel (%p555) target = $region76
        $region75: #{tpu_custom_call.1} parent=59 // pred_region
          %558 = dma.done %s551, 96
        $region76: #{tpu_custom_call.1} parent=59 // pred_fallthru
          _
        %s559 = sand.u32 %s36, 1
        %s560 = scalar_lea.sflag [#allocation11], %s559
        %s561 = sand.u32 %s162, 1
        %s562 = smul.addr %s561, 256
        %s563 = scalar_lea.vmem [#allocation12], %s562
        // Predicated region
        $region77: #{tpu_custom_call.1} parent=59 // pred_check
          %p564 = pneg %p175
        $region78: #{tpu_custom_call.1} parent=59 // pred_check_branch
          %566 = sbr.rel (%p564) target = $region80
        $region79: #{tpu_custom_call.1} parent=59 // pred_region
          %567 = dma.done %s560, 4096
        $region80: #{tpu_custom_call.1} parent=59 // pred_fallthru
          _
        %s568 = sand.u32 %s36, 1
        %s569 = scalar_lea.sflag [#allocation14], %s568
        %s570 = sand.u32 %s214, 1
        %s571 = smul.addr %s570, 1024
        %s572 = scalar_lea.vmem [#allocation13], %s571
        // Predicated region
        $region81: #{tpu_custom_call.1} parent=59 // pred_check
          %p573 = pneg %p227
        $region82: #{tpu_custom_call.1} parent=59 // pred_check_branch
          %575 = sbr.rel (%p573) target = $region84
        $region83: #{tpu_custom_call.1} parent=59 // pred_region
          %576 = dma.done %s569, 16384
        $region84: #{tpu_custom_call.1} parent=59 // pred_fallthru
          _
        %s577 = sand.u32 %s36, 1
        %s578 = scalar_lea.sflag [#allocation14], %s577
        %s579 = sand.u32 %s266, 1
        %s580 = smul.addr %s579, 1024
        %s581 = scalar_lea.vmem [#allocation15], %s580
        // Predicated region
        $region85: #{tpu_custom_call.1} parent=59 // pred_check
          %p582 = pneg %p279
        $region86: #{tpu_custom_call.1} parent=59 // pred_check_branch
          %584 = sbr.rel (%p582) target = $region88
        $region87: #{tpu_custom_call.1} parent=59 // pred_region
          %585 = dma.done %s578, 16384
        $region88: #{tpu_custom_call.1} parent=59 // pred_fallthru
          _
        %s586 = sand.u32 %s56, 1
        %s587 = scalar_lea.sflag [#allocation5], %s586
        %s588 = sand.u32 %s56, 1
        %s589 = smul.addr %s588, 512
        %s590 = scalar_lea.vmem [#allocation4], %s589
        %p591 = pneg %p69
        %p592 = pneg %p66
        %s593 = sand.u32 %s36, 1
        %s594 = scalar_lea.sflag [#allocation8], %s593
        %s595 = sand.u32 %s84, 1
        %s596 = smul.addr %s595, 12
        %s597 = scalar_lea.vmem [#allocation7], %s596
        %p598 = pneg %p97
        %p599 = pneg %p94
        %s600 = sand.u32 %s36, 1
        %s601 = scalar_lea.sflag [#allocation8], %s600
        %s602 = sand.u32 %s110, 1
        %s603 = smul.addr %s602, 768
        %s604 = scalar_lea.vmem [#allocation9], %s603
        %p605 = pneg %p123
        %p606 = pneg %p120
        %s607 = sand.u32 %s36, 1
        %s608 = scalar_lea.sflag [#allocation11], %s607
        %s609 = sand.u32 %s136, 1
        %s610 = smul.addr %s609, 6
        %s611 = scalar_lea.vmem [#allocation10], %s610
        %p612 = pneg %p149
        %p613 = pneg %p146
        %s614 = sand.u32 %s36, 1
        %s615 = scalar_lea.sflag [#allocation11], %s614
        %s616 = sand.u32 %s162, 1
        %s617 = smul.addr %s616, 256
        %s618 = scalar_lea.vmem [#allocation12], %s617
        %p619 = pneg %p175
        %p620 = pneg %p172
        %p621 = scmp.lt.s32.totalorder %s41, 1
        %s622 = scalar_select %p621, %s41, 1
        %s623 = smul.addr %s622, 2
        %s624 = scalar_lea.vmem %s5, %s623
        %p625 = pneg %p201
        %p626 = pneg %p198
        %s627 = sand.u32 %s36, 1
        %s628 = scalar_lea.sflag [#allocation14], %s627
        %s629 = sand.u32 %s214, 1
        %s630 = smul.addr %s629, 1024
        %s631 = scalar_lea.vmem [#allocation13], %s630
        %p632 = pneg %p227
        %p633 = pneg %p224
        %p634 = scmp.lt.s32.totalorder %s41, 1
        %s635 = scalar_select %p634, %s41, 1
        %s636 = smul.addr %s635, 8
        %s637 = scalar_lea.vmem %s7, %s636
        %p638 = pneg %p253
        %p639 = pneg %p250
        %s640 = sand.u32 %s36, 1
        %s641 = scalar_lea.sflag [#allocation14], %s640
        %s642 = sand.u32 %s266, 1
        %s643 = smul.addr %s642, 1024
        %s644 = scalar_lea.vmem [#allocation15], %s643
        %p645 = pneg %p279
        %p646 = pneg %p276
        %p647 = scmp.lt.s32.totalorder %s41, 1
        %s648 = scalar_select %p647, %s41, 1
        %s649 = smul.addr %s648, 2
        %s650 = scalar_lea.vmem %s9, %s649
        %p651 = pneg %p305
        %p652 = pneg %p302
        %p653 = pneg %p331
        %p654 = pneg %p328
        %s655 = sand.u32 %s318, 1
        %s656 = scalar_lea.sflag [#allocation6], %s655
        %s657 = sand.u32 %s318, 1
        %s658 = smul.addr %s657, 512
        %s659 = scalar_lea.vmem [#allocation16], %s658
        %p660 = scmp.lt.s32.totalorder %s41, 1
        %s661 = scalar_select %p660, %s41, 1
        %s662 = smul.addr %s661, 2
        %s663 = scalar_lea.vmem %s5, %s662
        %p664 = scmp.lt.s32.totalorder %s41, 1
        %s665 = scalar_select %p664, %s41, 1
        %s666 = smul.addr %s665, 8
        %s667 = scalar_lea.vmem %s7, %s666
        %p668 = scmp.lt.s32.totalorder %s41, 1
        %s669 = scalar_select %p668, %s41, 1
        %s670 = smul.addr %s669, 2
        %s671 = scalar_lea.vmem %s9, %s670
        %p677 = scmp.eq.s32.totalorder %s41, 0
        // Predicated region
        $region89: #{tpu_custom_call.1} parent=59 // pred_check
          %p678 = pneg %p677
        $region90: #{tpu_custom_call.1} parent=59 // pred_check_branch
          %680 = sbr.rel (%p678) target = $region92
        $region91: #{tpu_custom_call.1} parent=59 // pred_region
          %v681 = vld [vmem:[%s527] sm:$0xff]
          %v682 = vld [vmem:[%s527 + $0x8] sm:$0xff]
          %v683 = vld [vmem:[%s527 + $0x10] sm:$0xff]
          %v684 = vld [vmem:[%s527 + $0x18] sm:$0xff]
          %v685 = vld [vmem:[%s527 + $0x20] sm:$0xff]
          %v686 = vld [vmem:[%s527 + $0x28] sm:$0xff]
          %v687 = vld [vmem:[%s527 + $0x30] sm:$0xff]
          %v688 = vld [vmem:[%s527 + $0x38] sm:$0xff]
          %v689 = vld [vmem:[%s527 + $0x40] sm:$0xff]
          %v690 = vld [vmem:[%s527 + $0x48] sm:$0xff]
          %v691 = vld [vmem:[%s527 + $0x50] sm:$0xff]
          %v692 = vld [vmem:[%s527 + $0x58] sm:$0xff]
          %v693 = vld [vmem:[%s527 + $0x60] sm:$0xff]
          %v694 = vld [vmem:[%s527 + $0x68] sm:$0xff]
          %v695 = vld [vmem:[%s527 + $0x70] sm:$0xff]
          %v696 = vld [vmem:[%s527 + $0x78] sm:$0xff]
          %v697 = vld [vmem:[%s527 + $0x80] sm:$0xff]
          %v698 = vld [vmem:[%s527 + $0x88] sm:$0xff]
          %v699 = vld [vmem:[%s527 + $0x90] sm:$0xff]
          %v700 = vld [vmem:[%s527 + $0x98] sm:$0xff]
          %v701 = vld [vmem:[%s527 + $0xa0] sm:$0xff]
          %v702 = vld [vmem:[%s527 + $0xa8] sm:$0xff]
          %v703 = vld [vmem:[%s527 + $0xb0] sm:$0xff]
          %v704 = vld [vmem:[%s527 + $0xb8] sm:$0xff]
          %v705 = vld [vmem:[%s527 + $0xc0] sm:$0xff]
          %v706 = vld [vmem:[%s527 + $0xc8] sm:$0xff]
          %v707 = vld [vmem:[%s527 + $0xd0] sm:$0xff]
          %v708 = vld [vmem:[%s527 + $0xd8] sm:$0xff]
          %v709 = vld [vmem:[%s527 + $0xe0] sm:$0xff]
          %v710 = vld [vmem:[%s527 + $0xe8] sm:$0xff]
          %v711 = vld [vmem:[%s527 + $0xf0] sm:$0xff]
          %v712 = vld [vmem:[%s527 + $0xf8] sm:$0xff]
          %v713 = vld [vmem:[%s527 + $0x100] sm:$0xff]
          %v714 = vld [vmem:[%s527 + $0x108] sm:$0xff]
          %v715 = vld [vmem:[%s527 + $0x110] sm:$0xff]
          %v716 = vld [vmem:[%s527 + $0x118] sm:$0xff]
          %v717 = vld [vmem:[%s527 + $0x120] sm:$0xff]
          %v718 = vld [vmem:[%s527 + $0x128] sm:$0xff]
          %v719 = vld [vmem:[%s527 + $0x130] sm:$0xff]
          %v720 = vld [vmem:[%s527 + $0x138] sm:$0xff]
          %v721 = vld [vmem:[%s527 + $0x140] sm:$0xff]
          %v722 = vld [vmem:[%s527 + $0x148] sm:$0xff]
          %v723 = vld [vmem:[%s527 + $0x150] sm:$0xff]
          %v724 = vld [vmem:[%s527 + $0x158] sm:$0xff]
          %v725 = vld [vmem:[%s527 + $0x160] sm:$0xff]
          %v726 = vld [vmem:[%s527 + $0x168] sm:$0xff]
          %v727 = vld [vmem:[%s527 + $0x170] sm:$0xff]
          %v728 = vld [vmem:[%s527 + $0x178] sm:$0xff]
          %v729 = vld [vmem:[%s527 + $0x180] sm:$0xff]
          %v730 = vld [vmem:[%s527 + $0x188] sm:$0xff]
          %v731 = vld [vmem:[%s527 + $0x190] sm:$0xff]
          %v732 = vld [vmem:[%s527 + $0x198] sm:$0xff]
          %v733 = vld [vmem:[%s527 + $0x1a0] sm:$0xff]
          %v734 = vld [vmem:[%s527 + $0x1a8] sm:$0xff]
          %v735 = vld [vmem:[%s527 + $0x1b0] sm:$0xff]
          %v736 = vld [vmem:[%s527 + $0x1b8] sm:$0xff]
          %v737 = vld [vmem:[%s527 + $0x1c0] sm:$0xff]
          %v738 = vld [vmem:[%s527 + $0x1c8] sm:$0xff]
          %v739 = vld [vmem:[%s527 + $0x1d0] sm:$0xff]
          %v740 = vld [vmem:[%s527 + $0x1d8] sm:$0xff]
          %v741 = vld [vmem:[%s527 + $0x1e0] sm:$0xff]
          %v742 = vld [vmem:[%s527 + $0x1e8] sm:$0xff]
          %v743 = vld [vmem:[%s527 + $0x1f0] sm:$0xff]
          %v744 = vld [vmem:[%s527 + $0x1f8] sm:$0xff]
          %745 = vst [vmem:[#allocation2] sm:$0xff] %v681
          %746 = vst [vmem:[#allocation2 + $0x8] sm:$0xff] %v682
          %747 = vst [vmem:[#allocation2 + $0x10] sm:$0xff] %v683
          %748 = vst [vmem:[#allocation2 + $0x18] sm:$0xff] %v684
          %749 = vst [vmem:[#allocation2 + $0x20] sm:$0xff] %v685
          %750 = vst [vmem:[#allocation2 + $0x28] sm:$0xff] %v686
          %751 = vst [vmem:[#allocation2 + $0x30] sm:$0xff] %v687
          %752 = vst [vmem:[#allocation2 + $0x38] sm:$0xff] %v688
          %753 = vst [vmem:[#allocation2 + $0x40] sm:$0xff] %v689
          %754 = vst [vmem:[#allocation2 + $0x48] sm:$0xff] %v690
          %755 = vst [vmem:[#allocation2 + $0x50] sm:$0xff] %v691
          %756 = vst [vmem:[#allocation2 + $0x58] sm:$0xff] %v692
          %757 = vst [vmem:[#allocation2 + $0x60] sm:$0xff] %v693
          %758 = vst [vmem:[#allocation2 + $0x68] sm:$0xff] %v694
          %759 = vst [vmem:[#allocation2 + $0x70] sm:$0xff] %v695
          %760 = vst [vmem:[#allocation2 + $0x78] sm:$0xff] %v696
          %761 = vst [vmem:[#allocation2 + $0x80] sm:$0xff] %v697
          %762 = vst [vmem:[#allocation2 + $0x88] sm:$0xff] %v698
          %763 = vst [vmem:[#allocation2 + $0x90] sm:$0xff] %v699
          %764 = vst [vmem:[#allocation2 + $0x98] sm:$0xff] %v700
          %765 = vst [vmem:[#allocation2 + $0xa0] sm:$0xff] %v701
          %766 = vst [vmem:[#allocation2 + $0xa8] sm:$0xff] %v702
          %767 = vst [vmem:[#allocation2 + $0xb0] sm:$0xff] %v703
          %768 = vst [vmem:[#allocation2 + $0xb8] sm:$0xff] %v704
          %769 = vst [vmem:[#allocation2 + $0xc0] sm:$0xff] %v705
          %770 = vst [vmem:[#allocation2 + $0xc8] sm:$0xff] %v706
          %771 = vst [vmem:[#allocation2 + $0xd0] sm:$0xff] %v707
          %772 = vst [vmem:[#allocation2 + $0xd8] sm:$0xff] %v708
          %773 = vst [vmem:[#allocation2 + $0xe0] sm:$0xff] %v709
          %774 = vst [vmem:[#allocation2 + $0xe8] sm:$0xff] %v710
          %775 = vst [vmem:[#allocation2 + $0xf0] sm:$0xff] %v711
          %776 = vst [vmem:[#allocation2 + $0xf8] sm:$0xff] %v712
          %777 = vst [vmem:[#allocation2 + $0x100] sm:$0xff] %v713
          %778 = vst [vmem:[#allocation2 + $0x108] sm:$0xff] %v714
          %779 = vst [vmem:[#allocation2 + $0x110] sm:$0xff] %v715
          %780 = vst [vmem:[#allocation2 + $0x118] sm:$0xff] %v716
          %781 = vst [vmem:[#allocation2 + $0x120] sm:$0xff] %v717
          %782 = vst [vmem:[#allocation2 + $0x128] sm:$0xff] %v718
          %783 = vst [vmem:[#allocation2 + $0x130] sm:$0xff] %v719
          %784 = vst [vmem:[#allocation2 + $0x138] sm:$0xff] %v720
          %785 = vst [vmem:[#allocation2 + $0x140] sm:$0xff] %v721
          %786 = vst [vmem:[#allocation2 + $0x148] sm:$0xff] %v722
          %787 = vst [vmem:[#allocation2 + $0x150] sm:$0xff] %v723
          %788 = vst [vmem:[#allocation2 + $0x158] sm:$0xff] %v724
          %789 = vst [vmem:[#allocation2 + $0x160] sm:$0xff] %v725
          %790 = vst [vmem:[#allocation2 + $0x168] sm:$0xff] %v726
          %791 = vst [vmem:[#allocation2 + $0x170] sm:$0xff] %v727
          %792 = vst [vmem:[#allocation2 + $0x178] sm:$0xff] %v728
          %793 = vst [vmem:[#allocation2 + $0x180] sm:$0xff] %v729
          %794 = vst [vmem:[#allocation2 + $0x188] sm:$0xff] %v730
          %795 = vst [vmem:[#allocation2 + $0x190] sm:$0xff] %v731
          %796 = vst [vmem:[#allocation2 + $0x198] sm:$0xff] %v732
          %797 = vst [vmem:[#allocation2 + $0x1a0] sm:$0xff] %v733
          %798 = vst [vmem:[#allocation2 + $0x1a8] sm:$0xff] %v734
          %799 = vst [vmem:[#allocation2 + $0x1b0] sm:$0xff] %v735
          %800 = vst [vmem:[#allocation2 + $0x1b8] sm:$0xff] %v736
          %801 = vst [vmem:[#allocation2 + $0x1c0] sm:$0xff] %v737
          %802 = vst [vmem:[#allocation2 + $0x1c8] sm:$0xff] %v738
          %803 = vst [vmem:[#allocation2 + $0x1d0] sm:$0xff] %v739
          %804 = vst [vmem:[#allocation2 + $0x1d8] sm:$0xff] %v740
          %805 = vst [vmem:[#allocation2 + $0x1e0] sm:$0xff] %v741
          %806 = vst [vmem:[#allocation2 + $0x1e8] sm:$0xff] %v742
          %807 = vst [vmem:[#allocation2 + $0x1f0] sm:$0xff] %v743
          %808 = vst [vmem:[#allocation2 + $0x1f8] sm:$0xff] %v744
        $region92: #{tpu_custom_call.1} parent=59 // pred_fallthru
          _
        %v809 = vld [vmem:[#allocation2] sm:$0xff]
        %v810 = vld [vmem:[#allocation2 + $0x8] sm:$0xff]
        %v811 = vld [vmem:[#allocation2 + $0x10] sm:$0xff]
        %v812 = vld [vmem:[#allocation2 + $0x18] sm:$0xff]
        %v813 = vld [vmem:[#allocation2 + $0x20] sm:$0xff]
        %v814 = vld [vmem:[#allocation2 + $0x28] sm:$0xff]
        %v815 = vld [vmem:[#allocation2 + $0x30] sm:$0xff]
        %v816 = vld [vmem:[#allocation2 + $0x38] sm:$0xff]
        %v817 = vld [vmem:[#allocation2 + $0x40] sm:$0xff]
        %v818 = vld [vmem:[#allocation2 + $0x48] sm:$0xff]
        %v819 = vld [vmem:[#allocation2 + $0x50] sm:$0xff]
        %v820 = vld [vmem:[#allocation2 + $0x58] sm:$0xff]
        %v821 = vld [vmem:[#allocation2 + $0x60] sm:$0xff]
        %v822 = vld [vmem:[#allocation2 + $0x68] sm:$0xff]
        %v823 = vld [vmem:[#allocation2 + $0x70] sm:$0xff]
        %v824 = vld [vmem:[#allocation2 + $0x78] sm:$0xff]
        %v825 = vld [vmem:[#allocation2 + $0x80] sm:$0xff]
        %v826 = vld [vmem:[#allocation2 + $0x88] sm:$0xff]
        %v827 = vld [vmem:[#allocation2 + $0x90] sm:$0xff]
        %v828 = vld [vmem:[#allocation2 + $0x98] sm:$0xff]
        %v829 = vld [vmem:[#allocation2 + $0xa0] sm:$0xff]
        %v830 = vld [vmem:[#allocation2 + $0xa8] sm:$0xff]
        %v831 = vld [vmem:[#allocation2 + $0xb0] sm:$0xff]
        %v832 = vld [vmem:[#allocation2 + $0xb8] sm:$0xff]
        %v833 = vld [vmem:[#allocation2 + $0xc0] sm:$0xff]
        %v834 = vld [vmem:[#allocation2 + $0xc8] sm:$0xff]
        %v835 = vld [vmem:[#allocation2 + $0xd0] sm:$0xff]
        %v836 = vld [vmem:[#allocation2 + $0xd8] sm:$0xff]
        %v837 = vld [vmem:[#allocation2 + $0xe0] sm:$0xff]
        %v838 = vld [vmem:[#allocation2 + $0xe8] sm:$0xff]
        %v839 = vld [vmem:[#allocation2 + $0xf0] sm:$0xff]
        %v840 = vld [vmem:[#allocation2 + $0xf8] sm:$0xff]
        %v841 = vld [vmem:[#allocation2 + $0x100] sm:$0xff]
        %v842 = vld [vmem:[#allocation2 + $0x108] sm:$0xff]
        %v843 = vld [vmem:[#allocation2 + $0x110] sm:$0xff]
        %v844 = vld [vmem:[#allocation2 + $0x118] sm:$0xff]
        %v845 = vld [vmem:[#allocation2 + $0x120] sm:$0xff]
        %v846 = vld [vmem:[#allocation2 + $0x128] sm:$0xff]
        %v847 = vld [vmem:[#allocation2 + $0x130] sm:$0xff]
        %v848 = vld [vmem:[#allocation2 + $0x138] sm:$0xff]
        %v849 = vld [vmem:[#allocation2 + $0x140] sm:$0xff]
        %v850 = vld [vmem:[#allocation2 + $0x148] sm:$0xff]
        %v851 = vld [vmem:[#allocation2 + $0x150] sm:$0xff]
        %v852 = vld [vmem:[#allocation2 + $0x158] sm:$0xff]
        %v853 = vld [vmem:[#allocation2 + $0x160] sm:$0xff]
        %v854 = vld [vmem:[#allocation2 + $0x168] sm:$0xff]
        %v855 = vld [vmem:[#allocation2 + $0x170] sm:$0xff]
        %v856 = vld [vmem:[#allocation2 + $0x178] sm:$0xff]
        %v857 = vld [vmem:[#allocation2 + $0x180] sm:$0xff]
        %v858 = vld [vmem:[#allocation2 + $0x188] sm:$0xff]
        %v859 = vld [vmem:[#allocation2 + $0x190] sm:$0xff]
        %v860 = vld [vmem:[#allocation2 + $0x198] sm:$0xff]
        %v861 = vld [vmem:[#allocation2 + $0x1a0] sm:$0xff]
        %v862 = vld [vmem:[#allocation2 + $0x1a8] sm:$0xff]
        %v863 = vld [vmem:[#allocation2 + $0x1b0] sm:$0xff]
        %v864 = vld [vmem:[#allocation2 + $0x1b8] sm:$0xff]
        %v865 = vld [vmem:[#allocation2 + $0x1c0] sm:$0xff]
        %v866 = vld [vmem:[#allocation2 + $0x1c8] sm:$0xff]
        %v867 = vld [vmem:[#allocation2 + $0x1d0] sm:$0xff]
        %v868 = vld [vmem:[#allocation2 + $0x1d8] sm:$0xff]
        %v869 = vld [vmem:[#allocation2 + $0x1e0] sm:$0xff]
        %v870 = vld [vmem:[#allocation2 + $0x1e8] sm:$0xff]
        %v871 = vld [vmem:[#allocation2 + $0x1f0] sm:$0xff]
        %v872 = vld [vmem:[#allocation2 + $0x1f8] sm:$0xff]
        %v873 = vld [vmem:[%s536] sm:$0xff]
        %v874 = vld [vmem:[%s536 + $0x8] sm:$0xf]
        %v876 = vrot.slane %v873, 2
        %v878 = vadd.f32 %v809, %v810
        %879 = vadd.xlane.f32.xlu0 %v878
        %v880 = vpop.xlane.xlu0 %879
        %v881 = vadd.f32 %v811, %v812
        %882 = vadd.xlane.f32.xlu0 %v881
        %v883 = vpop.xlane.xlu0 %882
        %v884 = vadd.f32 %v813, %v814
        %885 = vadd.xlane.f32.xlu0 %v884
        %v886 = vpop.xlane.xlu0 %885
        %v887 = vadd.f32 %v815, %v816
        %888 = vadd.xlane.f32.xlu0 %v887
        %v889 = vpop.xlane.xlu0 %888
        %v890 = vadd.f32 %v817, %v818
        %891 = vadd.xlane.f32.xlu0 %v890
        %v892 = vpop.xlane.xlu0 %891
        %v893 = vadd.f32 %v819, %v820
        %894 = vadd.xlane.f32.xlu0 %v893
        %v895 = vpop.xlane.xlu0 %894
        %v896 = vadd.f32 %v821, %v822
        %897 = vadd.xlane.f32.xlu0 %v896
        %v898 = vpop.xlane.xlu0 %897
        %v899 = vadd.f32 %v823, %v824
        %900 = vadd.xlane.f32.xlu0 %v899
        %v901 = vpop.xlane.xlu0 %900
        %v902 = vadd.f32 %v825, %v826
        %903 = vadd.xlane.f32.xlu0 %v902
        %v904 = vpop.xlane.xlu0 %903
        %v905 = vadd.f32 %v827, %v828
        %906 = vadd.xlane.f32.xlu0 %v905
        %v907 = vpop.xlane.xlu0 %906
        %v908 = vadd.f32 %v829, %v830
        %909 = vadd.xlane.f32.xlu0 %v908
        %v910 = vpop.xlane.xlu0 %909
        %v911 = vadd.f32 %v831, %v832
        %912 = vadd.xlane.f32.xlu0 %v911
        %v913 = vpop.xlane.xlu0 %912
        %v914 = vadd.f32 %v833, %v834
        %915 = vadd.xlane.f32.xlu0 %v914
        %v916 = vpop.xlane.xlu0 %915
        %v917 = vadd.f32 %v835, %v836
        %918 = vadd.xlane.f32.xlu0 %v917
        %v919 = vpop.xlane.xlu0 %918
        %v920 = vadd.f32 %v837, %v838
        %921 = vadd.xlane.f32.xlu0 %v920
        %v922 = vpop.xlane.xlu0 %921
        %v923 = vadd.f32 %v839, %v840
        %924 = vadd.xlane.f32.xlu0 %v923
        %v925 = vpop.xlane.xlu0 %924
        %v926 = vadd.f32 %v841, %v842
        %927 = vadd.xlane.f32.xlu0 %v926
        %v928 = vpop.xlane.xlu0 %927
        %v929 = vadd.f32 %v843, %v844
        %930 = vadd.xlane.f32.xlu0 %v929
        %v931 = vpop.xlane.xlu0 %930
        %v932 = vadd.f32 %v845, %v846
        %933 = vadd.xlane.f32.xlu0 %v932
        %v934 = vpop.xlane.xlu0 %933
        %v935 = vadd.f32 %v847, %v848
        %936 = vadd.xlane.f32.xlu0 %v935
        %v937 = vpop.xlane.xlu0 %936
        %v938 = vadd.f32 %v849, %v850
        %939 = vadd.xlane.f32.xlu0 %v938
        %v940 = vpop.xlane.xlu0 %939
        %v941 = vadd.f32 %v851, %v852
        %942 = vadd.xlane.f32.xlu0 %v941
        %v943 = vpop.xlane.xlu0 %942
        %v944 = vadd.f32 %v853, %v854
        %945 = vadd.xlane.f32.xlu0 %v944
        %v946 = vpop.xlane.xlu0 %945
        %v947 = vadd.f32 %v855, %v856
        %948 = vadd.xlane.f32.xlu0 %v947
        %v949 = vpop.xlane.xlu0 %948
        %v950 = vadd.f32 %v857, %v858
        %951 = vadd.xlane.f32.xlu0 %v950
        %v952 = vpop.xlane.xlu0 %951
        %v953 = vadd.f32 %v859, %v860
        %954 = vadd.xlane.f32.xlu0 %v953
        %v955 = vpop.xlane.xlu0 %954
        %v956 = vadd.f32 %v861, %v862
        %957 = vadd.xlane.f32.xlu0 %v956
        %v958 = vpop.xlane.xlu0 %957
        %v959 = vadd.f32 %v863, %v864
        %960 = vadd.xlane.f32.xlu0 %v959
        %v961 = vpop.xlane.xlu0 %960
        %v962 = vadd.f32 %v865, %v866
        %963 = vadd.xlane.f32.xlu0 %v962
        %v964 = vpop.xlane.xlu0 %963
        %v965 = vadd.f32 %v867, %v868
        %966 = vadd.xlane.f32.xlu0 %v965
        %v967 = vpop.xlane.xlu0 %966
        %v968 = vadd.f32 %v869, %v870
        %969 = vadd.xlane.f32.xlu0 %v968
        %v970 = vpop.xlane.xlu0 %969
        %v971 = vadd.f32 %v871, %v872
        %972 = vadd.xlane.f32.xlu0 %v971
        %v973 = vpop.xlane.xlu0 %972
        %v974 = vrcp.pop 256.0
        %v975 = vmul.f32 %v880, %v974
        %v976 = vmul.f32 %v883, %v974
        %v977 = vmul.f32 %v886, %v974
        %v978 = vmul.f32 %v889, %v974
        %v979 = vmul.f32 %v892, %v974
        %v980 = vmul.f32 %v895, %v974
        %v981 = vmul.f32 %v898, %v974
        %v982 = vmul.f32 %v901, %v974
        %v983 = vmul.f32 %v904, %v974
        %v984 = vmul.f32 %v907, %v974
        %v985 = vmul.f32 %v910, %v974
        %v986 = vmul.f32 %v913, %v974
        %v987 = vmul.f32 %v916, %v974
        %v988 = vmul.f32 %v919, %v974
        %v989 = vmul.f32 %v922, %v974
        %v990 = vmul.f32 %v925, %v974
        %v991 = vmul.f32 %v928, %v974
        %v992 = vmul.f32 %v931, %v974
        %v993 = vmul.f32 %v934, %v974
        %v994 = vmul.f32 %v937, %v974
        %v995 = vmul.f32 %v940, %v974
        %v996 = vmul.f32 %v943, %v974
        %v997 = vmul.f32 %v946, %v974
        %v998 = vmul.f32 %v949, %v974
        %v999 = vmul.f32 %v952, %v974
        %v1000 = vmul.f32 %v955, %v974
        %v1001 = vmul.f32 %v958, %v974
        %v1002 = vmul.f32 %v961, %v974
        %v1003 = vmul.f32 %v964, %v974
        %v1004 = vmul.f32 %v967, %v974
        %v1005 = vmul.f32 %v970, %v974
        %v1006 = vmul.f32 %v973, %v974
        %v1007 = vsub.f32 %v809, %v975
        %v1008 = vsub.f32 %v810, %v975
        %v1009 = vsub.f32 %v811, %v976
        %v1010 = vsub.f32 %v812, %v976
        %v1011 = vsub.f32 %v813, %v977
        %v1012 = vsub.f32 %v814, %v977
        %v1013 = vsub.f32 %v815, %v978
        %v1014 = vsub.f32 %v816, %v978
        %v1015 = vsub.f32 %v817, %v979
        %v1016 = vsub.f32 %v818, %v979
        %v1017 = vsub.f32 %v819, %v980
        %v1018 = vsub.f32 %v820, %v980
        %v1019 = vsub.f32 %v821, %v981
        %v1020 = vsub.f32 %v822, %v981
        %v1021 = vsub.f32 %v823, %v982
        %v1022 = vsub.f32 %v824, %v982
        %v1023 = vsub.f32 %v825, %v983
        %v1024 = vsub.f32 %v826, %v983
        %v1025 = vsub.f32 %v827, %v984
        %v1026 = vsub.f32 %v828, %v984
        %v1027 = vsub.f32 %v829, %v985
        %v1028 = vsub.f32 %v830, %v985
        %v1029 = vsub.f32 %v831, %v986
        %v1030 = vsub.f32 %v832, %v986
        %v1031 = vsub.f32 %v833, %v987
        %v1032 = vsub.f32 %v834, %v987
        %v1033 = vsub.f32 %v835, %v988
        %v1034 = vsub.f32 %v836, %v988
        %v1035 = vsub.f32 %v837, %v989
        %v1036 = vsub.f32 %v838, %v989
        %v1037 = vsub.f32 %v839, %v990
        %v1038 = vsub.f32 %v840, %v990
        %v1039 = vsub.f32 %v841, %v991
        %v1040 = vsub.f32 %v842, %v991
        %v1041 = vsub.f32 %v843, %v992
        %v1042 = vsub.f32 %v844, %v992
        %v1043 = vsub.f32 %v845, %v993
        %v1044 = vsub.f32 %v846, %v993
        %v1045 = vsub.f32 %v847, %v994
        %v1046 = vsub.f32 %v848, %v994
        %v1047 = vsub.f32 %v849, %v995
        %v1048 = vsub.f32 %v850, %v995
        %v1049 = vsub.f32 %v851, %v996
        %v1050 = vsub.f32 %v852, %v996
        %v1051 = vsub.f32 %v853, %v997
        %v1052 = vsub.f32 %v854, %v997
        %v1053 = vsub.f32 %v855, %v998
        %v1054 = vsub.f32 %v856, %v998
        %v1055 = vsub.f32 %v857, %v999
        %v1056 = vsub.f32 %v858, %v999
        %v1057 = vsub.f32 %v859, %v1000
        %v1058 = vsub.f32 %v860, %v1000
        %v1059 = vsub.f32 %v861, %v1001
        %v1060 = vsub.f32 %v862, %v1001
        %v1061 = vsub.f32 %v863, %v1002
        %v1062 = vsub.f32 %v864, %v1002
        %v1063 = vsub.f32 %v865, %v1003
        %v1064 = vsub.f32 %v866, %v1003
        %v1065 = vsub.f32 %v867, %v1004
        %v1066 = vsub.f32 %v868, %v1004
        %v1067 = vsub.f32 %v869, %v1005
        %v1068 = vsub.f32 %v870, %v1005
        %v1069 = vsub.f32 %v871, %v1006
        %v1070 = vsub.f32 %v872, %v1006
        %v1071 = vmul.f32 %v1007, %v1007
        %v1072 = vmul.f32 %v1008, %v1008
        %v1073 = vmul.f32 %v1009, %v1009
        %v1074 = vmul.f32 %v1010, %v1010
        %v1075 = vmul.f32 %v1011, %v1011
        %v1076 = vmul.f32 %v1012, %v1012
        %v1077 = vmul.f32 %v1013, %v1013
        %v1078 = vmul.f32 %v1014, %v1014
        %v1079 = vmul.f32 %v1015, %v1015
        %v1080 = vmul.f32 %v1016, %v1016
        %v1081 = vmul.f32 %v1017, %v1017
        %v1082 = vmul.f32 %v1018, %v1018
        %v1083 = vmul.f32 %v1019, %v1019
        %v1084 = vmul.f32 %v1020, %v1020
        %v1085 = vmul.f32 %v1021, %v1021
        %v1086 = vmul.f32 %v1022, %v1022
        %v1087 = vmul.f32 %v1023, %v1023
        %v1088 = vmul.f32 %v1024, %v1024
        %v1089 = vmul.f32 %v1025, %v1025
        %v1090 = vmul.f32 %v1026, %v1026
        %v1091 = vmul.f32 %v1027, %v1027
        %v1092 = vmul.f32 %v1028, %v1028
        %v1093 = vmul.f32 %v1029, %v1029
        %v1094 = vmul.f32 %v1030, %v1030
        %v1095 = vmul.f32 %v1031, %v1031
        %v1096 = vmul.f32 %v1032, %v1032
        %v1097 = vmul.f32 %v1033, %v1033
        %v1098 = vmul.f32 %v1034, %v1034
        %v1099 = vmul.f32 %v1035, %v1035
        %v1100 = vmul.f32 %v1036, %v1036
        %v1101 = vmul.f32 %v1037, %v1037
        %v1102 = vmul.f32 %v1038, %v1038
        %v1103 = vmul.f32 %v1039, %v1039
        %v1104 = vmul.f32 %v1040, %v1040
        %v1105 = vmul.f32 %v1041, %v1041
        %v1106 = vmul.f32 %v1042, %v1042
        %v1107 = vmul.f32 %v1043, %v1043
        %v1108 = vmul.f32 %v1044, %v1044
        %v1109 = vmul.f32 %v1045, %v1045
        %v1110 = vmul.f32 %v1046, %v1046
        %v1111 = vmul.f32 %v1047, %v1047
        %v1112 = vmul.f32 %v1048, %v1048
        %v1113 = vmul.f32 %v1049, %v1049
        %v1114 = vmul.f32 %v1050, %v1050
        %v1115 = vmul.f32 %v1051, %v1051
        %v1116 = vmul.f32 %v1052, %v1052
        %v1117 = vmul.f32 %v1053, %v1053
        %v1118 = vmul.f32 %v1054, %v1054
        %v1119 = vmul.f32 %v1055, %v1055
        %v1120 = vmul.f32 %v1056, %v1056
        %v1121 = vmul.f32 %v1057, %v1057
        %v1122 = vmul.f32 %v1058, %v1058
        %v1123 = vmul.f32 %v1059, %v1059
        %v1124 = vmul.f32 %v1060, %v1060
        %v1125 = vmul.f32 %v1061, %v1061
        %v1126 = vmul.f32 %v1062, %v1062
        %v1127 = vmul.f32 %v1063, %v1063
        %v1128 = vmul.f32 %v1064, %v1064
        %v1129 = vmul.f32 %v1065, %v1065
        %v1130 = vmul.f32 %v1066, %v1066
        %v1131 = vmul.f32 %v1067, %v1067
        %v1132 = vmul.f32 %v1068, %v1068
        %v1133 = vmul.f32 %v1069, %v1069
        %v1134 = vmul.f32 %v1070, %v1070
        %v1135 = vadd.f32 %v1071, %v1072
        %1136 = vadd.xlane.f32.xlu0 %v1135
        %v1137 = vpop.xlane.xlu0 %1136
        %v1138 = vadd.f32 %v1073, %v1074
        %1139 = vadd.xlane.f32.xlu0 %v1138
        %v1140 = vpop.xlane.xlu0 %1139
        %v1141 = vadd.f32 %v1075, %v1076
        %1142 = vadd.xlane.f32.xlu0 %v1141
        %v1143 = vpop.xlane.xlu0 %1142
        %v1144 = vadd.f32 %v1077, %v1078
        %1145 = vadd.xlane.f32.xlu0 %v1144
        %v1146 = vpop.xlane.xlu0 %1145
        %v1147 = vadd.f32 %v1079, %v1080
        %1148 = vadd.xlane.f32.xlu0 %v1147
        %v1149 = vpop.xlane.xlu0 %1148
        %v1150 = vadd.f32 %v1081, %v1082
        %1151 = vadd.xlane.f32.xlu0 %v1150
        %v1152 = vpop.xlane.xlu0 %1151
        %v1153 = vadd.f32 %v1083, %v1084
        %1154 = vadd.xlane.f32.xlu0 %v1153
        %v1155 = vpop.xlane.xlu0 %1154
        %v1156 = vadd.f32 %v1085, %v1086
        %1157 = vadd.xlane.f32.xlu0 %v1156
        %v1158 = vpop.xlane.xlu0 %1157
        %v1159 = vadd.f32 %v1087, %v1088
        %1160 = vadd.xlane.f32.xlu0 %v1159
        %v1161 = vpop.xlane.xlu0 %1160
        %v1162 = vadd.f32 %v1089, %v1090
        %1163 = vadd.xlane.f32.xlu0 %v1162
        %v1164 = vpop.xlane.xlu0 %1163
        %v1165 = vadd.f32 %v1091, %v1092
        %1166 = vadd.xlane.f32.xlu0 %v1165
        %v1167 = vpop.xlane.xlu0 %1166
        %v1168 = vadd.f32 %v1093, %v1094
        %1169 = vadd.xlane.f32.xlu0 %v1168
        %v1170 = vpop.xlane.xlu0 %1169
        %v1171 = vadd.f32 %v1095, %v1096
        %1172 = vadd.xlane.f32.xlu0 %v1171
        %v1173 = vpop.xlane.xlu0 %1172
        %v1174 = vadd.f32 %v1097, %v1098
        %1175 = vadd.xlane.f32.xlu0 %v1174
        %v1176 = vpop.xlane.xlu0 %1175
        %v1177 = vadd.f32 %v1099, %v1100
        %1178 = vadd.xlane.f32.xlu0 %v1177
        %v1179 = vpop.xlane.xlu0 %1178
        %v1180 = vadd.f32 %v1101, %v1102
        %1181 = vadd.xlane.f32.xlu0 %v1180
        %v1182 = vpop.xlane.xlu0 %1181
        %v1183 = vadd.f32 %v1103, %v1104
        %1184 = vadd.xlane.f32.xlu0 %v1183
        %v1185 = vpop.xlane.xlu0 %1184
        %v1186 = vadd.f32 %v1105, %v1106
        %1187 = vadd.xlane.f32.xlu0 %v1186
        %v1188 = vpop.xlane.xlu0 %1187
        %v1189 = vadd.f32 %v1107, %v1108
        %1190 = vadd.xlane.f32.xlu0 %v1189
        %v1191 = vpop.xlane.xlu0 %1190
        %v1192 = vadd.f32 %v1109, %v1110
        %1193 = vadd.xlane.f32.xlu0 %v1192
        %v1194 = vpop.xlane.xlu0 %1193
        %v1195 = vadd.f32 %v1111, %v1112
        %1196 = vadd.xlane.f32.xlu0 %v1195
        %v1197 = vpop.xlane.xlu0 %1196
        %v1198 = vadd.f32 %v1113, %v1114
        %1199 = vadd.xlane.f32.xlu0 %v1198
        %v1200 = vpop.xlane.xlu0 %1199
        %v1201 = vadd.f32 %v1115, %v1116
        %1202 = vadd.xlane.f32.xlu0 %v1201
        %v1203 = vpop.xlane.xlu0 %1202
        %v1204 = vadd.f32 %v1117, %v1118
        %1205 = vadd.xlane.f32.xlu0 %v1204
        %v1206 = vpop.xlane.xlu0 %1205
        %v1207 = vadd.f32 %v1119, %v1120
        %1208 = vadd.xlane.f32.xlu0 %v1207
        %v1209 = vpop.xlane.xlu0 %1208
        %v1210 = vadd.f32 %v1121, %v1122
        %1211 = vadd.xlane.f32.xlu0 %v1210
        %v1212 = vpop.xlane.xlu0 %1211
        %v1213 = vadd.f32 %v1123, %v1124
        %1214 = vadd.xlane.f32.xlu0 %v1213
        %v1215 = vpop.xlane.xlu0 %1214
        %v1216 = vadd.f32 %v1125, %v1126
        %1217 = vadd.xlane.f32.xlu0 %v1216
        %v1218 = vpop.xlane.xlu0 %1217
        %v1219 = vadd.f32 %v1127, %v1128
        %1220 = vadd.xlane.f32.xlu0 %v1219
        %v1221 = vpop.xlane.xlu0 %1220
        %v1222 = vadd.f32 %v1129, %v1130
        %1223 = vadd.xlane.f32.xlu0 %v1222
        %v1224 = vpop.xlane.xlu0 %1223
        %v1225 = vadd.f32 %v1131, %v1132
        %1226 = vadd.xlane.f32.xlu0 %v1225
        %v1227 = vpop.xlane.xlu0 %1226
        %v1228 = vadd.f32 %v1133, %v1134
        %1229 = vadd.xlane.f32.xlu0 %v1228
        %v1230 = vpop.xlane.xlu0 %1229
        %v1231 = vmul.f32 %v1137, %v974
        %v1232 = vmul.f32 %v1140, %v974
        %v1233 = vmul.f32 %v1143, %v974
        %v1234 = vmul.f32 %v1146, %v974
        %v1235 = vmul.f32 %v1149, %v974
        %v1236 = vmul.f32 %v1152, %v974
        %v1237 = vmul.f32 %v1155, %v974
        %v1238 = vmul.f32 %v1158, %v974
        %v1239 = vmul.f32 %v1161, %v974
        %v1240 = vmul.f32 %v1164, %v974
        %v1241 = vmul.f32 %v1167, %v974
        %v1242 = vmul.f32 %v1170, %v974
        %v1243 = vmul.f32 %v1173, %v974
        %v1244 = vmul.f32 %v1176, %v974
        %v1245 = vmul.f32 %v1179, %v974
        %v1246 = vmul.f32 %v1182, %v974
        %v1247 = vmul.f32 %v1185, %v974
        %v1248 = vmul.f32 %v1188, %v974
        %v1249 = vmul.f32 %v1191, %v974
        %v1250 = vmul.f32 %v1194, %v974
        %v1251 = vmul.f32 %v1197, %v974
        %v1252 = vmul.f32 %v1200, %v974
        %v1253 = vmul.f32 %v1203, %v974
        %v1254 = vmul.f32 %v1206, %v974
        %v1255 = vmul.f32 %v1209, %v974
        %v1256 = vmul.f32 %v1212, %v974
        %v1257 = vmul.f32 %v1215, %v974
        %v1258 = vmul.f32 %v1218, %v974
        %v1259 = vmul.f32 %v1221, %v974
        %v1260 = vmul.f32 %v1224, %v974
        %v1261 = vmul.f32 %v1227, %v974
        %v1262 = vmul.f32 %v1230, %v974
        %v1263 = vadd.f32 %v1231, 1e-06
        %v1264 = vadd.f32 %v1232, 1e-06
        %v1265 = vadd.f32 %v1233, 1e-06
        %v1266 = vadd.f32 %v1234, 1e-06
        %v1267 = vadd.f32 %v1235, 1e-06
        %v1268 = vadd.f32 %v1236, 1e-06
        %v1269 = vadd.f32 %v1237, 1e-06
        %v1270 = vadd.f32 %v1238, 1e-06
        %v1271 = vadd.f32 %v1239, 1e-06
        %v1272 = vadd.f32 %v1240, 1e-06
        %v1273 = vadd.f32 %v1241, 1e-06
        %v1274 = vadd.f32 %v1242, 1e-06
        %v1275 = vadd.f32 %v1243, 1e-06
        %v1276 = vadd.f32 %v1244, 1e-06
        %v1277 = vadd.f32 %v1245, 1e-06
        %v1278 = vadd.f32 %v1246, 1e-06
        %v1279 = vadd.f32 %v1247, 1e-06
        %v1280 = vadd.f32 %v1248, 1e-06
        %v1281 = vadd.f32 %v1249, 1e-06
        %v1282 = vadd.f32 %v1250, 1e-06
        %v1283 = vadd.f32 %v1251, 1e-06
        %v1284 = vadd.f32 %v1252, 1e-06
        %v1285 = vadd.f32 %v1253, 1e-06
        %v1286 = vadd.f32 %v1254, 1e-06
        %v1287 = vadd.f32 %v1255, 1e-06
        %v1288 = vadd.f32 %v1256, 1e-06
        %v1289 = vadd.f32 %v1257, 1e-06
        %v1290 = vadd.f32 %v1258, 1e-06
        %v1291 = vadd.f32 %v1259, 1e-06
        %v1292 = vadd.f32 %v1260, 1e-06
        %v1293 = vadd.f32 %v1261, 1e-06
        %v1294 = vadd.f32 %v1262, 1e-06
        %v1295 = vrsqrt.pop %v1263
        %v1296 = vrsqrt.pop %v1264
        %v1297 = vrsqrt.pop %v1265
        %v1298 = vrsqrt.pop %v1266
        %v1299 = vrsqrt.pop %v1267
        %v1300 = vrsqrt.pop %v1268
        %v1301 = vrsqrt.pop %v1269
        %v1302 = vrsqrt.pop %v1270
        %v1303 = vrsqrt.pop %v1271
        %v1304 = vrsqrt.pop %v1272
        %v1305 = vrsqrt.pop %v1273
        %v1306 = vrsqrt.pop %v1274
        %v1307 = vrsqrt.pop %v1275
        %v1308 = vrsqrt.pop %v1276
        %v1309 = vrsqrt.pop %v1277
        %v1310 = vrsqrt.pop %v1278
        %v1311 = vrsqrt.pop %v1279
        %v1312 = vrsqrt.pop %v1280
        %v1313 = vrsqrt.pop %v1281
        %v1314 = vrsqrt.pop %v1282
        %v1315 = vrsqrt.pop %v1283
        %v1316 = vrsqrt.pop %v1284
        %v1317 = vrsqrt.pop %v1285
        %v1318 = vrsqrt.pop %v1286
        %v1319 = vrsqrt.pop %v1287
        %v1320 = vrsqrt.pop %v1288
        %v1321 = vrsqrt.pop %v1289
        %v1322 = vrsqrt.pop %v1290
        %v1323 = vrsqrt.pop %v1291
        %v1324 = vrsqrt.pop %v1292
        %v1325 = vrsqrt.pop %v1293
        %v1326 = vrsqrt.pop %v1294
        %v1327 = vmul.f32 %v1007, %v1295
        %v1328 = vmul.f32 %v1008, %v1295
        %v1329 = vmul.f32 %v1009, %v1296
        %v1330 = vmul.f32 %v1010, %v1296
        %v1331 = vmul.f32 %v1011, %v1297
        %v1332 = vmul.f32 %v1012, %v1297
        %v1333 = vmul.f32 %v1013, %v1298
        %v1334 = vmul.f32 %v1014, %v1298
        %v1335 = vmul.f32 %v1015, %v1299
        %v1336 = vmul.f32 %v1016, %v1299
        %v1337 = vmul.f32 %v1017, %v1300
        %v1338 = vmul.f32 %v1018, %v1300
        %v1339 = vmul.f32 %v1019, %v1301
        %v1340 = vmul.f32 %v1020, %v1301
        %v1341 = vmul.f32 %v1021, %v1302
        %v1342 = vmul.f32 %v1022, %v1302
        %v1343 = vmul.f32 %v1023, %v1303
        %v1344 = vmul.f32 %v1024, %v1303
        %v1345 = vmul.f32 %v1025, %v1304
        %v1346 = vmul.f32 %v1026, %v1304
        %v1347 = vmul.f32 %v1027, %v1305
        %v1348 = vmul.f32 %v1028, %v1305
        %v1349 = vmul.f32 %v1029, %v1306
        %v1350 = vmul.f32 %v1030, %v1306
        %v1351 = vmul.f32 %v1031, %v1307
        %v1352 = vmul.f32 %v1032, %v1307
        %v1353 = vmul.f32 %v1033, %v1308
        %v1354 = vmul.f32 %v1034, %v1308
        %v1355 = vmul.f32 %v1035, %v1309
        %v1356 = vmul.f32 %v1036, %v1309
        %v1357 = vmul.f32 %v1037, %v1310
        %v1358 = vmul.f32 %v1038, %v1310
        %v1359 = vmul.f32 %v1039, %v1311
        %v1360 = vmul.f32 %v1040, %v1311
        %v1361 = vmul.f32 %v1041, %v1312
        %v1362 = vmul.f32 %v1042, %v1312
        %v1363 = vmul.f32 %v1043, %v1313
        %v1364 = vmul.f32 %v1044, %v1313
        %v1365 = vmul.f32 %v1045, %v1314
        %v1366 = vmul.f32 %v1046, %v1314
        %v1367 = vmul.f32 %v1047, %v1315
        %v1368 = vmul.f32 %v1048, %v1315
        %v1369 = vmul.f32 %v1049, %v1316
        %v1370 = vmul.f32 %v1050, %v1316
        %v1371 = vmul.f32 %v1051, %v1317
        %v1372 = vmul.f32 %v1052, %v1317
        %v1373 = vmul.f32 %v1053, %v1318
        %v1374 = vmul.f32 %v1054, %v1318
        %v1375 = vmul.f32 %v1055, %v1319
        %v1376 = vmul.f32 %v1056, %v1319
        %v1377 = vmul.f32 %v1057, %v1320
        %v1378 = vmul.f32 %v1058, %v1320
        %v1379 = vmul.f32 %v1059, %v1321
        %v1380 = vmul.f32 %v1060, %v1321
        %v1381 = vmul.f32 %v1061, %v1322
        %v1382 = vmul.f32 %v1062, %v1322
        %v1383 = vmul.f32 %v1063, %v1323
        %v1384 = vmul.f32 %v1064, %v1323
        %v1385 = vmul.f32 %v1065, %v1324
        %v1386 = vmul.f32 %v1066, %v1324
        %v1387 = vmul.f32 %v1067, %v1325
        %v1388 = vmul.f32 %v1068, %v1325
        %v1389 = vmul.f32 %v1069, %v1326
        %v1390 = vmul.f32 %v1070, %v1326
        %v1391 = vadd.f32 %v876, 1.0
        %v1393 = vlaneseq
        %v1394 = vshrl.u32 %v1393, 7
        %v1395 = vsub.s32 0, %v1394
        %v1396 = vrot.slane %v1391, %v1395
        %v1397 = vlaneseq
        %v1398 = vshrl.u32 %v1397, 7
        %v1399 = vsub.s32 1, %v1398
        %v1400 = vrot.slane %v1391, %v1399
        %v1403 = vmul.f32 %v1327, %v1396
        %v1404 = vmul.f32 %v1328, %v1400
        %v1405 = vmul.f32 %v1329, %v1396
        %v1406 = vmul.f32 %v1330, %v1400
        %v1407 = vmul.f32 %v1331, %v1396
        %v1408 = vmul.f32 %v1332, %v1400
        %v1409 = vmul.f32 %v1333, %v1396
        %v1410 = vmul.f32 %v1334, %v1400
        %v1411 = vmul.f32 %v1335, %v1396
        %v1412 = vmul.f32 %v1336, %v1400
        %v1413 = vmul.f32 %v1337, %v1396
        %v1414 = vmul.f32 %v1338, %v1400
        %v1415 = vmul.f32 %v1339, %v1396
        %v1416 = vmul.f32 %v1340, %v1400
        %v1417 = vmul.f32 %v1341, %v1396
        %v1418 = vmul.f32 %v1342, %v1400
        %v1419 = vmul.f32 %v1343, %v1396
        %v1420 = vmul.f32 %v1344, %v1400
        %v1421 = vmul.f32 %v1345, %v1396
        %v1422 = vmul.f32 %v1346, %v1400
        %v1423 = vmul.f32 %v1347, %v1396
        %v1424 = vmul.f32 %v1348, %v1400
        %v1425 = vmul.f32 %v1349, %v1396
        %v1426 = vmul.f32 %v1350, %v1400
        %v1427 = vmul.f32 %v1351, %v1396
        %v1428 = vmul.f32 %v1352, %v1400
        %v1429 = vmul.f32 %v1353, %v1396
        %v1430 = vmul.f32 %v1354, %v1400
        %v1431 = vmul.f32 %v1355, %v1396
        %v1432 = vmul.f32 %v1356, %v1400
        %v1433 = vmul.f32 %v1357, %v1396
        %v1434 = vmul.f32 %v1358, %v1400
        %v1435 = vmul.f32 %v1359, %v1396
        %v1436 = vmul.f32 %v1360, %v1400
        %v1437 = vmul.f32 %v1361, %v1396
        %v1438 = vmul.f32 %v1362, %v1400
        %v1439 = vmul.f32 %v1363, %v1396
        %v1440 = vmul.f32 %v1364, %v1400
        %v1441 = vmul.f32 %v1365, %v1396
        %v1442 = vmul.f32 %v1366, %v1400
        %v1443 = vmul.f32 %v1367, %v1396
        %v1444 = vmul.f32 %v1368, %v1400
        %v1445 = vmul.f32 %v1369, %v1396
        %v1446 = vmul.f32 %v1370, %v1400
        %v1447 = vmul.f32 %v1371, %v1396
        %v1448 = vmul.f32 %v1372, %v1400
        %v1449 = vmul.f32 %v1373, %v1396
        %v1450 = vmul.f32 %v1374, %v1400
        %v1451 = vmul.f32 %v1375, %v1396
        %v1452 = vmul.f32 %v1376, %v1400
        %v1453 = vmul.f32 %v1377, %v1396
        %v1454 = vmul.f32 %v1378, %v1400
        %v1455 = vmul.f32 %v1379, %v1396
        %v1456 = vmul.f32 %v1380, %v1400
        %v1457 = vmul.f32 %v1381, %v1396
        %v1458 = vmul.f32 %v1382, %v1400
        %v1459 = vmul.f32 %v1383, %v1396
        %v1460 = vmul.f32 %v1384, %v1400
        %v1461 = vmul.f32 %v1385, %v1396
        %v1462 = vmul.f32 %v1386, %v1400
        %v1463 = vmul.f32 %v1387, %v1396
        %v1464 = vmul.f32 %v1388, %v1400
        %v1465 = vmul.f32 %v1389, %v1396
        %v1466 = vmul.f32 %v1390, %v1400
        %v1467 = vlaneseq
        %v1468 = vshrl.u32 %v1467, 7
        %v1469 = vsub.s32 0, %v1468
        %v1470 = vrot.slane %v873, %v1469
        %v1471 = vlaneseq
        %v1472 = vshrl.u32 %v1471, 7
        %v1473 = vsub.s32 1, %v1472
        %v1474 = vrot.slane %v873, %v1473
        %v1477 = vadd.f32 %v1403, %v1470
        %v1478 = vadd.f32 %v1404, %v1474
        %v1479 = vadd.f32 %v1405, %v1470
        %v1480 = vadd.f32 %v1406, %v1474
        %v1481 = vadd.f32 %v1407, %v1470
        %v1482 = vadd.f32 %v1408, %v1474
        %v1483 = vadd.f32 %v1409, %v1470
        %v1484 = vadd.f32 %v1410, %v1474
        %v1485 = vadd.f32 %v1411, %v1470
        %v1486 = vadd.f32 %v1412, %v1474
        %v1487 = vadd.f32 %v1413, %v1470
        %v1488 = vadd.f32 %v1414, %v1474
        %v1489 = vadd.f32 %v1415, %v1470
        %v1490 = vadd.f32 %v1416, %v1474
        %v1491 = vadd.f32 %v1417, %v1470
        %v1492 = vadd.f32 %v1418, %v1474
        %v1493 = vadd.f32 %v1419, %v1470
        %v1494 = vadd.f32 %v1420, %v1474
        %v1495 = vadd.f32 %v1421, %v1470
        %v1496 = vadd.f32 %v1422, %v1474
        %v1497 = vadd.f32 %v1423, %v1470
        %v1498 = vadd.f32 %v1424, %v1474
        %v1499 = vadd.f32 %v1425, %v1470
        %v1500 = vadd.f32 %v1426, %v1474
        %v1501 = vadd.f32 %v1427, %v1470
        %v1502 = vadd.f32 %v1428, %v1474
        %v1503 = vadd.f32 %v1429, %v1470
        %v1504 = vadd.f32 %v1430, %v1474
        %v1505 = vadd.f32 %v1431, %v1470
        %v1506 = vadd.f32 %v1432, %v1474
        %v1507 = vadd.f32 %v1433, %v1470
        %v1508 = vadd.f32 %v1434, %v1474
        %v1509 = vadd.f32 %v1435, %v1470
        %v1510 = vadd.f32 %v1436, %v1474
        %v1511 = vadd.f32 %v1437, %v1470
        %v1512 = vadd.f32 %v1438, %v1474
        %v1513 = vadd.f32 %v1439, %v1470
        %v1514 = vadd.f32 %v1440, %v1474
        %v1515 = vadd.f32 %v1441, %v1470
        %v1516 = vadd.f32 %v1442, %v1474
        %v1517 = vadd.f32 %v1443, %v1470
        %v1518 = vadd.f32 %v1444, %v1474
        %v1519 = vadd.f32 %v1445, %v1470
        %v1520 = vadd.f32 %v1446, %v1474
        %v1521 = vadd.f32 %v1447, %v1470
        %v1522 = vadd.f32 %v1448, %v1474
        %v1523 = vadd.f32 %v1449, %v1470
        %v1524 = vadd.f32 %v1450, %v1474
        %v1525 = vadd.f32 %v1451, %v1470
        %v1526 = vadd.f32 %v1452, %v1474
        %v1527 = vadd.f32 %v1453, %v1470
        %v1528 = vadd.f32 %v1454, %v1474
        %v1529 = vadd.f32 %v1455, %v1470
        %v1530 = vadd.f32 %v1456, %v1474
        %v1531 = vadd.f32 %v1457, %v1470
        %v1532 = vadd.f32 %v1458, %v1474
        %v1533 = vadd.f32 %v1459, %v1470
        %v1534 = vadd.f32 %v1460, %v1474
        %v1535 = vadd.f32 %v1461, %v1470
        %v1536 = vadd.f32 %v1462, %v1474
        %v1537 = vadd.f32 %v1463, %v1470
        %v1538 = vadd.f32 %v1464, %v1474
        %v1539 = vadd.f32 %v1465, %v1470
        %v1540 = vadd.f32 %v1466, %v1474
        %v1541 = vpack.c.bf16 %v1479, %v1477
        %v1542 = vpack.c.bf16 %v1480, %v1478
        %v1543 = vpack.c.bf16 %v1483, %v1481
        %v1544 = vpack.c.bf16 %v1484, %v1482
        %v1545 = vpack.c.bf16 %v1487, %v1485
        %v1546 = vpack.c.bf16 %v1488, %v1486
        %v1547 = vpack.c.bf16 %v1491, %v1489
        %v1548 = vpack.c.bf16 %v1492, %v1490
        %v1549 = vpack.c.bf16 %v1495, %v1493
        %v1550 = vpack.c.bf16 %v1496, %v1494
        %v1551 = vpack.c.bf16 %v1499, %v1497
        %v1552 = vpack.c.bf16 %v1500, %v1498
        %v1553 = vpack.c.bf16 %v1503, %v1501
        %v1554 = vpack.c.bf16 %v1504, %v1502
        %v1555 = vpack.c.bf16 %v1507, %v1505
        %v1556 = vpack.c.bf16 %v1508, %v1506
        %v1557 = vpack.c.bf16 %v1511, %v1509
        %v1558 = vpack.c.bf16 %v1512, %v1510
        %v1559 = vpack.c.bf16 %v1515, %v1513
        %v1560 = vpack.c.bf16 %v1516, %v1514
        %v1561 = vpack.c.bf16 %v1519, %v1517
        %v1562 = vpack.c.bf16 %v1520, %v1518
        %v1563 = vpack.c.bf16 %v1523, %v1521
        %v1564 = vpack.c.bf16 %v1524, %v1522
        %v1565 = vpack.c.bf16 %v1527, %v1525
        %v1566 = vpack.c.bf16 %v1528, %v1526
        %v1567 = vpack.c.bf16 %v1531, %v1529
        %v1568 = vpack.c.bf16 %v1532, %v1530
        %v1569 = vpack.c.bf16 %v1535, %v1533
        %v1570 = vpack.c.bf16 %v1536, %v1534
        %v1571 = vpack.c.bf16 %v1539, %v1537
        %v1572 = vpack.c.bf16 %v1540, %v1538
        %v1573 = vld [vmem:[%s545] sm:$0xff]
        %v1574 = vld [vmem:[%s545 + $0x8] sm:$0xff]
        %v1575 = vld [vmem:[%s545 + $0x10] sm:$0xff]
        %v1576 = vld [vmem:[%s545 + $0x18] sm:$0xff]
        %v1577 = vld [vmem:[%s545 + $0x20] sm:$0xff]
        %v1578 = vld [vmem:[%s545 + $0x28] sm:$0xff]
        %v1579 = vld [vmem:[%s545 + $0x30] sm:$0xff]
        %v1580 = vld [vmem:[%s545 + $0x38] sm:$0xff]
        %v1581 = vld [vmem:[%s545 + $0x40] sm:$0xff]
        %v1582 = vld [vmem:[%s545 + $0x48] sm:$0xff]
        %v1583 = vld [vmem:[%s545 + $0x50] sm:$0xff]
        %v1584 = vld [vmem:[%s545 + $0x58] sm:$0xff]
        %v1585 = vld [vmem:[%s545 + $0x60] sm:$0xff]
        %v1586 = vld [vmem:[%s545 + $0x68] sm:$0xff]
        %v1587 = vld [vmem:[%s545 + $0x70] sm:$0xff]
        %v1588 = vld [vmem:[%s545 + $0x78] sm:$0xff]
        %v1589 = vld [vmem:[%s545 + $0x80] sm:$0xff]
        %v1590 = vld [vmem:[%s545 + $0x88] sm:$0xff]
        %v1591 = vld [vmem:[%s545 + $0x90] sm:$0xff]
        %v1592 = vld [vmem:[%s545 + $0x98] sm:$0xff]
        %v1593 = vld [vmem:[%s545 + $0xa0] sm:$0xff]
        %v1594 = vld [vmem:[%s545 + $0xa8] sm:$0xff]
        %v1595 = vld [vmem:[%s545 + $0xb0] sm:$0xff]
        %v1596 = vld [vmem:[%s545 + $0xb8] sm:$0xff]
        %v1597 = vld [vmem:[%s545 + $0xc0] sm:$0xff]
        %v1598 = vld [vmem:[%s545 + $0xc8] sm:$0xff]
        %v1599 = vld [vmem:[%s545 + $0xd0] sm:$0xff]
        %v1600 = vld [vmem:[%s545 + $0xd8] sm:$0xff]
        %v1601 = vld [vmem:[%s545 + $0xe0] sm:$0xff]
        %v1602 = vld [vmem:[%s545 + $0xe8] sm:$0xff]
        %v1603 = vld [vmem:[%s545 + $0xf0] sm:$0xff]
        %v1604 = vld [vmem:[%s545 + $0xf8] sm:$0xff]
        %v1605 = vld [vmem:[%s545 + $0x100] sm:$0xff]
        %v1606 = vld [vmem:[%s545 + $0x108] sm:$0xff]
        %v1607 = vld [vmem:[%s545 + $0x110] sm:$0xff]
        %v1608 = vld [vmem:[%s545 + $0x118] sm:$0xff]
        %v1609 = vld [vmem:[%s545 + $0x120] sm:$0xff]
        %v1610 = vld [vmem:[%s545 + $0x128] sm:$0xff]
        %v1611 = vld [vmem:[%s545 + $0x130] sm:$0xff]
        %v1612 = vld [vmem:[%s545 + $0x138] sm:$0xff]
        %v1613 = vld [vmem:[%s545 + $0x140] sm:$0xff]
        %v1614 = vld [vmem:[%s545 + $0x148] sm:$0xff]
        %v1615 = vld [vmem:[%s545 + $0x150] sm:$0xff]
        %v1616 = vld [vmem:[%s545 + $0x158] sm:$0xff]
        %v1617 = vld [vmem:[%s545 + $0x160] sm:$0xff]
        %v1618 = vld [vmem:[%s545 + $0x168] sm:$0xff]
        %v1619 = vld [vmem:[%s545 + $0x170] sm:$0xff]
        %v1620 = vld [vmem:[%s545 + $0x178] sm:$0xff]
        %v1621 = vld [vmem:[%s545 + $0x180] sm:$0xff]
        %v1622 = vld [vmem:[%s545 + $0x188] sm:$0xff]
        %v1623 = vld [vmem:[%s545 + $0x190] sm:$0xff]
        %v1624 = vld [vmem:[%s545 + $0x198] sm:$0xff]
        %v1625 = vld [vmem:[%s545 + $0x1a0] sm:$0xff]
        %v1626 = vld [vmem:[%s545 + $0x1a8] sm:$0xff]
        %v1627 = vld [vmem:[%s545 + $0x1b0] sm:$0xff]
        %v1628 = vld [vmem:[%s545 + $0x1b8] sm:$0xff]
        %v1629 = vld [vmem:[%s545 + $0x1c0] sm:$0xff]
        %v1630 = vld [vmem:[%s545 + $0x1c8] sm:$0xff]
        %v1631 = vld [vmem:[%s545 + $0x1d0] sm:$0xff]
        %v1632 = vld [vmem:[%s545 + $0x1d8] sm:$0xff]
        %v1633 = vld [vmem:[%s545 + $0x1e0] sm:$0xff]
        %v1634 = vld [vmem:[%s545 + $0x1e8] sm:$0xff]
        %v1635 = vld [vmem:[%s545 + $0x1f0] sm:$0xff]
        %v1636 = vld [vmem:[%s545 + $0x1f8] sm:$0xff]
        %v1637 = vld [vmem:[%s545 + $0x200] sm:$0xff]
        %v1638 = vld [vmem:[%s545 + $0x208] sm:$0xff]
        %v1639 = vld [vmem:[%s545 + $0x210] sm:$0xff]
        %v1640 = vld [vmem:[%s545 + $0x218] sm:$0xff]
        %v1641 = vld [vmem:[%s545 + $0x220] sm:$0xff]
        %v1642 = vld [vmem:[%s545 + $0x228] sm:$0xff]
        %v1643 = vld [vmem:[%s545 + $0x230] sm:$0xff]
        %v1644 = vld [vmem:[%s545 + $0x238] sm:$0xff]
        %v1645 = vld [vmem:[%s545 + $0x240] sm:$0xff]
        %v1646 = vld [vmem:[%s545 + $0x248] sm:$0xff]
        %v1647 = vld [vmem:[%s545 + $0x250] sm:$0xff]
        %v1648 = vld [vmem:[%s545 + $0x258] sm:$0xff]
        %v1649 = vld [vmem:[%s545 + $0x260] sm:$0xff]
        %v1650 = vld [vmem:[%s545 + $0x268] sm:$0xff]
        %v1651 = vld [vmem:[%s545 + $0x270] sm:$0xff]
        %v1652 = vld [vmem:[%s545 + $0x278] sm:$0xff]
        %v1653 = vld [vmem:[%s545 + $0x280] sm:$0xff]
        %v1654 = vld [vmem:[%s545 + $0x288] sm:$0xff]
        %v1655 = vld [vmem:[%s545 + $0x290] sm:$0xff]
        %v1656 = vld [vmem:[%s545 + $0x298] sm:$0xff]
        %v1657 = vld [vmem:[%s545 + $0x2a0] sm:$0xff]
        %v1658 = vld [vmem:[%s545 + $0x2a8] sm:$0xff]
        %v1659 = vld [vmem:[%s545 + $0x2b0] sm:$0xff]
        %v1660 = vld [vmem:[%s545 + $0x2b8] sm:$0xff]
        %v1661 = vld [vmem:[%s545 + $0x2c0] sm:$0xff]
        %v1662 = vld [vmem:[%s545 + $0x2c8] sm:$0xff]
        %v1663 = vld [vmem:[%s545 + $0x2d0] sm:$0xff]
        %v1664 = vld [vmem:[%s545 + $0x2d8] sm:$0xff]
        %v1665 = vld [vmem:[%s545 + $0x2e0] sm:$0xff]
        %v1666 = vld [vmem:[%s545 + $0x2e8] sm:$0xff]
        %v1667 = vld [vmem:[%s545 + $0x2f0] sm:$0xff]
        %v1668 = vld [vmem:[%s545 + $0x2f8] sm:$0xff]
        %v1669 = vld [vmem:[%s554] sm:$0x3f]
        %v1671 = vlaneseq
        %v1672 = vshrl.u32 %v1671, 7
        %v1673 = vsub.s32 0, %v1672
        %v1674 = vrot.slane %v1669, %v1673
        %v1675 = vlaneseq
        %v1676 = vshrl.u32 %v1675, 7
        %v1677 = vsub.s32 1, %v1676
        %v1678 = vrot.slane %v1669, %v1677
        %v1679 = vlaneseq
        %v1680 = vshrl.u32 %v1679, 7
        %v1681 = vsub.s32 2, %v1680
        %v1682 = vrot.slane %v1669, %v1681
        %v1683 = vlaneseq
        %v1684 = vshrl.u32 %v1683, 7
        %v1685 = vsub.s32 3, %v1684
        %v1686 = vrot.slane %v1669, %v1685
        %v1687 = vlaneseq
        %v1688 = vshrl.u32 %v1687, 7
        %v1689 = vsub.s32 4, %v1688
        %v1690 = vrot.slane %v1669, %v1689
        %v1691 = vlaneseq
        %v1692 = vshrl.u32 %v1691, 7
        %v1693 = vsub.s32 5, %v1692
        %v1694 = vrot.slane %v1669, %v1693
        %v1797 = vunpack.c.l.b16 %v1573
        %v1798 = vunpack.c.h.b16 %v1573
        %v1799 = vunpack.c.l.b16 %v1574
        %v1800 = vunpack.c.h.b16 %v1574
        %v1801 = vunpack.c.l.b16 %v1575
        %v1802 = vunpack.c.h.b16 %v1575
        %v1803 = vunpack.c.l.b16 %v1576
        %v1804 = vunpack.c.h.b16 %v1576
        %v1805 = vunpack.c.l.b16 %v1577
        %v1806 = vunpack.c.h.b16 %v1577
        %v1807 = vunpack.c.l.b16 %v1578
        %v1808 = vunpack.c.h.b16 %v1578
        %v1809 = vunpack.c.l.b16 %v1579
        %v1810 = vunpack.c.h.b16 %v1579
        %v1811 = vunpack.c.l.b16 %v1580
        %v1812 = vunpack.c.h.b16 %v1580
        %v1813 = vunpack.c.l.b16 %v1581
        %v1814 = vunpack.c.h.b16 %v1581
        %v1815 = vunpack.c.l.b16 %v1582
        %v1816 = vunpack.c.h.b16 %v1582
        %v1817 = vunpack.c.l.b16 %v1583
        %v1818 = vunpack.c.h.b16 %v1583
        %v1819 = vunpack.c.l.b16 %v1584
        %v1820 = vunpack.c.h.b16 %v1584
        %v1821 = vunpack.c.l.b16 %v1585
        %v1822 = vunpack.c.h.b16 %v1585
        %v1823 = vunpack.c.l.b16 %v1586
        %v1824 = vunpack.c.h.b16 %v1586
        %v1825 = vunpack.c.l.b16 %v1587
        %v1826 = vunpack.c.h.b16 %v1587
        %v1827 = vunpack.c.l.b16 %v1588
        %v1828 = vunpack.c.h.b16 %v1588
        %v1829 = vunpack.c.l.b16 %v1589
        %v1830 = vunpack.c.h.b16 %v1589
        %v1831 = vunpack.c.l.b16 %v1590
        %v1832 = vunpack.c.h.b16 %v1590
        %v1833 = vunpack.c.l.b16 %v1591
        %v1834 = vunpack.c.h.b16 %v1591
        %v1835 = vunpack.c.l.b16 %v1592
        %v1836 = vunpack.c.h.b16 %v1592
        %v1837 = vunpack.c.l.b16 %v1593
        %v1838 = vunpack.c.h.b16 %v1593
        %v1839 = vunpack.c.l.b16 %v1594
        %v1840 = vunpack.c.h.b16 %v1594
        %v1841 = vunpack.c.l.b16 %v1595
        %v1842 = vunpack.c.h.b16 %v1595
        %v1843 = vunpack.c.l.b16 %v1596
        %v1844 = vunpack.c.h.b16 %v1596
        %v1845 = vunpack.c.l.b16 %v1597
        %v1846 = vunpack.c.h.b16 %v1597
        %v1847 = vunpack.c.l.b16 %v1598
        %v1848 = vunpack.c.h.b16 %v1598
        %v1849 = vunpack.c.l.b16 %v1599
        %v1850 = vunpack.c.h.b16 %v1599
        %v1851 = vunpack.c.l.b16 %v1600
        %v1852 = vunpack.c.h.b16 %v1600
        %v1853 = vunpack.c.l.b16 %v1601
        %v1854 = vunpack.c.h.b16 %v1601
        %v1855 = vunpack.c.l.b16 %v1602
        %v1856 = vunpack.c.h.b16 %v1602
        %v1857 = vunpack.c.l.b16 %v1603
        %v1858 = vunpack.c.h.b16 %v1603
        %v1859 = vunpack.c.l.b16 %v1604
        %v1860 = vunpack.c.h.b16 %v1604
        %v1861 = vunpack.c.l.b16 %v1605
        %v1862 = vunpack.c.h.b16 %v1605
        %v1863 = vunpack.c.l.b16 %v1606
        %v1864 = vunpack.c.h.b16 %v1606
        %v1865 = vunpack.c.l.b16 %v1607
        %v1866 = vunpack.c.h.b16 %v1607
        %v1867 = vunpack.c.l.b16 %v1608
        %v1868 = vunpack.c.h.b16 %v1608
        %v1869 = vunpack.c.l.b16 %v1609
        %v1870 = vunpack.c.h.b16 %v1609
        %v1871 = vunpack.c.l.b16 %v1610
        %v1872 = vunpack.c.h.b16 %v1610
        %v1873 = vunpack.c.l.b16 %v1611
        %v1874 = vunpack.c.h.b16 %v1611
        %v1875 = vunpack.c.l.b16 %v1612
        %v1876 = vunpack.c.h.b16 %v1612
        %v1877 = vunpack.c.l.b16 %v1613
        %v1878 = vunpack.c.h.b16 %v1613
        %v1879 = vunpack.c.l.b16 %v1614
        %v1880 = vunpack.c.h.b16 %v1614
        %v1881 = vunpack.c.l.b16 %v1615
        %v1882 = vunpack.c.h.b16 %v1615
        %v1883 = vunpack.c.l.b16 %v1616
        %v1884 = vunpack.c.h.b16 %v1616
        %v1885 = vunpack.c.l.b16 %v1617
        %v1886 = vunpack.c.h.b16 %v1617
        %v1887 = vunpack.c.l.b16 %v1618
        %v1888 = vunpack.c.h.b16 %v1618
        %v1889 = vunpack.c.l.b16 %v1619
        %v1890 = vunpack.c.h.b16 %v1619
        %v1891 = vunpack.c.l.b16 %v1620
        %v1892 = vunpack.c.h.b16 %v1620
        %v1893 = vunpack.c.l.b16 %v1621
        %v1894 = vunpack.c.h.b16 %v1621
        %v1895 = vunpack.c.l.b16 %v1622
        %v1896 = vunpack.c.h.b16 %v1622
        %v1897 = vunpack.c.l.b16 %v1623
        %v1898 = vunpack.c.h.b16 %v1623
        %v1899 = vunpack.c.l.b16 %v1624
        %v1900 = vunpack.c.h.b16 %v1624
        %v1901 = vunpack.c.l.b16 %v1625
        %v1902 = vunpack.c.h.b16 %v1625
        %v1903 = vunpack.c.l.b16 %v1626
        %v1904 = vunpack.c.h.b16 %v1626
        %v1905 = vunpack.c.l.b16 %v1627
        %v1906 = vunpack.c.h.b16 %v1627
        %v1907 = vunpack.c.l.b16 %v1628
        %v1908 = vunpack.c.h.b16 %v1628
        %v1909 = vunpack.c.l.b16 %v1629
        %v1910 = vunpack.c.h.b16 %v1629
        %v1911 = vunpack.c.l.b16 %v1630
        %v1912 = vunpack.c.h.b16 %v1630
        %v1913 = vunpack.c.l.b16 %v1631
        %v1914 = vunpack.c.h.b16 %v1631
        %v1915 = vunpack.c.l.b16 %v1632
        %v1916 = vunpack.c.h.b16 %v1632
        %v1917 = vunpack.c.l.b16 %v1633
        %v1918 = vunpack.c.h.b16 %v1633
        %v1919 = vunpack.c.l.b16 %v1634
        %v1920 = vunpack.c.h.b16 %v1634
        %v1921 = vunpack.c.l.b16 %v1635
        %v1922 = vunpack.c.h.b16 %v1635
        %v1923 = vunpack.c.l.b16 %v1636
        %v1924 = vunpack.c.h.b16 %v1636
        %v1925 = vunpack.c.l.b16 %v1637
        %v1926 = vunpack.c.h.b16 %v1637
        %v1927 = vunpack.c.l.b16 %v1638
        %v1928 = vunpack.c.h.b16 %v1638
        %v1929 = vunpack.c.l.b16 %v1639
        %v1930 = vunpack.c.h.b16 %v1639
        %v1931 = vunpack.c.l.b16 %v1640
        %v1932 = vunpack.c.h.b16 %v1640
        %v1933 = vunpack.c.l.b16 %v1641
        %v1934 = vunpack.c.h.b16 %v1641
        %v1935 = vunpack.c.l.b16 %v1642
        %v1936 = vunpack.c.h.b16 %v1642
        %v1937 = vunpack.c.l.b16 %v1643
        %v1938 = vunpack.c.h.b16 %v1643
        %v1939 = vunpack.c.l.b16 %v1644
        %v1940 = vunpack.c.h.b16 %v1644
        %v1941 = vunpack.c.l.b16 %v1645
        %v1942 = vunpack.c.h.b16 %v1645
        %v1943 = vunpack.c.l.b16 %v1646
        %v1944 = vunpack.c.h.b16 %v1646
        %v1945 = vunpack.c.l.b16 %v1647
        %v1946 = vunpack.c.h.b16 %v1647
        %v1947 = vunpack.c.l.b16 %v1648
        %v1948 = vunpack.c.h.b16 %v1648
        %v1949 = vunpack.c.l.b16 %v1649
        %v1950 = vunpack.c.h.b16 %v1649
        %v1951 = vunpack.c.l.b16 %v1650
        %v1952 = vunpack.c.h.b16 %v1650
        %v1953 = vunpack.c.l.b16 %v1651
        %v1954 = vunpack.c.h.b16 %v1651
        %v1955 = vunpack.c.l.b16 %v1652
        %v1956 = vunpack.c.h.b16 %v1652
        %v1957 = vunpack.c.l.b16 %v1653
        %v1958 = vunpack.c.h.b16 %v1653
        %v1959 = vunpack.c.l.b16 %v1654
        %v1960 = vunpack.c.h.b16 %v1654
        %v1961 = vunpack.c.l.b16 %v1655
        %v1962 = vunpack.c.h.b16 %v1655
        %v1963 = vunpack.c.l.b16 %v1656
        %v1964 = vunpack.c.h.b16 %v1656
        %v1965 = vunpack.c.l.b16 %v1657
        %v1966 = vunpack.c.h.b16 %v1657
        %v1967 = vunpack.c.l.b16 %v1658
        %v1968 = vunpack.c.h.b16 %v1658
        %v1969 = vunpack.c.l.b16 %v1659
        %v1970 = vunpack.c.h.b16 %v1659
        %v1971 = vunpack.c.l.b16 %v1660
        %v1972 = vunpack.c.h.b16 %v1660
        %v1973 = vunpack.c.l.b16 %v1661
        %v1974 = vunpack.c.h.b16 %v1661
        %v1975 = vunpack.c.l.b16 %v1662
        %v1976 = vunpack.c.h.b16 %v1662
        %v1977 = vunpack.c.l.b16 %v1663
        %v1978 = vunpack.c.h.b16 %v1663
        %v1979 = vunpack.c.l.b16 %v1664
        %v1980 = vunpack.c.h.b16 %v1664
        %v1981 = vunpack.c.l.b16 %v1665
        %v1982 = vunpack.c.h.b16 %v1665
        %v1983 = vunpack.c.l.b16 %v1666
        %v1984 = vunpack.c.h.b16 %v1666
        %v1985 = vunpack.c.l.b16 %v1667
        %v1986 = vunpack.c.h.b16 %v1667
        %v1987 = vunpack.c.l.b16 %v1668
        %v1988 = vunpack.c.h.b16 %v1668
        %v1989 = vpack.c.b16 %v1803, %v1797
        %v1990 = vpack.c.b16 %v1804, %v1798
        %v1991 = vpack.c.b16 %v1805, %v1799
        %v1992 = vpack.c.b16 %v1806, %v1800
        %v1993 = vpack.c.b16 %v1807, %v1801
        %v1994 = vpack.c.b16 %v1808, %v1802
        %v1995 = vpack.c.b16 %v1815, %v1809
        %v1996 = vpack.c.b16 %v1816, %v1810
        %v1997 = vpack.c.b16 %v1817, %v1811
        %v1998 = vpack.c.b16 %v1818, %v1812
        %v1999 = vpack.c.b16 %v1819, %v1813
        %v2000 = vpack.c.b16 %v1820, %v1814
        %v2001 = vpack.c.b16 %v1827, %v1821
        %v2002 = vpack.c.b16 %v1828, %v1822
        %v2003 = vpack.c.b16 %v1829, %v1823
        %v2004 = vpack.c.b16 %v1830, %v1824
        %v2005 = vpack.c.b16 %v1831, %v1825
        %v2006 = vpack.c.b16 %v1832, %v1826
        %v2007 = vpack.c.b16 %v1839, %v1833
        %v2008 = vpack.c.b16 %v1840, %v1834
        %v2009 = vpack.c.b16 %v1841, %v1835
        %v2010 = vpack.c.b16 %v1842, %v1836
        %v2011 = vpack.c.b16 %v1843, %v1837
        %v2012 = vpack.c.b16 %v1844, %v1838
        %v2013 = vpack.c.b16 %v1851, %v1845
        %v2014 = vpack.c.b16 %v1852, %v1846
        %v2015 = vpack.c.b16 %v1853, %v1847
        %v2016 = vpack.c.b16 %v1854, %v1848
        %v2017 = vpack.c.b16 %v1855, %v1849
        %v2018 = vpack.c.b16 %v1856, %v1850
        %v2019 = vpack.c.b16 %v1863, %v1857
        %v2020 = vpack.c.b16 %v1864, %v1858
        %v2021 = vpack.c.b16 %v1865, %v1859
        %v2022 = vpack.c.b16 %v1866, %v1860
        %v2023 = vpack.c.b16 %v1867, %v1861
        %v2024 = vpack.c.b16 %v1868, %v1862
        %v2025 = vpack.c.b16 %v1875, %v1869
        %v2026 = vpack.c.b16 %v1876, %v1870
        %v2027 = vpack.c.b16 %v1877, %v1871
        %v2028 = vpack.c.b16 %v1878, %v1872
        %v2029 = vpack.c.b16 %v1879, %v1873
        %v2030 = vpack.c.b16 %v1880, %v1874
        %v2031 = vpack.c.b16 %v1887, %v1881
        %v2032 = vpack.c.b16 %v1888, %v1882
        %v2033 = vpack.c.b16 %v1889, %v1883
        %v2034 = vpack.c.b16 %v1890, %v1884
        %v2035 = vpack.c.b16 %v1891, %v1885
        %v2036 = vpack.c.b16 %v1892, %v1886
        %v2037 = vpack.c.b16 %v1899, %v1893
        %v2038 = vpack.c.b16 %v1900, %v1894
        %v2039 = vpack.c.b16 %v1901, %v1895
        %v2040 = vpack.c.b16 %v1902, %v1896
        %v2041 = vpack.c.b16 %v1903, %v1897
        %v2042 = vpack.c.b16 %v1904, %v1898
        %v2043 = vpack.c.b16 %v1911, %v1905
        %v2044 = vpack.c.b16 %v1912, %v1906
        %v2045 = vpack.c.b16 %v1913, %v1907
        %v2046 = vpack.c.b16 %v1914, %v1908
        %v2047 = vpack.c.b16 %v1915, %v1909
        %v2048 = vpack.c.b16 %v1916, %v1910
        %v2049 = vpack.c.b16 %v1923, %v1917
        %v2050 = vpack.c.b16 %v1924, %v1918
        %v2051 = vpack.c.b16 %v1925, %v1919
        %v2052 = vpack.c.b16 %v1926, %v1920
        %v2053 = vpack.c.b16 %v1927, %v1921
        %v2054 = vpack.c.b16 %v1928, %v1922
        %v2055 = vpack.c.b16 %v1935, %v1929
        %v2056 = vpack.c.b16 %v1936, %v1930
        %v2057 = vpack.c.b16 %v1937, %v1931
        %v2058 = vpack.c.b16 %v1938, %v1932
        %v2059 = vpack.c.b16 %v1939, %v1933
        %v2060 = vpack.c.b16 %v1940, %v1934
        %v2061 = vpack.c.b16 %v1947, %v1941
        %v2062 = vpack.c.b16 %v1948, %v1942
        %v2063 = vpack.c.b16 %v1949, %v1943
        %v2064 = vpack.c.b16 %v1950, %v1944
        %v2065 = vpack.c.b16 %v1951, %v1945
        %v2066 = vpack.c.b16 %v1952, %v1946
        %v2067 = vpack.c.b16 %v1959, %v1953
        %v2068 = vpack.c.b16 %v1960, %v1954
        %v2069 = vpack.c.b16 %v1961, %v1955
        %v2070 = vpack.c.b16 %v1962, %v1956
        %v2071 = vpack.c.b16 %v1963, %v1957
        %v2072 = vpack.c.b16 %v1964, %v1958
        %v2073 = vpack.c.b16 %v1971, %v1965
        %v2074 = vpack.c.b16 %v1972, %v1966
        %v2075 = vpack.c.b16 %v1973, %v1967
        %v2076 = vpack.c.b16 %v1974, %v1968
        %v2077 = vpack.c.b16 %v1975, %v1969
        %v2078 = vpack.c.b16 %v1976, %v1970
        %v2079 = vpack.c.b16 %v1983, %v1977
        %v2080 = vpack.c.b16 %v1984, %v1978
        %v2081 = vpack.c.b16 %v1985, %v1979
        %v2082 = vpack.c.b16 %v1986, %v1980
        %v2083 = vpack.c.b16 %v1987, %v1981
        %v2084 = vpack.c.b16 %v1988, %v1982
        %2181 = vmatprep.subr.bf16.mxu0 %v1990
        %2182 = vmatpush1.bf16.msra.mxu0 %v1989
        %2183 = vmatprep.subr.bf16.mxu0 %v1996
        %2184 = vmatpush1.bf16.msra.mxu0 %v1995
        %2185 = vmatprep.subr.bf16.mxu0 %v2002
        %2186 = vmatpush1.bf16.msra.mxu0 %v2001
        %2187 = vmatprep.subr.bf16.mxu0 %v2008
        %2188 = vmatpush1.bf16.msra.mxu0 %v2007
        %2189 = vmatprep.subr.bf16.mxu0 %v2014
        %2190 = vmatpush1.bf16.msra.mxu0 %v2013
        %2191 = vmatprep.subr.bf16.mxu0 %v2020
        %2192 = vmatpush1.bf16.msra.mxu0 %v2019
        %2193 = vmatprep.subr.bf16.mxu0 %v2026
        %2194 = vmatpush1.bf16.msra.mxu0 %v2025
        %2195 = vmatprep.subr.bf16.mxu0 %v2032
        %2196 = vmatpush1.bf16.msra.mxu0 %v2031
        %2197 = vmatprep.subr.bf16.mxu0 %v2038
        %2198 = vmatpush1.bf16.msra.mxu0 %v2037
        %2199 = vmatprep.subr.bf16.mxu0 %v2044
        %2200 = vmatpush1.bf16.msra.mxu0 %v2043
        %2201 = vmatprep.subr.bf16.mxu0 %v2050
        %2202 = vmatpush1.bf16.msra.mxu0 %v2049
        %2203 = vmatprep.subr.bf16.mxu0 %v2056
        %2204 = vmatpush1.bf16.msra.mxu0 %v2055
        %2205 = vmatprep.subr.bf16.mxu0 %v2062
        %2206 = vmatpush1.bf16.msra.mxu0 %v2061
        %2207 = vmatprep.subr.bf16.mxu0 %v2068
        %2208 = vmatpush1.bf16.msra.mxu0 %v2067
        %2209 = vmatprep.subr.bf16.mxu0 %v2074
        %2210 = vmatpush1.bf16.msra.mxu0 %v2073
        %2211 = vmatprep.subr.bf16.mxu0 %v2080
        %2212 = vmatpush1.bf16.msra.mxu0 %v2079
        %2213 = vmatprep.mubr.bf16.mxu0 %v1542
        %2214 = vmatmul.mubr.bf16.gmra.mrb[0].mxu0 %v1541
        %v2215 = vpop.f32.mrb[0].mxu0
        %v2216 = vadd.f32 %v1674, %v2215
        %v2217 = vpop.f32.mrb[0].mxu0
        %v2218 = vadd.f32 %v1678, %v2217
        %v2219 = vpop.f32.mrb[0].mxu0
        %v2220 = vadd.f32 %v1674, %v2219
        %v2221 = vpop.f32.mrb[0].mxu0
        %v2222 = vadd.f32 %v1678, %v2221
        %2223 = vmatprep.mubr.bf16.mxu0 %v1544
        %2224 = vmatmul.mubr.bf16.gmra.mrb[0].mxu0 %v1543
        %v2225 = vpop.f32.mrb[0].mxu0
        %v2226 = vadd.f32 %v1674, %v2225
        %v2227 = vpop.f32.mrb[0].mxu0
        %v2228 = vadd.f32 %v1678, %v2227
        %v2229 = vpop.f32.mrb[0].mxu0
        %v2230 = vadd.f32 %v1674, %v2229
        %v2231 = vpop.f32.mrb[0].mxu0
        %v2232 = vadd.f32 %v1678, %v2231
        %2233 = vmatprep.mubr.bf16.mxu0 %v1546
        %2234 = vmatmul.mubr.bf16.gmra.mrb[0].mxu0 %v1545
        %v2235 = vpop.f32.mrb[0].mxu0
        %v2236 = vadd.f32 %v1674, %v2235
        %v2237 = vpop.f32.mrb[0].mxu0
        %v2238 = vadd.f32 %v1678, %v2237
        %v2239 = vpop.f32.mrb[0].mxu0
        %v2240 = vadd.f32 %v1674, %v2239
        %v2241 = vpop.f32.mrb[0].mxu0
        %v2242 = vadd.f32 %v1678, %v2241
        %2243 = vmatprep.mubr.bf16.mxu0 %v1548
        %2244 = vmatmul.mubr.bf16.gmra.mrb[0].mxu0 %v1547
        %v2245 = vpop.f32.mrb[0].mxu0
        %v2246 = vadd.f32 %v1674, %v2245
        %v2247 = vpop.f32.mrb[0].mxu0
        %v2248 = vadd.f32 %v1678, %v2247
        %v2249 = vpop.f32.mrb[0].mxu0
        %v2250 = vadd.f32 %v1674, %v2249
        %v2251 = vpop.f32.mrb[0].mxu0
        %v2252 = vadd.f32 %v1678, %v2251
        %2253 = vmatprep.mubr.bf16.mxu0 %v1550
        %2254 = vmatmul.mubr.bf16.gmra.mrb[0].mxu0 %v1549
        %v2255 = vpop.f32.mrb[0].mxu0
        %v2256 = vadd.f32 %v1674, %v2255
        %v2257 = vpop.f32.mrb[0].mxu0
        %v2258 = vadd.f32 %v1678, %v2257
        %v2259 = vpop.f32.mrb[0].mxu0
        %v2260 = vadd.f32 %v1674, %v2259
        %v2261 = vpop.f32.mrb[0].mxu0
        %v2262 = vadd.f32 %v1678, %v2261
        %2263 = vmatprep.mubr.bf16.mxu0 %v1552
        %2264 = vmatmul.mubr.bf16.gmra.mrb[0].mxu0 %v1551
        %v2265 = vpop.f32.mrb[0].mxu0
        %v2266 = vadd.f32 %v1674, %v2265
        %v2267 = vpop.f32.mrb[0].mxu0
        %v2268 = vadd.f32 %v1678, %v2267
        %v2269 = vpop.f32.mrb[0].mxu0
        %v2270 = vadd.f32 %v1674, %v2269
        %v2271 = vpop.f32.mrb[0].mxu0
        %v2272 = vadd.f32 %v1678, %v2271
        %2273 = vmatprep.mubr.bf16.mxu0 %v1554
        %2274 = vmatmul.mubr.bf16.gmra.mrb[0].mxu0 %v1553
        %v2275 = vpop.f32.mrb[0].mxu0
        %v2276 = vadd.f32 %v1674, %v2275
        %v2277 = vpop.f32.mrb[0].mxu0
        %v2278 = vadd.f32 %v1678, %v2277
        %v2279 = vpop.f32.mrb[0].mxu0
        %v2280 = vadd.f32 %v1674, %v2279
        %v2281 = vpop.f32.mrb[0].mxu0
        %v2282 = vadd.f32 %v1678, %v2281
        %2283 = vmatprep.mubr.bf16.mxu0 %v1556
        %2284 = vmatmul.mubr.bf16.gmra.mrb[0].mxu0 %v1555
        %v2285 = vpop.f32.mrb[0].mxu0
        %v2286 = vadd.f32 %v1674, %v2285
        %v2287 = vpop.f32.mrb[0].mxu0
        %v2288 = vadd.f32 %v1678, %v2287
        %v2289 = vpop.f32.mrb[0].mxu0
        %v2290 = vadd.f32 %v1674, %v2289
        %v2291 = vpop.f32.mrb[0].mxu0
        %v2292 = vadd.f32 %v1678, %v2291
        %2293 = vmatprep.mubr.bf16.mxu0 %v1558
        %2294 = vmatmul.mubr.bf16.gmra.mrb[0].mxu0 %v1557
        %v2295 = vpop.f32.mrb[0].mxu0
        %v2296 = vadd.f32 %v1674, %v2295
        %v2297 = vpop.f32.mrb[0].mxu0
        %v2298 = vadd.f32 %v1678, %v2297
        %v2299 = vpop.f32.mrb[0].mxu0
        %v2300 = vadd.f32 %v1674, %v2299
        %v2301 = vpop.f32.mrb[0].mxu0
        %v2302 = vadd.f32 %v1678, %v2301
        %2303 = vmatprep.mubr.bf16.mxu0 %v1560
        %2304 = vmatmul.mubr.bf16.gmra.mrb[0].mxu0 %v1559
        %v2305 = vpop.f32.mrb[0].mxu0
        %v2306 = vadd.f32 %v1674, %v2305
        %v2307 = vpop.f32.mrb[0].mxu0
        %v2308 = vadd.f32 %v1678, %v2307
        %v2309 = vpop.f32.mrb[0].mxu0
        %v2310 = vadd.f32 %v1674, %v2309
        %v2311 = vpop.f32.mrb[0].mxu0
        %v2312 = vadd.f32 %v1678, %v2311
        %2313 = vmatprep.mubr.bf16.mxu0 %v1562
        %2314 = vmatmul.mubr.bf16.gmra.mrb[0].mxu0 %v1561
        %v2315 = vpop.f32.mrb[0].mxu0
        %v2316 = vadd.f32 %v1674, %v2315
        %v2317 = vpop.f32.mrb[0].mxu0
        %v2318 = vadd.f32 %v1678, %v2317
        %v2319 = vpop.f32.mrb[0].mxu0
        %v2320 = vadd.f32 %v1674, %v2319
        %v2321 = vpop.f32.mrb[0].mxu0
        %v2322 = vadd.f32 %v1678, %v2321
        %2323 = vmatprep.mubr.bf16.mxu0 %v1564
        %2324 = vmatmul.mubr.bf16.gmra.mrb[0].mxu0 %v1563
        %v2325 = vpop.f32.mrb[0].mxu0
        %v2326 = vadd.f32 %v1674, %v2325
        %v2327 = vpop.f32.mrb[0].mxu0
        %v2328 = vadd.f32 %v1678, %v2327
        %v2329 = vpop.f32.mrb[0].mxu0
        %v2330 = vadd.f32 %v1674, %v2329
        %v2331 = vpop.f32.mrb[0].mxu0
        %v2332 = vadd.f32 %v1678, %v2331
        %2333 = vmatprep.mubr.bf16.mxu0 %v1566
        %2334 = vmatmul.mubr.bf16.gmra.mrb[0].mxu0 %v1565
        %v2335 = vpop.f32.mrb[0].mxu0
        %v2336 = vadd.f32 %v1674, %v2335
        %v2337 = vpop.f32.mrb[0].mxu0
        %v2338 = vadd.f32 %v1678, %v2337
        %v2339 = vpop.f32.mrb[0].mxu0
        %v2340 = vadd.f32 %v1674, %v2339
        %v2341 = vpop.f32.mrb[0].mxu0
        %v2342 = vadd.f32 %v1678, %v2341
        %2343 = vmatprep.mubr.bf16.mxu0 %v1568
        %2344 = vmatmul.mubr.bf16.gmra.mrb[0].mxu0 %v1567
        %v2345 = vpop.f32.mrb[0].mxu0
        %v2346 = vadd.f32 %v1674, %v2345
        %v2347 = vpop.f32.mrb[0].mxu0
        %v2348 = vadd.f32 %v1678, %v2347
        %v2349 = vpop.f32.mrb[0].mxu0
        %v2350 = vadd.f32 %v1674, %v2349
        %v2351 = vpop.f32.mrb[0].mxu0
        %v2352 = vadd.f32 %v1678, %v2351
        %2353 = vmatprep.mubr.bf16.mxu0 %v1570
        %2354 = vmatmul.mubr.bf16.gmra.mrb[0].mxu0 %v1569
        %v2355 = vpop.f32.mrb[0].mxu0
        %v2356 = vadd.f32 %v1674, %v2355
        %v2357 = vpop.f32.mrb[0].mxu0
        %v2358 = vadd.f32 %v1678, %v2357
        %v2359 = vpop.f32.mrb[0].mxu0
        %v2360 = vadd.f32 %v1674, %v2359
        %v2361 = vpop.f32.mrb[0].mxu0
        %v2362 = vadd.f32 %v1678, %v2361
        %2363 = vmatprep.mubr.bf16.mxu0 %v1572
        %2364 = vmatmul.mubr.bf16.gmra.mrb[0].mxu0 %v1571
        %v2365 = vpop.f32.mrb[0].mxu0
        %v2366 = vadd.f32 %v1674, %v2365
        %v2367 = vpop.f32.mrb[0].mxu0
        %v2368 = vadd.f32 %v1678, %v2367
        %v2369 = vpop.f32.mrb[0].mxu0
        %v2370 = vadd.f32 %v1674, %v2369
        %v2371 = vpop.f32.mrb[0].mxu0
        %v2372 = vadd.f32 %v1678, %v2371
        %2373 = vdwg.mxu0
        %2374 = vmatprep.subr.bf16.mxu0 %v1992
        %2375 = vmatpush1.bf16.msra.mxu0 %v1991
        %2376 = vmatprep.subr.bf16.mxu0 %v1998
        %2377 = vmatpush1.bf16.msra.mxu0 %v1997
        %2378 = vmatprep.subr.bf16.mxu0 %v2004
        %2379 = vmatpush1.bf16.msra.mxu0 %v2003
        %2380 = vmatprep.subr.bf16.mxu0 %v2010
        %2381 = vmatpush1.bf16.msra.mxu0 %v2009
        %2382 = vmatprep.subr.bf16.mxu0 %v2016
        %2383 = vmatpush1.bf16.msra.mxu0 %v2015
        %2384 = vmatprep.subr.bf16.mxu0 %v2022
        %2385 = vmatpush1.bf16.msra.mxu0 %v2021
        %2386 = vmatprep.subr.bf16.mxu0 %v2028
        %2387 = vmatpush1.bf16.msra.mxu0 %v2027
        %2388 = vmatprep.subr.bf16.mxu0 %v2034
        %2389 = vmatpush1.bf16.msra.mxu0 %v2033
        %2390 = vmatprep.subr.bf16.mxu0 %v2040
        %2391 = vmatpush1.bf16.msra.mxu0 %v2039
        %2392 = vmatprep.subr.bf16.mxu0 %v2046
        %2393 = vmatpush1.bf16.msra.mxu0 %v2045
        %2394 = vmatprep.subr.bf16.mxu0 %v2052
        %2395 = vmatpush1.bf16.msra.mxu0 %v2051
        %2396 = vmatprep.subr.bf16.mxu0 %v2058
        %2397 = vmatpush1.bf16.msra.mxu0 %v2057
        %2398 = vmatprep.subr.bf16.mxu0 %v2064
        %2399 = vmatpush1.bf16.msra.mxu0 %v2063
        %2400 = vmatprep.subr.bf16.mxu0 %v2070
        %2401 = vmatpush1.bf16.msra.mxu0 %v2069
        %2402 = vmatprep.subr.bf16.mxu0 %v2076
        %2403 = vmatpush1.bf16.msra.mxu0 %v2075
        %2404 = vmatprep.subr.bf16.mxu0 %v2082
        %2405 = vmatpush1.bf16.msra.mxu0 %v2081
        %2406 = vmatprep.mubr.bf16.mxu0 %v1542
        %2407 = vmatmul.mubr.bf16.gmra.mrb[0].mxu0 %v1541
        %v2408 = vpop.f32.mrb[0].mxu0
        %v2409 = vadd.f32 %v1682, %v2408
        %v2410 = vpop.f32.mrb[0].mxu0
        %v2411 = vadd.f32 %v1686, %v2410
        %v2412 = vpop.f32.mrb[0].mxu0
        %v2413 = vadd.f32 %v1682, %v2412
        %v2414 = vpop.f32.mrb[0].mxu0
        %v2415 = vadd.f32 %v1686, %v2414
        %2416 = vmatprep.mubr.bf16.mxu0 %v1544
        %2417 = vmatmul.mubr.bf16.gmra.mrb[0].mxu0 %v1543
        %v2418 = vpop.f32.mrb[0].mxu0
        %v2419 = vadd.f32 %v1682, %v2418
        %v2420 = vpop.f32.mrb[0].mxu0
        %v2421 = vadd.f32 %v1686, %v2420
        %v2422 = vpop.f32.mrb[0].mxu0
        %v2423 = vadd.f32 %v1682, %v2422
        %v2424 = vpop.f32.mrb[0].mxu0
        %v2425 = vadd.f32 %v1686, %v2424
        %2426 = vmatprep.mubr.bf16.mxu0 %v1546
        %2427 = vmatmul.mubr.bf16.gmra.mrb[0].mxu0 %v1545
        %v2428 = vpop.f32.mrb[0].mxu0
        %v2429 = vadd.f32 %v1682, %v2428
        %v2430 = vpop.f32.mrb[0].mxu0
        %v2431 = vadd.f32 %v1686, %v2430
        %v2432 = vpop.f32.mrb[0].mxu0
        %v2433 = vadd.f32 %v1682, %v2432
        %v2434 = vpop.f32.mrb[0].mxu0
        %v2435 = vadd.f32 %v1686, %v2434
        %2436 = vmatprep.mubr.bf16.mxu0 %v1548
        %2437 = vmatmul.mubr.bf16.gmra.mrb[0].mxu0 %v1547
        %v2438 = vpop.f32.mrb[0].mxu0
        %v2439 = vadd.f32 %v1682, %v2438
        %v2440 = vpop.f32.mrb[0].mxu0
        %v2441 = vadd.f32 %v1686, %v2440
        %v2442 = vpop.f32.mrb[0].mxu0
        %v2443 = vadd.f32 %v1682, %v2442
        %v2444 = vpop.f32.mrb[0].mxu0
        %v2445 = vadd.f32 %v1686, %v2444
        %2446 = vmatprep.mubr.bf16.mxu0 %v1550
        %2447 = vmatmul.mubr.bf16.gmra.mrb[0].mxu0 %v1549
        %v2448 = vpop.f32.mrb[0].mxu0
        %v2449 = vadd.f32 %v1682, %v2448
        %v2450 = vpop.f32.mrb[0].mxu0
        %v2451 = vadd.f32 %v1686, %v2450
        %v2452 = vpop.f32.mrb[0].mxu0
        %v2453 = vadd.f32 %v1682, %v2452
        %v2454 = vpop.f32.mrb[0].mxu0
        %v2455 = vadd.f32 %v1686, %v2454
        %2456 = vmatprep.mubr.bf16.mxu0 %v1552
        %2457 = vmatmul.mubr.bf16.gmra.mrb[0].mxu0 %v1551
        %v2458 = vpop.f32.mrb[0].mxu0
        %v2459 = vadd.f32 %v1682, %v2458
        %v2460 = vpop.f32.mrb[0].mxu0
        %v2461 = vadd.f32 %v1686, %v2460
        %v2462 = vpop.f32.mrb[0].mxu0
        %v2463 = vadd.f32 %v1682, %v2462
        %v2464 = vpop.f32.mrb[0].mxu0
        %v2465 = vadd.f32 %v1686, %v2464
        %2466 = vmatprep.mubr.bf16.mxu0 %v1554
        %2467 = vmatmul.mubr.bf16.gmra.mrb[0].mxu0 %v1553
        %v2468 = vpop.f32.mrb[0].mxu0
        %v2469 = vadd.f32 %v1682, %v2468
        %v2470 = vpop.f32.mrb[0].mxu0
        %v2471 = vadd.f32 %v1686, %v2470
        %v2472 = vpop.f32.mrb[0].mxu0
        %v2473 = vadd.f32 %v1682, %v2472
        %v2474 = vpop.f32.mrb[0].mxu0
        %v2475 = vadd.f32 %v1686, %v2474
        %2476 = vmatprep.mubr.bf16.mxu0 %v1556
        %2477 = vmatmul.mubr.bf16.gmra.mrb[0].mxu0 %v1555
        %v2478 = vpop.f32.mrb[0].mxu0
        %v2479 = vadd.f32 %v1682, %v2478
        %v2480 = vpop.f32.mrb[0].mxu0
        %v2481 = vadd.f32 %v1686, %v2480
        %v2482 = vpop.f32.mrb[0].mxu0
        %v2483 = vadd.f32 %v1682, %v2482
        %v2484 = vpop.f32.mrb[0].mxu0
        %v2485 = vadd.f32 %v1686, %v2484
        %2486 = vmatprep.mubr.bf16.mxu0 %v1558
        %2487 = vmatmul.mubr.bf16.gmra.mrb[0].mxu0 %v1557
        %v2488 = vpop.f32.mrb[0].mxu0
        %v2489 = vadd.f32 %v1682, %v2488
        %v2490 = vpop.f32.mrb[0].mxu0
        %v2491 = vadd.f32 %v1686, %v2490
        %v2492 = vpop.f32.mrb[0].mxu0
        %v2493 = vadd.f32 %v1682, %v2492
        %v2494 = vpop.f32.mrb[0].mxu0
        %v2495 = vadd.f32 %v1686, %v2494
        %2496 = vmatprep.mubr.bf16.mxu0 %v1560
        %2497 = vmatmul.mubr.bf16.gmra.mrb[0].mxu0 %v1559
        %v2498 = vpop.f32.mrb[0].mxu0
        %v2499 = vadd.f32 %v1682, %v2498
        %v2500 = vpop.f32.mrb[0].mxu0
        %v2501 = vadd.f32 %v1686, %v2500
        %v2502 = vpop.f32.mrb[0].mxu0
        %v2503 = vadd.f32 %v1682, %v2502
        %v2504 = vpop.f32.mrb[0].mxu0
        %v2505 = vadd.f32 %v1686, %v2504
        %2506 = vmatprep.mubr.bf16.mxu0 %v1562
        %2507 = vmatmul.mubr.bf16.gmra.mrb[0].mxu0 %v1561
        %v2508 = vpop.f32.mrb[0].mxu0
        %v2509 = vadd.f32 %v1682, %v2508
        %v2510 = vpop.f32.mrb[0].mxu0
        %v2511 = vadd.f32 %v1686, %v2510
        %v2512 = vpop.f32.mrb[0].mxu0
        %v2513 = vadd.f32 %v1682, %v2512
        %v2514 = vpop.f32.mrb[0].mxu0
        %v2515 = vadd.f32 %v1686, %v2514
        %2516 = vmatprep.mubr.bf16.mxu0 %v1564
        %2517 = vmatmul.mubr.bf16.gmra.mrb[0].mxu0 %v1563
        %v2518 = vpop.f32.mrb[0].mxu0
        %v2519 = vadd.f32 %v1682, %v2518
        %v2520 = vpop.f32.mrb[0].mxu0
        %v2521 = vadd.f32 %v1686, %v2520
        %v2522 = vpop.f32.mrb[0].mxu0
        %v2523 = vadd.f32 %v1682, %v2522
        %v2524 = vpop.f32.mrb[0].mxu0
        %v2525 = vadd.f32 %v1686, %v2524
        %2526 = vmatprep.mubr.bf16.mxu0 %v1566
        %2527 = vmatmul.mubr.bf16.gmra.mrb[0].mxu0 %v1565
        %v2528 = vpop.f32.mrb[0].mxu0
        %v2529 = vadd.f32 %v1682, %v2528
        %v2530 = vpop.f32.mrb[0].mxu0
        %v2531 = vadd.f32 %v1686, %v2530
        %v2532 = vpop.f32.mrb[0].mxu0
        %v2533 = vadd.f32 %v1682, %v2532
        %v2534 = vpop.f32.mrb[0].mxu0
        %v2535 = vadd.f32 %v1686, %v2534
        %2536 = vmatprep.mubr.bf16.mxu0 %v1568
        %2537 = vmatmul.mubr.bf16.gmra.mrb[0].mxu0 %v1567
        %v2538 = vpop.f32.mrb[0].mxu0
        %v2539 = vadd.f32 %v1682, %v2538
        %v2540 = vpop.f32.mrb[0].mxu0
        %v2541 = vadd.f32 %v1686, %v2540
        %v2542 = vpop.f32.mrb[0].mxu0
        %v2543 = vadd.f32 %v1682, %v2542
        %v2544 = vpop.f32.mrb[0].mxu0
        %v2545 = vadd.f32 %v1686, %v2544
        %2546 = vmatprep.mubr.bf16.mxu0 %v1570
        %2547 = vmatmul.mubr.bf16.gmra.mrb[0].mxu0 %v1569
        %v2548 = vpop.f32.mrb[0].mxu0
        %v2549 = vadd.f32 %v1682, %v2548
        %v2550 = vpop.f32.mrb[0].mxu0
        %v2551 = vadd.f32 %v1686, %v2550
        %v2552 = vpop.f32.mrb[0].mxu0
        %v2553 = vadd.f32 %v1682, %v2552
        %v2554 = vpop.f32.mrb[0].mxu0
        %v2555 = vadd.f32 %v1686, %v2554
        %2556 = vmatprep.mubr.bf16.mxu0 %v1572
        %2557 = vmatmul.mubr.bf16.gmra.mrb[0].mxu0 %v1571
        %v2558 = vpop.f32.mrb[0].mxu0
        %v2559 = vadd.f32 %v1682, %v2558
        %v2560 = vpop.f32.mrb[0].mxu0
        %v2561 = vadd.f32 %v1686, %v2560
        %v2562 = vpop.f32.mrb[0].mxu0
        %v2563 = vadd.f32 %v1682, %v2562
        %v2564 = vpop.f32.mrb[0].mxu0
        %v2565 = vadd.f32 %v1686, %v2564
        %2566 = vdwg.mxu0
        %2567 = vmatprep.subr.bf16.mxu0 %v1994
        %2568 = vmatpush1.bf16.msra.mxu0 %v1993
        %2569 = vmatprep.subr.bf16.mxu0 %v2000
        %2570 = vmatpush1.bf16.msra.mxu0 %v1999
        %2571 = vmatprep.subr.bf16.mxu0 %v2006
        %2572 = vmatpush1.bf16.msra.mxu0 %v2005
        %2573 = vmatprep.subr.bf16.mxu0 %v2012
        %2574 = vmatpush1.bf16.msra.mxu0 %v2011
        %2575 = vmatprep.subr.bf16.mxu0 %v2018
        %2576 = vmatpush1.bf16.msra.mxu0 %v2017
        %2577 = vmatprep.subr.bf16.mxu0 %v2024
        %2578 = vmatpush1.bf16.msra.mxu0 %v2023
        %2579 = vmatprep.subr.bf16.mxu0 %v2030
        %2580 = vmatpush1.bf16.msra.mxu0 %v2029
        %2581 = vmatprep.subr.bf16.mxu0 %v2036
        %2582 = vmatpush1.bf16.msra.mxu0 %v2035
        %2583 = vmatprep.subr.bf16.mxu0 %v2042
        %2584 = vmatpush1.bf16.msra.mxu0 %v2041
        %2585 = vmatprep.subr.bf16.mxu0 %v2048
        %2586 = vmatpush1.bf16.msra.mxu0 %v2047
        %2587 = vmatprep.subr.bf16.mxu0 %v2054
        %2588 = vmatpush1.bf16.msra.mxu0 %v2053
        %2589 = vmatprep.subr.bf16.mxu0 %v2060
        %2590 = vmatpush1.bf16.msra.mxu0 %v2059
        %2591 = vmatprep.subr.bf16.mxu0 %v2066
        %2592 = vmatpush1.bf16.msra.mxu0 %v2065
        %2593 = vmatprep.subr.bf16.mxu0 %v2072
        %2594 = vmatpush1.bf16.msra.mxu0 %v2071
        %2595 = vmatprep.subr.bf16.mxu0 %v2078
        %2596 = vmatpush1.bf16.msra.mxu0 %v2077
        %2597 = vmatprep.subr.bf16.mxu0 %v2084
        %2598 = vmatpush1.bf16.msra.mxu0 %v2083
        %2599 = vmatprep.mubr.bf16.mxu0 %v1542
        %2600 = vmatmul.mubr.bf16.gmra.mrb[0].mxu0 %v1541
        %v2601 = vpop.f32.mrb[0].mxu0
        %v2602 = vadd.f32 %v1690, %v2601
        %v2603 = vpop.f32.mrb[0].mxu0
        %v2604 = vadd.f32 %v1694, %v2603
        %v2605 = vpop.f32.mrb[0].mxu0
        %v2606 = vadd.f32 %v1690, %v2605
        %v2607 = vpop.f32.mrb[0].mxu0
        %v2608 = vadd.f32 %v1694, %v2607
        %2609 = vmatprep.mubr.bf16.mxu0 %v1544
        %2610 = vmatmul.mubr.bf16.gmra.mrb[0].mxu0 %v1543
        %v2611 = vpop.f32.mrb[0].mxu0
        %v2612 = vadd.f32 %v1690, %v2611
        %v2613 = vpop.f32.mrb[0].mxu0
        %v2614 = vadd.f32 %v1694, %v2613
        %v2615 = vpop.f32.mrb[0].mxu0
        %v2616 = vadd.f32 %v1690, %v2615
        %v2617 = vpop.f32.mrb[0].mxu0
        %v2618 = vadd.f32 %v1694, %v2617
        %2619 = vmatprep.mubr.bf16.mxu0 %v1546
        %2620 = vmatmul.mubr.bf16.gmra.mrb[0].mxu0 %v1545
        %v2621 = vpop.f32.mrb[0].mxu0
        %v2622 = vadd.f32 %v1690, %v2621
        %v2623 = vpop.f32.mrb[0].mxu0
        %v2624 = vadd.f32 %v1694, %v2623
        %v2625 = vpop.f32.mrb[0].mxu0
        %v2626 = vadd.f32 %v1690, %v2625
        %v2627 = vpop.f32.mrb[0].mxu0
        %v2628 = vadd.f32 %v1694, %v2627
        %2629 = vmatprep.mubr.bf16.mxu0 %v1548
        %2630 = vmatmul.mubr.bf16.gmra.mrb[0].mxu0 %v1547
        %v2631 = vpop.f32.mrb[0].mxu0
        %v2632 = vadd.f32 %v1690, %v2631
        %v2633 = vpop.f32.mrb[0].mxu0
        %v2634 = vadd.f32 %v1694, %v2633
        %v2635 = vpop.f32.mrb[0].mxu0
        %v2636 = vadd.f32 %v1690, %v2635
        %v2637 = vpop.f32.mrb[0].mxu0
        %v2638 = vadd.f32 %v1694, %v2637
        %2639 = vmatprep.mubr.bf16.mxu0 %v1550
        %2640 = vmatmul.mubr.bf16.gmra.mrb[0].mxu0 %v1549
        %v2641 = vpop.f32.mrb[0].mxu0
        %v2642 = vadd.f32 %v1690, %v2641
        %v2643 = vpop.f32.mrb[0].mxu0
        %v2644 = vadd.f32 %v1694, %v2643
        %v2645 = vpop.f32.mrb[0].mxu0
        %v2646 = vadd.f32 %v1690, %v2645
        %v2647 = vpop.f32.mrb[0].mxu0
        %v2648 = vadd.f32 %v1694, %v2647
        %2649 = vmatprep.mubr.bf16.mxu0 %v1552
        %2650 = vmatmul.mubr.bf16.gmra.mrb[0].mxu0 %v1551
        %v2651 = vpop.f32.mrb[0].mxu0
        %v2652 = vadd.f32 %v1690, %v2651
        %v2653 = vpop.f32.mrb[0].mxu0
        %v2654 = vadd.f32 %v1694, %v2653
        %v2655 = vpop.f32.mrb[0].mxu0
        %v2656 = vadd.f32 %v1690, %v2655
        %v2657 = vpop.f32.mrb[0].mxu0
        %v2658 = vadd.f32 %v1694, %v2657
        %2659 = vmatprep.mubr.bf16.mxu0 %v1554
        %2660 = vmatmul.mubr.bf16.gmra.mrb[0].mxu0 %v1553
        %v2661 = vpop.f32.mrb[0].mxu0
        %v2662 = vadd.f32 %v1690, %v2661
        %v2663 = vpop.f32.mrb[0].mxu0
        %v2664 = vadd.f32 %v1694, %v2663
        %v2665 = vpop.f32.mrb[0].mxu0
        %v2666 = vadd.f32 %v1690, %v2665
        %v2667 = vpop.f32.mrb[0].mxu0
        %v2668 = vadd.f32 %v1694, %v2667
        %2669 = vmatprep.mubr.bf16.mxu0 %v1556
        %2670 = vmatmul.mubr.bf16.gmra.mrb[0].mxu0 %v1555
        %v2671 = vpop.f32.mrb[0].mxu0
        %v2672 = vadd.f32 %v1690, %v2671
        %v2673 = vpop.f32.mrb[0].mxu0
        %v2674 = vadd.f32 %v1694, %v2673
        %v2675 = vpop.f32.mrb[0].mxu0
        %v2676 = vadd.f32 %v1690, %v2675
        %v2677 = vpop.f32.mrb[0].mxu0
        %v2678 = vadd.f32 %v1694, %v2677
        %2679 = vmatprep.mubr.bf16.mxu0 %v1558
        %2680 = vmatmul.mubr.bf16.gmra.mrb[0].mxu0 %v1557
        %v2681 = vpop.f32.mrb[0].mxu0
        %v2682 = vadd.f32 %v1690, %v2681
        %v2683 = vpop.f32.mrb[0].mxu0
        %v2684 = vadd.f32 %v1694, %v2683
        %v2685 = vpop.f32.mrb[0].mxu0
        %v2686 = vadd.f32 %v1690, %v2685
        %v2687 = vpop.f32.mrb[0].mxu0
        %v2688 = vadd.f32 %v1694, %v2687
        %2689 = vmatprep.mubr.bf16.mxu0 %v1560
        %2690 = vmatmul.mubr.bf16.gmra.mrb[0].mxu0 %v1559
        %v2691 = vpop.f32.mrb[0].mxu0
        %v2692 = vadd.f32 %v1690, %v2691
        %v2693 = vpop.f32.mrb[0].mxu0
        %v2694 = vadd.f32 %v1694, %v2693
        %v2695 = vpop.f32.mrb[0].mxu0
        %v2696 = vadd.f32 %v1690, %v2695
        %v2697 = vpop.f32.mrb[0].mxu0
        %v2698 = vadd.f32 %v1694, %v2697
        %2699 = vmatprep.mubr.bf16.mxu0 %v1562
        %2700 = vmatmul.mubr.bf16.gmra.mrb[0].mxu0 %v1561
        %v2701 = vpop.f32.mrb[0].mxu0
        %v2702 = vadd.f32 %v1690, %v2701
        %v2703 = vpop.f32.mrb[0].mxu0
        %v2704 = vadd.f32 %v1694, %v2703
        %v2705 = vpop.f32.mrb[0].mxu0
        %v2706 = vadd.f32 %v1690, %v2705
        %v2707 = vpop.f32.mrb[0].mxu0
        %v2708 = vadd.f32 %v1694, %v2707
        %2709 = vmatprep.mubr.bf16.mxu0 %v1564
        %2710 = vmatmul.mubr.bf16.gmra.mrb[0].mxu0 %v1563
        %v2711 = vpop.f32.mrb[0].mxu0
        %v2712 = vadd.f32 %v1690, %v2711
        %v2713 = vpop.f32.mrb[0].mxu0
        %v2714 = vadd.f32 %v1694, %v2713
        %v2715 = vpop.f32.mrb[0].mxu0
        %v2716 = vadd.f32 %v1690, %v2715
        %v2717 = vpop.f32.mrb[0].mxu0
        %v2718 = vadd.f32 %v1694, %v2717
        %2719 = vmatprep.mubr.bf16.mxu0 %v1566
        %2720 = vmatmul.mubr.bf16.gmra.mrb[0].mxu0 %v1565
        %v2721 = vpop.f32.mrb[0].mxu0
        %v2722 = vadd.f32 %v1690, %v2721
        %v2723 = vpop.f32.mrb[0].mxu0
        %v2724 = vadd.f32 %v1694, %v2723
        %v2725 = vpop.f32.mrb[0].mxu0
        %v2726 = vadd.f32 %v1690, %v2725
        %v2727 = vpop.f32.mrb[0].mxu0
        %v2728 = vadd.f32 %v1694, %v2727
        %2729 = vmatprep.mubr.bf16.mxu0 %v1568
        %2730 = vmatmul.mubr.bf16.gmra.mrb[0].mxu0 %v1567
        %v2731 = vpop.f32.mrb[0].mxu0
        %v2732 = vadd.f32 %v1690, %v2731
        %v2733 = vpop.f32.mrb[0].mxu0
        %v2734 = vadd.f32 %v1694, %v2733
        %v2735 = vpop.f32.mrb[0].mxu0
        %v2736 = vadd.f32 %v1690, %v2735
        %v2737 = vpop.f32.mrb[0].mxu0
        %v2738 = vadd.f32 %v1694, %v2737
        %2739 = vmatprep.mubr.bf16.mxu0 %v1570
        %2740 = vmatmul.mubr.bf16.gmra.mrb[0].mxu0 %v1569
        %v2741 = vpop.f32.mrb[0].mxu0
        %v2742 = vadd.f32 %v1690, %v2741
        %v2743 = vpop.f32.mrb[0].mxu0
        %v2744 = vadd.f32 %v1694, %v2743
        %v2745 = vpop.f32.mrb[0].mxu0
        %v2746 = vadd.f32 %v1690, %v2745
        %v2747 = vpop.f32.mrb[0].mxu0
        %v2748 = vadd.f32 %v1694, %v2747
        %2749 = vmatprep.mubr.bf16.mxu0 %v1572
        %2750 = vmatmul.mubr.bf16.gmra.mrb[0].mxu0 %v1571
        %v2751 = vpop.f32.mrb[0].mxu0
        %v2752 = vadd.f32 %v1690, %v2751
        %v2753 = vpop.f32.mrb[0].mxu0
        %v2754 = vadd.f32 %v1694, %v2753
        %v2755 = vpop.f32.mrb[0].mxu0
        %v2756 = vadd.f32 %v1690, %v2755
        %v2757 = vpop.f32.mrb[0].mxu0
        %v2758 = vadd.f32 %v1694, %v2757
        %2759 = vdwg.mxu0
        %v2760 = vpack.c.bf16 %v2220, %v2216
        %v2761 = vpack.c.bf16 %v2230, %v2226
        %v2762 = vpack.c.bf16 %v2240, %v2236
        %v2763 = vpack.c.bf16 %v2250, %v2246
        %v2764 = vpack.c.bf16 %v2260, %v2256
        %v2765 = vpack.c.bf16 %v2270, %v2266
        %v2766 = vpack.c.bf16 %v2280, %v2276
        %v2767 = vpack.c.bf16 %v2290, %v2286
        %v2768 = vpack.c.bf16 %v2300, %v2296
        %v2769 = vpack.c.bf16 %v2310, %v2306
        %v2770 = vpack.c.bf16 %v2320, %v2316
        %v2771 = vpack.c.bf16 %v2330, %v2326
        %v2772 = vpack.c.bf16 %v2340, %v2336
        %v2773 = vpack.c.bf16 %v2350, %v2346
        %v2774 = vpack.c.bf16 %v2360, %v2356
        %v2775 = vpack.c.bf16 %v2370, %v2366
        %v2776 = vpack.c.bf16 %v2413, %v2409
        %v2777 = vpack.c.bf16 %v2423, %v2419
        %v2778 = vpack.c.bf16 %v2433, %v2429
        %v2779 = vpack.c.bf16 %v2443, %v2439
        %v2780 = vpack.c.bf16 %v2453, %v2449
        %v2781 = vpack.c.bf16 %v2463, %v2459
        %v2782 = vpack.c.bf16 %v2473, %v2469
        %v2783 = vpack.c.bf16 %v2483, %v2479
        %v2784 = vpack.c.bf16 %v2493, %v2489
        %v2785 = vpack.c.bf16 %v2503, %v2499
        %v2786 = vpack.c.bf16 %v2513, %v2509
        %v2787 = vpack.c.bf16 %v2523, %v2519
        %v2788 = vpack.c.bf16 %v2533, %v2529
        %v2789 = vpack.c.bf16 %v2543, %v2539
        %v2790 = vpack.c.bf16 %v2553, %v2549
        %v2791 = vpack.c.bf16 %v2563, %v2559
        %v2792 = vpack.c.bf16 %v2606, %v2602
        %v2793 = vpack.c.bf16 %v2616, %v2612
        %v2794 = vpack.c.bf16 %v2626, %v2622
        %v2795 = vpack.c.bf16 %v2636, %v2632
        %v2796 = vpack.c.bf16 %v2646, %v2642
        %v2797 = vpack.c.bf16 %v2656, %v2652
        %v2798 = vpack.c.bf16 %v2666, %v2662
        %v2799 = vpack.c.bf16 %v2676, %v2672
        %v2800 = vpack.c.bf16 %v2686, %v2682
        %v2801 = vpack.c.bf16 %v2696, %v2692
        %v2802 = vpack.c.bf16 %v2706, %v2702
        %v2803 = vpack.c.bf16 %v2716, %v2712
        %v2804 = vpack.c.bf16 %v2726, %v2722
        %v2805 = vpack.c.bf16 %v2736, %v2732
        %v2806 = vpack.c.bf16 %v2746, %v2742
        %v2807 = vpack.c.bf16 %v2756, %v2752
        %2808 = vmatprep.subr.bf16.mxu0 0
        %2809 = vmatpush1.bf16.xpose.msra.mxu0 %v2776
        %2810 = vmatprep.subr.bf16.mxu0 0
        %2811 = vmatpush1.bf16.xpose.msra.mxu0 %v2777
        %2812 = vmatprep.subr.bf16.mxu0 0
        %2813 = vmatpush1.bf16.xpose.msra.mxu0 %v2778
        %2814 = vmatprep.subr.bf16.mxu0 0
        %2815 = vmatpush1.bf16.xpose.msra.mxu0 %v2779
        %2816 = vmatprep.subr.bf16.mxu0 0
        %2817 = vmatpush1.bf16.xpose.msra.mxu0 %v2780
        %2818 = vmatprep.subr.bf16.mxu0 0
        %2819 = vmatpush1.bf16.xpose.msra.mxu0 %v2781
        %2820 = vmatprep.subr.bf16.mxu0 0
        %2821 = vmatpush1.bf16.xpose.msra.mxu0 %v2782
        %2822 = vmatprep.subr.bf16.mxu0 0
        %2823 = vmatpush1.bf16.xpose.msra.mxu0 %v2783
        %2824 = vmatprep.subr.bf16.mxu0 0
        %2825 = vmatpush1.bf16.xpose.msra.mxu0 %v2784
        %2826 = vmatprep.subr.bf16.mxu0 0
        %2827 = vmatpush1.bf16.xpose.msra.mxu0 %v2785
        %2828 = vmatprep.subr.bf16.mxu0 0
        %2829 = vmatpush1.bf16.xpose.msra.mxu0 %v2786
        %2830 = vmatprep.subr.bf16.mxu0 0
        %2831 = vmatpush1.bf16.xpose.msra.mxu0 %v2787
        %2832 = vmatprep.subr.bf16.mxu0 0
        %2833 = vmatpush1.bf16.xpose.msra.mxu0 %v2788
        %2834 = vmatprep.subr.bf16.mxu0 0
        %2835 = vmatpush1.bf16.xpose.msra.mxu0 %v2789
        %2836 = vmatprep.subr.bf16.mxu0 0
        %2837 = vmatpush1.bf16.xpose.msra.mxu0 %v2790
        %2838 = vmatprep.subr.bf16.mxu0 0
        %2839 = vmatpush1.bf16.xpose.msra.mxu0 %v2791
        %2840 = vmatprep.mubr.bf16.mxu0 0
        %2841 = vmatmul.mubr.bf16.gmra.mrb[0].mxu0 %v2760
        %v2842 = vpop.f32.mrb[0].mxu0
        %v2843 = vadd.f32 0.0, %v2842
        %v2844 = vpop.f32.mrb[0].mxu0
        %v2845 = vadd.f32 0.0, %v2844
        %v2846 = vpop.f32.mrb[0].mxu0
        %v2847 = vadd.f32 0.0, %v2846
        %v2848 = vpop.f32.mrb[0].mxu0
        %v2849 = vadd.f32 0.0, %v2848
        %2850 = vmatprep.mubr.bf16.mxu0 0
        %2851 = vmatmul.mubr.bf16.gmra.mrb[0].mxu0 %v2761
        %v2852 = vpop.f32.mrb[0].mxu0
        %v2853 = vadd.f32 0.0, %v2852
        %v2854 = vpop.f32.mrb[0].mxu0
        %v2855 = vadd.f32 0.0, %v2854
        %v2856 = vpop.f32.mrb[0].mxu0
        %v2857 = vadd.f32 0.0, %v2856
        %v2858 = vpop.f32.mrb[0].mxu0
        %v2859 = vadd.f32 0.0, %v2858
        %2860 = vmatprep.mubr.bf16.mxu0 0
        %2861 = vmatmul.mubr.bf16.gmra.mrb[0].mxu0 %v2762
        %v2862 = vpop.f32.mrb[0].mxu0
        %v2863 = vadd.f32 0.0, %v2862
        %v2864 = vpop.f32.mrb[0].mxu0
        %v2865 = vadd.f32 0.0, %v2864
        %v2866 = vpop.f32.mrb[0].mxu0
        %v2867 = vadd.f32 0.0, %v2866
        %v2868 = vpop.f32.mrb[0].mxu0
        %v2869 = vadd.f32 0.0, %v2868
        %2870 = vmatprep.mubr.bf16.mxu0 0
        %2871 = vmatmul.mubr.bf16.gmra.mrb[0].mxu0 %v2763
        %v2872 = vpop.f32.mrb[0].mxu0
        %v2873 = vadd.f32 0.0, %v2872
        %v2874 = vpop.f32.mrb[0].mxu0
        %v2875 = vadd.f32 0.0, %v2874
        %v2876 = vpop.f32.mrb[0].mxu0
        %v2877 = vadd.f32 0.0, %v2876
        %v2878 = vpop.f32.mrb[0].mxu0
        %v2879 = vadd.f32 0.0, %v2878
        %2880 = vmatprep.mubr.bf16.mxu0 0
        %2881 = vmatmul.mubr.bf16.gmra.mrb[0].mxu0 %v2764
        %v2882 = vpop.f32.mrb[0].mxu0
        %v2883 = vadd.f32 0.0, %v2882
        %v2884 = vpop.f32.mrb[0].mxu0
        %v2885 = vadd.f32 0.0, %v2884
        %v2886 = vpop.f32.mrb[0].mxu0
        %v2887 = vadd.f32 0.0, %v2886
        %v2888 = vpop.f32.mrb[0].mxu0
        %v2889 = vadd.f32 0.0, %v2888
        %2890 = vmatprep.mubr.bf16.mxu0 0
        %2891 = vmatmul.mubr.bf16.gmra.mrb[0].mxu0 %v2765
        %v2892 = vpop.f32.mrb[0].mxu0
        %v2893 = vadd.f32 0.0, %v2892
        %v2894 = vpop.f32.mrb[0].mxu0
        %v2895 = vadd.f32 0.0, %v2894
        %v2896 = vpop.f32.mrb[0].mxu0
        %v2897 = vadd.f32 0.0, %v2896
        %v2898 = vpop.f32.mrb[0].mxu0
        %v2899 = vadd.f32 0.0, %v2898
        %2900 = vmatprep.mubr.bf16.mxu0 0
        %2901 = vmatmul.mubr.bf16.gmra.mrb[0].mxu0 %v2766
        %v2902 = vpop.f32.mrb[0].mxu0
        %v2903 = vadd.f32 0.0, %v2902
        %v2904 = vpop.f32.mrb[0].mxu0
        %v2905 = vadd.f32 0.0, %v2904
        %v2906 = vpop.f32.mrb[0].mxu0
        %v2907 = vadd.f32 0.0, %v2906
        %v2908 = vpop.f32.mrb[0].mxu0
        %v2909 = vadd.f32 0.0, %v2908
        %2910 = vmatprep.mubr.bf16.mxu0 0
        %2911 = vmatmul.mubr.bf16.gmra.mrb[0].mxu0 %v2767
        %v2912 = vpop.f32.mrb[0].mxu0
        %v2913 = vadd.f32 0.0, %v2912
        %v2914 = vpop.f32.mrb[0].mxu0
        %v2915 = vadd.f32 0.0, %v2914
        %v2916 = vpop.f32.mrb[0].mxu0
        %v2917 = vadd.f32 0.0, %v2916
        %v2918 = vpop.f32.mrb[0].mxu0
        %v2919 = vadd.f32 0.0, %v2918
        %2920 = vmatprep.mubr.bf16.mxu0 0
        %2921 = vmatmul.mubr.bf16.gmra.mrb[0].mxu0 %v2768
        %v2922 = vpop.f32.mrb[0].mxu0
        %v2923 = vadd.f32 0.0, %v2922
        %v2924 = vpop.f32.mrb[0].mxu0
        %v2925 = vadd.f32 0.0, %v2924
        %v2926 = vpop.f32.mrb[0].mxu0
        %v2927 = vadd.f32 0.0, %v2926
        %v2928 = vpop.f32.mrb[0].mxu0
        %v2929 = vadd.f32 0.0, %v2928
        %2930 = vmatprep.mubr.bf16.mxu0 0
        %2931 = vmatmul.mubr.bf16.gmra.mrb[0].mxu0 %v2769
        %v2932 = vpop.f32.mrb[0].mxu0
        %v2933 = vadd.f32 0.0, %v2932
        %v2934 = vpop.f32.mrb[0].mxu0
        %v2935 = vadd.f32 0.0, %v2934
        %v2936 = vpop.f32.mrb[0].mxu0
        %v2937 = vadd.f32 0.0, %v2936
        %v2938 = vpop.f32.mrb[0].mxu0
        %v2939 = vadd.f32 0.0, %v2938
        %2940 = vmatprep.mubr.bf16.mxu0 0
        %2941 = vmatmul.mubr.bf16.gmra.mrb[0].mxu0 %v2770
        %v2942 = vpop.f32.mrb[0].mxu0
        %v2943 = vadd.f32 0.0, %v2942
        %v2944 = vpop.f32.mrb[0].mxu0
        %v2945 = vadd.f32 0.0, %v2944
        %v2946 = vpop.f32.mrb[0].mxu0
        %v2947 = vadd.f32 0.0, %v2946
        %v2948 = vpop.f32.mrb[0].mxu0
        %v2949 = vadd.f32 0.0, %v2948
        %2950 = vmatprep.mubr.bf16.mxu0 0
        %2951 = vmatmul.mubr.bf16.gmra.mrb[0].mxu0 %v2771
        %v2952 = vpop.f32.mrb[0].mxu0
        %v2953 = vadd.f32 0.0, %v2952
        %v2954 = vpop.f32.mrb[0].mxu0
        %v2955 = vadd.f32 0.0, %v2954
        %v2956 = vpop.f32.mrb[0].mxu0
        %v2957 = vadd.f32 0.0, %v2956
        %v2958 = vpop.f32.mrb[0].mxu0
        %v2959 = vadd.f32 0.0, %v2958
        %2960 = vmatprep.mubr.bf16.mxu0 0
        %2961 = vmatmul.mubr.bf16.gmra.mrb[0].mxu0 %v2772
        %v2962 = vpop.f32.mrb[0].mxu0
        %v2963 = vadd.f32 0.0, %v2962
        %v2964 = vpop.f32.mrb[0].mxu0
        %v2965 = vadd.f32 0.0, %v2964
        %v2966 = vpop.f32.mrb[0].mxu0
        %v2967 = vadd.f32 0.0, %v2966
        %v2968 = vpop.f32.mrb[0].mxu0
        %v2969 = vadd.f32 0.0, %v2968
        %2970 = vmatprep.mubr.bf16.mxu0 0
        %2971 = vmatmul.mubr.bf16.gmra.mrb[0].mxu0 %v2773
        %v2972 = vpop.f32.mrb[0].mxu0
        %v2973 = vadd.f32 0.0, %v2972
        %v2974 = vpop.f32.mrb[0].mxu0
        %v2975 = vadd.f32 0.0, %v2974
        %v2976 = vpop.f32.mrb[0].mxu0
        %v2977 = vadd.f32 0.0, %v2976
        %v2978 = vpop.f32.mrb[0].mxu0
        %v2979 = vadd.f32 0.0, %v2978
        %2980 = vmatprep.mubr.bf16.mxu0 0
        %2981 = vmatmul.mubr.bf16.gmra.mrb[0].mxu0 %v2774
        %v2982 = vpop.f32.mrb[0].mxu0
        %v2983 = vadd.f32 0.0, %v2982
        %v2984 = vpop.f32.mrb[0].mxu0
        %v2985 = vadd.f32 0.0, %v2984
        %v2986 = vpop.f32.mrb[0].mxu0
        %v2987 = vadd.f32 0.0, %v2986
        %v2988 = vpop.f32.mrb[0].mxu0
        %v2989 = vadd.f32 0.0, %v2988
        %2990 = vmatprep.mubr.bf16.mxu0 0
        %2991 = vmatmul.mubr.bf16.gmra.mrb[0].mxu0 %v2775
        %v2992 = vpop.f32.mrb[0].mxu0
        %v2993 = vadd.f32 0.0, %v2992
        %v2994 = vpop.f32.mrb[0].mxu0
        %v2995 = vadd.f32 0.0, %v2994
        %v2996 = vpop.f32.mrb[0].mxu0
        %v2997 = vadd.f32 0.0, %v2996
        %v2998 = vpop.f32.mrb[0].mxu0
        %v2999 = vadd.f32 0.0, %v2998
        %3000 = vdwg.mxu0
        %v3001 = vmax.f32 %v2843, %v2845
        %3002 = vmax.xlane.f32.xlu0 %v3001
        %v3003 = vpop.xlane.xlu0 %3002
        %v3004 = vmax.f32 %v2847, %v2849
        %3005 = vmax.xlane.f32.xlu0 %v3004
        %v3006 = vpop.xlane.xlu0 %3005
        %v3007 = vmax.f32 %v2853, %v2855
        %3008 = vmax.xlane.f32.xlu0 %v3007
        %v3009 = vpop.xlane.xlu0 %3008
        %v3010 = vmax.f32 %v2857, %v2859
        %3011 = vmax.xlane.f32.xlu0 %v3010
        %v3012 = vpop.xlane.xlu0 %3011
        %v3013 = vmax.f32 %v2863, %v2865
        %3014 = vmax.xlane.f32.xlu0 %v3013
        %v3015 = vpop.xlane.xlu0 %3014
        %v3016 = vmax.f32 %v2867, %v2869
        %3017 = vmax.xlane.f32.xlu0 %v3016
        %v3018 = vpop.xlane.xlu0 %3017
        %v3019 = vmax.f32 %v2873, %v2875
        %3020 = vmax.xlane.f32.xlu0 %v3019
        %v3021 = vpop.xlane.xlu0 %3020
        %v3022 = vmax.f32 %v2877, %v2879
        %3023 = vmax.xlane.f32.xlu0 %v3022
        %v3024 = vpop.xlane.xlu0 %3023
        %v3025 = vmax.f32 %v2883, %v2885
        %3026 = vmax.xlane.f32.xlu0 %v3025
        %v3027 = vpop.xlane.xlu0 %3026
        %v3028 = vmax.f32 %v2887, %v2889
        %3029 = vmax.xlane.f32.xlu0 %v3028
        %v3030 = vpop.xlane.xlu0 %3029
        %v3031 = vmax.f32 %v2893, %v2895
        %3032 = vmax.xlane.f32.xlu0 %v3031
        %v3033 = vpop.xlane.xlu0 %3032
        %v3034 = vmax.f32 %v2897, %v2899
        %3035 = vmax.xlane.f32.xlu0 %v3034
        %v3036 = vpop.xlane.xlu0 %3035
        %v3037 = vmax.f32 %v2903, %v2905
        %3038 = vmax.xlane.f32.xlu0 %v3037
        %v3039 = vpop.xlane.xlu0 %3038
        %v3040 = vmax.f32 %v2907, %v2909
        %3041 = vmax.xlane.f32.xlu0 %v3040
        %v3042 = vpop.xlane.xlu0 %3041
        %v3043 = vmax.f32 %v2913, %v2915
        %3044 = vmax.xlane.f32.xlu0 %v3043
        %v3045 = vpop.xlane.xlu0 %3044
        %v3046 = vmax.f32 %v2917, %v2919
        %3047 = vmax.xlane.f32.xlu0 %v3046
        %v3048 = vpop.xlane.xlu0 %3047
        %v3049 = vmax.f32 %v2923, %v2925
        %3050 = vmax.xlane.f32.xlu0 %v3049
        %v3051 = vpop.xlane.xlu0 %3050
        %v3052 = vmax.f32 %v2927, %v2929
        %3053 = vmax.xlane.f32.xlu0 %v3052
        %v3054 = vpop.xlane.xlu0 %3053
        %v3055 = vmax.f32 %v2933, %v2935
        %3056 = vmax.xlane.f32.xlu0 %v3055
        %v3057 = vpop.xlane.xlu0 %3056
        %v3058 = vmax.f32 %v2937, %v2939
        %3059 = vmax.xlane.f32.xlu0 %v3058
        %v3060 = vpop.xlane.xlu0 %3059
        %v3061 = vmax.f32 %v2943, %v2945
        %3062 = vmax.xlane.f32.xlu0 %v3061
        %v3063 = vpop.xlane.xlu0 %3062
        %v3064 = vmax.f32 %v2947, %v2949
        %3065 = vmax.xlane.f32.xlu0 %v3064
        %v3066 = vpop.xlane.xlu0 %3065
        %v3067 = vmax.f32 %v2953, %v2955
        %3068 = vmax.xlane.f32.xlu0 %v3067
        %v3069 = vpop.xlane.xlu0 %3068
        %v3070 = vmax.f32 %v2957, %v2959
        %3071 = vmax.xlane.f32.xlu0 %v3070
        %v3072 = vpop.xlane.xlu0 %3071
        %v3073 = vmax.f32 %v2963, %v2965
        %3074 = vmax.xlane.f32.xlu0 %v3073
        %v3075 = vpop.xlane.xlu0 %3074
        %v3076 = vmax.f32 %v2967, %v2969
        %3077 = vmax.xlane.f32.xlu0 %v3076
        %v3078 = vpop.xlane.xlu0 %3077
        %v3079 = vmax.f32 %v2973, %v2975
        %3080 = vmax.xlane.f32.xlu0 %v3079
        %v3081 = vpop.xlane.xlu0 %3080
        %v3082 = vmax.f32 %v2977, %v2979
        %3083 = vmax.xlane.f32.xlu0 %v3082
        %v3084 = vpop.xlane.xlu0 %3083
        %v3085 = vmax.f32 %v2983, %v2985
        %3086 = vmax.xlane.f32.xlu0 %v3085
        %v3087 = vpop.xlane.xlu0 %3086
        %v3088 = vmax.f32 %v2987, %v2989
        %3089 = vmax.xlane.f32.xlu0 %v3088
        %v3090 = vpop.xlane.xlu0 %3089
        %v3091 = vmax.f32 %v2993, %v2995
        %3092 = vmax.xlane.f32.xlu0 %v3091
        %v3093 = vpop.xlane.xlu0 %3092
        %v3094 = vmax.f32 %v2997, %v2999
        %3095 = vmax.xlane.f32.xlu0 %v3094
        %v3096 = vpop.xlane.xlu0 %3095
        %v3097 = vsub.f32 %v2843, %v3003
        %v3098 = vsub.f32 %v2845, %v3003
        %v3099 = vsub.f32 %v2847, %v3006
        %v3100 = vsub.f32 %v2849, %v3006
        %v3101 = vsub.f32 %v2853, %v3009
        %v3102 = vsub.f32 %v2855, %v3009
        %v3103 = vsub.f32 %v2857, %v3012
        %v3104 = vsub.f32 %v2859, %v3012
        %v3105 = vsub.f32 %v2863, %v3015
        %v3106 = vsub.f32 %v2865, %v3015
        %v3107 = vsub.f32 %v2867, %v3018
        %v3108 = vsub.f32 %v2869, %v3018
        %v3109 = vsub.f32 %v2873, %v3021
        %v3110 = vsub.f32 %v2875, %v3021
        %v3111 = vsub.f32 %v2877, %v3024
        %v3112 = vsub.f32 %v2879, %v3024
        %v3113 = vsub.f32 %v2883, %v3027
        %v3114 = vsub.f32 %v2885, %v3027
        %v3115 = vsub.f32 %v2887, %v3030
        %v3116 = vsub.f32 %v2889, %v3030
        %v3117 = vsub.f32 %v2893, %v3033
        %v3118 = vsub.f32 %v2895, %v3033
        %v3119 = vsub.f32 %v2897, %v3036
        %v3120 = vsub.f32 %v2899, %v3036
        %v3121 = vsub.f32 %v2903, %v3039
        %v3122 = vsub.f32 %v2905, %v3039
        %v3123 = vsub.f32 %v2907, %v3042
        %v3124 = vsub.f32 %v2909, %v3042
        %v3125 = vsub.f32 %v2913, %v3045
        %v3126 = vsub.f32 %v2915, %v3045
        %v3127 = vsub.f32 %v2917, %v3048
        %v3128 = vsub.f32 %v2919, %v3048
        %v3129 = vsub.f32 %v2923, %v3051
        %v3130 = vsub.f32 %v2925, %v3051
        %v3131 = vsub.f32 %v2927, %v3054
        %v3132 = vsub.f32 %v2929, %v3054
        %v3133 = vsub.f32 %v2933, %v3057
        %v3134 = vsub.f32 %v2935, %v3057
        %v3135 = vsub.f32 %v2937, %v3060
        %v3136 = vsub.f32 %v2939, %v3060
        %v3137 = vsub.f32 %v2943, %v3063
        %v3138 = vsub.f32 %v2945, %v3063
        %v3139 = vsub.f32 %v2947, %v3066
        %v3140 = vsub.f32 %v2949, %v3066
        %v3141 = vsub.f32 %v2953, %v3069
        %v3142 = vsub.f32 %v2955, %v3069
        %v3143 = vsub.f32 %v2957, %v3072
        %v3144 = vsub.f32 %v2959, %v3072
        %v3145 = vsub.f32 %v2963, %v3075
        %v3146 = vsub.f32 %v2965, %v3075
        %v3147 = vsub.f32 %v2967, %v3078
        %v3148 = vsub.f32 %v2969, %v3078
        %v3149 = vsub.f32 %v2973, %v3081
        %v3150 = vsub.f32 %v2975, %v3081
        %v3151 = vsub.f32 %v2977, %v3084
        %v3152 = vsub.f32 %v2979, %v3084
        %v3153 = vsub.f32 %v2983, %v3087
        %v3154 = vsub.f32 %v2985, %v3087
        %v3155 = vsub.f32 %v2987, %v3090
        %v3156 = vsub.f32 %v2989, %v3090
        %v3157 = vsub.f32 %v2993, %v3093
        %v3158 = vsub.f32 %v2995, %v3093
        %v3159 = vsub.f32 %v2997, %v3096
        %v3160 = vsub.f32 %v2999, %v3096
        %v3161 = vmul.f32 %v3097, 1.442695
        %v3162 = vpow.pop %v3161
        %v3163 = vmul.f32 %v3098, 1.442695
        %v3164 = vpow.pop %v3163
        %v3165 = vmul.f32 %v3099, 1.442695
        %v3166 = vpow.pop %v3165
        %v3167 = vmul.f32 %v3100, 1.442695
        %v3168 = vpow.pop %v3167
        %v3169 = vmul.f32 %v3101, 1.442695
        %v3170 = vpow.pop %v3169
        %v3171 = vmul.f32 %v3102, 1.442695
        %v3172 = vpow.pop %v3171
        %v3173 = vmul.f32 %v3103, 1.442695
        %v3174 = vpow.pop %v3173
        %v3175 = vmul.f32 %v3104, 1.442695
        %v3176 = vpow.pop %v3175
        %v3177 = vmul.f32 %v3105, 1.442695
        %v3178 = vpow.pop %v3177
        %v3179 = vmul.f32 %v3106, 1.442695
        %v3180 = vpow.pop %v3179
        %v3181 = vmul.f32 %v3107, 1.442695
        %v3182 = vpow.pop %v3181
        %v3183 = vmul.f32 %v3108, 1.442695
        %v3184 = vpow.pop %v3183
        %v3185 = vmul.f32 %v3109, 1.442695
        %v3186 = vpow.pop %v3185
        %v3187 = vmul.f32 %v3110, 1.442695
        %v3188 = vpow.pop %v3187
        %v3189 = vmul.f32 %v3111, 1.442695
        %v3190 = vpow.pop %v3189
        %v3191 = vmul.f32 %v3112, 1.442695
        %v3192 = vpow.pop %v3191
        %v3193 = vmul.f32 %v3113, 1.442695
        %v3194 = vpow.pop %v3193
        %v3195 = vmul.f32 %v3114, 1.442695
        %v3196 = vpow.pop %v3195
        %v3197 = vmul.f32 %v3115, 1.442695
        %v3198 = vpow.pop %v3197
        %v3199 = vmul.f32 %v3116, 1.442695
        %v3200 = vpow.pop %v3199
        %v3201 = vmul.f32 %v3117, 1.442695
        %v3202 = vpow.pop %v3201
        %v3203 = vmul.f32 %v3118, 1.442695
        %v3204 = vpow.pop %v3203
        %v3205 = vmul.f32 %v3119, 1.442695
        %v3206 = vpow.pop %v3205
        %v3207 = vmul.f32 %v3120, 1.442695
        %v3208 = vpow.pop %v3207
        %v3209 = vmul.f32 %v3121, 1.442695
        %v3210 = vpow.pop %v3209
        %v3211 = vmul.f32 %v3122, 1.442695
        %v3212 = vpow.pop %v3211
        %v3213 = vmul.f32 %v3123, 1.442695
        %v3214 = vpow.pop %v3213
        %v3215 = vmul.f32 %v3124, 1.442695
        %v3216 = vpow.pop %v3215
        %v3217 = vmul.f32 %v3125, 1.442695
        %v3218 = vpow.pop %v3217
        %v3219 = vmul.f32 %v3126, 1.442695
        %v3220 = vpow.pop %v3219
        %v3221 = vmul.f32 %v3127, 1.442695
        %v3222 = vpow.pop %v3221
        %v3223 = vmul.f32 %v3128, 1.442695
        %v3224 = vpow.pop %v3223
        %v3225 = vmul.f32 %v3129, 1.442695
        %v3226 = vpow.pop %v3225
        %v3227 = vmul.f32 %v3130, 1.442695
        %v3228 = vpow.pop %v3227
        %v3229 = vmul.f32 %v3131, 1.442695
        %v3230 = vpow.pop %v3229
        %v3231 = vmul.f32 %v3132, 1.442695
        %v3232 = vpow.pop %v3231
        %v3233 = vmul.f32 %v3133, 1.442695
        %v3234 = vpow.pop %v3233
        %v3235 = vmul.f32 %v3134, 1.442695
        %v3236 = vpow.pop %v3235
        %v3237 = vmul.f32 %v3135, 1.442695
        %v3238 = vpow.pop %v3237
        %v3239 = vmul.f32 %v3136, 1.442695
        %v3240 = vpow.pop %v3239
        %v3241 = vmul.f32 %v3137, 1.442695
        %v3242 = vpow.pop %v3241
        %v3243 = vmul.f32 %v3138, 1.442695
        %v3244 = vpow.pop %v3243
        %v3245 = vmul.f32 %v3139, 1.442695
        %v3246 = vpow.pop %v3245
        %v3247 = vmul.f32 %v3140, 1.442695
        %v3248 = vpow.pop %v3247
        %v3249 = vmul.f32 %v3141, 1.442695
        %v3250 = vpow.pop %v3249
        %v3251 = vmul.f32 %v3142, 1.442695
        %v3252 = vpow.pop %v3251
        %v3253 = vmul.f32 %v3143, 1.442695
        %v3254 = vpow.pop %v3253
        %v3255 = vmul.f32 %v3144, 1.442695
        %v3256 = vpow.pop %v3255
        %v3257 = vmul.f32 %v3145, 1.442695
        %v3258 = vpow.pop %v3257
        %v3259 = vmul.f32 %v3146, 1.442695
        %v3260 = vpow.pop %v3259
        %v3261 = vmul.f32 %v3147, 1.442695
        %v3262 = vpow.pop %v3261
        %v3263 = vmul.f32 %v3148, 1.442695
        %v3264 = vpow.pop %v3263
        %v3265 = vmul.f32 %v3149, 1.442695
        %v3266 = vpow.pop %v3265
        %v3267 = vmul.f32 %v3150, 1.442695
        %v3268 = vpow.pop %v3267
        %v3269 = vmul.f32 %v3151, 1.442695
        %v3270 = vpow.pop %v3269
        %v3271 = vmul.f32 %v3152, 1.442695
        %v3272 = vpow.pop %v3271
        %v3273 = vmul.f32 %v3153, 1.442695
        %v3274 = vpow.pop %v3273
        %v3275 = vmul.f32 %v3154, 1.442695
        %v3276 = vpow.pop %v3275
        %v3277 = vmul.f32 %v3155, 1.442695
        %v3278 = vpow.pop %v3277
        %v3279 = vmul.f32 %v3156, 1.442695
        %v3280 = vpow.pop %v3279
        %v3281 = vmul.f32 %v3157, 1.442695
        %v3282 = vpow.pop %v3281
        %v3283 = vmul.f32 %v3158, 1.442695
        %v3284 = vpow.pop %v3283
        %v3285 = vmul.f32 %v3159, 1.442695
        %v3286 = vpow.pop %v3285
        %v3287 = vmul.f32 %v3160, 1.442695
        %v3288 = vpow.pop %v3287
        %v3289 = vadd.f32 %v3162, %v3164
        %3290 = vadd.xlane.f32.xlu0 %v3289
        %v3291 = vpop.xlane.xlu0 %3290
        %v3292 = vadd.f32 %v3166, %v3168
        %3293 = vadd.xlane.f32.xlu0 %v3292
        %v3294 = vpop.xlane.xlu0 %3293
        %v3295 = vadd.f32 %v3170, %v3172
        %3296 = vadd.xlane.f32.xlu0 %v3295
        %v3297 = vpop.xlane.xlu0 %3296
        %v3298 = vadd.f32 %v3174, %v3176
        %3299 = vadd.xlane.f32.xlu0 %v3298
        %v3300 = vpop.xlane.xlu0 %3299
        %v3301 = vadd.f32 %v3178, %v3180
        %3302 = vadd.xlane.f32.xlu0 %v3301
        %v3303 = vpop.xlane.xlu0 %3302
        %v3304 = vadd.f32 %v3182, %v3184
        %3305 = vadd.xlane.f32.xlu0 %v3304
        %v3306 = vpop.xlane.xlu0 %3305
        %v3307 = vadd.f32 %v3186, %v3188
        %3308 = vadd.xlane.f32.xlu0 %v3307
        %v3309 = vpop.xlane.xlu0 %3308
        %v3310 = vadd.f32 %v3190, %v3192
        %3311 = vadd.xlane.f32.xlu0 %v3310
        %v3312 = vpop.xlane.xlu0 %3311
        %v3313 = vadd.f32 %v3194, %v3196
        %3314 = vadd.xlane.f32.xlu0 %v3313
        %v3315 = vpop.xlane.xlu0 %3314
        %v3316 = vadd.f32 %v3198, %v3200
        %3317 = vadd.xlane.f32.xlu0 %v3316
        %v3318 = vpop.xlane.xlu0 %3317
        %v3319 = vadd.f32 %v3202, %v3204
        %3320 = vadd.xlane.f32.xlu0 %v3319
        %v3321 = vpop.xlane.xlu0 %3320
        %v3322 = vadd.f32 %v3206, %v3208
        %3323 = vadd.xlane.f32.xlu0 %v3322
        %v3324 = vpop.xlane.xlu0 %3323
        %v3325 = vadd.f32 %v3210, %v3212
        %3326 = vadd.xlane.f32.xlu0 %v3325
        %v3327 = vpop.xlane.xlu0 %3326
        %v3328 = vadd.f32 %v3214, %v3216
        %3329 = vadd.xlane.f32.xlu0 %v3328
        %v3330 = vpop.xlane.xlu0 %3329
        %v3331 = vadd.f32 %v3218, %v3220
        %3332 = vadd.xlane.f32.xlu0 %v3331
        %v3333 = vpop.xlane.xlu0 %3332
        %v3334 = vadd.f32 %v3222, %v3224
        %3335 = vadd.xlane.f32.xlu0 %v3334
        %v3336 = vpop.xlane.xlu0 %3335
        %v3337 = vadd.f32 %v3226, %v3228
        %3338 = vadd.xlane.f32.xlu0 %v3337
        %v3339 = vpop.xlane.xlu0 %3338
        %v3340 = vadd.f32 %v3230, %v3232
        %3341 = vadd.xlane.f32.xlu0 %v3340
        %v3342 = vpop.xlane.xlu0 %3341
        %v3343 = vadd.f32 %v3234, %v3236
        %3344 = vadd.xlane.f32.xlu0 %v3343
        %v3345 = vpop.xlane.xlu0 %3344
        %v3346 = vadd.f32 %v3238, %v3240
        %3347 = vadd.xlane.f32.xlu0 %v3346
        %v3348 = vpop.xlane.xlu0 %3347
        %v3349 = vadd.f32 %v3242, %v3244
        %3350 = vadd.xlane.f32.xlu0 %v3349
        %v3351 = vpop.xlane.xlu0 %3350
        %v3352 = vadd.f32 %v3246, %v3248
        %3353 = vadd.xlane.f32.xlu0 %v3352
        %v3354 = vpop.xlane.xlu0 %3353
        %v3355 = vadd.f32 %v3250, %v3252
        %3356 = vadd.xlane.f32.xlu0 %v3355
        %v3357 = vpop.xlane.xlu0 %3356
        %v3358 = vadd.f32 %v3254, %v3256
        %3359 = vadd.xlane.f32.xlu0 %v3358
        %v3360 = vpop.xlane.xlu0 %3359
        %v3361 = vadd.f32 %v3258, %v3260
        %3362 = vadd.xlane.f32.xlu0 %v3361
        %v3363 = vpop.xlane.xlu0 %3362
        %v3364 = vadd.f32 %v3262, %v3264
        %3365 = vadd.xlane.f32.xlu0 %v3364
        %v3366 = vpop.xlane.xlu0 %3365
        %v3367 = vadd.f32 %v3266, %v3268
        %3368 = vadd.xlane.f32.xlu0 %v3367
        %v3369 = vpop.xlane.xlu0 %3368
        %v3370 = vadd.f32 %v3270, %v3272
        %3371 = vadd.xlane.f32.xlu0 %v3370
        %v3372 = vpop.xlane.xlu0 %3371
        %v3373 = vadd.f32 %v3274, %v3276
        %3374 = vadd.xlane.f32.xlu0 %v3373
        %v3375 = vpop.xlane.xlu0 %3374
        %v3376 = vadd.f32 %v3278, %v3280
        %3377 = vadd.xlane.f32.xlu0 %v3376
        %v3378 = vpop.xlane.xlu0 %3377
        %v3379 = vadd.f32 %v3282, %v3284
        %3380 = vadd.xlane.f32.xlu0 %v3379
        %v3381 = vpop.xlane.xlu0 %3380
        %v3382 = vadd.f32 %v3286, %v3288
        %3383 = vadd.xlane.f32.xlu0 %v3382
        %v3384 = vpop.xlane.xlu0 %3383
        %v3385 = vrcp.pop %v3291
        %v3386 = vrcp.pop %v3294
        %v3387 = vrcp.pop %v3297
        %v3388 = vrcp.pop %v3300
        %v3389 = vrcp.pop %v3303
        %v3390 = vrcp.pop %v3306
        %v3391 = vrcp.pop %v3309
        %v3392 = vrcp.pop %v3312
        %v3393 = vrcp.pop %v3315
        %v3394 = vrcp.pop %v3318
        %v3395 = vrcp.pop %v3321
        %v3396 = vrcp.pop %v3324
        %v3397 = vrcp.pop %v3327
        %v3398 = vrcp.pop %v3330
        %v3399 = vrcp.pop %v3333
        %v3400 = vrcp.pop %v3336
        %v3401 = vrcp.pop %v3339
        %v3402 = vrcp.pop %v3342
        %v3403 = vrcp.pop %v3345
        %v3404 = vrcp.pop %v3348
        %v3405 = vrcp.pop %v3351
        %v3406 = vrcp.pop %v3354
        %v3407 = vrcp.pop %v3357
        %v3408 = vrcp.pop %v3360
        %v3409 = vrcp.pop %v3363
        %v3410 = vrcp.pop %v3366
        %v3411 = vrcp.pop %v3369
        %v3412 = vrcp.pop %v3372
        %v3413 = vrcp.pop %v3375
        %v3414 = vrcp.pop %v3378
        %v3415 = vrcp.pop %v3381
        %v3416 = vrcp.pop %v3384
        %v3417 = vmul.f32 %v3162, %v3385
        %v3418 = vmul.f32 %v3164, %v3385
        %v3419 = vmul.f32 %v3166, %v3386
        %v3420 = vmul.f32 %v3168, %v3386
        %v3421 = vmul.f32 %v3170, %v3387
        %v3422 = vmul.f32 %v3172, %v3387
        %v3423 = vmul.f32 %v3174, %v3388
        %v3424 = vmul.f32 %v3176, %v3388
        %v3425 = vmul.f32 %v3178, %v3389
        %v3426 = vmul.f32 %v3180, %v3389
        %v3427 = vmul.f32 %v3182, %v3390
        %v3428 = vmul.f32 %v3184, %v3390
        %v3429 = vmul.f32 %v3186, %v3391
        %v3430 = vmul.f32 %v3188, %v3391
        %v3431 = vmul.f32 %v3190, %v3392
        %v3432 = vmul.f32 %v3192, %v3392
        %v3433 = vmul.f32 %v3194, %v3393
        %v3434 = vmul.f32 %v3196, %v3393
        %v3435 = vmul.f32 %v3198, %v3394
        %v3436 = vmul.f32 %v3200, %v3394
        %v3437 = vmul.f32 %v3202, %v3395
        %v3438 = vmul.f32 %v3204, %v3395
        %v3439 = vmul.f32 %v3206, %v3396
        %v3440 = vmul.f32 %v3208, %v3396
        %v3441 = vmul.f32 %v3210, %v3397
        %v3442 = vmul.f32 %v3212, %v3397
        %v3443 = vmul.f32 %v3214, %v3398
        %v3444 = vmul.f32 %v3216, %v3398
        %v3445 = vmul.f32 %v3218, %v3399
        %v3446 = vmul.f32 %v3220, %v3399
        %v3447 = vmul.f32 %v3222, %v3400
        %v3448 = vmul.f32 %v3224, %v3400
        %v3449 = vmul.f32 %v3226, %v3401
        %v3450 = vmul.f32 %v3228, %v3401
        %v3451 = vmul.f32 %v3230, %v3402
        %v3452 = vmul.f32 %v3232, %v3402
        %v3453 = vmul.f32 %v3234, %v3403
        %v3454 = vmul.f32 %v3236, %v3403
        %v3455 = vmul.f32 %v3238, %v3404
        %v3456 = vmul.f32 %v3240, %v3404
        %v3457 = vmul.f32 %v3242, %v3405
        %v3458 = vmul.f32 %v3244, %v3405
        %v3459 = vmul.f32 %v3246, %v3406
        %v3460 = vmul.f32 %v3248, %v3406
        %v3461 = vmul.f32 %v3250, %v3407
        %v3462 = vmul.f32 %v3252, %v3407
        %v3463 = vmul.f32 %v3254, %v3408
        %v3464 = vmul.f32 %v3256, %v3408
        %v3465 = vmul.f32 %v3258, %v3409
        %v3466 = vmul.f32 %v3260, %v3409
        %v3467 = vmul.f32 %v3262, %v3410
        %v3468 = vmul.f32 %v3264, %v3410
        %v3469 = vmul.f32 %v3266, %v3411
        %v3470 = vmul.f32 %v3268, %v3411
        %v3471 = vmul.f32 %v3270, %v3412
        %v3472 = vmul.f32 %v3272, %v3412
        %v3473 = vmul.f32 %v3274, %v3413
        %v3474 = vmul.f32 %v3276, %v3413
        %v3475 = vmul.f32 %v3278, %v3414
        %v3476 = vmul.f32 %v3280, %v3414
        %v3477 = vmul.f32 %v3282, %v3415
        %v3478 = vmul.f32 %v3284, %v3415
        %v3479 = vmul.f32 %v3286, %v3416
        %v3480 = vmul.f32 %v3288, %v3416
        %v3481 = vpack.c.bf16 %v3419, %v3417
        %v3482 = vpack.c.bf16 %v3420, %v3418
        %v3483 = vpack.c.bf16 %v3423, %v3421
        %v3484 = vpack.c.bf16 %v3424, %v3422
        %v3485 = vpack.c.bf16 %v3427, %v3425
        %v3486 = vpack.c.bf16 %v3428, %v3426
        %v3487 = vpack.c.bf16 %v3431, %v3429
        %v3488 = vpack.c.bf16 %v3432, %v3430
        %v3489 = vpack.c.bf16 %v3435, %v3433
        %v3490 = vpack.c.bf16 %v3436, %v3434
        %v3491 = vpack.c.bf16 %v3439, %v3437
        %v3492 = vpack.c.bf16 %v3440, %v3438
        %v3493 = vpack.c.bf16 %v3443, %v3441
        %v3494 = vpack.c.bf16 %v3444, %v3442
        %v3495 = vpack.c.bf16 %v3447, %v3445
        %v3496 = vpack.c.bf16 %v3448, %v3446
        %v3497 = vpack.c.bf16 %v3451, %v3449
        %v3498 = vpack.c.bf16 %v3452, %v3450
        %v3499 = vpack.c.bf16 %v3455, %v3453
        %v3500 = vpack.c.bf16 %v3456, %v3454
        %v3501 = vpack.c.bf16 %v3459, %v3457
        %v3502 = vpack.c.bf16 %v3460, %v3458
        %v3503 = vpack.c.bf16 %v3463, %v3461
        %v3504 = vpack.c.bf16 %v3464, %v3462
        %v3505 = vpack.c.bf16 %v3467, %v3465
        %v3506 = vpack.c.bf16 %v3468, %v3466
        %v3507 = vpack.c.bf16 %v3471, %v3469
        %v3508 = vpack.c.bf16 %v3472, %v3470
        %v3509 = vpack.c.bf16 %v3475, %v3473
        %v3510 = vpack.c.bf16 %v3476, %v3474
        %v3511 = vpack.c.bf16 %v3479, %v3477
        %v3512 = vpack.c.bf16 %v3480, %v3478
        %3513 = vmatprep.subr.bf16.mxu0 0
        %3514 = vmatpush1.bf16.msra.mxu0 %v2792
        %3515 = vmatprep.subr.bf16.mxu0 0
        %3516 = vmatpush1.bf16.msra.mxu0 %v2793
        %3517 = vmatprep.subr.bf16.mxu0 0
        %3518 = vmatpush1.bf16.msra.mxu0 %v2794
        %3519 = vmatprep.subr.bf16.mxu0 0
        %3520 = vmatpush1.bf16.msra.mxu0 %v2795
        %3521 = vmatprep.subr.bf16.mxu0 0
        %3522 = vmatpush1.bf16.msra.mxu0 %v2796
        %3523 = vmatprep.subr.bf16.mxu0 0
        %3524 = vmatpush1.bf16.msra.mxu0 %v2797
        %3525 = vmatprep.subr.bf16.mxu0 0
        %3526 = vmatpush1.bf16.msra.mxu0 %v2798
        %3527 = vmatprep.subr.bf16.mxu0 0
        %3528 = vmatpush1.bf16.msra.mxu0 %v2799
        %3529 = vmatprep.subr.bf16.mxu0 0
        %3530 = vmatpush1.bf16.msra.mxu0 %v2800
        %3531 = vmatprep.subr.bf16.mxu0 0
        %3532 = vmatpush1.bf16.msra.mxu0 %v2801
        %3533 = vmatprep.subr.bf16.mxu0 0
        %3534 = vmatpush1.bf16.msra.mxu0 %v2802
        %3535 = vmatprep.subr.bf16.mxu0 0
        %3536 = vmatpush1.bf16.msra.mxu0 %v2803
        %3537 = vmatprep.subr.bf16.mxu0 0
        %3538 = vmatpush1.bf16.msra.mxu0 %v2804
        %3539 = vmatprep.subr.bf16.mxu0 0
        %3540 = vmatpush1.bf16.msra.mxu0 %v2805
        %3541 = vmatprep.subr.bf16.mxu0 0
        %3542 = vmatpush1.bf16.msra.mxu0 %v2806
        %3543 = vmatprep.subr.bf16.mxu0 0
        %3544 = vmatpush1.bf16.msra.mxu0 %v2807
        %3545 = vmatprep.mubr.bf16.mxu0 %v3482
        %3546 = vmatmul.mubr.bf16.gmra.mrb[0].mxu0 %v3481
        %v3547 = vpop.f32.mrb[0].mxu0
        %v3548 = vadd.f32 0.0, %v3547
        %v3549 = vpop.f32.mrb[0].mxu0
        %v3550 = vpop.f32.mrb[0].mxu0
        %v3551 = vadd.f32 0.0, %v3550
        %v3552 = vpop.f32.mrb[0].mxu0
        %3553 = vmatprep.mubr.bf16.mxu0 %v3484
        %3554 = vmatmul.mubr.bf16.gmra.mrb[0].mxu0 %v3483
        %v3555 = vpop.f32.mrb[0].mxu0
        %v3556 = vadd.f32 0.0, %v3555
        %v3557 = vpop.f32.mrb[0].mxu0
        %v3558 = vpop.f32.mrb[0].mxu0
        %v3559 = vadd.f32 0.0, %v3558
        %v3560 = vpop.f32.mrb[0].mxu0
        %3561 = vmatprep.mubr.bf16.mxu0 %v3486
        %3562 = vmatmul.mubr.bf16.gmra.mrb[0].mxu0 %v3485
        %v3563 = vpop.f32.mrb[0].mxu0
        %v3564 = vadd.f32 0.0, %v3563
        %v3565 = vpop.f32.mrb[0].mxu0
        %v3566 = vpop.f32.mrb[0].mxu0
        %v3567 = vadd.f32 0.0, %v3566
        %v3568 = vpop.f32.mrb[0].mxu0
        %3569 = vmatprep.mubr.bf16.mxu0 %v3488
        %3570 = vmatmul.mubr.bf16.gmra.mrb[0].mxu0 %v3487
        %v3571 = vpop.f32.mrb[0].mxu0
        %v3572 = vadd.f32 0.0, %v3571
        %v3573 = vpop.f32.mrb[0].mxu0
        %v3574 = vpop.f32.mrb[0].mxu0
        %v3575 = vadd.f32 0.0, %v3574
        %v3576 = vpop.f32.mrb[0].mxu0
        %3577 = vmatprep.mubr.bf16.mxu0 %v3490
        %3578 = vmatmul.mubr.bf16.gmra.mrb[0].mxu0 %v3489
        %v3579 = vpop.f32.mrb[0].mxu0
        %v3580 = vadd.f32 0.0, %v3579
        %v3581 = vpop.f32.mrb[0].mxu0
        %v3582 = vpop.f32.mrb[0].mxu0
        %v3583 = vadd.f32 0.0, %v3582
        %v3584 = vpop.f32.mrb[0].mxu0
        %3585 = vmatprep.mubr.bf16.mxu0 %v3492
        %3586 = vmatmul.mubr.bf16.gmra.mrb[0].mxu0 %v3491
        %v3587 = vpop.f32.mrb[0].mxu0
        %v3588 = vadd.f32 0.0, %v3587
        %v3589 = vpop.f32.mrb[0].mxu0
        %v3590 = vpop.f32.mrb[0].mxu0
        %v3591 = vadd.f32 0.0, %v3590
        %v3592 = vpop.f32.mrb[0].mxu0
        %3593 = vmatprep.mubr.bf16.mxu0 %v3494
        %3594 = vmatmul.mubr.bf16.gmra.mrb[0].mxu0 %v3493
        %v3595 = vpop.f32.mrb[0].mxu0
        %v3596 = vadd.f32 0.0, %v3595
        %v3597 = vpop.f32.mrb[0].mxu0
        %v3598 = vpop.f32.mrb[0].mxu0
        %v3599 = vadd.f32 0.0, %v3598
        %v3600 = vpop.f32.mrb[0].mxu0
        %3601 = vmatprep.mubr.bf16.mxu0 %v3496
        %3602 = vmatmul.mubr.bf16.gmra.mrb[0].mxu0 %v3495
        %v3603 = vpop.f32.mrb[0].mxu0
        %v3604 = vadd.f32 0.0, %v3603
        %v3605 = vpop.f32.mrb[0].mxu0
        %v3606 = vpop.f32.mrb[0].mxu0
        %v3607 = vadd.f32 0.0, %v3606
        %v3608 = vpop.f32.mrb[0].mxu0
        %3609 = vmatprep.mubr.bf16.mxu0 %v3498
        %3610 = vmatmul.mubr.bf16.gmra.mrb[0].mxu0 %v3497
        %v3611 = vpop.f32.mrb[0].mxu0
        %v3612 = vadd.f32 0.0, %v3611
        %v3613 = vpop.f32.mrb[0].mxu0
        %v3614 = vpop.f32.mrb[0].mxu0
        %v3615 = vadd.f32 0.0, %v3614
        %v3616 = vpop.f32.mrb[0].mxu0
        %3617 = vmatprep.mubr.bf16.mxu0 %v3500
        %3618 = vmatmul.mubr.bf16.gmra.mrb[0].mxu0 %v3499
        %v3619 = vpop.f32.mrb[0].mxu0
        %v3620 = vadd.f32 0.0, %v3619
        %v3621 = vpop.f32.mrb[0].mxu0
        %v3622 = vpop.f32.mrb[0].mxu0
        %v3623 = vadd.f32 0.0, %v3622
        %v3624 = vpop.f32.mrb[0].mxu0
        %3625 = vmatprep.mubr.bf16.mxu0 %v3502
        %3626 = vmatmul.mubr.bf16.gmra.mrb[0].mxu0 %v3501
        %v3627 = vpop.f32.mrb[0].mxu0
        %v3628 = vadd.f32 0.0, %v3627
        %v3629 = vpop.f32.mrb[0].mxu0
        %v3630 = vpop.f32.mrb[0].mxu0
        %v3631 = vadd.f32 0.0, %v3630
        %v3632 = vpop.f32.mrb[0].mxu0
        %3633 = vmatprep.mubr.bf16.mxu0 %v3504
        %3634 = vmatmul.mubr.bf16.gmra.mrb[0].mxu0 %v3503
        %v3635 = vpop.f32.mrb[0].mxu0
        %v3636 = vadd.f32 0.0, %v3635
        %v3637 = vpop.f32.mrb[0].mxu0
        %v3638 = vpop.f32.mrb[0].mxu0
        %v3639 = vadd.f32 0.0, %v3638
        %v3640 = vpop.f32.mrb[0].mxu0
        %3641 = vmatprep.mubr.bf16.mxu0 %v3506
        %3642 = vmatmul.mubr.bf16.gmra.mrb[0].mxu0 %v3505
        %v3643 = vpop.f32.mrb[0].mxu0
        %v3644 = vadd.f32 0.0, %v3643
        %v3645 = vpop.f32.mrb[0].mxu0
        %v3646 = vpop.f32.mrb[0].mxu0
        %v3647 = vadd.f32 0.0, %v3646
        %v3648 = vpop.f32.mrb[0].mxu0
        %3649 = vmatprep.mubr.bf16.mxu0 %v3508
        %3650 = vmatmul.mubr.bf16.gmra.mrb[0].mxu0 %v3507
        %v3651 = vpop.f32.mrb[0].mxu0
        %v3652 = vadd.f32 0.0, %v3651
        %v3653 = vpop.f32.mrb[0].mxu0
        %v3654 = vpop.f32.mrb[0].mxu0
        %v3655 = vadd.f32 0.0, %v3654
        %v3656 = vpop.f32.mrb[0].mxu0
        %3657 = vmatprep.mubr.bf16.mxu0 %v3510
        %3658 = vmatmul.mubr.bf16.gmra.mrb[0].mxu0 %v3509
        %v3659 = vpop.f32.mrb[0].mxu0
        %v3660 = vadd.f32 0.0, %v3659
        %v3661 = vpop.f32.mrb[0].mxu0
        %v3662 = vpop.f32.mrb[0].mxu0
        %v3663 = vadd.f32 0.0, %v3662
        %v3664 = vpop.f32.mrb[0].mxu0
        %3665 = vmatprep.mubr.bf16.mxu0 %v3512
        %3666 = vmatmul.mubr.bf16.gmra.mrb[0].mxu0 %v3511
        %v3667 = vpop.f32.mrb[0].mxu0
        %v3668 = vadd.f32 0.0, %v3667
        %v3669 = vpop.f32.mrb[0].mxu0
        %v3670 = vpop.f32.mrb[0].mxu0
        %v3671 = vadd.f32 0.0, %v3670
        %v3672 = vpop.f32.mrb[0].mxu0
        %3673 = vdwg.mxu0
        %3674 = vst [vmem:[#allocation3] sm:$0xff] %v3548
        %3675 = vst [vmem:[#allocation3 + $0x10] sm:$0xff] %v3551
        %3676 = vst [vmem:[#allocation3 + $0x20] sm:$0xff] %v3556
        %3677 = vst [vmem:[#allocation3 + $0x30] sm:$0xff] %v3559
        %3678 = vst [vmem:[#allocation3 + $0x40] sm:$0xff] %v3564
        %3679 = vst [vmem:[#allocation3 + $0x50] sm:$0xff] %v3567
        %3680 = vst [vmem:[#allocation3 + $0x60] sm:$0xff] %v3572
        %3681 = vst [vmem:[#allocation3 + $0x70] sm:$0xff] %v3575
        %3682 = vst [vmem:[#allocation3 + $0x80] sm:$0xff] %v3580
        %3683 = vst [vmem:[#allocation3 + $0x90] sm:$0xff] %v3583
        %3684 = vst [vmem:[#allocation3 + $0xa0] sm:$0xff] %v3588
        %3685 = vst [vmem:[#allocation3 + $0xb0] sm:$0xff] %v3591
        %3686 = vst [vmem:[#allocation3 + $0xc0] sm:$0xff] %v3596
        %3687 = vst [vmem:[#allocation3 + $0xd0] sm:$0xff] %v3599
        %3688 = vst [vmem:[#allocation3 + $0xe0] sm:$0xff] %v3604
        %3689 = vst [vmem:[#allocation3 + $0xf0] sm:$0xff] %v3607
        %3690 = vst [vmem:[#allocation3 + $0x100] sm:$0xff] %v3612
        %3691 = vst [vmem:[#allocation3 + $0x110] sm:$0xff] %v3615
        %3692 = vst [vmem:[#allocation3 + $0x120] sm:$0xff] %v3620
        %3693 = vst [vmem:[#allocation3 + $0x130] sm:$0xff] %v3623
        %3694 = vst [vmem:[#allocation3 + $0x140] sm:$0xff] %v3628
        %3695 = vst [vmem:[#allocation3 + $0x150] sm:$0xff] %v3631
        %3696 = vst [vmem:[#allocation3 + $0x160] sm:$0xff] %v3636
        %3697 = vst [vmem:[#allocation3 + $0x170] sm:$0xff] %v3639
        %3698 = vst [vmem:[#allocation3 + $0x180] sm:$0xff] %v3644
        %3699 = vst [vmem:[#allocation3 + $0x190] sm:$0xff] %v3647
        %3700 = vst [vmem:[#allocation3 + $0x1a0] sm:$0xff] %v3652
        %3701 = vst [vmem:[#allocation3 + $0x1b0] sm:$0xff] %v3655
        %3702 = vst [vmem:[#allocation3 + $0x1c0] sm:$0xff] %v3660
        %3703 = vst [vmem:[#allocation3 + $0x1d0] sm:$0xff] %v3663
        %3704 = vst [vmem:[#allocation3 + $0x1e0] sm:$0xff] %v3668
        %3705 = vst [vmem:[#allocation3 + $0x1f0] sm:$0xff] %v3671
        %v3706 = vpack.c.bf16 %v2222, %v2218
        %v3707 = vpack.c.bf16 %v2232, %v2228
        %v3708 = vpack.c.bf16 %v2242, %v2238
        %v3709 = vpack.c.bf16 %v2252, %v2248
        %v3710 = vpack.c.bf16 %v2262, %v2258
        %v3711 = vpack.c.bf16 %v2272, %v2268
        %v3712 = vpack.c.bf16 %v2282, %v2278
        %v3713 = vpack.c.bf16 %v2292, %v2288
        %v3714 = vpack.c.bf16 %v2302, %v2298
        %v3715 = vpack.c.bf16 %v2312, %v2308
        %v3716 = vpack.c.bf16 %v2322, %v2318
        %v3717 = vpack.c.bf16 %v2332, %v2328
        %v3718 = vpack.c.bf16 %v2342, %v2338
        %v3719 = vpack.c.bf16 %v2352, %v2348
        %v3720 = vpack.c.bf16 %v2362, %v2358
        %v3721 = vpack.c.bf16 %v2372, %v2368
        %v3722 = vpack.c.bf16 %v2415, %v2411
        %v3723 = vpack.c.bf16 %v2425, %v2421
        %v3724 = vpack.c.bf16 %v2435, %v2431
        %v3725 = vpack.c.bf16 %v2445, %v2441
        %v3726 = vpack.c.bf16 %v2455, %v2451
        %v3727 = vpack.c.bf16 %v2465, %v2461
        %v3728 = vpack.c.bf16 %v2475, %v2471
        %v3729 = vpack.c.bf16 %v2485, %v2481
        %v3730 = vpack.c.bf16 %v2495, %v2491
        %v3731 = vpack.c.bf16 %v2505, %v2501
        %v3732 = vpack.c.bf16 %v2515, %v2511
        %v3733 = vpack.c.bf16 %v2525, %v2521
        %v3734 = vpack.c.bf16 %v2535, %v2531
        %v3735 = vpack.c.bf16 %v2545, %v2541
        %v3736 = vpack.c.bf16 %v2555, %v2551
        %v3737 = vpack.c.bf16 %v2565, %v2561
        %v3738 = vpack.c.bf16 %v2608, %v2604
        %v3739 = vpack.c.bf16 %v2618, %v2614
        %v3740 = vpack.c.bf16 %v2628, %v2624
        %v3741 = vpack.c.bf16 %v2638, %v2634
        %v3742 = vpack.c.bf16 %v2648, %v2644
        %v3743 = vpack.c.bf16 %v2658, %v2654
        %v3744 = vpack.c.bf16 %v2668, %v2664
        %v3745 = vpack.c.bf16 %v2678, %v2674
        %v3746 = vpack.c.bf16 %v2688, %v2684
        %v3747 = vpack.c.bf16 %v2698, %v2694
        %v3748 = vpack.c.bf16 %v2708, %v2704
        %v3749 = vpack.c.bf16 %v2718, %v2714
        %v3750 = vpack.c.bf16 %v2728, %v2724
        %v3751 = vpack.c.bf16 %v2738, %v2734
        %v3752 = vpack.c.bf16 %v2748, %v2744
        %v3753 = vpack.c.bf16 %v2758, %v2754
        %3754 = vmatprep.subr.bf16.mxu0 0
        %3755 = vmatpush1.bf16.xpose.msra.mxu0 %v3722
        %3756 = vmatprep.subr.bf16.mxu0 0
        %3757 = vmatpush1.bf16.xpose.msra.mxu0 %v3723
        %3758 = vmatprep.subr.bf16.mxu0 0
        %3759 = vmatpush1.bf16.xpose.msra.mxu0 %v3724
        %3760 = vmatprep.subr.bf16.mxu0 0
        %3761 = vmatpush1.bf16.xpose.msra.mxu0 %v3725
        %3762 = vmatprep.subr.bf16.mxu0 0
        %3763 = vmatpush1.bf16.xpose.msra.mxu0 %v3726
        %3764 = vmatprep.subr.bf16.mxu0 0
        %3765 = vmatpush1.bf16.xpose.msra.mxu0 %v3727
        %3766 = vmatprep.subr.bf16.mxu0 0
        %3767 = vmatpush1.bf16.xpose.msra.mxu0 %v3728
        %3768 = vmatprep.subr.bf16.mxu0 0
        %3769 = vmatpush1.bf16.xpose.msra.mxu0 %v3729
        %3770 = vmatprep.subr.bf16.mxu0 0
        %3771 = vmatpush1.bf16.xpose.msra.mxu0 %v3730
        %3772 = vmatprep.subr.bf16.mxu0 0
        %3773 = vmatpush1.bf16.xpose.msra.mxu0 %v3731
        %3774 = vmatprep.subr.bf16.mxu0 0
        %3775 = vmatpush1.bf16.xpose.msra.mxu0 %v3732
        %3776 = vmatprep.subr.bf16.mxu0 0
        %3777 = vmatpush1.bf16.xpose.msra.mxu0 %v3733
        %3778 = vmatprep.subr.bf16.mxu0 0
        %3779 = vmatpush1.bf16.xpose.msra.mxu0 %v3734
        %3780 = vmatprep.subr.bf16.mxu0 0
        %3781 = vmatpush1.bf16.xpose.msra.mxu0 %v3735
        %3782 = vmatprep.subr.bf16.mxu0 0
        %3783 = vmatpush1.bf16.xpose.msra.mxu0 %v3736
        %3784 = vmatprep.subr.bf16.mxu0 0
        %3785 = vmatpush1.bf16.xpose.msra.mxu0 %v3737
        %3786 = vmatprep.mubr.bf16.mxu0 0
        %3787 = vmatmul.mubr.bf16.gmra.mrb[0].mxu0 %v3706
        %v3788 = vpop.f32.mrb[0].mxu0
        %v3789 = vadd.f32 0.0, %v3788
        %v3790 = vpop.f32.mrb[0].mxu0
        %v3791 = vadd.f32 0.0, %v3790
        %v3792 = vpop.f32.mrb[0].mxu0
        %v3793 = vadd.f32 0.0, %v3792
        %v3794 = vpop.f32.mrb[0].mxu0
        %v3795 = vadd.f32 0.0, %v3794
        %3796 = vmatprep.mubr.bf16.mxu0 0
        %3797 = vmatmul.mubr.bf16.gmra.mrb[0].mxu0 %v3707
        %v3798 = vpop.f32.mrb[0].mxu0
        %v3799 = vadd.f32 0.0, %v3798
        %v3800 = vpop.f32.mrb[0].mxu0
        %v3801 = vadd.f32 0.0, %v3800
        %v3802 = vpop.f32.mrb[0].mxu0
        %v3803 = vadd.f32 0.0, %v3802
        %v3804 = vpop.f32.mrb[0].mxu0
        %v3805 = vadd.f32 0.0, %v3804
        %3806 = vmatprep.mubr.bf16.mxu0 0
        %3807 = vmatmul.mubr.bf16.gmra.mrb[0].mxu0 %v3708
        %v3808 = vpop.f32.mrb[0].mxu0
        %v3809 = vadd.f32 0.0, %v3808
        %v3810 = vpop.f32.mrb[0].mxu0
        %v3811 = vadd.f32 0.0, %v3810
        %v3812 = vpop.f32.mrb[0].mxu0
        %v3813 = vadd.f32 0.0, %v3812
        %v3814 = vpop.f32.mrb[0].mxu0
        %v3815 = vadd.f32 0.0, %v3814
        %3816 = vmatprep.mubr.bf16.mxu0 0
        %3817 = vmatmul.mubr.bf16.gmra.mrb[0].mxu0 %v3709
        %v3818 = vpop.f32.mrb[0].mxu0
        %v3819 = vadd.f32 0.0, %v3818
        %v3820 = vpop.f32.mrb[0].mxu0
        %v3821 = vadd.f32 0.0, %v3820
        %v3822 = vpop.f32.mrb[0].mxu0
        %v3823 = vadd.f32 0.0, %v3822
        %v3824 = vpop.f32.mrb[0].mxu0
        %v3825 = vadd.f32 0.0, %v3824
        %3826 = vmatprep.mubr.bf16.mxu0 0
        %3827 = vmatmul.mubr.bf16.gmra.mrb[0].mxu0 %v3710
        %v3828 = vpop.f32.mrb[0].mxu0
        %v3829 = vadd.f32 0.0, %v3828
        %v3830 = vpop.f32.mrb[0].mxu0
        %v3831 = vadd.f32 0.0, %v3830
        %v3832 = vpop.f32.mrb[0].mxu0
        %v3833 = vadd.f32 0.0, %v3832
        %v3834 = vpop.f32.mrb[0].mxu0
        %v3835 = vadd.f32 0.0, %v3834
        %3836 = vmatprep.mubr.bf16.mxu0 0
        %3837 = vmatmul.mubr.bf16.gmra.mrb[0].mxu0 %v3711
        %v3838 = vpop.f32.mrb[0].mxu0
        %v3839 = vadd.f32 0.0, %v3838
        %v3840 = vpop.f32.mrb[0].mxu0
        %v3841 = vadd.f32 0.0, %v3840
        %v3842 = vpop.f32.mrb[0].mxu0
        %v3843 = vadd.f32 0.0, %v3842
        %v3844 = vpop.f32.mrb[0].mxu0
        %v3845 = vadd.f32 0.0, %v3844
        %3846 = vmatprep.mubr.bf16.mxu0 0
        %3847 = vmatmul.mubr.bf16.gmra.mrb[0].mxu0 %v3712
        %v3848 = vpop.f32.mrb[0].mxu0
        %v3849 = vadd.f32 0.0, %v3848
        %v3850 = vpop.f32.mrb[0].mxu0
        %v3851 = vadd.f32 0.0, %v3850
        %v3852 = vpop.f32.mrb[0].mxu0
        %v3853 = vadd.f32 0.0, %v3852
        %v3854 = vpop.f32.mrb[0].mxu0
        %v3855 = vadd.f32 0.0, %v3854
        %3856 = vmatprep.mubr.bf16.mxu0 0
        %3857 = vmatmul.mubr.bf16.gmra.mrb[0].mxu0 %v3713
        %v3858 = vpop.f32.mrb[0].mxu0
        %v3859 = vadd.f32 0.0, %v3858
        %v3860 = vpop.f32.mrb[0].mxu0
        %v3861 = vadd.f32 0.0, %v3860
        %v3862 = vpop.f32.mrb[0].mxu0
        %v3863 = vadd.f32 0.0, %v3862
        %v3864 = vpop.f32.mrb[0].mxu0
        %v3865 = vadd.f32 0.0, %v3864
        %3866 = vmatprep.mubr.bf16.mxu0 0
        %3867 = vmatmul.mubr.bf16.gmra.mrb[0].mxu0 %v3714
        %v3868 = vpop.f32.mrb[0].mxu0
        %v3869 = vadd.f32 0.0, %v3868
        %v3870 = vpop.f32.mrb[0].mxu0
        %v3871 = vadd.f32 0.0, %v3870
        %v3872 = vpop.f32.mrb[0].mxu0
        %v3873 = vadd.f32 0.0, %v3872
        %v3874 = vpop.f32.mrb[0].mxu0
        %v3875 = vadd.f32 0.0, %v3874
        %3876 = vmatprep.mubr.bf16.mxu0 0
        %3877 = vmatmul.mubr.bf16.gmra.mrb[0].mxu0 %v3715
        %v3878 = vpop.f32.mrb[0].mxu0
        %v3879 = vadd.f32 0.0, %v3878
        %v3880 = vpop.f32.mrb[0].mxu0
        %v3881 = vadd.f32 0.0, %v3880
        %v3882 = vpop.f32.mrb[0].mxu0
        %v3883 = vadd.f32 0.0, %v3882
        %v3884 = vpop.f32.mrb[0].mxu0
        %v3885 = vadd.f32 0.0, %v3884
        %3886 = vmatprep.mubr.bf16.mxu0 0
        %3887 = vmatmul.mubr.bf16.gmra.mrb[0].mxu0 %v3716
        %v3888 = vpop.f32.mrb[0].mxu0
        %v3889 = vadd.f32 0.0, %v3888
        %v3890 = vpop.f32.mrb[0].mxu0
        %v3891 = vadd.f32 0.0, %v3890
        %v3892 = vpop.f32.mrb[0].mxu0
        %v3893 = vadd.f32 0.0, %v3892
        %v3894 = vpop.f32.mrb[0].mxu0
        %v3895 = vadd.f32 0.0, %v3894
        %3896 = vmatprep.mubr.bf16.mxu0 0
        %3897 = vmatmul.mubr.bf16.gmra.mrb[0].mxu0 %v3717
        %v3898 = vpop.f32.mrb[0].mxu0
        %v3899 = vadd.f32 0.0, %v3898
        %v3900 = vpop.f32.mrb[0].mxu0
        %v3901 = vadd.f32 0.0, %v3900
        %v3902 = vpop.f32.mrb[0].mxu0
        %v3903 = vadd.f32 0.0, %v3902
        %v3904 = vpop.f32.mrb[0].mxu0
        %v3905 = vadd.f32 0.0, %v3904
        %3906 = vmatprep.mubr.bf16.mxu0 0
        %3907 = vmatmul.mubr.bf16.gmra.mrb[0].mxu0 %v3718
        %v3908 = vpop.f32.mrb[0].mxu0
        %v3909 = vadd.f32 0.0, %v3908
        %v3910 = vpop.f32.mrb[0].mxu0
        %v3911 = vadd.f32 0.0, %v3910
        %v3912 = vpop.f32.mrb[0].mxu0
        %v3913 = vadd.f32 0.0, %v3912
        %v3914 = vpop.f32.mrb[0].mxu0
        %v3915 = vadd.f32 0.0, %v3914
        %3916 = vmatprep.mubr.bf16.mxu0 0
        %3917 = vmatmul.mubr.bf16.gmra.mrb[0].mxu0 %v3719
        %v3918 = vpop.f32.mrb[0].mxu0
        %v3919 = vadd.f32 0.0, %v3918
        %v3920 = vpop.f32.mrb[0].mxu0
        %v3921 = vadd.f32 0.0, %v3920
        %v3922 = vpop.f32.mrb[0].mxu0
        %v3923 = vadd.f32 0.0, %v3922
        %v3924 = vpop.f32.mrb[0].mxu0
        %v3925 = vadd.f32 0.0, %v3924
        %3926 = vmatprep.mubr.bf16.mxu0 0
        %3927 = vmatmul.mubr.bf16.gmra.mrb[0].mxu0 %v3720
        %v3928 = vpop.f32.mrb[0].mxu0
        %v3929 = vadd.f32 0.0, %v3928
        %v3930 = vpop.f32.mrb[0].mxu0
        %v3931 = vadd.f32 0.0, %v3930
        %v3932 = vpop.f32.mrb[0].mxu0
        %v3933 = vadd.f32 0.0, %v3932
        %v3934 = vpop.f32.mrb[0].mxu0
        %v3935 = vadd.f32 0.0, %v3934
        %3936 = vmatprep.mubr.bf16.mxu0 0
        %3937 = vmatmul.mubr.bf16.gmra.mrb[0].mxu0 %v3721
        %v3938 = vpop.f32.mrb[0].mxu0
        %v3939 = vadd.f32 0.0, %v3938
        %v3940 = vpop.f32.mrb[0].mxu0
        %v3941 = vadd.f32 0.0, %v3940
        %v3942 = vpop.f32.mrb[0].mxu0
        %v3943 = vadd.f32 0.0, %v3942
        %v3944 = vpop.f32.mrb[0].mxu0
        %v3945 = vadd.f32 0.0, %v3944
        %3946 = vdwg.mxu0
        %v3947 = vmax.f32 %v3789, %v3791
        %3948 = vmax.xlane.f32.xlu0 %v3947
        %v3949 = vpop.xlane.xlu0 %3948
        %v3950 = vmax.f32 %v3793, %v3795
        %3951 = vmax.xlane.f32.xlu0 %v3950
        %v3952 = vpop.xlane.xlu0 %3951
        %v3953 = vmax.f32 %v3799, %v3801
        %3954 = vmax.xlane.f32.xlu0 %v3953
        %v3955 = vpop.xlane.xlu0 %3954
        %v3956 = vmax.f32 %v3803, %v3805
        %3957 = vmax.xlane.f32.xlu0 %v3956
        %v3958 = vpop.xlane.xlu0 %3957
        %v3959 = vmax.f32 %v3809, %v3811
        %3960 = vmax.xlane.f32.xlu0 %v3959
        %v3961 = vpop.xlane.xlu0 %3960
        %v3962 = vmax.f32 %v3813, %v3815
        %3963 = vmax.xlane.f32.xlu0 %v3962
        %v3964 = vpop.xlane.xlu0 %3963
        %v3965 = vmax.f32 %v3819, %v3821
        %3966 = vmax.xlane.f32.xlu0 %v3965
        %v3967 = vpop.xlane.xlu0 %3966
        %v3968 = vmax.f32 %v3823, %v3825
        %3969 = vmax.xlane.f32.xlu0 %v3968
        %v3970 = vpop.xlane.xlu0 %3969
        %v3971 = vmax.f32 %v3829, %v3831
        %3972 = vmax.xlane.f32.xlu0 %v3971
        %v3973 = vpop.xlane.xlu0 %3972
        %v3974 = vmax.f32 %v3833, %v3835
        %3975 = vmax.xlane.f32.xlu0 %v3974
        %v3976 = vpop.xlane.xlu0 %3975
        %v3977 = vmax.f32 %v3839, %v3841
        %3978 = vmax.xlane.f32.xlu0 %v3977
        %v3979 = vpop.xlane.xlu0 %3978
        %v3980 = vmax.f32 %v3843, %v3845
        %3981 = vmax.xlane.f32.xlu0 %v3980
        %v3982 = vpop.xlane.xlu0 %3981
        %v3983 = vmax.f32 %v3849, %v3851
        %3984 = vmax.xlane.f32.xlu0 %v3983
        %v3985 = vpop.xlane.xlu0 %3984
        %v3986 = vmax.f32 %v3853, %v3855
        %3987 = vmax.xlane.f32.xlu0 %v3986
        %v3988 = vpop.xlane.xlu0 %3987
        %v3989 = vmax.f32 %v3859, %v3861
        %3990 = vmax.xlane.f32.xlu0 %v3989
        %v3991 = vpop.xlane.xlu0 %3990
        %v3992 = vmax.f32 %v3863, %v3865
        %3993 = vmax.xlane.f32.xlu0 %v3992
        %v3994 = vpop.xlane.xlu0 %3993
        %v3995 = vmax.f32 %v3869, %v3871
        %3996 = vmax.xlane.f32.xlu0 %v3995
        %v3997 = vpop.xlane.xlu0 %3996
        %v3998 = vmax.f32 %v3873, %v3875
        %3999 = vmax.xlane.f32.xlu0 %v3998
        %v4000 = vpop.xlane.xlu0 %3999
        %v4001 = vmax.f32 %v3879, %v3881
        %4002 = vmax.xlane.f32.xlu0 %v4001
        %v4003 = vpop.xlane.xlu0 %4002
        %v4004 = vmax.f32 %v3883, %v3885
        %4005 = vmax.xlane.f32.xlu0 %v4004
        %v4006 = vpop.xlane.xlu0 %4005
        %v4007 = vmax.f32 %v3889, %v3891
        %4008 = vmax.xlane.f32.xlu0 %v4007
        %v4009 = vpop.xlane.xlu0 %4008
        %v4010 = vmax.f32 %v3893, %v3895
        %4011 = vmax.xlane.f32.xlu0 %v4010
        %v4012 = vpop.xlane.xlu0 %4011
        %v4013 = vmax.f32 %v3899, %v3901
        %4014 = vmax.xlane.f32.xlu0 %v4013
        %v4015 = vpop.xlane.xlu0 %4014
        %v4016 = vmax.f32 %v3903, %v3905
        %4017 = vmax.xlane.f32.xlu0 %v4016
        %v4018 = vpop.xlane.xlu0 %4017
        %v4019 = vmax.f32 %v3909, %v3911
        %4020 = vmax.xlane.f32.xlu0 %v4019
        %v4021 = vpop.xlane.xlu0 %4020
        %v4022 = vmax.f32 %v3913, %v3915
        %4023 = vmax.xlane.f32.xlu0 %v4022
        %v4024 = vpop.xlane.xlu0 %4023
        %v4025 = vmax.f32 %v3919, %v3921
        %4026 = vmax.xlane.f32.xlu0 %v4025
        %v4027 = vpop.xlane.xlu0 %4026
        %v4028 = vmax.f32 %v3923, %v3925
        %4029 = vmax.xlane.f32.xlu0 %v4028
        %v4030 = vpop.xlane.xlu0 %4029
        %v4031 = vmax.f32 %v3929, %v3931
        %4032 = vmax.xlane.f32.xlu0 %v4031
        %v4033 = vpop.xlane.xlu0 %4032
        %v4034 = vmax.f32 %v3933, %v3935
        %4035 = vmax.xlane.f32.xlu0 %v4034
        %v4036 = vpop.xlane.xlu0 %4035
        %v4037 = vmax.f32 %v3939, %v3941
        %4038 = vmax.xlane.f32.xlu0 %v4037
        %v4039 = vpop.xlane.xlu0 %4038
        %v4040 = vmax.f32 %v3943, %v3945
        %4041 = vmax.xlane.f32.xlu0 %v4040
        %v4042 = vpop.xlane.xlu0 %4041
        %v4043 = vsub.f32 %v3789, %v3949
        %v4044 = vsub.f32 %v3791, %v3949
        %v4045 = vsub.f32 %v3793, %v3952
        %v4046 = vsub.f32 %v3795, %v3952
        %v4047 = vsub.f32 %v3799, %v3955
        %v4048 = vsub.f32 %v3801, %v3955
        %v4049 = vsub.f32 %v3803, %v3958
        %v4050 = vsub.f32 %v3805, %v3958
        %v4051 = vsub.f32 %v3809, %v3961
        %v4052 = vsub.f32 %v3811, %v3961
        %v4053 = vsub.f32 %v3813, %v3964
        %v4054 = vsub.f32 %v3815, %v3964
        %v4055 = vsub.f32 %v3819, %v3967
        %v4056 = vsub.f32 %v3821, %v3967
        %v4057 = vsub.f32 %v3823, %v3970
        %v4058 = vsub.f32 %v3825, %v3970
        %v4059 = vsub.f32 %v3829, %v3973
        %v4060 = vsub.f32 %v3831, %v3973
        %v4061 = vsub.f32 %v3833, %v3976
        %v4062 = vsub.f32 %v3835, %v3976
        %v4063 = vsub.f32 %v3839, %v3979
        %v4064 = vsub.f32 %v3841, %v3979
        %v4065 = vsub.f32 %v3843, %v3982
        %v4066 = vsub.f32 %v3845, %v3982
        %v4067 = vsub.f32 %v3849, %v3985
        %v4068 = vsub.f32 %v3851, %v3985
        %v4069 = vsub.f32 %v3853, %v3988
        %v4070 = vsub.f32 %v3855, %v3988
        %v4071 = vsub.f32 %v3859, %v3991
        %v4072 = vsub.f32 %v3861, %v3991
        %v4073 = vsub.f32 %v3863, %v3994
        %v4074 = vsub.f32 %v3865, %v3994
        %v4075 = vsub.f32 %v3869, %v3997
        %v4076 = vsub.f32 %v3871, %v3997
        %v4077 = vsub.f32 %v3873, %v4000
        %v4078 = vsub.f32 %v3875, %v4000
        %v4079 = vsub.f32 %v3879, %v4003
        %v4080 = vsub.f32 %v3881, %v4003
        %v4081 = vsub.f32 %v3883, %v4006
        %v4082 = vsub.f32 %v3885, %v4006
        %v4083 = vsub.f32 %v3889, %v4009
        %v4084 = vsub.f32 %v3891, %v4009
        %v4085 = vsub.f32 %v3893, %v4012
        %v4086 = vsub.f32 %v3895, %v4012
        %v4087 = vsub.f32 %v3899, %v4015
        %v4088 = vsub.f32 %v3901, %v4015
        %v4089 = vsub.f32 %v3903, %v4018
        %v4090 = vsub.f32 %v3905, %v4018
        %v4091 = vsub.f32 %v3909, %v4021
        %v4092 = vsub.f32 %v3911, %v4021
        %v4093 = vsub.f32 %v3913, %v4024
        %v4094 = vsub.f32 %v3915, %v4024
        %v4095 = vsub.f32 %v3919, %v4027
        %v4096 = vsub.f32 %v3921, %v4027
        %v4097 = vsub.f32 %v3923, %v4030
        %v4098 = vsub.f32 %v3925, %v4030
        %v4099 = vsub.f32 %v3929, %v4033
        %v4100 = vsub.f32 %v3931, %v4033
        %v4101 = vsub.f32 %v3933, %v4036
        %v4102 = vsub.f32 %v3935, %v4036
        %v4103 = vsub.f32 %v3939, %v4039
        %v4104 = vsub.f32 %v3941, %v4039
        %v4105 = vsub.f32 %v3943, %v4042
        %v4106 = vsub.f32 %v3945, %v4042
        %v4107 = vmul.f32 %v4043, 1.442695
        %v4108 = vpow.pop %v4107
        %v4109 = vmul.f32 %v4044, 1.442695
        %v4110 = vpow.pop %v4109
        %v4111 = vmul.f32 %v4045, 1.442695
        %v4112 = vpow.pop %v4111
        %v4113 = vmul.f32 %v4046, 1.442695
        %v4114 = vpow.pop %v4113
        %v4115 = vmul.f32 %v4047, 1.442695
        %v4116 = vpow.pop %v4115
        %v4117 = vmul.f32 %v4048, 1.442695
        %v4118 = vpow.pop %v4117
        %v4119 = vmul.f32 %v4049, 1.442695
        %v4120 = vpow.pop %v4119
        %v4121 = vmul.f32 %v4050, 1.442695
        %v4122 = vpow.pop %v4121
        %v4123 = vmul.f32 %v4051, 1.442695
        %v4124 = vpow.pop %v4123
        %v4125 = vmul.f32 %v4052, 1.442695
        %v4126 = vpow.pop %v4125
        %v4127 = vmul.f32 %v4053, 1.442695
        %v4128 = vpow.pop %v4127
        %v4129 = vmul.f32 %v4054, 1.442695
        %v4130 = vpow.pop %v4129
        %v4131 = vmul.f32 %v4055, 1.442695
        %v4132 = vpow.pop %v4131
        %v4133 = vmul.f32 %v4056, 1.442695
        %v4134 = vpow.pop %v4133
        %v4135 = vmul.f32 %v4057, 1.442695
        %v4136 = vpow.pop %v4135
        %v4137 = vmul.f32 %v4058, 1.442695
        %v4138 = vpow.pop %v4137
        %v4139 = vmul.f32 %v4059, 1.442695
        %v4140 = vpow.pop %v4139
        %v4141 = vmul.f32 %v4060, 1.442695
        %v4142 = vpow.pop %v4141
        %v4143 = vmul.f32 %v4061, 1.442695
        %v4144 = vpow.pop %v4143
        %v4145 = vmul.f32 %v4062, 1.442695
        %v4146 = vpow.pop %v4145
        %v4147 = vmul.f32 %v4063, 1.442695
        %v4148 = vpow.pop %v4147
        %v4149 = vmul.f32 %v4064, 1.442695
        %v4150 = vpow.pop %v4149
        %v4151 = vmul.f32 %v4065, 1.442695
        %v4152 = vpow.pop %v4151
        %v4153 = vmul.f32 %v4066, 1.442695
        %v4154 = vpow.pop %v4153
        %v4155 = vmul.f32 %v4067, 1.442695
        %v4156 = vpow.pop %v4155
        %v4157 = vmul.f32 %v4068, 1.442695
        %v4158 = vpow.pop %v4157
        %v4159 = vmul.f32 %v4069, 1.442695
        %v4160 = vpow.pop %v4159
        %v4161 = vmul.f32 %v4070, 1.442695
        %v4162 = vpow.pop %v4161
        %v4163 = vmul.f32 %v4071, 1.442695
        %v4164 = vpow.pop %v4163
        %v4165 = vmul.f32 %v4072, 1.442695
        %v4166 = vpow.pop %v4165
        %v4167 = vmul.f32 %v4073, 1.442695
        %v4168 = vpow.pop %v4167
        %v4169 = vmul.f32 %v4074, 1.442695
        %v4170 = vpow.pop %v4169
        %v4171 = vmul.f32 %v4075, 1.442695
        %v4172 = vpow.pop %v4171
        %v4173 = vmul.f32 %v4076, 1.442695
        %v4174 = vpow.pop %v4173
        %v4175 = vmul.f32 %v4077, 1.442695
        %v4176 = vpow.pop %v4175
        %v4177 = vmul.f32 %v4078, 1.442695
        %v4178 = vpow.pop %v4177
        %v4179 = vmul.f32 %v4079, 1.442695
        %v4180 = vpow.pop %v4179
        %v4181 = vmul.f32 %v4080, 1.442695
        %v4182 = vpow.pop %v4181
        %v4183 = vmul.f32 %v4081, 1.442695
        %v4184 = vpow.pop %v4183
        %v4185 = vmul.f32 %v4082, 1.442695
        %v4186 = vpow.pop %v4185
        %v4187 = vmul.f32 %v4083, 1.442695
        %v4188 = vpow.pop %v4187
        %v4189 = vmul.f32 %v4084, 1.442695
        %v4190 = vpow.pop %v4189
        %v4191 = vmul.f32 %v4085, 1.442695
        %v4192 = vpow.pop %v4191
        %v4193 = vmul.f32 %v4086, 1.442695
        %v4194 = vpow.pop %v4193
        %v4195 = vmul.f32 %v4087, 1.442695
        %v4196 = vpow.pop %v4195
        %v4197 = vmul.f32 %v4088, 1.442695
        %v4198 = vpow.pop %v4197
        %v4199 = vmul.f32 %v4089, 1.442695
        %v4200 = vpow.pop %v4199
        %v4201 = vmul.f32 %v4090, 1.442695
        %v4202 = vpow.pop %v4201
        %v4203 = vmul.f32 %v4091, 1.442695
        %v4204 = vpow.pop %v4203
        %v4205 = vmul.f32 %v4092, 1.442695
        %v4206 = vpow.pop %v4205
        %v4207 = vmul.f32 %v4093, 1.442695
        %v4208 = vpow.pop %v4207
        %v4209 = vmul.f32 %v4094, 1.442695
        %v4210 = vpow.pop %v4209
        %v4211 = vmul.f32 %v4095, 1.442695
        %v4212 = vpow.pop %v4211
        %v4213 = vmul.f32 %v4096, 1.442695
        %v4214 = vpow.pop %v4213
        %v4215 = vmul.f32 %v4097, 1.442695
        %v4216 = vpow.pop %v4215
        %v4217 = vmul.f32 %v4098, 1.442695
        %v4218 = vpow.pop %v4217
        %v4219 = vmul.f32 %v4099, 1.442695
        %v4220 = vpow.pop %v4219
        %v4221 = vmul.f32 %v4100, 1.442695
        %v4222 = vpow.pop %v4221
        %v4223 = vmul.f32 %v4101, 1.442695
        %v4224 = vpow.pop %v4223
        %v4225 = vmul.f32 %v4102, 1.442695
        %v4226 = vpow.pop %v4225
        %v4227 = vmul.f32 %v4103, 1.442695
        %v4228 = vpow.pop %v4227
        %v4229 = vmul.f32 %v4104, 1.442695
        %v4230 = vpow.pop %v4229
        %v4231 = vmul.f32 %v4105, 1.442695
        %v4232 = vpow.pop %v4231
        %v4233 = vmul.f32 %v4106, 1.442695
        %v4234 = vpow.pop %v4233
        %v4235 = vadd.f32 %v4108, %v4110
        %4236 = vadd.xlane.f32.xlu0 %v4235
        %v4237 = vpop.xlane.xlu0 %4236
        %v4238 = vadd.f32 %v4112, %v4114
        %4239 = vadd.xlane.f32.xlu0 %v4238
        %v4240 = vpop.xlane.xlu0 %4239
        %v4241 = vadd.f32 %v4116, %v4118
        %4242 = vadd.xlane.f32.xlu0 %v4241
        %v4243 = vpop.xlane.xlu0 %4242
        %v4244 = vadd.f32 %v4120, %v4122
        %4245 = vadd.xlane.f32.xlu0 %v4244
        %v4246 = vpop.xlane.xlu0 %4245
        %v4247 = vadd.f32 %v4124, %v4126
        %4248 = vadd.xlane.f32.xlu0 %v4247
        %v4249 = vpop.xlane.xlu0 %4248
        %v4250 = vadd.f32 %v4128, %v4130
        %4251 = vadd.xlane.f32.xlu0 %v4250
        %v4252 = vpop.xlane.xlu0 %4251
        %v4253 = vadd.f32 %v4132, %v4134
        %4254 = vadd.xlane.f32.xlu0 %v4253
        %v4255 = vpop.xlane.xlu0 %4254
        %v4256 = vadd.f32 %v4136, %v4138
        %4257 = vadd.xlane.f32.xlu0 %v4256
        %v4258 = vpop.xlane.xlu0 %4257
        %v4259 = vadd.f32 %v4140, %v4142
        %4260 = vadd.xlane.f32.xlu0 %v4259
        %v4261 = vpop.xlane.xlu0 %4260
        %v4262 = vadd.f32 %v4144, %v4146
        %4263 = vadd.xlane.f32.xlu0 %v4262
        %v4264 = vpop.xlane.xlu0 %4263
        %v4265 = vadd.f32 %v4148, %v4150
        %4266 = vadd.xlane.f32.xlu0 %v4265
        %v4267 = vpop.xlane.xlu0 %4266
        %v4268 = vadd.f32 %v4152, %v4154
        %4269 = vadd.xlane.f32.xlu0 %v4268
        %v4270 = vpop.xlane.xlu0 %4269
        %v4271 = vadd.f32 %v4156, %v4158
        %4272 = vadd.xlane.f32.xlu0 %v4271
        %v4273 = vpop.xlane.xlu0 %4272
        %v4274 = vadd.f32 %v4160, %v4162
        %4275 = vadd.xlane.f32.xlu0 %v4274
        %v4276 = vpop.xlane.xlu0 %4275
        %v4277 = vadd.f32 %v4164, %v4166
        %4278 = vadd.xlane.f32.xlu0 %v4277
        %v4279 = vpop.xlane.xlu0 %4278
        %v4280 = vadd.f32 %v4168, %v4170
        %4281 = vadd.xlane.f32.xlu0 %v4280
        %v4282 = vpop.xlane.xlu0 %4281
        %v4283 = vadd.f32 %v4172, %v4174
        %4284 = vadd.xlane.f32.xlu0 %v4283
        %v4285 = vpop.xlane.xlu0 %4284
        %v4286 = vadd.f32 %v4176, %v4178
        %4287 = vadd.xlane.f32.xlu0 %v4286
        %v4288 = vpop.xlane.xlu0 %4287
        %v4289 = vadd.f32 %v4180, %v4182
        %4290 = vadd.xlane.f32.xlu0 %v4289
        %v4291 = vpop.xlane.xlu0 %4290
        %v4292 = vadd.f32 %v4184, %v4186
        %4293 = vadd.xlane.f32.xlu0 %v4292
        %v4294 = vpop.xlane.xlu0 %4293
        %v4295 = vadd.f32 %v4188, %v4190
        %4296 = vadd.xlane.f32.xlu0 %v4295
        %v4297 = vpop.xlane.xlu0 %4296
        %v4298 = vadd.f32 %v4192, %v4194
        %4299 = vadd.xlane.f32.xlu0 %v4298
        %v4300 = vpop.xlane.xlu0 %4299
        %v4301 = vadd.f32 %v4196, %v4198
        %4302 = vadd.xlane.f32.xlu0 %v4301
        %v4303 = vpop.xlane.xlu0 %4302
        %v4304 = vadd.f32 %v4200, %v4202
        %4305 = vadd.xlane.f32.xlu0 %v4304
        %v4306 = vpop.xlane.xlu0 %4305
        %v4307 = vadd.f32 %v4204, %v4206
        %4308 = vadd.xlane.f32.xlu0 %v4307
        %v4309 = vpop.xlane.xlu0 %4308
        %v4310 = vadd.f32 %v4208, %v4210
        %4311 = vadd.xlane.f32.xlu0 %v4310
        %v4312 = vpop.xlane.xlu0 %4311
        %v4313 = vadd.f32 %v4212, %v4214
        %4314 = vadd.xlane.f32.xlu0 %v4313
        %v4315 = vpop.xlane.xlu0 %4314
        %v4316 = vadd.f32 %v4216, %v4218
        %4317 = vadd.xlane.f32.xlu0 %v4316
        %v4318 = vpop.xlane.xlu0 %4317
        %v4319 = vadd.f32 %v4220, %v4222
        %4320 = vadd.xlane.f32.xlu0 %v4319
        %v4321 = vpop.xlane.xlu0 %4320
        %v4322 = vadd.f32 %v4224, %v4226
        %4323 = vadd.xlane.f32.xlu0 %v4322
        %v4324 = vpop.xlane.xlu0 %4323
        %v4325 = vadd.f32 %v4228, %v4230
        %4326 = vadd.xlane.f32.xlu0 %v4325
        %v4327 = vpop.xlane.xlu0 %4326
        %v4328 = vadd.f32 %v4232, %v4234
        %4329 = vadd.xlane.f32.xlu0 %v4328
        %v4330 = vpop.xlane.xlu0 %4329
        %v4331 = vrcp.pop %v4237
        %v4332 = vrcp.pop %v4240
        %v4333 = vrcp.pop %v4243
        %v4334 = vrcp.pop %v4246
        %v4335 = vrcp.pop %v4249
        %v4336 = vrcp.pop %v4252
        %v4337 = vrcp.pop %v4255
        %v4338 = vrcp.pop %v4258
        %v4339 = vrcp.pop %v4261
        %v4340 = vrcp.pop %v4264
        %v4341 = vrcp.pop %v4267
        %v4342 = vrcp.pop %v4270
        %v4343 = vrcp.pop %v4273
        %v4344 = vrcp.pop %v4276
        %v4345 = vrcp.pop %v4279
        %v4346 = vrcp.pop %v4282
        %v4347 = vrcp.pop %v4285
        %v4348 = vrcp.pop %v4288
        %v4349 = vrcp.pop %v4291
        %v4350 = vrcp.pop %v4294
        %v4351 = vrcp.pop %v4297
        %v4352 = vrcp.pop %v4300
        %v4353 = vrcp.pop %v4303
        %v4354 = vrcp.pop %v4306
        %v4355 = vrcp.pop %v4309
        %v4356 = vrcp.pop %v4312
        %v4357 = vrcp.pop %v4315
        %v4358 = vrcp.pop %v4318
        %v4359 = vrcp.pop %v4321
        %v4360 = vrcp.pop %v4324
        %v4361 = vrcp.pop %v4327
        %v4362 = vrcp.pop %v4330
        %v4363 = vmul.f32 %v4108, %v4331
        %v4364 = vmul.f32 %v4110, %v4331
        %v4365 = vmul.f32 %v4112, %v4332
        %v4366 = vmul.f32 %v4114, %v4332
        %v4367 = vmul.f32 %v4116, %v4333
        %v4368 = vmul.f32 %v4118, %v4333
        %v4369 = vmul.f32 %v4120, %v4334
        %v4370 = vmul.f32 %v4122, %v4334
        %v4371 = vmul.f32 %v4124, %v4335
        %v4372 = vmul.f32 %v4126, %v4335
        %v4373 = vmul.f32 %v4128, %v4336
        %v4374 = vmul.f32 %v4130, %v4336
        %v4375 = vmul.f32 %v4132, %v4337
        %v4376 = vmul.f32 %v4134, %v4337
        %v4377 = vmul.f32 %v4136, %v4338
        %v4378 = vmul.f32 %v4138, %v4338
        %v4379 = vmul.f32 %v4140, %v4339
        %v4380 = vmul.f32 %v4142, %v4339
        %v4381 = vmul.f32 %v4144, %v4340
        %v4382 = vmul.f32 %v4146, %v4340
        %v4383 = vmul.f32 %v4148, %v4341
        %v4384 = vmul.f32 %v4150, %v4341
        %v4385 = vmul.f32 %v4152, %v4342
        %v4386 = vmul.f32 %v4154, %v4342
        %v4387 = vmul.f32 %v4156, %v4343
        %v4388 = vmul.f32 %v4158, %v4343
        %v4389 = vmul.f32 %v4160, %v4344
        %v4390 = vmul.f32 %v4162, %v4344
        %v4391 = vmul.f32 %v4164, %v4345
        %v4392 = vmul.f32 %v4166, %v4345
        %v4393 = vmul.f32 %v4168, %v4346
        %v4394 = vmul.f32 %v4170, %v4346
        %v4395 = vmul.f32 %v4172, %v4347
        %v4396 = vmul.f32 %v4174, %v4347
        %v4397 = vmul.f32 %v4176, %v4348
        %v4398 = vmul.f32 %v4178, %v4348
        %v4399 = vmul.f32 %v4180, %v4349
        %v4400 = vmul.f32 %v4182, %v4349
        %v4401 = vmul.f32 %v4184, %v4350
        %v4402 = vmul.f32 %v4186, %v4350
        %v4403 = vmul.f32 %v4188, %v4351
        %v4404 = vmul.f32 %v4190, %v4351
        %v4405 = vmul.f32 %v4192, %v4352
        %v4406 = vmul.f32 %v4194, %v4352
        %v4407 = vmul.f32 %v4196, %v4353
        %v4408 = vmul.f32 %v4198, %v4353
        %v4409 = vmul.f32 %v4200, %v4354
        %v4410 = vmul.f32 %v4202, %v4354
        %v4411 = vmul.f32 %v4204, %v4355
        %v4412 = vmul.f32 %v4206, %v4355
        %v4413 = vmul.f32 %v4208, %v4356
        %v4414 = vmul.f32 %v4210, %v4356
        %v4415 = vmul.f32 %v4212, %v4357
        %v4416 = vmul.f32 %v4214, %v4357
        %v4417 = vmul.f32 %v4216, %v4358
        %v4418 = vmul.f32 %v4218, %v4358
        %v4419 = vmul.f32 %v4220, %v4359
        %v4420 = vmul.f32 %v4222, %v4359
        %v4421 = vmul.f32 %v4224, %v4360
        %v4422 = vmul.f32 %v4226, %v4360
        %v4423 = vmul.f32 %v4228, %v4361
        %v4424 = vmul.f32 %v4230, %v4361
        %v4425 = vmul.f32 %v4232, %v4362
        %v4426 = vmul.f32 %v4234, %v4362
        %v4427 = vpack.c.bf16 %v4365, %v4363
        %v4428 = vpack.c.bf16 %v4366, %v4364
        %v4429 = vpack.c.bf16 %v4369, %v4367
        %v4430 = vpack.c.bf16 %v4370, %v4368
        %v4431 = vpack.c.bf16 %v4373, %v4371
        %v4432 = vpack.c.bf16 %v4374, %v4372
        %v4433 = vpack.c.bf16 %v4377, %v4375
        %v4434 = vpack.c.bf16 %v4378, %v4376
        %v4435 = vpack.c.bf16 %v4381, %v4379
        %v4436 = vpack.c.bf16 %v4382, %v4380
        %v4437 = vpack.c.bf16 %v4385, %v4383
        %v4438 = vpack.c.bf16 %v4386, %v4384
        %v4439 = vpack.c.bf16 %v4389, %v4387
        %v4440 = vpack.c.bf16 %v4390, %v4388
        %v4441 = vpack.c.bf16 %v4393, %v4391
        %v4442 = vpack.c.bf16 %v4394, %v4392
        %v4443 = vpack.c.bf16 %v4397, %v4395
        %v4444 = vpack.c.bf16 %v4398, %v4396
        %v4445 = vpack.c.bf16 %v4401, %v4399
        %v4446 = vpack.c.bf16 %v4402, %v4400
        %v4447 = vpack.c.bf16 %v4405, %v4403
        %v4448 = vpack.c.bf16 %v4406, %v4404
        %v4449 = vpack.c.bf16 %v4409, %v4407
        %v4450 = vpack.c.bf16 %v4410, %v4408
        %v4451 = vpack.c.bf16 %v4413, %v4411
        %v4452 = vpack.c.bf16 %v4414, %v4412
        %v4453 = vpack.c.bf16 %v4417, %v4415
        %v4454 = vpack.c.bf16 %v4418, %v4416
        %v4455 = vpack.c.bf16 %v4421, %v4419
        %v4456 = vpack.c.bf16 %v4422, %v4420
        %v4457 = vpack.c.bf16 %v4425, %v4423
        %v4458 = vpack.c.bf16 %v4426, %v4424
        %4459 = vmatprep.subr.bf16.mxu0 0
        %4460 = vmatpush1.bf16.msra.mxu0 %v3738
        %4461 = vmatprep.subr.bf16.mxu0 0
        %4462 = vmatpush1.bf16.msra.mxu0 %v3739
        %4463 = vmatprep.subr.bf16.mxu0 0
        %4464 = vmatpush1.bf16.msra.mxu0 %v3740
        %4465 = vmatprep.subr.bf16.mxu0 0
        %4466 = vmatpush1.bf16.msra.mxu0 %v3741
        %4467 = vmatprep.subr.bf16.mxu0 0
        %4468 = vmatpush1.bf16.msra.mxu0 %v3742
        %4469 = vmatprep.subr.bf16.mxu0 0
        %4470 = vmatpush1.bf16.msra.mxu0 %v3743
        %4471 = vmatprep.subr.bf16.mxu0 0
        %4472 = vmatpush1.bf16.msra.mxu0 %v3744
        %4473 = vmatprep.subr.bf16.mxu0 0
        %4474 = vmatpush1.bf16.msra.mxu0 %v3745
        %4475 = vmatprep.subr.bf16.mxu0 0
        %4476 = vmatpush1.bf16.msra.mxu0 %v3746
        %4477 = vmatprep.subr.bf16.mxu0 0
        %4478 = vmatpush1.bf16.msra.mxu0 %v3747
        %4479 = vmatprep.subr.bf16.mxu0 0
        %4480 = vmatpush1.bf16.msra.mxu0 %v3748
        %4481 = vmatprep.subr.bf16.mxu0 0
        %4482 = vmatpush1.bf16.msra.mxu0 %v3749
        %4483 = vmatprep.subr.bf16.mxu0 0
        %4484 = vmatpush1.bf16.msra.mxu0 %v3750
        %4485 = vmatprep.subr.bf16.mxu0 0
        %4486 = vmatpush1.bf16.msra.mxu0 %v3751
        %4487 = vmatprep.subr.bf16.mxu0 0
        %4488 = vmatpush1.bf16.msra.mxu0 %v3752
        %4489 = vmatprep.subr.bf16.mxu0 0
        %4490 = vmatpush1.bf16.msra.mxu0 %v3753
        %4491 = vmatprep.mubr.bf16.mxu0 %v4428
        %4492 = vmatmul.mubr.bf16.gmra.mrb[0].mxu0 %v4427
        %v4493 = vpop.f32.mrb[0].mxu0
        %v4494 = vadd.f32 0.0, %v4493
        %v4495 = vpop.f32.mrb[0].mxu0
        %v4496 = vpop.f32.mrb[0].mxu0
        %v4497 = vadd.f32 0.0, %v4496
        %v4498 = vpop.f32.mrb[0].mxu0
        %4499 = vmatprep.mubr.bf16.mxu0 %v4430
        %4500 = vmatmul.mubr.bf16.gmra.mrb[0].mxu0 %v4429
        %v4501 = vpop.f32.mrb[0].mxu0
        %v4502 = vadd.f32 0.0, %v4501
        %v4503 = vpop.f32.mrb[0].mxu0
        %v4504 = vpop.f32.mrb[0].mxu0
        %v4505 = vadd.f32 0.0, %v4504
        %v4506 = vpop.f32.mrb[0].mxu0
        %4507 = vmatprep.mubr.bf16.mxu0 %v4432
        %4508 = vmatmul.mubr.bf16.gmra.mrb[0].mxu0 %v4431
        %v4509 = vpop.f32.mrb[0].mxu0
        %v4510 = vadd.f32 0.0, %v4509
        %v4511 = vpop.f32.mrb[0].mxu0
        %v4512 = vpop.f32.mrb[0].mxu0
        %v4513 = vadd.f32 0.0, %v4512
        %v4514 = vpop.f32.mrb[0].mxu0
        %4515 = vmatprep.mubr.bf16.mxu0 %v4434
        %4516 = vmatmul.mubr.bf16.gmra.mrb[0].mxu0 %v4433
        %v4517 = vpop.f32.mrb[0].mxu0
        %v4518 = vadd.f32 0.0, %v4517
        %v4519 = vpop.f32.mrb[0].mxu0
        %v4520 = vpop.f32.mrb[0].mxu0
        %v4521 = vadd.f32 0.0, %v4520
        %v4522 = vpop.f32.mrb[0].mxu0
        %4523 = vmatprep.mubr.bf16.mxu0 %v4436
        %4524 = vmatmul.mubr.bf16.gmra.mrb[0].mxu0 %v4435
        %v4525 = vpop.f32.mrb[0].mxu0
        %v4526 = vadd.f32 0.0, %v4525
        %v4527 = vpop.f32.mrb[0].mxu0
        %v4528 = vpop.f32.mrb[0].mxu0
        %v4529 = vadd.f32 0.0, %v4528
        %v4530 = vpop.f32.mrb[0].mxu0
        %4531 = vmatprep.mubr.bf16.mxu0 %v4438
        %4532 = vmatmul.mubr.bf16.gmra.mrb[0].mxu0 %v4437
        %v4533 = vpop.f32.mrb[0].mxu0
        %v4534 = vadd.f32 0.0, %v4533
        %v4535 = vpop.f32.mrb[0].mxu0
        %v4536 = vpop.f32.mrb[0].mxu0
        %v4537 = vadd.f32 0.0, %v4536
        %v4538 = vpop.f32.mrb[0].mxu0
        %4539 = vmatprep.mubr.bf16.mxu0 %v4440
        %4540 = vmatmul.mubr.bf16.gmra.mrb[0].mxu0 %v4439
        %v4541 = vpop.f32.mrb[0].mxu0
        %v4542 = vadd.f32 0.0, %v4541
        %v4543 = vpop.f32.mrb[0].mxu0
        %v4544 = vpop.f32.mrb[0].mxu0
        %v4545 = vadd.f32 0.0, %v4544
        %v4546 = vpop.f32.mrb[0].mxu0
        %4547 = vmatprep.mubr.bf16.mxu0 %v4442
        %4548 = vmatmul.mubr.bf16.gmra.mrb[0].mxu0 %v4441
        %v4549 = vpop.f32.mrb[0].mxu0
        %v4550 = vadd.f32 0.0, %v4549
        %v4551 = vpop.f32.mrb[0].mxu0
        %v4552 = vpop.f32.mrb[0].mxu0
        %v4553 = vadd.f32 0.0, %v4552
        %v4554 = vpop.f32.mrb[0].mxu0
        %4555 = vmatprep.mubr.bf16.mxu0 %v4444
        %4556 = vmatmul.mubr.bf16.gmra.mrb[0].mxu0 %v4443
        %v4557 = vpop.f32.mrb[0].mxu0
        %v4558 = vadd.f32 0.0, %v4557
        %v4559 = vpop.f32.mrb[0].mxu0
        %v4560 = vpop.f32.mrb[0].mxu0
        %v4561 = vadd.f32 0.0, %v4560
        %v4562 = vpop.f32.mrb[0].mxu0
        %4563 = vmatprep.mubr.bf16.mxu0 %v4446
        %4564 = vmatmul.mubr.bf16.gmra.mrb[0].mxu0 %v4445
        %v4565 = vpop.f32.mrb[0].mxu0
        %v4566 = vadd.f32 0.0, %v4565
        %v4567 = vpop.f32.mrb[0].mxu0
        %v4568 = vpop.f32.mrb[0].mxu0
        %v4569 = vadd.f32 0.0, %v4568
        %v4570 = vpop.f32.mrb[0].mxu0
        %4571 = vmatprep.mubr.bf16.mxu0 %v4448
        %4572 = vmatmul.mubr.bf16.gmra.mrb[0].mxu0 %v4447
        %v4573 = vpop.f32.mrb[0].mxu0
        %v4574 = vadd.f32 0.0, %v4573
        %v4575 = vpop.f32.mrb[0].mxu0
        %v4576 = vpop.f32.mrb[0].mxu0
        %v4577 = vadd.f32 0.0, %v4576
        %v4578 = vpop.f32.mrb[0].mxu0
        %4579 = vmatprep.mubr.bf16.mxu0 %v4450
        %4580 = vmatmul.mubr.bf16.gmra.mrb[0].mxu0 %v4449
        %v4581 = vpop.f32.mrb[0].mxu0
        %v4582 = vadd.f32 0.0, %v4581
        %v4583 = vpop.f32.mrb[0].mxu0
        %v4584 = vpop.f32.mrb[0].mxu0
        %v4585 = vadd.f32 0.0, %v4584
        %v4586 = vpop.f32.mrb[0].mxu0
        %4587 = vmatprep.mubr.bf16.mxu0 %v4452
        %4588 = vmatmul.mubr.bf16.gmra.mrb[0].mxu0 %v4451
        %v4589 = vpop.f32.mrb[0].mxu0
        %v4590 = vadd.f32 0.0, %v4589
        %v4591 = vpop.f32.mrb[0].mxu0
        %v4592 = vpop.f32.mrb[0].mxu0
        %v4593 = vadd.f32 0.0, %v4592
        %v4594 = vpop.f32.mrb[0].mxu0
        %4595 = vmatprep.mubr.bf16.mxu0 %v4454
        %4596 = vmatmul.mubr.bf16.gmra.mrb[0].mxu0 %v4453
        %v4597 = vpop.f32.mrb[0].mxu0
        %v4598 = vadd.f32 0.0, %v4597
        %v4599 = vpop.f32.mrb[0].mxu0
        %v4600 = vpop.f32.mrb[0].mxu0
        %v4601 = vadd.f32 0.0, %v4600
        %v4602 = vpop.f32.mrb[0].mxu0
        %4603 = vmatprep.mubr.bf16.mxu0 %v4456
        %4604 = vmatmul.mubr.bf16.gmra.mrb[0].mxu0 %v4455
        %v4605 = vpop.f32.mrb[0].mxu0
        %v4606 = vadd.f32 0.0, %v4605
        %v4607 = vpop.f32.mrb[0].mxu0
        %v4608 = vpop.f32.mrb[0].mxu0
        %v4609 = vadd.f32 0.0, %v4608
        %v4610 = vpop.f32.mrb[0].mxu0
        %4611 = vmatprep.mubr.bf16.mxu0 %v4458
        %4612 = vmatmul.mubr.bf16.gmra.mrb[0].mxu0 %v4457
        %v4613 = vpop.f32.mrb[0].mxu0
        %v4614 = vadd.f32 0.0, %v4613
        %v4615 = vpop.f32.mrb[0].mxu0
        %v4616 = vpop.f32.mrb[0].mxu0
        %v4617 = vadd.f32 0.0, %v4616
        %v4618 = vpop.f32.mrb[0].mxu0
        %4619 = vdwg.mxu0
        %4620 = vst [vmem:[#allocation3 + $0x8] sm:$0xff] %v4494
        %4621 = vst [vmem:[#allocation3 + $0x18] sm:$0xff] %v4497
        %4622 = vst [vmem:[#allocation3 + $0x28] sm:$0xff] %v4502
        %4623 = vst [vmem:[#allocation3 + $0x38] sm:$0xff] %v4505
        %4624 = vst [vmem:[#allocation3 + $0x48] sm:$0xff] %v4510
        %4625 = vst [vmem:[#allocation3 + $0x58] sm:$0xff] %v4513
        %4626 = vst [vmem:[#allocation3 + $0x68] sm:$0xff] %v4518
        %4627 = vst [vmem:[#allocation3 + $0x78] sm:$0xff] %v4521
        %4628 = vst [vmem:[#allocation3 + $0x88] sm:$0xff] %v4526
        %4629 = vst [vmem:[#allocation3 + $0x98] sm:$0xff] %v4529
        %4630 = vst [vmem:[#allocation3 + $0xa8] sm:$0xff] %v4534
        %4631 = vst [vmem:[#allocation3 + $0xb8] sm:$0xff] %v4537
        %4632 = vst [vmem:[#allocation3 + $0xc8] sm:$0xff] %v4542
        %4633 = vst [vmem:[#allocation3 + $0xd8] sm:$0xff] %v4545
        %4634 = vst [vmem:[#allocation3 + $0xe8] sm:$0xff] %v4550
        %4635 = vst [vmem:[#allocation3 + $0xf8] sm:$0xff] %v4553
        %4636 = vst [vmem:[#allocation3 + $0x108] sm:$0xff] %v4558
        %4637 = vst [vmem:[#allocation3 + $0x118] sm:$0xff] %v4561
        %4638 = vst [vmem:[#allocation3 + $0x128] sm:$0xff] %v4566
        %4639 = vst [vmem:[#allocation3 + $0x138] sm:$0xff] %v4569
        %4640 = vst [vmem:[#allocation3 + $0x148] sm:$0xff] %v4574
        %4641 = vst [vmem:[#allocation3 + $0x158] sm:$0xff] %v4577
        %4642 = vst [vmem:[#allocation3 + $0x168] sm:$0xff] %v4582
        %4643 = vst [vmem:[#allocation3 + $0x178] sm:$0xff] %v4585
        %4644 = vst [vmem:[#allocation3 + $0x188] sm:$0xff] %v4590
        %4645 = vst [vmem:[#allocation3 + $0x198] sm:$0xff] %v4593
        %4646 = vst [vmem:[#allocation3 + $0x1a8] sm:$0xff] %v4598
        %4647 = vst [vmem:[#allocation3 + $0x1b8] sm:$0xff] %v4601
        %4648 = vst [vmem:[#allocation3 + $0x1c8] sm:$0xff] %v4606
        %4649 = vst [vmem:[#allocation3 + $0x1d8] sm:$0xff] %v4609
        %4650 = vst [vmem:[#allocation3 + $0x1e8] sm:$0xff] %v4614
        %4651 = vst [vmem:[#allocation3 + $0x1f8] sm:$0xff] %v4617
        %v4652 = vld [vmem:[#allocation3] sm:$0xff]
        %v4653 = vld [vmem:[#allocation3 + $0x8] sm:$0xff]
        %v4654 = vld [vmem:[#allocation3 + $0x10] sm:$0xff]
        %v4655 = vld [vmem:[#allocation3 + $0x18] sm:$0xff]
        %v4656 = vld [vmem:[#allocation3 + $0x20] sm:$0xff]
        %v4657 = vld [vmem:[#allocation3 + $0x28] sm:$0xff]
        %v4658 = vld [vmem:[#allocation3 + $0x30] sm:$0xff]
        %v4659 = vld [vmem:[#allocation3 + $0x38] sm:$0xff]
        %v4660 = vld [vmem:[#allocation3 + $0x40] sm:$0xff]
        %v4661 = vld [vmem:[#allocation3 + $0x48] sm:$0xff]
        %v4662 = vld [vmem:[#allocation3 + $0x50] sm:$0xff]
        %v4663 = vld [vmem:[#allocation3 + $0x58] sm:$0xff]
        %v4664 = vld [vmem:[#allocation3 + $0x60] sm:$0xff]
        %v4665 = vld [vmem:[#allocation3 + $0x68] sm:$0xff]
        %v4666 = vld [vmem:[#allocation3 + $0x70] sm:$0xff]
        %v4667 = vld [vmem:[#allocation3 + $0x78] sm:$0xff]
        %v4668 = vld [vmem:[#allocation3 + $0x80] sm:$0xff]
        %v4669 = vld [vmem:[#allocation3 + $0x88] sm:$0xff]
        %v4670 = vld [vmem:[#allocation3 + $0x90] sm:$0xff]
        %v4671 = vld [vmem:[#allocation3 + $0x98] sm:$0xff]
        %v4672 = vld [vmem:[#allocation3 + $0xa0] sm:$0xff]
        %v4673 = vld [vmem:[#allocation3 + $0xa8] sm:$0xff]
        %v4674 = vld [vmem:[#allocation3 + $0xb0] sm:$0xff]
        %v4675 = vld [vmem:[#allocation3 + $0xb8] sm:$0xff]
        %v4676 = vld [vmem:[#allocation3 + $0xc0] sm:$0xff]
        %v4677 = vld [vmem:[#allocation3 + $0xc8] sm:$0xff]
        %v4678 = vld [vmem:[#allocation3 + $0xd0] sm:$0xff]
        %v4679 = vld [vmem:[#allocation3 + $0xd8] sm:$0xff]
        %v4680 = vld [vmem:[#allocation3 + $0xe0] sm:$0xff]
        %v4681 = vld [vmem:[#allocation3 + $0xe8] sm:$0xff]
        %v4682 = vld [vmem:[#allocation3 + $0xf0] sm:$0xff]
        %v4683 = vld [vmem:[#allocation3 + $0xf8] sm:$0xff]
        %v4684 = vld [vmem:[#allocation3 + $0x100] sm:$0xff]
        %v4685 = vld [vmem:[#allocation3 + $0x108] sm:$0xff]
        %v4686 = vld [vmem:[#allocation3 + $0x110] sm:$0xff]
        %v4687 = vld [vmem:[#allocation3 + $0x118] sm:$0xff]
        %v4688 = vld [vmem:[#allocation3 + $0x120] sm:$0xff]
        %v4689 = vld [vmem:[#allocation3 + $0x128] sm:$0xff]
        %v4690 = vld [vmem:[#allocation3 + $0x130] sm:$0xff]
        %v4691 = vld [vmem:[#allocation3 + $0x138] sm:$0xff]
        %v4692 = vld [vmem:[#allocation3 + $0x140] sm:$0xff]
        %v4693 = vld [vmem:[#allocation3 + $0x148] sm:$0xff]
        %v4694 = vld [vmem:[#allocation3 + $0x150] sm:$0xff]
        %v4695 = vld [vmem:[#allocation3 + $0x158] sm:$0xff]
        %v4696 = vld [vmem:[#allocation3 + $0x160] sm:$0xff]
        %v4697 = vld [vmem:[#allocation3 + $0x168] sm:$0xff]
        %v4698 = vld [vmem:[#allocation3 + $0x170] sm:$0xff]
        %v4699 = vld [vmem:[#allocation3 + $0x178] sm:$0xff]
        %v4700 = vld [vmem:[#allocation3 + $0x180] sm:$0xff]
        %v4701 = vld [vmem:[#allocation3 + $0x188] sm:$0xff]
        %v4702 = vld [vmem:[#allocation3 + $0x190] sm:$0xff]
        %v4703 = vld [vmem:[#allocation3 + $0x198] sm:$0xff]
        %v4704 = vld [vmem:[#allocation3 + $0x1a0] sm:$0xff]
        %v4705 = vld [vmem:[#allocation3 + $0x1a8] sm:$0xff]
        %v4706 = vld [vmem:[#allocation3 + $0x1b0] sm:$0xff]
        %v4707 = vld [vmem:[#allocation3 + $0x1b8] sm:$0xff]
        %v4708 = vld [vmem:[#allocation3 + $0x1c0] sm:$0xff]
        %v4709 = vld [vmem:[#allocation3 + $0x1c8] sm:$0xff]
        %v4710 = vld [vmem:[#allocation3 + $0x1d0] sm:$0xff]
        %v4711 = vld [vmem:[#allocation3 + $0x1d8] sm:$0xff]
        %v4712 = vld [vmem:[#allocation3 + $0x1e0] sm:$0xff]
        %v4713 = vld [vmem:[#allocation3 + $0x1e8] sm:$0xff]
        %v4714 = vld [vmem:[#allocation3 + $0x1f0] sm:$0xff]
        %v4715 = vld [vmem:[#allocation3 + $0x1f8] sm:$0xff]
        %v4716 = vpack.c.bf16 %v4654, %v4652
        %v4717 = vpack.c.bf16 %v4655, %v4653
        %v4718 = vpack.c.bf16 %v4658, %v4656
        %v4719 = vpack.c.bf16 %v4659, %v4657
        %v4720 = vpack.c.bf16 %v4662, %v4660
        %v4721 = vpack.c.bf16 %v4663, %v4661
        %v4722 = vpack.c.bf16 %v4666, %v4664
        %v4723 = vpack.c.bf16 %v4667, %v4665
        %v4724 = vpack.c.bf16 %v4670, %v4668
        %v4725 = vpack.c.bf16 %v4671, %v4669
        %v4726 = vpack.c.bf16 %v4674, %v4672
        %v4727 = vpack.c.bf16 %v4675, %v4673
        %v4728 = vpack.c.bf16 %v4678, %v4676
        %v4729 = vpack.c.bf16 %v4679, %v4677
        %v4730 = vpack.c.bf16 %v4682, %v4680
        %v4731 = vpack.c.bf16 %v4683, %v4681
        %v4732 = vpack.c.bf16 %v4686, %v4684
        %v4733 = vpack.c.bf16 %v4687, %v4685
        %v4734 = vpack.c.bf16 %v4690, %v4688
        %v4735 = vpack.c.bf16 %v4691, %v4689
        %v4736 = vpack.c.bf16 %v4694, %v4692
        %v4737 = vpack.c.bf16 %v4695, %v4693
        %v4738 = vpack.c.bf16 %v4698, %v4696
        %v4739 = vpack.c.bf16 %v4699, %v4697
        %v4740 = vpack.c.bf16 %v4702, %v4700
        %v4741 = vpack.c.bf16 %v4703, %v4701
        %v4742 = vpack.c.bf16 %v4706, %v4704
        %v4743 = vpack.c.bf16 %v4707, %v4705
        %v4744 = vpack.c.bf16 %v4710, %v4708
        %v4745 = vpack.c.bf16 %v4711, %v4709
        %v4746 = vpack.c.bf16 %v4714, %v4712
        %v4747 = vpack.c.bf16 %v4715, %v4713
        %v4748 = vld [vmem:[%s563] sm:$0xff]
        %v4749 = vld [vmem:[%s563 + $0x8] sm:$0xff]
        %v4750 = vld [vmem:[%s563 + $0x10] sm:$0xff]
        %v4751 = vld [vmem:[%s563 + $0x18] sm:$0xff]
        %v4752 = vld [vmem:[%s563 + $0x20] sm:$0xff]
        %v4753 = vld [vmem:[%s563 + $0x28] sm:$0xff]
        %v4754 = vld [vmem:[%s563 + $0x30] sm:$0xff]
        %v4755 = vld [vmem:[%s563 + $0x38] sm:$0xff]
        %v4756 = vld [vmem:[%s563 + $0x40] sm:$0xff]
        %v4757 = vld [vmem:[%s563 + $0x48] sm:$0xff]
        %v4758 = vld [vmem:[%s563 + $0x50] sm:$0xff]
        %v4759 = vld [vmem:[%s563 + $0x58] sm:$0xff]
        %v4760 = vld [vmem:[%s563 + $0x60] sm:$0xff]
        %v4761 = vld [vmem:[%s563 + $0x68] sm:$0xff]
        %v4762 = vld [vmem:[%s563 + $0x70] sm:$0xff]
        %v4763 = vld [vmem:[%s563 + $0x78] sm:$0xff]
        %v4764 = vld [vmem:[%s563 + $0x80] sm:$0xff]
        %v4765 = vld [vmem:[%s563 + $0x88] sm:$0xff]
        %v4766 = vld [vmem:[%s563 + $0x90] sm:$0xff]
        %v4767 = vld [vmem:[%s563 + $0x98] sm:$0xff]
        %v4768 = vld [vmem:[%s563 + $0xa0] sm:$0xff]
        %v4769 = vld [vmem:[%s563 + $0xa8] sm:$0xff]
        %v4770 = vld [vmem:[%s563 + $0xb0] sm:$0xff]
        %v4771 = vld [vmem:[%s563 + $0xb8] sm:$0xff]
        %v4772 = vld [vmem:[%s563 + $0xc0] sm:$0xff]
        %v4773 = vld [vmem:[%s563 + $0xc8] sm:$0xff]
        %v4774 = vld [vmem:[%s563 + $0xd0] sm:$0xff]
        %v4775 = vld [vmem:[%s563 + $0xd8] sm:$0xff]
        %v4776 = vld [vmem:[%s563 + $0xe0] sm:$0xff]
        %v4777 = vld [vmem:[%s563 + $0xe8] sm:$0xff]
        %v4778 = vld [vmem:[%s563 + $0xf0] sm:$0xff]
        %v4779 = vld [vmem:[%s563 + $0xf8] sm:$0xff]
        %v4780 = vld [vmem:[%s663] sm:$0x3]
        %v4782 = vlaneseq
        %v4783 = vshrl.u32 %v4782, 7
        %v4784 = vsub.s32 0, %v4783
        %v4785 = vrot.slane %v4780, %v4784
        %v4786 = vlaneseq
        %v4787 = vshrl.u32 %v4786, 7
        %v4788 = vsub.s32 1, %v4787
        %v4789 = vrot.slane %v4780, %v4788
        %v4824 = vunpack.c.l.b16 %v4748
        %v4825 = vunpack.c.h.b16 %v4748
        %v4826 = vunpack.c.l.b16 %v4749
        %v4827 = vunpack.c.h.b16 %v4749
        %v4828 = vunpack.c.l.b16 %v4750
        %v4829 = vunpack.c.h.b16 %v4750
        %v4830 = vunpack.c.l.b16 %v4751
        %v4831 = vunpack.c.h.b16 %v4751
        %v4832 = vunpack.c.l.b16 %v4752
        %v4833 = vunpack.c.h.b16 %v4752
        %v4834 = vunpack.c.l.b16 %v4753
        %v4835 = vunpack.c.h.b16 %v4753
        %v4836 = vunpack.c.l.b16 %v4754
        %v4837 = vunpack.c.h.b16 %v4754
        %v4838 = vunpack.c.l.b16 %v4755
        %v4839 = vunpack.c.h.b16 %v4755
        %v4840 = vunpack.c.l.b16 %v4756
        %v4841 = vunpack.c.h.b16 %v4756
        %v4842 = vunpack.c.l.b16 %v4757
        %v4843 = vunpack.c.h.b16 %v4757
        %v4844 = vunpack.c.l.b16 %v4758
        %v4845 = vunpack.c.h.b16 %v4758
        %v4846 = vunpack.c.l.b16 %v4759
        %v4847 = vunpack.c.h.b16 %v4759
        %v4848 = vunpack.c.l.b16 %v4760
        %v4849 = vunpack.c.h.b16 %v4760
        %v4850 = vunpack.c.l.b16 %v4761
        %v4851 = vunpack.c.h.b16 %v4761
        %v4852 = vunpack.c.l.b16 %v4762
        %v4853 = vunpack.c.h.b16 %v4762
        %v4854 = vunpack.c.l.b16 %v4763
        %v4855 = vunpack.c.h.b16 %v4763
        %v4856 = vunpack.c.l.b16 %v4764
        %v4857 = vunpack.c.h.b16 %v4764
        %v4858 = vunpack.c.l.b16 %v4765
        %v4859 = vunpack.c.h.b16 %v4765
        %v4860 = vunpack.c.l.b16 %v4766
        %v4861 = vunpack.c.h.b16 %v4766
        %v4862 = vunpack.c.l.b16 %v4767
        %v4863 = vunpack.c.h.b16 %v4767
        %v4864 = vunpack.c.l.b16 %v4768
        %v4865 = vunpack.c.h.b16 %v4768
        %v4866 = vunpack.c.l.b16 %v4769
        %v4867 = vunpack.c.h.b16 %v4769
        %v4868 = vunpack.c.l.b16 %v4770
        %v4869 = vunpack.c.h.b16 %v4770
        %v4870 = vunpack.c.l.b16 %v4771
        %v4871 = vunpack.c.h.b16 %v4771
        %v4872 = vunpack.c.l.b16 %v4772
        %v4873 = vunpack.c.h.b16 %v4772
        %v4874 = vunpack.c.l.b16 %v4773
        %v4875 = vunpack.c.h.b16 %v4773
        %v4876 = vunpack.c.l.b16 %v4774
        %v4877 = vunpack.c.h.b16 %v4774
        %v4878 = vunpack.c.l.b16 %v4775
        %v4879 = vunpack.c.h.b16 %v4775
        %v4880 = vunpack.c.l.b16 %v4776
        %v4881 = vunpack.c.h.b16 %v4776
        %v4882 = vunpack.c.l.b16 %v4777
        %v4883 = vunpack.c.h.b16 %v4777
        %v4884 = vunpack.c.l.b16 %v4778
        %v4885 = vunpack.c.h.b16 %v4778
        %v4886 = vunpack.c.l.b16 %v4779
        %v4887 = vunpack.c.h.b16 %v4779
        %v4888 = vpack.c.b16 %v4826, %v4824
        %v4889 = vpack.c.b16 %v4827, %v4825
        %v4890 = vpack.c.b16 %v4830, %v4828
        %v4891 = vpack.c.b16 %v4831, %v4829
        %v4892 = vpack.c.b16 %v4834, %v4832
        %v4893 = vpack.c.b16 %v4835, %v4833
        %v4894 = vpack.c.b16 %v4838, %v4836
        %v4895 = vpack.c.b16 %v4839, %v4837
        %v4896 = vpack.c.b16 %v4842, %v4840
        %v4897 = vpack.c.b16 %v4843, %v4841
        %v4898 = vpack.c.b16 %v4846, %v4844
        %v4899 = vpack.c.b16 %v4847, %v4845
        %v4900 = vpack.c.b16 %v4850, %v4848
        %v4901 = vpack.c.b16 %v4851, %v4849
        %v4902 = vpack.c.b16 %v4854, %v4852
        %v4903 = vpack.c.b16 %v4855, %v4853
        %v4904 = vpack.c.b16 %v4858, %v4856
        %v4905 = vpack.c.b16 %v4859, %v4857
        %v4906 = vpack.c.b16 %v4862, %v4860
        %v4907 = vpack.c.b16 %v4863, %v4861
        %v4908 = vpack.c.b16 %v4866, %v4864
        %v4909 = vpack.c.b16 %v4867, %v4865
        %v4910 = vpack.c.b16 %v4870, %v4868
        %v4911 = vpack.c.b16 %v4871, %v4869
        %v4912 = vpack.c.b16 %v4874, %v4872
        %v4913 = vpack.c.b16 %v4875, %v4873
        %v4914 = vpack.c.b16 %v4878, %v4876
        %v4915 = vpack.c.b16 %v4879, %v4877
        %v4916 = vpack.c.b16 %v4882, %v4880
        %v4917 = vpack.c.b16 %v4883, %v4881
        %v4918 = vpack.c.b16 %v4886, %v4884
        %v4919 = vpack.c.b16 %v4887, %v4885
        %4952 = vmatprep.subr.bf16.mxu0 %v4889
        %4953 = vmatpush1.bf16.msra.mxu0 %v4888
        %4954 = vmatprep.subr.bf16.mxu0 %v4891
        %4955 = vmatpush1.bf16.msra.mxu0 %v4890
        %4956 = vmatprep.subr.bf16.mxu0 %v4893
        %4957 = vmatpush1.bf16.msra.mxu0 %v4892
        %4958 = vmatprep.subr.bf16.mxu0 %v4895
        %4959 = vmatpush1.bf16.msra.mxu0 %v4894
        %4960 = vmatprep.subr.bf16.mxu0 %v4897
        %4961 = vmatpush1.bf16.msra.mxu0 %v4896
        %4962 = vmatprep.subr.bf16.mxu0 %v4899
        %4963 = vmatpush1.bf16.msra.mxu0 %v4898
        %4964 = vmatprep.subr.bf16.mxu0 %v4901
        %4965 = vmatpush1.bf16.msra.mxu0 %v4900
        %4966 = vmatprep.subr.bf16.mxu0 %v4903
        %4967 = vmatpush1.bf16.msra.mxu0 %v4902
        %4968 = vmatprep.subr.bf16.mxu0 %v4905
        %4969 = vmatpush1.bf16.msra.mxu0 %v4904
        %4970 = vmatprep.subr.bf16.mxu0 %v4907
        %4971 = vmatpush1.bf16.msra.mxu0 %v4906
        %4972 = vmatprep.subr.bf16.mxu0 %v4909
        %4973 = vmatpush1.bf16.msra.mxu0 %v4908
        %4974 = vmatprep.subr.bf16.mxu0 %v4911
        %4975 = vmatpush1.bf16.msra.mxu0 %v4910
        %4976 = vmatprep.subr.bf16.mxu0 %v4913
        %4977 = vmatpush1.bf16.msra.mxu0 %v4912
        %4978 = vmatprep.subr.bf16.mxu0 %v4915
        %4979 = vmatpush1.bf16.msra.mxu0 %v4914
        %4980 = vmatprep.subr.bf16.mxu0 %v4917
        %4981 = vmatpush1.bf16.msra.mxu0 %v4916
        %4982 = vmatprep.subr.bf16.mxu0 %v4919
        %4983 = vmatpush1.bf16.msra.mxu0 %v4918
        %4984 = vmatprep.mubr.bf16.mxu0 %v4717
        %4985 = vmatmul.mubr.bf16.gmra.mrb[0].mxu0 %v4716
        %v4986 = vpop.f32.mrb[0].mxu0
        %v4987 = vadd.f32 %v4785, %v4986
        %v4988 = vpop.f32.mrb[0].mxu0
        %v4989 = vadd.f32 %v4789, %v4988
        %v4990 = vpop.f32.mrb[0].mxu0
        %v4991 = vadd.f32 %v4785, %v4990
        %v4992 = vpop.f32.mrb[0].mxu0
        %v4993 = vadd.f32 %v4789, %v4992
        %4994 = vmatprep.mubr.bf16.mxu0 %v4719
        %4995 = vmatmul.mubr.bf16.gmra.mrb[0].mxu0 %v4718
        %v4996 = vpop.f32.mrb[0].mxu0
        %v4997 = vadd.f32 %v4785, %v4996
        %v4998 = vpop.f32.mrb[0].mxu0
        %v4999 = vadd.f32 %v4789, %v4998
        %v5000 = vpop.f32.mrb[0].mxu0
        %v5001 = vadd.f32 %v4785, %v5000
        %v5002 = vpop.f32.mrb[0].mxu0
        %v5003 = vadd.f32 %v4789, %v5002
        %5004 = vmatprep.mubr.bf16.mxu0 %v4721
        %5005 = vmatmul.mubr.bf16.gmra.mrb[0].mxu0 %v4720
        %v5006 = vpop.f32.mrb[0].mxu0
        %v5007 = vadd.f32 %v4785, %v5006
        %v5008 = vpop.f32.mrb[0].mxu0
        %v5009 = vadd.f32 %v4789, %v5008
        %v5010 = vpop.f32.mrb[0].mxu0
        %v5011 = vadd.f32 %v4785, %v5010
        %v5012 = vpop.f32.mrb[0].mxu0
        %v5013 = vadd.f32 %v4789, %v5012
        %5014 = vmatprep.mubr.bf16.mxu0 %v4723
        %5015 = vmatmul.mubr.bf16.gmra.mrb[0].mxu0 %v4722
        %v5016 = vpop.f32.mrb[0].mxu0
        %v5017 = vadd.f32 %v4785, %v5016
        %v5018 = vpop.f32.mrb[0].mxu0
        %v5019 = vadd.f32 %v4789, %v5018
        %v5020 = vpop.f32.mrb[0].mxu0
        %v5021 = vadd.f32 %v4785, %v5020
        %v5022 = vpop.f32.mrb[0].mxu0
        %v5023 = vadd.f32 %v4789, %v5022
        %5024 = vmatprep.mubr.bf16.mxu0 %v4725
        %5025 = vmatmul.mubr.bf16.gmra.mrb[0].mxu0 %v4724
        %v5026 = vpop.f32.mrb[0].mxu0
        %v5027 = vadd.f32 %v4785, %v5026
        %v5028 = vpop.f32.mrb[0].mxu0
        %v5029 = vadd.f32 %v4789, %v5028
        %v5030 = vpop.f32.mrb[0].mxu0
        %v5031 = vadd.f32 %v4785, %v5030
        %v5032 = vpop.f32.mrb[0].mxu0
        %v5033 = vadd.f32 %v4789, %v5032
        %5034 = vmatprep.mubr.bf16.mxu0 %v4727
        %5035 = vmatmul.mubr.bf16.gmra.mrb[0].mxu0 %v4726
        %v5036 = vpop.f32.mrb[0].mxu0
        %v5037 = vadd.f32 %v4785, %v5036
        %v5038 = vpop.f32.mrb[0].mxu0
        %v5039 = vadd.f32 %v4789, %v5038
        %v5040 = vpop.f32.mrb[0].mxu0
        %v5041 = vadd.f32 %v4785, %v5040
        %v5042 = vpop.f32.mrb[0].mxu0
        %v5043 = vadd.f32 %v4789, %v5042
        %5044 = vmatprep.mubr.bf16.mxu0 %v4729
        %5045 = vmatmul.mubr.bf16.gmra.mrb[0].mxu0 %v4728
        %v5046 = vpop.f32.mrb[0].mxu0
        %v5047 = vadd.f32 %v4785, %v5046
        %v5048 = vpop.f32.mrb[0].mxu0
        %v5049 = vadd.f32 %v4789, %v5048
        %v5050 = vpop.f32.mrb[0].mxu0
        %v5051 = vadd.f32 %v4785, %v5050
        %v5052 = vpop.f32.mrb[0].mxu0
        %v5053 = vadd.f32 %v4789, %v5052
        %5054 = vmatprep.mubr.bf16.mxu0 %v4731
        %5055 = vmatmul.mubr.bf16.gmra.mrb[0].mxu0 %v4730
        %v5056 = vpop.f32.mrb[0].mxu0
        %v5057 = vadd.f32 %v4785, %v5056
        %v5058 = vpop.f32.mrb[0].mxu0
        %v5059 = vadd.f32 %v4789, %v5058
        %v5060 = vpop.f32.mrb[0].mxu0
        %v5061 = vadd.f32 %v4785, %v5060
        %v5062 = vpop.f32.mrb[0].mxu0
        %v5063 = vadd.f32 %v4789, %v5062
        %5064 = vmatprep.mubr.bf16.mxu0 %v4733
        %5065 = vmatmul.mubr.bf16.gmra.mrb[0].mxu0 %v4732
        %v5066 = vpop.f32.mrb[0].mxu0
        %v5067 = vadd.f32 %v4785, %v5066
        %v5068 = vpop.f32.mrb[0].mxu0
        %v5069 = vadd.f32 %v4789, %v5068
        %v5070 = vpop.f32.mrb[0].mxu0
        %v5071 = vadd.f32 %v4785, %v5070
        %v5072 = vpop.f32.mrb[0].mxu0
        %v5073 = vadd.f32 %v4789, %v5072
        %5074 = vmatprep.mubr.bf16.mxu0 %v4735
        %5075 = vmatmul.mubr.bf16.gmra.mrb[0].mxu0 %v4734
        %v5076 = vpop.f32.mrb[0].mxu0
        %v5077 = vadd.f32 %v4785, %v5076
        %v5078 = vpop.f32.mrb[0].mxu0
        %v5079 = vadd.f32 %v4789, %v5078
        %v5080 = vpop.f32.mrb[0].mxu0
        %v5081 = vadd.f32 %v4785, %v5080
        %v5082 = vpop.f32.mrb[0].mxu0
        %v5083 = vadd.f32 %v4789, %v5082
        %5084 = vmatprep.mubr.bf16.mxu0 %v4737
        %5085 = vmatmul.mubr.bf16.gmra.mrb[0].mxu0 %v4736
        %v5086 = vpop.f32.mrb[0].mxu0
        %v5087 = vadd.f32 %v4785, %v5086
        %v5088 = vpop.f32.mrb[0].mxu0
        %v5089 = vadd.f32 %v4789, %v5088
        %v5090 = vpop.f32.mrb[0].mxu0
        %v5091 = vadd.f32 %v4785, %v5090
        %v5092 = vpop.f32.mrb[0].mxu0
        %v5093 = vadd.f32 %v4789, %v5092
        %5094 = vmatprep.mubr.bf16.mxu0 %v4739
        %5095 = vmatmul.mubr.bf16.gmra.mrb[0].mxu0 %v4738
        %v5096 = vpop.f32.mrb[0].mxu0
        %v5097 = vadd.f32 %v4785, %v5096
        %v5098 = vpop.f32.mrb[0].mxu0
        %v5099 = vadd.f32 %v4789, %v5098
        %v5100 = vpop.f32.mrb[0].mxu0
        %v5101 = vadd.f32 %v4785, %v5100
        %v5102 = vpop.f32.mrb[0].mxu0
        %v5103 = vadd.f32 %v4789, %v5102
        %5104 = vmatprep.mubr.bf16.mxu0 %v4741
        %5105 = vmatmul.mubr.bf16.gmra.mrb[0].mxu0 %v4740
        %v5106 = vpop.f32.mrb[0].mxu0
        %v5107 = vadd.f32 %v4785, %v5106
        %v5108 = vpop.f32.mrb[0].mxu0
        %v5109 = vadd.f32 %v4789, %v5108
        %v5110 = vpop.f32.mrb[0].mxu0
        %v5111 = vadd.f32 %v4785, %v5110
        %v5112 = vpop.f32.mrb[0].mxu0
        %v5113 = vadd.f32 %v4789, %v5112
        %5114 = vmatprep.mubr.bf16.mxu0 %v4743
        %5115 = vmatmul.mubr.bf16.gmra.mrb[0].mxu0 %v4742
        %v5116 = vpop.f32.mrb[0].mxu0
        %v5117 = vadd.f32 %v4785, %v5116
        %v5118 = vpop.f32.mrb[0].mxu0
        %v5119 = vadd.f32 %v4789, %v5118
        %v5120 = vpop.f32.mrb[0].mxu0
        %v5121 = vadd.f32 %v4785, %v5120
        %v5122 = vpop.f32.mrb[0].mxu0
        %v5123 = vadd.f32 %v4789, %v5122
        %5124 = vmatprep.mubr.bf16.mxu0 %v4745
        %5125 = vmatmul.mubr.bf16.gmra.mrb[0].mxu0 %v4744
        %v5126 = vpop.f32.mrb[0].mxu0
        %v5127 = vadd.f32 %v4785, %v5126
        %v5128 = vpop.f32.mrb[0].mxu0
        %v5129 = vadd.f32 %v4789, %v5128
        %v5130 = vpop.f32.mrb[0].mxu0
        %v5131 = vadd.f32 %v4785, %v5130
        %v5132 = vpop.f32.mrb[0].mxu0
        %v5133 = vadd.f32 %v4789, %v5132
        %5134 = vmatprep.mubr.bf16.mxu0 %v4747
        %5135 = vmatmul.mubr.bf16.gmra.mrb[0].mxu0 %v4746
        %v5136 = vpop.f32.mrb[0].mxu0
        %v5137 = vadd.f32 %v4785, %v5136
        %v5138 = vpop.f32.mrb[0].mxu0
        %v5139 = vadd.f32 %v4789, %v5138
        %v5140 = vpop.f32.mrb[0].mxu0
        %v5141 = vadd.f32 %v4785, %v5140
        %v5142 = vpop.f32.mrb[0].mxu0
        %v5143 = vadd.f32 %v4789, %v5142
        %5144 = vdwg.mxu0
        %v5145 = vrot.slane %v873, 4
        %v5146 = vlaneseq
        %v5147 = vshrl.u32 %v5146, 7
        %v5148 = vsub.s32 0, %v5147
        %v5149 = vrot.slane %v5145, %v5148
        %v5150 = vlaneseq
        %v5151 = vshrl.u32 %v5150, 7
        %v5152 = vsub.s32 1, %v5151
        %v5153 = vrot.slane %v5145, %v5152
        %v5156 = vmul.f32 %v5149, %v4987
        %v5157 = vmul.f32 %v5153, %v4989
        %v5158 = vmul.f32 %v5149, %v4991
        %v5159 = vmul.f32 %v5153, %v4993
        %v5160 = vmul.f32 %v5149, %v4997
        %v5161 = vmul.f32 %v5153, %v4999
        %v5162 = vmul.f32 %v5149, %v5001
        %v5163 = vmul.f32 %v5153, %v5003
        %v5164 = vmul.f32 %v5149, %v5007
        %v5165 = vmul.f32 %v5153, %v5009
        %v5166 = vmul.f32 %v5149, %v5011
        %v5167 = vmul.f32 %v5153, %v5013
        %v5168 = vmul.f32 %v5149, %v5017
        %v5169 = vmul.f32 %v5153, %v5019
        %v5170 = vmul.f32 %v5149, %v5021
        %v5171 = vmul.f32 %v5153, %v5023
        %v5172 = vmul.f32 %v5149, %v5027
        %v5173 = vmul.f32 %v5153, %v5029
        %v5174 = vmul.f32 %v5149, %v5031
        %v5175 = vmul.f32 %v5153, %v5033
        %v5176 = vmul.f32 %v5149, %v5037
        %v5177 = vmul.f32 %v5153, %v5039
        %v5178 = vmul.f32 %v5149, %v5041
        %v5179 = vmul.f32 %v5153, %v5043
        %v5180 = vmul.f32 %v5149, %v5047
        %v5181 = vmul.f32 %v5153, %v5049
        %v5182 = vmul.f32 %v5149, %v5051
        %v5183 = vmul.f32 %v5153, %v5053
        %v5184 = vmul.f32 %v5149, %v5057
        %v5185 = vmul.f32 %v5153, %v5059
        %v5186 = vmul.f32 %v5149, %v5061
        %v5187 = vmul.f32 %v5153, %v5063
        %v5188 = vmul.f32 %v5149, %v5067
        %v5189 = vmul.f32 %v5153, %v5069
        %v5190 = vmul.f32 %v5149, %v5071
        %v5191 = vmul.f32 %v5153, %v5073
        %v5192 = vmul.f32 %v5149, %v5077
        %v5193 = vmul.f32 %v5153, %v5079
        %v5194 = vmul.f32 %v5149, %v5081
        %v5195 = vmul.f32 %v5153, %v5083
        %v5196 = vmul.f32 %v5149, %v5087
        %v5197 = vmul.f32 %v5153, %v5089
        %v5198 = vmul.f32 %v5149, %v5091
        %v5199 = vmul.f32 %v5153, %v5093
        %v5200 = vmul.f32 %v5149, %v5097
        %v5201 = vmul.f32 %v5153, %v5099
        %v5202 = vmul.f32 %v5149, %v5101
        %v5203 = vmul.f32 %v5153, %v5103
        %v5204 = vmul.f32 %v5149, %v5107
        %v5205 = vmul.f32 %v5153, %v5109
        %v5206 = vmul.f32 %v5149, %v5111
        %v5207 = vmul.f32 %v5153, %v5113
        %v5208 = vmul.f32 %v5149, %v5117
        %v5209 = vmul.f32 %v5153, %v5119
        %v5210 = vmul.f32 %v5149, %v5121
        %v5211 = vmul.f32 %v5153, %v5123
        %v5212 = vmul.f32 %v5149, %v5127
        %v5213 = vmul.f32 %v5153, %v5129
        %v5214 = vmul.f32 %v5149, %v5131
        %v5215 = vmul.f32 %v5153, %v5133
        %v5216 = vmul.f32 %v5149, %v5137
        %v5217 = vmul.f32 %v5153, %v5139
        %v5218 = vmul.f32 %v5149, %v5141
        %v5219 = vmul.f32 %v5153, %v5143
        %v5220 = vadd.f32 %v809, %v5156
        %v5221 = vadd.f32 %v810, %v5157
        %v5222 = vadd.f32 %v811, %v5158
        %v5223 = vadd.f32 %v812, %v5159
        %v5224 = vadd.f32 %v813, %v5160
        %v5225 = vadd.f32 %v814, %v5161
        %v5226 = vadd.f32 %v815, %v5162
        %v5227 = vadd.f32 %v816, %v5163
        %v5228 = vadd.f32 %v817, %v5164
        %v5229 = vadd.f32 %v818, %v5165
        %v5230 = vadd.f32 %v819, %v5166
        %v5231 = vadd.f32 %v820, %v5167
        %v5232 = vadd.f32 %v821, %v5168
        %v5233 = vadd.f32 %v822, %v5169
        %v5234 = vadd.f32 %v823, %v5170
        %v5235 = vadd.f32 %v824, %v5171
        %v5236 = vadd.f32 %v825, %v5172
        %v5237 = vadd.f32 %v826, %v5173
        %v5238 = vadd.f32 %v827, %v5174
        %v5239 = vadd.f32 %v828, %v5175
        %v5240 = vadd.f32 %v829, %v5176
        %v5241 = vadd.f32 %v830, %v5177
        %v5242 = vadd.f32 %v831, %v5178
        %v5243 = vadd.f32 %v832, %v5179
        %v5244 = vadd.f32 %v833, %v5180
        %v5245 = vadd.f32 %v834, %v5181
        %v5246 = vadd.f32 %v835, %v5182
        %v5247 = vadd.f32 %v836, %v5183
        %v5248 = vadd.f32 %v837, %v5184
        %v5249 = vadd.f32 %v838, %v5185
        %v5250 = vadd.f32 %v839, %v5186
        %v5251 = vadd.f32 %v840, %v5187
        %v5252 = vadd.f32 %v841, %v5188
        %v5253 = vadd.f32 %v842, %v5189
        %v5254 = vadd.f32 %v843, %v5190
        %v5255 = vadd.f32 %v844, %v5191
        %v5256 = vadd.f32 %v845, %v5192
        %v5257 = vadd.f32 %v846, %v5193
        %v5258 = vadd.f32 %v847, %v5194
        %v5259 = vadd.f32 %v848, %v5195
        %v5260 = vadd.f32 %v849, %v5196
        %v5261 = vadd.f32 %v850, %v5197
        %v5262 = vadd.f32 %v851, %v5198
        %v5263 = vadd.f32 %v852, %v5199
        %v5264 = vadd.f32 %v853, %v5200
        %v5265 = vadd.f32 %v854, %v5201
        %v5266 = vadd.f32 %v855, %v5202
        %v5267 = vadd.f32 %v856, %v5203
        %v5268 = vadd.f32 %v857, %v5204
        %v5269 = vadd.f32 %v858, %v5205
        %v5270 = vadd.f32 %v859, %v5206
        %v5271 = vadd.f32 %v860, %v5207
        %v5272 = vadd.f32 %v861, %v5208
        %v5273 = vadd.f32 %v862, %v5209
        %v5274 = vadd.f32 %v863, %v5210
        %v5275 = vadd.f32 %v864, %v5211
        %v5276 = vadd.f32 %v865, %v5212
        %v5277 = vadd.f32 %v866, %v5213
        %v5278 = vadd.f32 %v867, %v5214
        %v5279 = vadd.f32 %v868, %v5215
        %v5280 = vadd.f32 %v869, %v5216
        %v5281 = vadd.f32 %v870, %v5217
        %v5282 = vadd.f32 %v871, %v5218
        %v5283 = vadd.f32 %v872, %v5219
        %v5284 = vadd.f32 %v5220, %v5221
        %5285 = vadd.xlane.f32.xlu0 %v5284
        %v5286 = vpop.xlane.xlu0 %5285
        %v5287 = vadd.f32 %v5222, %v5223
        %5288 = vadd.xlane.f32.xlu0 %v5287
        %v5289 = vpop.xlane.xlu0 %5288
        %v5290 = vadd.f32 %v5224, %v5225
        %5291 = vadd.xlane.f32.xlu0 %v5290
        %v5292 = vpop.xlane.xlu0 %5291
        %v5293 = vadd.f32 %v5226, %v5227
        %5294 = vadd.xlane.f32.xlu0 %v5293
        %v5295 = vpop.xlane.xlu0 %5294
        %v5296 = vadd.f32 %v5228, %v5229
        %5297 = vadd.xlane.f32.xlu0 %v5296
        %v5298 = vpop.xlane.xlu0 %5297
        %v5299 = vadd.f32 %v5230, %v5231
        %5300 = vadd.xlane.f32.xlu0 %v5299
        %v5301 = vpop.xlane.xlu0 %5300
        %v5302 = vadd.f32 %v5232, %v5233
        %5303 = vadd.xlane.f32.xlu0 %v5302
        %v5304 = vpop.xlane.xlu0 %5303
        %v5305 = vadd.f32 %v5234, %v5235
        %5306 = vadd.xlane.f32.xlu0 %v5305
        %v5307 = vpop.xlane.xlu0 %5306
        %v5308 = vadd.f32 %v5236, %v5237
        %5309 = vadd.xlane.f32.xlu0 %v5308
        %v5310 = vpop.xlane.xlu0 %5309
        %v5311 = vadd.f32 %v5238, %v5239
        %5312 = vadd.xlane.f32.xlu0 %v5311
        %v5313 = vpop.xlane.xlu0 %5312
        %v5314 = vadd.f32 %v5240, %v5241
        %5315 = vadd.xlane.f32.xlu0 %v5314
        %v5316 = vpop.xlane.xlu0 %5315
        %v5317 = vadd.f32 %v5242, %v5243
        %5318 = vadd.xlane.f32.xlu0 %v5317
        %v5319 = vpop.xlane.xlu0 %5318
        %v5320 = vadd.f32 %v5244, %v5245
        %5321 = vadd.xlane.f32.xlu0 %v5320
        %v5322 = vpop.xlane.xlu0 %5321
        %v5323 = vadd.f32 %v5246, %v5247
        %5324 = vadd.xlane.f32.xlu0 %v5323
        %v5325 = vpop.xlane.xlu0 %5324
        %v5326 = vadd.f32 %v5248, %v5249
        %5327 = vadd.xlane.f32.xlu0 %v5326
        %v5328 = vpop.xlane.xlu0 %5327
        %v5329 = vadd.f32 %v5250, %v5251
        %5330 = vadd.xlane.f32.xlu0 %v5329
        %v5331 = vpop.xlane.xlu0 %5330
        %v5332 = vadd.f32 %v5252, %v5253
        %5333 = vadd.xlane.f32.xlu0 %v5332
        %v5334 = vpop.xlane.xlu0 %5333
        %v5335 = vadd.f32 %v5254, %v5255
        %5336 = vadd.xlane.f32.xlu0 %v5335
        %v5337 = vpop.xlane.xlu0 %5336
        %v5338 = vadd.f32 %v5256, %v5257
        %5339 = vadd.xlane.f32.xlu0 %v5338
        %v5340 = vpop.xlane.xlu0 %5339
        %v5341 = vadd.f32 %v5258, %v5259
        %5342 = vadd.xlane.f32.xlu0 %v5341
        %v5343 = vpop.xlane.xlu0 %5342
        %v5344 = vadd.f32 %v5260, %v5261
        %5345 = vadd.xlane.f32.xlu0 %v5344
        %v5346 = vpop.xlane.xlu0 %5345
        %v5347 = vadd.f32 %v5262, %v5263
        %5348 = vadd.xlane.f32.xlu0 %v5347
        %v5349 = vpop.xlane.xlu0 %5348
        %v5350 = vadd.f32 %v5264, %v5265
        %5351 = vadd.xlane.f32.xlu0 %v5350
        %v5352 = vpop.xlane.xlu0 %5351
        %v5353 = vadd.f32 %v5266, %v5267
        %5354 = vadd.xlane.f32.xlu0 %v5353
        %v5355 = vpop.xlane.xlu0 %5354
        %v5356 = vadd.f32 %v5268, %v5269
        %5357 = vadd.xlane.f32.xlu0 %v5356
        %v5358 = vpop.xlane.xlu0 %5357
        %v5359 = vadd.f32 %v5270, %v5271
        %5360 = vadd.xlane.f32.xlu0 %v5359
        %v5361 = vpop.xlane.xlu0 %5360
        %v5362 = vadd.f32 %v5272, %v5273
        %5363 = vadd.xlane.f32.xlu0 %v5362
        %v5364 = vpop.xlane.xlu0 %5363
        %v5365 = vadd.f32 %v5274, %v5275
        %5366 = vadd.xlane.f32.xlu0 %v5365
        %v5367 = vpop.xlane.xlu0 %5366
        %v5368 = vadd.f32 %v5276, %v5277
        %5369 = vadd.xlane.f32.xlu0 %v5368
        %v5370 = vpop.xlane.xlu0 %5369
        %v5371 = vadd.f32 %v5278, %v5279
        %5372 = vadd.xlane.f32.xlu0 %v5371
        %v5373 = vpop.xlane.xlu0 %5372
        %v5374 = vadd.f32 %v5280, %v5281
        %5375 = vadd.xlane.f32.xlu0 %v5374
        %v5376 = vpop.xlane.xlu0 %5375
        %v5377 = vadd.f32 %v5282, %v5283
        %5378 = vadd.xlane.f32.xlu0 %v5377
        %v5379 = vpop.xlane.xlu0 %5378
        %v5380 = vmul.f32 %v5286, %v974
        %v5381 = vmul.f32 %v5289, %v974
        %v5382 = vmul.f32 %v5292, %v974
        %v5383 = vmul.f32 %v5295, %v974
        %v5384 = vmul.f32 %v5298, %v974
        %v5385 = vmul.f32 %v5301, %v974
        %v5386 = vmul.f32 %v5304, %v974
        %v5387 = vmul.f32 %v5307, %v974
        %v5388 = vmul.f32 %v5310, %v974
        %v5389 = vmul.f32 %v5313, %v974
        %v5390 = vmul.f32 %v5316, %v974
        %v5391 = vmul.f32 %v5319, %v974
        %v5392 = vmul.f32 %v5322, %v974
        %v5393 = vmul.f32 %v5325, %v974
        %v5394 = vmul.f32 %v5328, %v974
        %v5395 = vmul.f32 %v5331, %v974
        %v5396 = vmul.f32 %v5334, %v974
        %v5397 = vmul.f32 %v5337, %v974
        %v5398 = vmul.f32 %v5340, %v974
        %v5399 = vmul.f32 %v5343, %v974
        %v5400 = vmul.f32 %v5346, %v974
        %v5401 = vmul.f32 %v5349, %v974
        %v5402 = vmul.f32 %v5352, %v974
        %v5403 = vmul.f32 %v5355, %v974
        %v5404 = vmul.f32 %v5358, %v974
        %v5405 = vmul.f32 %v5361, %v974
        %v5406 = vmul.f32 %v5364, %v974
        %v5407 = vmul.f32 %v5367, %v974
        %v5408 = vmul.f32 %v5370, %v974
        %v5409 = vmul.f32 %v5373, %v974
        %v5410 = vmul.f32 %v5376, %v974
        %v5411 = vmul.f32 %v5379, %v974
        %v5412 = vsub.f32 %v5220, %v5380
        %v5413 = vsub.f32 %v5221, %v5380
        %v5414 = vsub.f32 %v5222, %v5381
        %v5415 = vsub.f32 %v5223, %v5381
        %v5416 = vsub.f32 %v5224, %v5382
        %v5417 = vsub.f32 %v5225, %v5382
        %v5418 = vsub.f32 %v5226, %v5383
        %v5419 = vsub.f32 %v5227, %v5383
        %v5420 = vsub.f32 %v5228, %v5384
        %v5421 = vsub.f32 %v5229, %v5384
        %v5422 = vsub.f32 %v5230, %v5385
        %v5423 = vsub.f32 %v5231, %v5385
        %v5424 = vsub.f32 %v5232, %v5386
        %v5425 = vsub.f32 %v5233, %v5386
        %v5426 = vsub.f32 %v5234, %v5387
        %v5427 = vsub.f32 %v5235, %v5387
        %v5428 = vsub.f32 %v5236, %v5388
        %v5429 = vsub.f32 %v5237, %v5388
        %v5430 = vsub.f32 %v5238, %v5389
        %v5431 = vsub.f32 %v5239, %v5389
        %v5432 = vsub.f32 %v5240, %v5390
        %v5433 = vsub.f32 %v5241, %v5390
        %v5434 = vsub.f32 %v5242, %v5391
        %v5435 = vsub.f32 %v5243, %v5391
        %v5436 = vsub.f32 %v5244, %v5392
        %v5437 = vsub.f32 %v5245, %v5392
        %v5438 = vsub.f32 %v5246, %v5393
        %v5439 = vsub.f32 %v5247, %v5393
        %v5440 = vsub.f32 %v5248, %v5394
        %v5441 = vsub.f32 %v5249, %v5394
        %v5442 = vsub.f32 %v5250, %v5395
        %v5443 = vsub.f32 %v5251, %v5395
        %v5444 = vsub.f32 %v5252, %v5396
        %v5445 = vsub.f32 %v5253, %v5396
        %v5446 = vsub.f32 %v5254, %v5397
        %v5447 = vsub.f32 %v5255, %v5397
        %v5448 = vsub.f32 %v5256, %v5398
        %v5449 = vsub.f32 %v5257, %v5398
        %v5450 = vsub.f32 %v5258, %v5399
        %v5451 = vsub.f32 %v5259, %v5399
        %v5452 = vsub.f32 %v5260, %v5400
        %v5453 = vsub.f32 %v5261, %v5400
        %v5454 = vsub.f32 %v5262, %v5401
        %v5455 = vsub.f32 %v5263, %v5401
        %v5456 = vsub.f32 %v5264, %v5402
        %v5457 = vsub.f32 %v5265, %v5402
        %v5458 = vsub.f32 %v5266, %v5403
        %v5459 = vsub.f32 %v5267, %v5403
        %v5460 = vsub.f32 %v5268, %v5404
        %v5461 = vsub.f32 %v5269, %v5404
        %v5462 = vsub.f32 %v5270, %v5405
        %v5463 = vsub.f32 %v5271, %v5405
        %v5464 = vsub.f32 %v5272, %v5406
        %v5465 = vsub.f32 %v5273, %v5406
        %v5466 = vsub.f32 %v5274, %v5407
        %v5467 = vsub.f32 %v5275, %v5407
        %v5468 = vsub.f32 %v5276, %v5408
        %v5469 = vsub.f32 %v5277, %v5408
        %v5470 = vsub.f32 %v5278, %v5409
        %v5471 = vsub.f32 %v5279, %v5409
        %v5472 = vsub.f32 %v5280, %v5410
        %v5473 = vsub.f32 %v5281, %v5410
        %v5474 = vsub.f32 %v5282, %v5411
        %v5475 = vsub.f32 %v5283, %v5411
        %v5476 = vmul.f32 %v5412, %v5412
        %v5477 = vmul.f32 %v5413, %v5413
        %v5478 = vmul.f32 %v5414, %v5414
        %v5479 = vmul.f32 %v5415, %v5415
        %v5480 = vmul.f32 %v5416, %v5416
        %v5481 = vmul.f32 %v5417, %v5417
        %v5482 = vmul.f32 %v5418, %v5418
        %v5483 = vmul.f32 %v5419, %v5419
        %v5484 = vmul.f32 %v5420, %v5420
        %v5485 = vmul.f32 %v5421, %v5421
        %v5486 = vmul.f32 %v5422, %v5422
        %v5487 = vmul.f32 %v5423, %v5423
        %v5488 = vmul.f32 %v5424, %v5424
        %v5489 = vmul.f32 %v5425, %v5425
        %v5490 = vmul.f32 %v5426, %v5426
        %v5491 = vmul.f32 %v5427, %v5427
        %v5492 = vmul.f32 %v5428, %v5428
        %v5493 = vmul.f32 %v5429, %v5429
        %v5494 = vmul.f32 %v5430, %v5430
        %v5495 = vmul.f32 %v5431, %v5431
        %v5496 = vmul.f32 %v5432, %v5432
        %v5497 = vmul.f32 %v5433, %v5433
        %v5498 = vmul.f32 %v5434, %v5434
        %v5499 = vmul.f32 %v5435, %v5435
        %v5500 = vmul.f32 %v5436, %v5436
        %v5501 = vmul.f32 %v5437, %v5437
        %v5502 = vmul.f32 %v5438, %v5438
        %v5503 = vmul.f32 %v5439, %v5439
        %v5504 = vmul.f32 %v5440, %v5440
        %v5505 = vmul.f32 %v5441, %v5441
        %v5506 = vmul.f32 %v5442, %v5442
        %v5507 = vmul.f32 %v5443, %v5443
        %v5508 = vmul.f32 %v5444, %v5444
        %v5509 = vmul.f32 %v5445, %v5445
        %v5510 = vmul.f32 %v5446, %v5446
        %v5511 = vmul.f32 %v5447, %v5447
        %v5512 = vmul.f32 %v5448, %v5448
        %v5513 = vmul.f32 %v5449, %v5449
        %v5514 = vmul.f32 %v5450, %v5450
        %v5515 = vmul.f32 %v5451, %v5451
        %v5516 = vmul.f32 %v5452, %v5452
        %v5517 = vmul.f32 %v5453, %v5453
        %v5518 = vmul.f32 %v5454, %v5454
        %v5519 = vmul.f32 %v5455, %v5455
        %v5520 = vmul.f32 %v5456, %v5456
        %v5521 = vmul.f32 %v5457, %v5457
        %v5522 = vmul.f32 %v5458, %v5458
        %v5523 = vmul.f32 %v5459, %v5459
        %v5524 = vmul.f32 %v5460, %v5460
        %v5525 = vmul.f32 %v5461, %v5461
        %v5526 = vmul.f32 %v5462, %v5462
        %v5527 = vmul.f32 %v5463, %v5463
        %v5528 = vmul.f32 %v5464, %v5464
        %v5529 = vmul.f32 %v5465, %v5465
        %v5530 = vmul.f32 %v5466, %v5466
        %v5531 = vmul.f32 %v5467, %v5467
        %v5532 = vmul.f32 %v5468, %v5468
        %v5533 = vmul.f32 %v5469, %v5469
        %v5534 = vmul.f32 %v5470, %v5470
        %v5535 = vmul.f32 %v5471, %v5471
        %v5536 = vmul.f32 %v5472, %v5472
        %v5537 = vmul.f32 %v5473, %v5473
        %v5538 = vmul.f32 %v5474, %v5474
        %v5539 = vmul.f32 %v5475, %v5475
        %v5540 = vadd.f32 %v5476, %v5477
        %5541 = vadd.xlane.f32.xlu0 %v5540
        %v5542 = vpop.xlane.xlu0 %5541
        %v5543 = vadd.f32 %v5478, %v5479
        %5544 = vadd.xlane.f32.xlu0 %v5543
        %v5545 = vpop.xlane.xlu0 %5544
        %v5546 = vadd.f32 %v5480, %v5481
        %5547 = vadd.xlane.f32.xlu0 %v5546
        %v5548 = vpop.xlane.xlu0 %5547
        %v5549 = vadd.f32 %v5482, %v5483
        %5550 = vadd.xlane.f32.xlu0 %v5549
        %v5551 = vpop.xlane.xlu0 %5550
        %v5552 = vadd.f32 %v5484, %v5485
        %5553 = vadd.xlane.f32.xlu0 %v5552
        %v5554 = vpop.xlane.xlu0 %5553
        %v5555 = vadd.f32 %v5486, %v5487
        %5556 = vadd.xlane.f32.xlu0 %v5555
        %v5557 = vpop.xlane.xlu0 %5556
        %v5558 = vadd.f32 %v5488, %v5489
        %5559 = vadd.xlane.f32.xlu0 %v5558
        %v5560 = vpop.xlane.xlu0 %5559
        %v5561 = vadd.f32 %v5490, %v5491
        %5562 = vadd.xlane.f32.xlu0 %v5561
        %v5563 = vpop.xlane.xlu0 %5562
        %v5564 = vadd.f32 %v5492, %v5493
        %5565 = vadd.xlane.f32.xlu0 %v5564
        %v5566 = vpop.xlane.xlu0 %5565
        %v5567 = vadd.f32 %v5494, %v5495
        %5568 = vadd.xlane.f32.xlu0 %v5567
        %v5569 = vpop.xlane.xlu0 %5568
        %v5570 = vadd.f32 %v5496, %v5497
        %5571 = vadd.xlane.f32.xlu0 %v5570
        %v5572 = vpop.xlane.xlu0 %5571
        %v5573 = vadd.f32 %v5498, %v5499
        %5574 = vadd.xlane.f32.xlu0 %v5573
        %v5575 = vpop.xlane.xlu0 %5574
        %v5576 = vadd.f32 %v5500, %v5501
        %5577 = vadd.xlane.f32.xlu0 %v5576
        %v5578 = vpop.xlane.xlu0 %5577
        %v5579 = vadd.f32 %v5502, %v5503
        %5580 = vadd.xlane.f32.xlu0 %v5579
        %v5581 = vpop.xlane.xlu0 %5580
        %v5582 = vadd.f32 %v5504, %v5505
        %5583 = vadd.xlane.f32.xlu0 %v5582
        %v5584 = vpop.xlane.xlu0 %5583
        %v5585 = vadd.f32 %v5506, %v5507
        %5586 = vadd.xlane.f32.xlu0 %v5585
        %v5587 = vpop.xlane.xlu0 %5586
        %v5588 = vadd.f32 %v5508, %v5509
        %5589 = vadd.xlane.f32.xlu0 %v5588
        %v5590 = vpop.xlane.xlu0 %5589
        %v5591 = vadd.f32 %v5510, %v5511
        %5592 = vadd.xlane.f32.xlu0 %v5591
        %v5593 = vpop.xlane.xlu0 %5592
        %v5594 = vadd.f32 %v5512, %v5513
        %5595 = vadd.xlane.f32.xlu0 %v5594
        %v5596 = vpop.xlane.xlu0 %5595
        %v5597 = vadd.f32 %v5514, %v5515
        %5598 = vadd.xlane.f32.xlu0 %v5597
        %v5599 = vpop.xlane.xlu0 %5598
        %v5600 = vadd.f32 %v5516, %v5517
        %5601 = vadd.xlane.f32.xlu0 %v5600
        %v5602 = vpop.xlane.xlu0 %5601
        %v5603 = vadd.f32 %v5518, %v5519
        %5604 = vadd.xlane.f32.xlu0 %v5603
        %v5605 = vpop.xlane.xlu0 %5604
        %v5606 = vadd.f32 %v5520, %v5521
        %5607 = vadd.xlane.f32.xlu0 %v5606
        %v5608 = vpop.xlane.xlu0 %5607
        %v5609 = vadd.f32 %v5522, %v5523
        %5610 = vadd.xlane.f32.xlu0 %v5609
        %v5611 = vpop.xlane.xlu0 %5610
        %v5612 = vadd.f32 %v5524, %v5525
        %5613 = vadd.xlane.f32.xlu0 %v5612
        %v5614 = vpop.xlane.xlu0 %5613
        %v5615 = vadd.f32 %v5526, %v5527
        %5616 = vadd.xlane.f32.xlu0 %v5615
        %v5617 = vpop.xlane.xlu0 %5616
        %v5618 = vadd.f32 %v5528, %v5529
        %5619 = vadd.xlane.f32.xlu0 %v5618
        %v5620 = vpop.xlane.xlu0 %5619
        %v5621 = vadd.f32 %v5530, %v5531
        %5622 = vadd.xlane.f32.xlu0 %v5621
        %v5623 = vpop.xlane.xlu0 %5622
        %v5624 = vadd.f32 %v5532, %v5533
        %5625 = vadd.xlane.f32.xlu0 %v5624
        %v5626 = vpop.xlane.xlu0 %5625
        %v5627 = vadd.f32 %v5534, %v5535
        %5628 = vadd.xlane.f32.xlu0 %v5627
        %v5629 = vpop.xlane.xlu0 %5628
        %v5630 = vadd.f32 %v5536, %v5537
        %5631 = vadd.xlane.f32.xlu0 %v5630
        %v5632 = vpop.xlane.xlu0 %5631
        %v5633 = vadd.f32 %v5538, %v5539
        %5634 = vadd.xlane.f32.xlu0 %v5633
        %v5635 = vpop.xlane.xlu0 %5634
        %v5636 = vmul.f32 %v5542, %v974
        %v5637 = vmul.f32 %v5545, %v974
        %v5638 = vmul.f32 %v5548, %v974
        %v5639 = vmul.f32 %v5551, %v974
        %v5640 = vmul.f32 %v5554, %v974
        %v5641 = vmul.f32 %v5557, %v974
        %v5642 = vmul.f32 %v5560, %v974
        %v5643 = vmul.f32 %v5563, %v974
        %v5644 = vmul.f32 %v5566, %v974
        %v5645 = vmul.f32 %v5569, %v974
        %v5646 = vmul.f32 %v5572, %v974
        %v5647 = vmul.f32 %v5575, %v974
        %v5648 = vmul.f32 %v5578, %v974
        %v5649 = vmul.f32 %v5581, %v974
        %v5650 = vmul.f32 %v5584, %v974
        %v5651 = vmul.f32 %v5587, %v974
        %v5652 = vmul.f32 %v5590, %v974
        %v5653 = vmul.f32 %v5593, %v974
        %v5654 = vmul.f32 %v5596, %v974
        %v5655 = vmul.f32 %v5599, %v974
        %v5656 = vmul.f32 %v5602, %v974
        %v5657 = vmul.f32 %v5605, %v974
        %v5658 = vmul.f32 %v5608, %v974
        %v5659 = vmul.f32 %v5611, %v974
        %v5660 = vmul.f32 %v5614, %v974
        %v5661 = vmul.f32 %v5617, %v974
        %v5662 = vmul.f32 %v5620, %v974
        %v5663 = vmul.f32 %v5623, %v974
        %v5664 = vmul.f32 %v5626, %v974
        %v5665 = vmul.f32 %v5629, %v974
        %v5666 = vmul.f32 %v5632, %v974
        %v5667 = vmul.f32 %v5635, %v974
        %v5668 = vadd.f32 %v5636, 1e-06
        %v5669 = vadd.f32 %v5637, 1e-06
        %v5670 = vadd.f32 %v5638, 1e-06
        %v5671 = vadd.f32 %v5639, 1e-06
        %v5672 = vadd.f32 %v5640, 1e-06
        %v5673 = vadd.f32 %v5641, 1e-06
        %v5674 = vadd.f32 %v5642, 1e-06
        %v5675 = vadd.f32 %v5643, 1e-06
        %v5676 = vadd.f32 %v5644, 1e-06
        %v5677 = vadd.f32 %v5645, 1e-06
        %v5678 = vadd.f32 %v5646, 1e-06
        %v5679 = vadd.f32 %v5647, 1e-06
        %v5680 = vadd.f32 %v5648, 1e-06
        %v5681 = vadd.f32 %v5649, 1e-06
        %v5682 = vadd.f32 %v5650, 1e-06
        %v5683 = vadd.f32 %v5651, 1e-06
        %v5684 = vadd.f32 %v5652, 1e-06
        %v5685 = vadd.f32 %v5653, 1e-06
        %v5686 = vadd.f32 %v5654, 1e-06
        %v5687 = vadd.f32 %v5655, 1e-06
        %v5688 = vadd.f32 %v5656, 1e-06
        %v5689 = vadd.f32 %v5657, 1e-06
        %v5690 = vadd.f32 %v5658, 1e-06
        %v5691 = vadd.f32 %v5659, 1e-06
        %v5692 = vadd.f32 %v5660, 1e-06
        %v5693 = vadd.f32 %v5661, 1e-06
        %v5694 = vadd.f32 %v5662, 1e-06
        %v5695 = vadd.f32 %v5663, 1e-06
        %v5696 = vadd.f32 %v5664, 1e-06
        %v5697 = vadd.f32 %v5665, 1e-06
        %v5698 = vadd.f32 %v5666, 1e-06
        %v5699 = vadd.f32 %v5667, 1e-06
        %v5700 = vrsqrt.pop %v5668
        %v5701 = vrsqrt.pop %v5669
        %v5702 = vrsqrt.pop %v5670
        %v5703 = vrsqrt.pop %v5671
        %v5704 = vrsqrt.pop %v5672
        %v5705 = vrsqrt.pop %v5673
        %v5706 = vrsqrt.pop %v5674
        %v5707 = vrsqrt.pop %v5675
        %v5708 = vrsqrt.pop %v5676
        %v5709 = vrsqrt.pop %v5677
        %v5710 = vrsqrt.pop %v5678
        %v5711 = vrsqrt.pop %v5679
        %v5712 = vrsqrt.pop %v5680
        %v5713 = vrsqrt.pop %v5681
        %v5714 = vrsqrt.pop %v5682
        %v5715 = vrsqrt.pop %v5683
        %v5716 = vrsqrt.pop %v5684
        %v5717 = vrsqrt.pop %v5685
        %v5718 = vrsqrt.pop %v5686
        %v5719 = vrsqrt.pop %v5687
        %v5720 = vrsqrt.pop %v5688
        %v5721 = vrsqrt.pop %v5689
        %v5722 = vrsqrt.pop %v5690
        %v5723 = vrsqrt.pop %v5691
        %v5724 = vrsqrt.pop %v5692
        %v5725 = vrsqrt.pop %v5693
        %v5726 = vrsqrt.pop %v5694
        %v5727 = vrsqrt.pop %v5695
        %v5728 = vrsqrt.pop %v5696
        %v5729 = vrsqrt.pop %v5697
        %v5730 = vrsqrt.pop %v5698
        %v5731 = vrsqrt.pop %v5699
        %v5732 = vmul.f32 %v5412, %v5700
        %v5733 = vmul.f32 %v5413, %v5700
        %v5734 = vmul.f32 %v5414, %v5701
        %v5735 = vmul.f32 %v5415, %v5701
        %v5736 = vmul.f32 %v5416, %v5702
        %v5737 = vmul.f32 %v5417, %v5702
        %v5738 = vmul.f32 %v5418, %v5703
        %v5739 = vmul.f32 %v5419, %v5703
        %v5740 = vmul.f32 %v5420, %v5704
        %v5741 = vmul.f32 %v5421, %v5704
        %v5742 = vmul.f32 %v5422, %v5705
        %v5743 = vmul.f32 %v5423, %v5705
        %v5744 = vmul.f32 %v5424, %v5706
        %v5745 = vmul.f32 %v5425, %v5706
        %v5746 = vmul.f32 %v5426, %v5707
        %v5747 = vmul.f32 %v5427, %v5707
        %v5748 = vmul.f32 %v5428, %v5708
        %v5749 = vmul.f32 %v5429, %v5708
        %v5750 = vmul.f32 %v5430, %v5709
        %v5751 = vmul.f32 %v5431, %v5709
        %v5752 = vmul.f32 %v5432, %v5710
        %v5753 = vmul.f32 %v5433, %v5710
        %v5754 = vmul.f32 %v5434, %v5711
        %v5755 = vmul.f32 %v5435, %v5711
        %v5756 = vmul.f32 %v5436, %v5712
        %v5757 = vmul.f32 %v5437, %v5712
        %v5758 = vmul.f32 %v5438, %v5713
        %v5759 = vmul.f32 %v5439, %v5713
        %v5760 = vmul.f32 %v5440, %v5714
        %v5761 = vmul.f32 %v5441, %v5714
        %v5762 = vmul.f32 %v5442, %v5715
        %v5763 = vmul.f32 %v5443, %v5715
        %v5764 = vmul.f32 %v5444, %v5716
        %v5765 = vmul.f32 %v5445, %v5716
        %v5766 = vmul.f32 %v5446, %v5717
        %v5767 = vmul.f32 %v5447, %v5717
        %v5768 = vmul.f32 %v5448, %v5718
        %v5769 = vmul.f32 %v5449, %v5718
        %v5770 = vmul.f32 %v5450, %v5719
        %v5771 = vmul.f32 %v5451, %v5719
        %v5772 = vmul.f32 %v5452, %v5720
        %v5773 = vmul.f32 %v5453, %v5720
        %v5774 = vmul.f32 %v5454, %v5721
        %v5775 = vmul.f32 %v5455, %v5721
        %v5776 = vmul.f32 %v5456, %v5722
        %v5777 = vmul.f32 %v5457, %v5722
        %v5778 = vmul.f32 %v5458, %v5723
        %v5779 = vmul.f32 %v5459, %v5723
        %v5780 = vmul.f32 %v5460, %v5724
        %v5781 = vmul.f32 %v5461, %v5724
        %v5782 = vmul.f32 %v5462, %v5725
        %v5783 = vmul.f32 %v5463, %v5725
        %v5784 = vmul.f32 %v5464, %v5726
        %v5785 = vmul.f32 %v5465, %v5726
        %v5786 = vmul.f32 %v5466, %v5727
        %v5787 = vmul.f32 %v5467, %v5727
        %v5788 = vmul.f32 %v5468, %v5728
        %v5789 = vmul.f32 %v5469, %v5728
        %v5790 = vmul.f32 %v5470, %v5729
        %v5791 = vmul.f32 %v5471, %v5729
        %v5792 = vmul.f32 %v5472, %v5730
        %v5793 = vmul.f32 %v5473, %v5730
        %v5794 = vmul.f32 %v5474, %v5731
        %v5795 = vmul.f32 %v5475, %v5731
        %v5796 = vadd.f32 %v874, 1.0
        %v5798 = vlaneseq
        %v5799 = vshrl.u32 %v5798, 7
        %v5800 = vsub.s32 0, %v5799
        %v5801 = vrot.slane %v5796, %v5800
        %v5802 = vlaneseq
        %v5803 = vshrl.u32 %v5802, 7
        %v5804 = vsub.s32 1, %v5803
        %v5805 = vrot.slane %v5796, %v5804
        %v5808 = vmul.f32 %v5732, %v5801
        %v5809 = vmul.f32 %v5733, %v5805
        %v5810 = vmul.f32 %v5734, %v5801
        %v5811 = vmul.f32 %v5735, %v5805
        %v5812 = vmul.f32 %v5736, %v5801
        %v5813 = vmul.f32 %v5737, %v5805
        %v5814 = vmul.f32 %v5738, %v5801
        %v5815 = vmul.f32 %v5739, %v5805
        %v5816 = vmul.f32 %v5740, %v5801
        %v5817 = vmul.f32 %v5741, %v5805
        %v5818 = vmul.f32 %v5742, %v5801
        %v5819 = vmul.f32 %v5743, %v5805
        %v5820 = vmul.f32 %v5744, %v5801
        %v5821 = vmul.f32 %v5745, %v5805
        %v5822 = vmul.f32 %v5746, %v5801
        %v5823 = vmul.f32 %v5747, %v5805
        %v5824 = vmul.f32 %v5748, %v5801
        %v5825 = vmul.f32 %v5749, %v5805
        %v5826 = vmul.f32 %v5750, %v5801
        %v5827 = vmul.f32 %v5751, %v5805
        %v5828 = vmul.f32 %v5752, %v5801
        %v5829 = vmul.f32 %v5753, %v5805
        %v5830 = vmul.f32 %v5754, %v5801
        %v5831 = vmul.f32 %v5755, %v5805
        %v5832 = vmul.f32 %v5756, %v5801
        %v5833 = vmul.f32 %v5757, %v5805
        %v5834 = vmul.f32 %v5758, %v5801
        %v5835 = vmul.f32 %v5759, %v5805
        %v5836 = vmul.f32 %v5760, %v5801
        %v5837 = vmul.f32 %v5761, %v5805
        %v5838 = vmul.f32 %v5762, %v5801
        %v5839 = vmul.f32 %v5763, %v5805
        %v5840 = vmul.f32 %v5764, %v5801
        %v5841 = vmul.f32 %v5765, %v5805
        %v5842 = vmul.f32 %v5766, %v5801
        %v5843 = vmul.f32 %v5767, %v5805
        %v5844 = vmul.f32 %v5768, %v5801
        %v5845 = vmul.f32 %v5769, %v5805
        %v5846 = vmul.f32 %v5770, %v5801
        %v5847 = vmul.f32 %v5771, %v5805
        %v5848 = vmul.f32 %v5772, %v5801
        %v5849 = vmul.f32 %v5773, %v5805
        %v5850 = vmul.f32 %v5774, %v5801
        %v5851 = vmul.f32 %v5775, %v5805
        %v5852 = vmul.f32 %v5776, %v5801
        %v5853 = vmul.f32 %v5777, %v5805
        %v5854 = vmul.f32 %v5778, %v5801
        %v5855 = vmul.f32 %v5779, %v5805
        %v5856 = vmul.f32 %v5780, %v5801
        %v5857 = vmul.f32 %v5781, %v5805
        %v5858 = vmul.f32 %v5782, %v5801
        %v5859 = vmul.f32 %v5783, %v5805
        %v5860 = vmul.f32 %v5784, %v5801
        %v5861 = vmul.f32 %v5785, %v5805
        %v5862 = vmul.f32 %v5786, %v5801
        %v5863 = vmul.f32 %v5787, %v5805
        %v5864 = vmul.f32 %v5788, %v5801
        %v5865 = vmul.f32 %v5789, %v5805
        %v5866 = vmul.f32 %v5790, %v5801
        %v5867 = vmul.f32 %v5791, %v5805
        %v5868 = vmul.f32 %v5792, %v5801
        %v5869 = vmul.f32 %v5793, %v5805
        %v5870 = vmul.f32 %v5794, %v5801
        %v5871 = vmul.f32 %v5795, %v5805
        %v5872 = vrot.slane %v873, 6
        %v5873 = vlaneseq
        %v5874 = vshrl.u32 %v5873, 7
        %v5875 = vsub.s32 0, %v5874
        %v5876 = vrot.slane %v5872, %v5875
        %v5877 = vlaneseq
        %v5878 = vshrl.u32 %v5877, 7
        %v5879 = vsub.s32 1, %v5878
        %v5880 = vrot.slane %v5872, %v5879
        %v5883 = vadd.f32 %v5808, %v5876
        %v5884 = vadd.f32 %v5809, %v5880
        %v5885 = vadd.f32 %v5810, %v5876
        %v5886 = vadd.f32 %v5811, %v5880
        %v5887 = vadd.f32 %v5812, %v5876
        %v5888 = vadd.f32 %v5813, %v5880
        %v5889 = vadd.f32 %v5814, %v5876
        %v5890 = vadd.f32 %v5815, %v5880
        %v5891 = vadd.f32 %v5816, %v5876
        %v5892 = vadd.f32 %v5817, %v5880
        %v5893 = vadd.f32 %v5818, %v5876
        %v5894 = vadd.f32 %v5819, %v5880
        %v5895 = vadd.f32 %v5820, %v5876
        %v5896 = vadd.f32 %v5821, %v5880
        %v5897 = vadd.f32 %v5822, %v5876
        %v5898 = vadd.f32 %v5823, %v5880
        %v5899 = vadd.f32 %v5824, %v5876
        %v5900 = vadd.f32 %v5825, %v5880
        %v5901 = vadd.f32 %v5826, %v5876
        %v5902 = vadd.f32 %v5827, %v5880
        %v5903 = vadd.f32 %v5828, %v5876
        %v5904 = vadd.f32 %v5829, %v5880
        %v5905 = vadd.f32 %v5830, %v5876
        %v5906 = vadd.f32 %v5831, %v5880
        %v5907 = vadd.f32 %v5832, %v5876
        %v5908 = vadd.f32 %v5833, %v5880
        %v5909 = vadd.f32 %v5834, %v5876
        %v5910 = vadd.f32 %v5835, %v5880
        %v5911 = vadd.f32 %v5836, %v5876
        %v5912 = vadd.f32 %v5837, %v5880
        %v5913 = vadd.f32 %v5838, %v5876
        %v5914 = vadd.f32 %v5839, %v5880
        %v5915 = vadd.f32 %v5840, %v5876
        %v5916 = vadd.f32 %v5841, %v5880
        %v5917 = vadd.f32 %v5842, %v5876
        %v5918 = vadd.f32 %v5843, %v5880
        %v5919 = vadd.f32 %v5844, %v5876
        %v5920 = vadd.f32 %v5845, %v5880
        %v5921 = vadd.f32 %v5846, %v5876
        %v5922 = vadd.f32 %v5847, %v5880
        %v5923 = vadd.f32 %v5848, %v5876
        %v5924 = vadd.f32 %v5849, %v5880
        %v5925 = vadd.f32 %v5850, %v5876
        %v5926 = vadd.f32 %v5851, %v5880
        %v5927 = vadd.f32 %v5852, %v5876
        %v5928 = vadd.f32 %v5853, %v5880
        %v5929 = vadd.f32 %v5854, %v5876
        %v5930 = vadd.f32 %v5855, %v5880
        %v5931 = vadd.f32 %v5856, %v5876
        %v5932 = vadd.f32 %v5857, %v5880
        %v5933 = vadd.f32 %v5858, %v5876
        %v5934 = vadd.f32 %v5859, %v5880
        %v5935 = vadd.f32 %v5860, %v5876
        %v5936 = vadd.f32 %v5861, %v5880
        %v5937 = vadd.f32 %v5862, %v5876
        %v5938 = vadd.f32 %v5863, %v5880
        %v5939 = vadd.f32 %v5864, %v5876
        %v5940 = vadd.f32 %v5865, %v5880
        %v5941 = vadd.f32 %v5866, %v5876
        %v5942 = vadd.f32 %v5867, %v5880
        %v5943 = vadd.f32 %v5868, %v5876
        %v5944 = vadd.f32 %v5869, %v5880
        %v5945 = vadd.f32 %v5870, %v5876
        %v5946 = vadd.f32 %v5871, %v5880
        %v5947 = vpack.c.bf16 %v5885, %v5883
        %v5948 = vpack.c.bf16 %v5886, %v5884
        %v5949 = vpack.c.bf16 %v5889, %v5887
        %v5950 = vpack.c.bf16 %v5890, %v5888
        %v5951 = vpack.c.bf16 %v5893, %v5891
        %v5952 = vpack.c.bf16 %v5894, %v5892
        %v5953 = vpack.c.bf16 %v5897, %v5895
        %v5954 = vpack.c.bf16 %v5898, %v5896
        %v5955 = vpack.c.bf16 %v5901, %v5899
        %v5956 = vpack.c.bf16 %v5902, %v5900
        %v5957 = vpack.c.bf16 %v5905, %v5903
        %v5958 = vpack.c.bf16 %v5906, %v5904
        %v5959 = vpack.c.bf16 %v5909, %v5907
        %v5960 = vpack.c.bf16 %v5910, %v5908
        %v5961 = vpack.c.bf16 %v5913, %v5911
        %v5962 = vpack.c.bf16 %v5914, %v5912
        %v5963 = vpack.c.bf16 %v5917, %v5915
        %v5964 = vpack.c.bf16 %v5918, %v5916
        %v5965 = vpack.c.bf16 %v5921, %v5919
        %v5966 = vpack.c.bf16 %v5922, %v5920
        %v5967 = vpack.c.bf16 %v5925, %v5923
        %v5968 = vpack.c.bf16 %v5926, %v5924
        %v5969 = vpack.c.bf16 %v5929, %v5927
        %v5970 = vpack.c.bf16 %v5930, %v5928
        %v5971 = vpack.c.bf16 %v5933, %v5931
        %v5972 = vpack.c.bf16 %v5934, %v5932
        %v5973 = vpack.c.bf16 %v5937, %v5935
        %v5974 = vpack.c.bf16 %v5938, %v5936
        %v5975 = vpack.c.bf16 %v5941, %v5939
        %v5976 = vpack.c.bf16 %v5942, %v5940
        %v5977 = vpack.c.bf16 %v5945, %v5943
        %v5978 = vpack.c.bf16 %v5946, %v5944
        %v5979 = vld [vmem:[%s572] sm:$0xff]
        %v5980 = vld [vmem:[%s572 + $0x8] sm:$0xff]
        %v5981 = vld [vmem:[%s572 + $0x10] sm:$0xff]
        %v5982 = vld [vmem:[%s572 + $0x18] sm:$0xff]
        %v5983 = vld [vmem:[%s572 + $0x20] sm:$0xff]
        %v5984 = vld [vmem:[%s572 + $0x28] sm:$0xff]
        %v5985 = vld [vmem:[%s572 + $0x30] sm:$0xff]
        %v5986 = vld [vmem:[%s572 + $0x38] sm:$0xff]
        %v5987 = vld [vmem:[%s572 + $0x40] sm:$0xff]
        %v5988 = vld [vmem:[%s572 + $0x48] sm:$0xff]
        %v5989 = vld [vmem:[%s572 + $0x50] sm:$0xff]
        %v5990 = vld [vmem:[%s572 + $0x58] sm:$0xff]
        %v5991 = vld [vmem:[%s572 + $0x60] sm:$0xff]
        %v5992 = vld [vmem:[%s572 + $0x68] sm:$0xff]
        %v5993 = vld [vmem:[%s572 + $0x70] sm:$0xff]
        %v5994 = vld [vmem:[%s572 + $0x78] sm:$0xff]
        %v5995 = vld [vmem:[%s572 + $0x80] sm:$0xff]
        %v5996 = vld [vmem:[%s572 + $0x88] sm:$0xff]
        %v5997 = vld [vmem:[%s572 + $0x90] sm:$0xff]
        %v5998 = vld [vmem:[%s572 + $0x98] sm:$0xff]
        %v5999 = vld [vmem:[%s572 + $0xa0] sm:$0xff]
        %v6000 = vld [vmem:[%s572 + $0xa8] sm:$0xff]
        %v6001 = vld [vmem:[%s572 + $0xb0] sm:$0xff]
        %v6002 = vld [vmem:[%s572 + $0xb8] sm:$0xff]
        %v6003 = vld [vmem:[%s572 + $0xc0] sm:$0xff]
        %v6004 = vld [vmem:[%s572 + $0xc8] sm:$0xff]
        %v6005 = vld [vmem:[%s572 + $0xd0] sm:$0xff]
        %v6006 = vld [vmem:[%s572 + $0xd8] sm:$0xff]
        %v6007 = vld [vmem:[%s572 + $0xe0] sm:$0xff]
        %v6008 = vld [vmem:[%s572 + $0xe8] sm:$0xff]
        %v6009 = vld [vmem:[%s572 + $0xf0] sm:$0xff]
        %v6010 = vld [vmem:[%s572 + $0xf8] sm:$0xff]
        %v6011 = vld [vmem:[%s572 + $0x100] sm:$0xff]
        %v6012 = vld [vmem:[%s572 + $0x108] sm:$0xff]
        %v6013 = vld [vmem:[%s572 + $0x110] sm:$0xff]
        %v6014 = vld [vmem:[%s572 + $0x118] sm:$0xff]
        %v6015 = vld [vmem:[%s572 + $0x120] sm:$0xff]
        %v6016 = vld [vmem:[%s572 + $0x128] sm:$0xff]
        %v6017 = vld [vmem:[%s572 + $0x130] sm:$0xff]
        %v6018 = vld [vmem:[%s572 + $0x138] sm:$0xff]
        %v6019 = vld [vmem:[%s572 + $0x140] sm:$0xff]
        %v6020 = vld [vmem:[%s572 + $0x148] sm:$0xff]
        %v6021 = vld [vmem:[%s572 + $0x150] sm:$0xff]
        %v6022 = vld [vmem:[%s572 + $0x158] sm:$0xff]
        %v6023 = vld [vmem:[%s572 + $0x160] sm:$0xff]
        %v6024 = vld [vmem:[%s572 + $0x168] sm:$0xff]
        %v6025 = vld [vmem:[%s572 + $0x170] sm:$0xff]
        %v6026 = vld [vmem:[%s572 + $0x178] sm:$0xff]
        %v6027 = vld [vmem:[%s572 + $0x180] sm:$0xff]
        %v6028 = vld [vmem:[%s572 + $0x188] sm:$0xff]
        %v6029 = vld [vmem:[%s572 + $0x190] sm:$0xff]
        %v6030 = vld [vmem:[%s572 + $0x198] sm:$0xff]
        %v6031 = vld [vmem:[%s572 + $0x1a0] sm:$0xff]
        %v6032 = vld [vmem:[%s572 + $0x1a8] sm:$0xff]
        %v6033 = vld [vmem:[%s572 + $0x1b0] sm:$0xff]
        %v6034 = vld [vmem:[%s572 + $0x1b8] sm:$0xff]
        %v6035 = vld [vmem:[%s572 + $0x1c0] sm:$0xff]
        %v6036 = vld [vmem:[%s572 + $0x1c8] sm:$0xff]
        %v6037 = vld [vmem:[%s572 + $0x1d0] sm:$0xff]
        %v6038 = vld [vmem:[%s572 + $0x1d8] sm:$0xff]
        %v6039 = vld [vmem:[%s572 + $0x1e0] sm:$0xff]
        %v6040 = vld [vmem:[%s572 + $0x1e8] sm:$0xff]
        %v6041 = vld [vmem:[%s572 + $0x1f0] sm:$0xff]
        %v6042 = vld [vmem:[%s572 + $0x1f8] sm:$0xff]
        %v6043 = vld [vmem:[%s572 + $0x200] sm:$0xff]
        %v6044 = vld [vmem:[%s572 + $0x208] sm:$0xff]
        %v6045 = vld [vmem:[%s572 + $0x210] sm:$0xff]
        %v6046 = vld [vmem:[%s572 + $0x218] sm:$0xff]
        %v6047 = vld [vmem:[%s572 + $0x220] sm:$0xff]
        %v6048 = vld [vmem:[%s572 + $0x228] sm:$0xff]
        %v6049 = vld [vmem:[%s572 + $0x230] sm:$0xff]
        %v6050 = vld [vmem:[%s572 + $0x238] sm:$0xff]
        %v6051 = vld [vmem:[%s572 + $0x240] sm:$0xff]
        %v6052 = vld [vmem:[%s572 + $0x248] sm:$0xff]
        %v6053 = vld [vmem:[%s572 + $0x250] sm:$0xff]
        %v6054 = vld [vmem:[%s572 + $0x258] sm:$0xff]
        %v6055 = vld [vmem:[%s572 + $0x260] sm:$0xff]
        %v6056 = vld [vmem:[%s572 + $0x268] sm:$0xff]
        %v6057 = vld [vmem:[%s572 + $0x270] sm:$0xff]
        %v6058 = vld [vmem:[%s572 + $0x278] sm:$0xff]
        %v6059 = vld [vmem:[%s572 + $0x280] sm:$0xff]
        %v6060 = vld [vmem:[%s572 + $0x288] sm:$0xff]
        %v6061 = vld [vmem:[%s572 + $0x290] sm:$0xff]
        %v6062 = vld [vmem:[%s572 + $0x298] sm:$0xff]
        %v6063 = vld [vmem:[%s572 + $0x2a0] sm:$0xff]
        %v6064 = vld [vmem:[%s572 + $0x2a8] sm:$0xff]
        %v6065 = vld [vmem:[%s572 + $0x2b0] sm:$0xff]
        %v6066 = vld [vmem:[%s572 + $0x2b8] sm:$0xff]
        %v6067 = vld [vmem:[%s572 + $0x2c0] sm:$0xff]
        %v6068 = vld [vmem:[%s572 + $0x2c8] sm:$0xff]
        %v6069 = vld [vmem:[%s572 + $0x2d0] sm:$0xff]
        %v6070 = vld [vmem:[%s572 + $0x2d8] sm:$0xff]
        %v6071 = vld [vmem:[%s572 + $0x2e0] sm:$0xff]
        %v6072 = vld [vmem:[%s572 + $0x2e8] sm:$0xff]
        %v6073 = vld [vmem:[%s572 + $0x2f0] sm:$0xff]
        %v6074 = vld [vmem:[%s572 + $0x2f8] sm:$0xff]
        %v6075 = vld [vmem:[%s572 + $0x300] sm:$0xff]
        %v6076 = vld [vmem:[%s572 + $0x308] sm:$0xff]
        %v6077 = vld [vmem:[%s572 + $0x310] sm:$0xff]
        %v6078 = vld [vmem:[%s572 + $0x318] sm:$0xff]
        %v6079 = vld [vmem:[%s572 + $0x320] sm:$0xff]
        %v6080 = vld [vmem:[%s572 + $0x328] sm:$0xff]
        %v6081 = vld [vmem:[%s572 + $0x330] sm:$0xff]
        %v6082 = vld [vmem:[%s572 + $0x338] sm:$0xff]
        %v6083 = vld [vmem:[%s572 + $0x340] sm:$0xff]
        %v6084 = vld [vmem:[%s572 + $0x348] sm:$0xff]
        %v6085 = vld [vmem:[%s572 + $0x350] sm:$0xff]
        %v6086 = vld [vmem:[%s572 + $0x358] sm:$0xff]
        %v6087 = vld [vmem:[%s572 + $0x360] sm:$0xff]
        %v6088 = vld [vmem:[%s572 + $0x368] sm:$0xff]
        %v6089 = vld [vmem:[%s572 + $0x370] sm:$0xff]
        %v6090 = vld [vmem:[%s572 + $0x378] sm:$0xff]
        %v6091 = vld [vmem:[%s572 + $0x380] sm:$0xff]
        %v6092 = vld [vmem:[%s572 + $0x388] sm:$0xff]
        %v6093 = vld [vmem:[%s572 + $0x390] sm:$0xff]
        %v6094 = vld [vmem:[%s572 + $0x398] sm:$0xff]
        %v6095 = vld [vmem:[%s572 + $0x3a0] sm:$0xff]
        %v6096 = vld [vmem:[%s572 + $0x3a8] sm:$0xff]
        %v6097 = vld [vmem:[%s572 + $0x3b0] sm:$0xff]
        %v6098 = vld [vmem:[%s572 + $0x3b8] sm:$0xff]
        %v6099 = vld [vmem:[%s572 + $0x3c0] sm:$0xff]
        %v6100 = vld [vmem:[%s572 + $0x3c8] sm:$0xff]
        %v6101 = vld [vmem:[%s572 + $0x3d0] sm:$0xff]
        %v6102 = vld [vmem:[%s572 + $0x3d8] sm:$0xff]
        %v6103 = vld [vmem:[%s572 + $0x3e0] sm:$0xff]
        %v6104 = vld [vmem:[%s572 + $0x3e8] sm:$0xff]
        %v6105 = vld [vmem:[%s572 + $0x3f0] sm:$0xff]
        %v6106 = vld [vmem:[%s572 + $0x3f8] sm:$0xff]
        %v6107 = vld [vmem:[%s667] sm:$0xff]
        %v6109 = vlaneseq
        %v6110 = vshrl.u32 %v6109, 7
        %v6111 = vsub.s32 0, %v6110
        %v6112 = vrot.slane %v6107, %v6111
        %v6113 = vlaneseq
        %v6114 = vshrl.u32 %v6113, 7
        %v6115 = vsub.s32 1, %v6114
        %v6116 = vrot.slane %v6107, %v6115
        %v6117 = vlaneseq
        %v6118 = vshrl.u32 %v6117, 7
        %v6119 = vsub.s32 2, %v6118
        %v6120 = vrot.slane %v6107, %v6119
        %v6121 = vlaneseq
        %v6122 = vshrl.u32 %v6121, 7
        %v6123 = vsub.s32 3, %v6122
        %v6124 = vrot.slane %v6107, %v6123
        %v6125 = vlaneseq
        %v6126 = vshrl.u32 %v6125, 7
        %v6127 = vsub.s32 4, %v6126
        %v6128 = vrot.slane %v6107, %v6127
        %v6129 = vlaneseq
        %v6130 = vshrl.u32 %v6129, 7
        %v6131 = vsub.s32 5, %v6130
        %v6132 = vrot.slane %v6107, %v6131
        %v6133 = vlaneseq
        %v6134 = vshrl.u32 %v6133, 7
        %v6135 = vsub.s32 6, %v6134
        %v6136 = vrot.slane %v6107, %v6135
        %v6137 = vlaneseq
        %v6138 = vshrl.u32 %v6137, 7
        %v6139 = vsub.s32 7, %v6138
        %v6140 = vrot.slane %v6107, %v6139
        %v6277 = vunpack.c.l.b16 %v5979
        %v6278 = vunpack.c.h.b16 %v5979
        %v6279 = vunpack.c.l.b16 %v5980
        %v6280 = vunpack.c.h.b16 %v5980
        %v6281 = vunpack.c.l.b16 %v5981
        %v6282 = vunpack.c.h.b16 %v5981
        %v6283 = vunpack.c.l.b16 %v5982
        %v6284 = vunpack.c.h.b16 %v5982
        %v6285 = vunpack.c.l.b16 %v5983
        %v6286 = vunpack.c.h.b16 %v5983
        %v6287 = vunpack.c.l.b16 %v5984
        %v6288 = vunpack.c.h.b16 %v5984
        %v6289 = vunpack.c.l.b16 %v5985
        %v6290 = vunpack.c.h.b16 %v5985
        %v6291 = vunpack.c.l.b16 %v5986
        %v6292 = vunpack.c.h.b16 %v5986
        %v6293 = vunpack.c.l.b16 %v5987
        %v6294 = vunpack.c.h.b16 %v5987
        %v6295 = vunpack.c.l.b16 %v5988
        %v6296 = vunpack.c.h.b16 %v5988
        %v6297 = vunpack.c.l.b16 %v5989
        %v6298 = vunpack.c.h.b16 %v5989
        %v6299 = vunpack.c.l.b16 %v5990
        %v6300 = vunpack.c.h.b16 %v5990
        %v6301 = vunpack.c.l.b16 %v5991
        %v6302 = vunpack.c.h.b16 %v5991
        %v6303 = vunpack.c.l.b16 %v5992
        %v6304 = vunpack.c.h.b16 %v5992
        %v6305 = vunpack.c.l.b16 %v5993
        %v6306 = vunpack.c.h.b16 %v5993
        %v6307 = vunpack.c.l.b16 %v5994
        %v6308 = vunpack.c.h.b16 %v5994
        %v6309 = vunpack.c.l.b16 %v5995
        %v6310 = vunpack.c.h.b16 %v5995
        %v6311 = vunpack.c.l.b16 %v5996
        %v6312 = vunpack.c.h.b16 %v5996
        %v6313 = vunpack.c.l.b16 %v5997
        %v6314 = vunpack.c.h.b16 %v5997
        %v6315 = vunpack.c.l.b16 %v5998
        %v6316 = vunpack.c.h.b16 %v5998
        %v6317 = vunpack.c.l.b16 %v5999
        %v6318 = vunpack.c.h.b16 %v5999
        %v6319 = vunpack.c.l.b16 %v6000
        %v6320 = vunpack.c.h.b16 %v6000
        %v6321 = vunpack.c.l.b16 %v6001
        %v6322 = vunpack.c.h.b16 %v6001
        %v6323 = vunpack.c.l.b16 %v6002
        %v6324 = vunpack.c.h.b16 %v6002
        %v6325 = vunpack.c.l.b16 %v6003
        %v6326 = vunpack.c.h.b16 %v6003
        %v6327 = vunpack.c.l.b16 %v6004
        %v6328 = vunpack.c.h.b16 %v6004
        %v6329 = vunpack.c.l.b16 %v6005
        %v6330 = vunpack.c.h.b16 %v6005
        %v6331 = vunpack.c.l.b16 %v6006
        %v6332 = vunpack.c.h.b16 %v6006
        %v6333 = vunpack.c.l.b16 %v6007
        %v6334 = vunpack.c.h.b16 %v6007
        %v6335 = vunpack.c.l.b16 %v6008
        %v6336 = vunpack.c.h.b16 %v6008
        %v6337 = vunpack.c.l.b16 %v6009
        %v6338 = vunpack.c.h.b16 %v6009
        %v6339 = vunpack.c.l.b16 %v6010
        %v6340 = vunpack.c.h.b16 %v6010
        %v6341 = vunpack.c.l.b16 %v6011
        %v6342 = vunpack.c.h.b16 %v6011
        %v6343 = vunpack.c.l.b16 %v6012
        %v6344 = vunpack.c.h.b16 %v6012
        %v6345 = vunpack.c.l.b16 %v6013
        %v6346 = vunpack.c.h.b16 %v6013
        %v6347 = vunpack.c.l.b16 %v6014
        %v6348 = vunpack.c.h.b16 %v6014
        %v6349 = vunpack.c.l.b16 %v6015
        %v6350 = vunpack.c.h.b16 %v6015
        %v6351 = vunpack.c.l.b16 %v6016
        %v6352 = vunpack.c.h.b16 %v6016
        %v6353 = vunpack.c.l.b16 %v6017
        %v6354 = vunpack.c.h.b16 %v6017
        %v6355 = vunpack.c.l.b16 %v6018
        %v6356 = vunpack.c.h.b16 %v6018
        %v6357 = vunpack.c.l.b16 %v6019
        %v6358 = vunpack.c.h.b16 %v6019
        %v6359 = vunpack.c.l.b16 %v6020
        %v6360 = vunpack.c.h.b16 %v6020
        %v6361 = vunpack.c.l.b16 %v6021
        %v6362 = vunpack.c.h.b16 %v6021
        %v6363 = vunpack.c.l.b16 %v6022
        %v6364 = vunpack.c.h.b16 %v6022
        %v6365 = vunpack.c.l.b16 %v6023
        %v6366 = vunpack.c.h.b16 %v6023
        %v6367 = vunpack.c.l.b16 %v6024
        %v6368 = vunpack.c.h.b16 %v6024
        %v6369 = vunpack.c.l.b16 %v6025
        %v6370 = vunpack.c.h.b16 %v6025
        %v6371 = vunpack.c.l.b16 %v6026
        %v6372 = vunpack.c.h.b16 %v6026
        %v6373 = vunpack.c.l.b16 %v6027
        %v6374 = vunpack.c.h.b16 %v6027
        %v6375 = vunpack.c.l.b16 %v6028
        %v6376 = vunpack.c.h.b16 %v6028
        %v6377 = vunpack.c.l.b16 %v6029
        %v6378 = vunpack.c.h.b16 %v6029
        %v6379 = vunpack.c.l.b16 %v6030
        %v6380 = vunpack.c.h.b16 %v6030
        %v6381 = vunpack.c.l.b16 %v6031
        %v6382 = vunpack.c.h.b16 %v6031
        %v6383 = vunpack.c.l.b16 %v6032
        %v6384 = vunpack.c.h.b16 %v6032
        %v6385 = vunpack.c.l.b16 %v6033
        %v6386 = vunpack.c.h.b16 %v6033
        %v6387 = vunpack.c.l.b16 %v6034
        %v6388 = vunpack.c.h.b16 %v6034
        %v6389 = vunpack.c.l.b16 %v6035
        %v6390 = vunpack.c.h.b16 %v6035
        %v6391 = vunpack.c.l.b16 %v6036
        %v6392 = vunpack.c.h.b16 %v6036
        %v6393 = vunpack.c.l.b16 %v6037
        %v6394 = vunpack.c.h.b16 %v6037
        %v6395 = vunpack.c.l.b16 %v6038
        %v6396 = vunpack.c.h.b16 %v6038
        %v6397 = vunpack.c.l.b16 %v6039
        %v6398 = vunpack.c.h.b16 %v6039
        %v6399 = vunpack.c.l.b16 %v6040
        %v6400 = vunpack.c.h.b16 %v6040
        %v6401 = vunpack.c.l.b16 %v6041
        %v6402 = vunpack.c.h.b16 %v6041
        %v6403 = vunpack.c.l.b16 %v6042
        %v6404 = vunpack.c.h.b16 %v6042
        %v6405 = vunpack.c.l.b16 %v6043
        %v6406 = vunpack.c.h.b16 %v6043
        %v6407 = vunpack.c.l.b16 %v6044
        %v6408 = vunpack.c.h.b16 %v6044
        %v6409 = vunpack.c.l.b16 %v6045
        %v6410 = vunpack.c.h.b16 %v6045
        %v6411 = vunpack.c.l.b16 %v6046
        %v6412 = vunpack.c.h.b16 %v6046
        %v6413 = vunpack.c.l.b16 %v6047
        %v6414 = vunpack.c.h.b16 %v6047
        %v6415 = vunpack.c.l.b16 %v6048
        %v6416 = vunpack.c.h.b16 %v6048
        %v6417 = vunpack.c.l.b16 %v6049
        %v6418 = vunpack.c.h.b16 %v6049
        %v6419 = vunpack.c.l.b16 %v6050
        %v6420 = vunpack.c.h.b16 %v6050
        %v6421 = vunpack.c.l.b16 %v6051
        %v6422 = vunpack.c.h.b16 %v6051
        %v6423 = vunpack.c.l.b16 %v6052
        %v6424 = vunpack.c.h.b16 %v6052
        %v6425 = vunpack.c.l.b16 %v6053
        %v6426 = vunpack.c.h.b16 %v6053
        %v6427 = vunpack.c.l.b16 %v6054
        %v6428 = vunpack.c.h.b16 %v6054
        %v6429 = vunpack.c.l.b16 %v6055
        %v6430 = vunpack.c.h.b16 %v6055
        %v6431 = vunpack.c.l.b16 %v6056
        %v6432 = vunpack.c.h.b16 %v6056
        %v6433 = vunpack.c.l.b16 %v6057
        %v6434 = vunpack.c.h.b16 %v6057
        %v6435 = vunpack.c.l.b16 %v6058
        %v6436 = vunpack.c.h.b16 %v6058
        %v6437 = vunpack.c.l.b16 %v6059
        %v6438 = vunpack.c.h.b16 %v6059
        %v6439 = vunpack.c.l.b16 %v6060
        %v6440 = vunpack.c.h.b16 %v6060
        %v6441 = vunpack.c.l.b16 %v6061
        %v6442 = vunpack.c.h.b16 %v6061
        %v6443 = vunpack.c.l.b16 %v6062
        %v6444 = vunpack.c.h.b16 %v6062
        %v6445 = vunpack.c.l.b16 %v6063
        %v6446 = vunpack.c.h.b16 %v6063
        %v6447 = vunpack.c.l.b16 %v6064
        %v6448 = vunpack.c.h.b16 %v6064
        %v6449 = vunpack.c.l.b16 %v6065
        %v6450 = vunpack.c.h.b16 %v6065
        %v6451 = vunpack.c.l.b16 %v6066
        %v6452 = vunpack.c.h.b16 %v6066
        %v6453 = vunpack.c.l.b16 %v6067
        %v6454 = vunpack.c.h.b16 %v6067
        %v6455 = vunpack.c.l.b16 %v6068
        %v6456 = vunpack.c.h.b16 %v6068
        %v6457 = vunpack.c.l.b16 %v6069
        %v6458 = vunpack.c.h.b16 %v6069
        %v6459 = vunpack.c.l.b16 %v6070
        %v6460 = vunpack.c.h.b16 %v6070
        %v6461 = vunpack.c.l.b16 %v6071
        %v6462 = vunpack.c.h.b16 %v6071
        %v6463 = vunpack.c.l.b16 %v6072
        %v6464 = vunpack.c.h.b16 %v6072
        %v6465 = vunpack.c.l.b16 %v6073
        %v6466 = vunpack.c.h.b16 %v6073
        %v6467 = vunpack.c.l.b16 %v6074
        %v6468 = vunpack.c.h.b16 %v6074
        %v6469 = vunpack.c.l.b16 %v6075
        %v6470 = vunpack.c.h.b16 %v6075
        %v6471 = vunpack.c.l.b16 %v6076
        %v6472 = vunpack.c.h.b16 %v6076
        %v6473 = vunpack.c.l.b16 %v6077
        %v6474 = vunpack.c.h.b16 %v6077
        %v6475 = vunpack.c.l.b16 %v6078
        %v6476 = vunpack.c.h.b16 %v6078
        %v6477 = vunpack.c.l.b16 %v6079
        %v6478 = vunpack.c.h.b16 %v6079
        %v6479 = vunpack.c.l.b16 %v6080
        %v6480 = vunpack.c.h.b16 %v6080
        %v6481 = vunpack.c.l.b16 %v6081
        %v6482 = vunpack.c.h.b16 %v6081
        %v6483 = vunpack.c.l.b16 %v6082
        %v6484 = vunpack.c.h.b16 %v6082
        %v6485 = vunpack.c.l.b16 %v6083
        %v6486 = vunpack.c.h.b16 %v6083
        %v6487 = vunpack.c.l.b16 %v6084
        %v6488 = vunpack.c.h.b16 %v6084
        %v6489 = vunpack.c.l.b16 %v6085
        %v6490 = vunpack.c.h.b16 %v6085
        %v6491 = vunpack.c.l.b16 %v6086
        %v6492 = vunpack.c.h.b16 %v6086
        %v6493 = vunpack.c.l.b16 %v6087
        %v6494 = vunpack.c.h.b16 %v6087
        %v6495 = vunpack.c.l.b16 %v6088
        %v6496 = vunpack.c.h.b16 %v6088
        %v6497 = vunpack.c.l.b16 %v6089
        %v6498 = vunpack.c.h.b16 %v6089
        %v6499 = vunpack.c.l.b16 %v6090
        %v6500 = vunpack.c.h.b16 %v6090
        %v6501 = vunpack.c.l.b16 %v6091
        %v6502 = vunpack.c.h.b16 %v6091
        %v6503 = vunpack.c.l.b16 %v6092
        %v6504 = vunpack.c.h.b16 %v6092
        %v6505 = vunpack.c.l.b16 %v6093
        %v6506 = vunpack.c.h.b16 %v6093
        %v6507 = vunpack.c.l.b16 %v6094
        %v6508 = vunpack.c.h.b16 %v6094
        %v6509 = vunpack.c.l.b16 %v6095
        %v6510 = vunpack.c.h.b16 %v6095
        %v6511 = vunpack.c.l.b16 %v6096
        %v6512 = vunpack.c.h.b16 %v6096
        %v6513 = vunpack.c.l.b16 %v6097
        %v6514 = vunpack.c.h.b16 %v6097
        %v6515 = vunpack.c.l.b16 %v6098
        %v6516 = vunpack.c.h.b16 %v6098
        %v6517 = vunpack.c.l.b16 %v6099
        %v6518 = vunpack.c.h.b16 %v6099
        %v6519 = vunpack.c.l.b16 %v6100
        %v6520 = vunpack.c.h.b16 %v6100
        %v6521 = vunpack.c.l.b16 %v6101
        %v6522 = vunpack.c.h.b16 %v6101
        %v6523 = vunpack.c.l.b16 %v6102
        %v6524 = vunpack.c.h.b16 %v6102
        %v6525 = vunpack.c.l.b16 %v6103
        %v6526 = vunpack.c.h.b16 %v6103
        %v6527 = vunpack.c.l.b16 %v6104
        %v6528 = vunpack.c.h.b16 %v6104
        %v6529 = vunpack.c.l.b16 %v6105
        %v6530 = vunpack.c.h.b16 %v6105
        %v6531 = vunpack.c.l.b16 %v6106
        %v6532 = vunpack.c.h.b16 %v6106
        %v6533 = vpack.c.b16 %v6285, %v6277
        %v6534 = vpack.c.b16 %v6286, %v6278
        %v6535 = vpack.c.b16 %v6287, %v6279
        %v6536 = vpack.c.b16 %v6288, %v6280
        %v6537 = vpack.c.b16 %v6289, %v6281
        %v6538 = vpack.c.b16 %v6290, %v6282
        %v6539 = vpack.c.b16 %v6291, %v6283
        %v6540 = vpack.c.b16 %v6292, %v6284
        %v6541 = vpack.c.b16 %v6301, %v6293
        %v6542 = vpack.c.b16 %v6302, %v6294
        %v6543 = vpack.c.b16 %v6303, %v6295
        %v6544 = vpack.c.b16 %v6304, %v6296
        %v6545 = vpack.c.b16 %v6305, %v6297
        %v6546 = vpack.c.b16 %v6306, %v6298
        %v6547 = vpack.c.b16 %v6307, %v6299
        %v6548 = vpack.c.b16 %v6308, %v6300
        %v6549 = vpack.c.b16 %v6317, %v6309
        %v6550 = vpack.c.b16 %v6318, %v6310
        %v6551 = vpack.c.b16 %v6319, %v6311
        %v6552 = vpack.c.b16 %v6320, %v6312
        %v6553 = vpack.c.b16 %v6321, %v6313
        %v6554 = vpack.c.b16 %v6322, %v6314
        %v6555 = vpack.c.b16 %v6323, %v6315
        %v6556 = vpack.c.b16 %v6324, %v6316
        %v6557 = vpack.c.b16 %v6333, %v6325
        %v6558 = vpack.c.b16 %v6334, %v6326
        %v6559 = vpack.c.b16 %v6335, %v6327
        %v6560 = vpack.c.b16 %v6336, %v6328
        %v6561 = vpack.c.b16 %v6337, %v6329
        %v6562 = vpack.c.b16 %v6338, %v6330
        %v6563 = vpack.c.b16 %v6339, %v6331
        %v6564 = vpack.c.b16 %v6340, %v6332
        %v6565 = vpack.c.b16 %v6349, %v6341
        %v6566 = vpack.c.b16 %v6350, %v6342
        %v6567 = vpack.c.b16 %v6351, %v6343
        %v6568 = vpack.c.b16 %v6352, %v6344
        %v6569 = vpack.c.b16 %v6353, %v6345
        %v6570 = vpack.c.b16 %v6354, %v6346
        %v6571 = vpack.c.b16 %v6355, %v6347
        %v6572 = vpack.c.b16 %v6356, %v6348
        %v6573 = vpack.c.b16 %v6365, %v6357
        %v6574 = vpack.c.b16 %v6366, %v6358
        %v6575 = vpack.c.b16 %v6367, %v6359
        %v6576 = vpack.c.b16 %v6368, %v6360
        %v6577 = vpack.c.b16 %v6369, %v6361
        %v6578 = vpack.c.b16 %v6370, %v6362
        %v6579 = vpack.c.b16 %v6371, %v6363
        %v6580 = vpack.c.b16 %v6372, %v6364
        %v6581 = vpack.c.b16 %v6381, %v6373
        %v6582 = vpack.c.b16 %v6382, %v6374
        %v6583 = vpack.c.b16 %v6383, %v6375
        %v6584 = vpack.c.b16 %v6384, %v6376
        %v6585 = vpack.c.b16 %v6385, %v6377
        %v6586 = vpack.c.b16 %v6386, %v6378
        %v6587 = vpack.c.b16 %v6387, %v6379
        %v6588 = vpack.c.b16 %v6388, %v6380
        %v6589 = vpack.c.b16 %v6397, %v6389
        %v6590 = vpack.c.b16 %v6398, %v6390
        %v6591 = vpack.c.b16 %v6399, %v6391
        %v6592 = vpack.c.b16 %v6400, %v6392
        %v6593 = vpack.c.b16 %v6401, %v6393
        %v6594 = vpack.c.b16 %v6402, %v6394
        %v6595 = vpack.c.b16 %v6403, %v6395
        %v6596 = vpack.c.b16 %v6404, %v6396
        %v6597 = vpack.c.b16 %v6413, %v6405
        %v6598 = vpack.c.b16 %v6414, %v6406
        %v6599 = vpack.c.b16 %v6415, %v6407
        %v6600 = vpack.c.b16 %v6416, %v6408
        %v6601 = vpack.c.b16 %v6417, %v6409
        %v6602 = vpack.c.b16 %v6418, %v6410
        %v6603 = vpack.c.b16 %v6419, %v6411
        %v6604 = vpack.c.b16 %v6420, %v6412
        %v6605 = vpack.c.b16 %v6429, %v6421
        %v6606 = vpack.c.b16 %v6430, %v6422
        %v6607 = vpack.c.b16 %v6431, %v6423
        %v6608 = vpack.c.b16 %v6432, %v6424
        %v6609 = vpack.c.b16 %v6433, %v6425
        %v6610 = vpack.c.b16 %v6434, %v6426
        %v6611 = vpack.c.b16 %v6435, %v6427
        %v6612 = vpack.c.b16 %v6436, %v6428
        %v6613 = vpack.c.b16 %v6445, %v6437
        %v6614 = vpack.c.b16 %v6446, %v6438
        %v6615 = vpack.c.b16 %v6447, %v6439
        %v6616 = vpack.c.b16 %v6448, %v6440
        %v6617 = vpack.c.b16 %v6449, %v6441
        %v6618 = vpack.c.b16 %v6450, %v6442
        %v6619 = vpack.c.b16 %v6451, %v6443
        %v6620 = vpack.c.b16 %v6452, %v6444
        %v6621 = vpack.c.b16 %v6461, %v6453
        %v6622 = vpack.c.b16 %v6462, %v6454
        %v6623 = vpack.c.b16 %v6463, %v6455
        %v6624 = vpack.c.b16 %v6464, %v6456
        %v6625 = vpack.c.b16 %v6465, %v6457
        %v6626 = vpack.c.b16 %v6466, %v6458
        %v6627 = vpack.c.b16 %v6467, %v6459
        %v6628 = vpack.c.b16 %v6468, %v6460
        %v6629 = vpack.c.b16 %v6477, %v6469
        %v6630 = vpack.c.b16 %v6478, %v6470
        %v6631 = vpack.c.b16 %v6479, %v6471
        %v6632 = vpack.c.b16 %v6480, %v6472
        %v6633 = vpack.c.b16 %v6481, %v6473
        %v6634 = vpack.c.b16 %v6482, %v6474
        %v6635 = vpack.c.b16 %v6483, %v6475
        %v6636 = vpack.c.b16 %v6484, %v6476
        %v6637 = vpack.c.b16 %v6493, %v6485
        %v6638 = vpack.c.b16 %v6494, %v6486
        %v6639 = vpack.c.b16 %v6495, %v6487
        %v6640 = vpack.c.b16 %v6496, %v6488
        %v6641 = vpack.c.b16 %v6497, %v6489
        %v6642 = vpack.c.b16 %v6498, %v6490
        %v6643 = vpack.c.b16 %v6499, %v6491
        %v6644 = vpack.c.b16 %v6500, %v6492
        %v6645 = vpack.c.b16 %v6509, %v6501
        %v6646 = vpack.c.b16 %v6510, %v6502
        %v6647 = vpack.c.b16 %v6511, %v6503
        %v6648 = vpack.c.b16 %v6512, %v6504
        %v6649 = vpack.c.b16 %v6513, %v6505
        %v6650 = vpack.c.b16 %v6514, %v6506
        %v6651 = vpack.c.b16 %v6515, %v6507
        %v6652 = vpack.c.b16 %v6516, %v6508
        %v6653 = vpack.c.b16 %v6525, %v6517
        %v6654 = vpack.c.b16 %v6526, %v6518
        %v6655 = vpack.c.b16 %v6527, %v6519
        %v6656 = vpack.c.b16 %v6528, %v6520
        %v6657 = vpack.c.b16 %v6529, %v6521
        %v6658 = vpack.c.b16 %v6530, %v6522
        %v6659 = vpack.c.b16 %v6531, %v6523
        %v6660 = vpack.c.b16 %v6532, %v6524
        %6789 = vmatprep.subr.bf16.mxu0 %v6534
        %6790 = vmatpush1.bf16.msra.mxu0 %v6533
        %6791 = vmatprep.subr.bf16.mxu0 %v6542
        %6792 = vmatpush1.bf16.msra.mxu0 %v6541
        %6793 = vmatprep.subr.bf16.mxu0 %v6550
        %6794 = vmatpush1.bf16.msra.mxu0 %v6549
        %6795 = vmatprep.subr.bf16.mxu0 %v6558
        %6796 = vmatpush1.bf16.msra.mxu0 %v6557
        %6797 = vmatprep.subr.bf16.mxu0 %v6566
        %6798 = vmatpush1.bf16.msra.mxu0 %v6565
        %6799 = vmatprep.subr.bf16.mxu0 %v6574
        %6800 = vmatpush1.bf16.msra.mxu0 %v6573
        %6801 = vmatprep.subr.bf16.mxu0 %v6582
        %6802 = vmatpush1.bf16.msra.mxu0 %v6581
        %6803 = vmatprep.subr.bf16.mxu0 %v6590
        %6804 = vmatpush1.bf16.msra.mxu0 %v6589
        %6805 = vmatprep.subr.bf16.mxu0 %v6598
        %6806 = vmatpush1.bf16.msra.mxu0 %v6597
        %6807 = vmatprep.subr.bf16.mxu0 %v6606
        %6808 = vmatpush1.bf16.msra.mxu0 %v6605
        %6809 = vmatprep.subr.bf16.mxu0 %v6614
        %6810 = vmatpush1.bf16.msra.mxu0 %v6613
        %6811 = vmatprep.subr.bf16.mxu0 %v6622
        %6812 = vmatpush1.bf16.msra.mxu0 %v6621
        %6813 = vmatprep.subr.bf16.mxu0 %v6630
        %6814 = vmatpush1.bf16.msra.mxu0 %v6629
        %6815 = vmatprep.subr.bf16.mxu0 %v6638
        %6816 = vmatpush1.bf16.msra.mxu0 %v6637
        %6817 = vmatprep.subr.bf16.mxu0 %v6646
        %6818 = vmatpush1.bf16.msra.mxu0 %v6645
        %6819 = vmatprep.subr.bf16.mxu0 %v6654
        %6820 = vmatpush1.bf16.msra.mxu0 %v6653
        %6821 = vmatprep.mubr.bf16.mxu0 %v5948
        %6822 = vmatmul.mubr.bf16.gmra.mrb[0].mxu0 %v5947
        %v6823 = vpop.f32.mrb[0].mxu0
        %v6824 = vadd.f32 %v6112, %v6823
        %v6825 = vpop.f32.mrb[0].mxu0
        %v6826 = vadd.f32 %v6116, %v6825
        %v6827 = vpop.f32.mrb[0].mxu0
        %v6828 = vadd.f32 %v6112, %v6827
        %v6829 = vpop.f32.mrb[0].mxu0
        %v6830 = vadd.f32 %v6116, %v6829
        %6831 = vmatprep.mubr.bf16.mxu0 %v5950
        %6832 = vmatmul.mubr.bf16.gmra.mrb[0].mxu0 %v5949
        %v6833 = vpop.f32.mrb[0].mxu0
        %v6834 = vadd.f32 %v6112, %v6833
        %v6835 = vpop.f32.mrb[0].mxu0
        %v6836 = vadd.f32 %v6116, %v6835
        %v6837 = vpop.f32.mrb[0].mxu0
        %v6838 = vadd.f32 %v6112, %v6837
        %v6839 = vpop.f32.mrb[0].mxu0
        %v6840 = vadd.f32 %v6116, %v6839
        %6841 = vmatprep.mubr.bf16.mxu0 %v5952
        %6842 = vmatmul.mubr.bf16.gmra.mrb[0].mxu0 %v5951
        %v6843 = vpop.f32.mrb[0].mxu0
        %v6844 = vadd.f32 %v6112, %v6843
        %v6845 = vpop.f32.mrb[0].mxu0
        %v6846 = vadd.f32 %v6116, %v6845
        %v6847 = vpop.f32.mrb[0].mxu0
        %v6848 = vadd.f32 %v6112, %v6847
        %v6849 = vpop.f32.mrb[0].mxu0
        %v6850 = vadd.f32 %v6116, %v6849
        %6851 = vmatprep.mubr.bf16.mxu0 %v5954
        %6852 = vmatmul.mubr.bf16.gmra.mrb[0].mxu0 %v5953
        %v6853 = vpop.f32.mrb[0].mxu0
        %v6854 = vadd.f32 %v6112, %v6853
        %v6855 = vpop.f32.mrb[0].mxu0
        %v6856 = vadd.f32 %v6116, %v6855
        %v6857 = vpop.f32.mrb[0].mxu0
        %v6858 = vadd.f32 %v6112, %v6857
        %v6859 = vpop.f32.mrb[0].mxu0
        %v6860 = vadd.f32 %v6116, %v6859
        %6861 = vmatprep.mubr.bf16.mxu0 %v5956
        %6862 = vmatmul.mubr.bf16.gmra.mrb[0].mxu0 %v5955
        %v6863 = vpop.f32.mrb[0].mxu0
        %v6864 = vadd.f32 %v6112, %v6863
        %v6865 = vpop.f32.mrb[0].mxu0
        %v6866 = vadd.f32 %v6116, %v6865
        %v6867 = vpop.f32.mrb[0].mxu0
        %v6868 = vadd.f32 %v6112, %v6867
        %v6869 = vpop.f32.mrb[0].mxu0
        %v6870 = vadd.f32 %v6116, %v6869
        %6871 = vmatprep.mubr.bf16.mxu0 %v5958
        %6872 = vmatmul.mubr.bf16.gmra.mrb[0].mxu0 %v5957
        %v6873 = vpop.f32.mrb[0].mxu0
        %v6874 = vadd.f32 %v6112, %v6873
        %v6875 = vpop.f32.mrb[0].mxu0
        %v6876 = vadd.f32 %v6116, %v6875
        %v6877 = vpop.f32.mrb[0].mxu0
        %v6878 = vadd.f32 %v6112, %v6877
        %v6879 = vpop.f32.mrb[0].mxu0
        %v6880 = vadd.f32 %v6116, %v6879
        %6881 = vmatprep.mubr.bf16.mxu0 %v5960
        %6882 = vmatmul.mubr.bf16.gmra.mrb[0].mxu0 %v5959
        %v6883 = vpop.f32.mrb[0].mxu0
        %v6884 = vadd.f32 %v6112, %v6883
        %v6885 = vpop.f32.mrb[0].mxu0
        %v6886 = vadd.f32 %v6116, %v6885
        %v6887 = vpop.f32.mrb[0].mxu0
        %v6888 = vadd.f32 %v6112, %v6887
        %v6889 = vpop.f32.mrb[0].mxu0
        %v6890 = vadd.f32 %v6116, %v6889
        %6891 = vmatprep.mubr.bf16.mxu0 %v5962
        %6892 = vmatmul.mubr.bf16.gmra.mrb[0].mxu0 %v5961
        %v6893 = vpop.f32.mrb[0].mxu0
        %v6894 = vadd.f32 %v6112, %v6893
        %v6895 = vpop.f32.mrb[0].mxu0
        %v6896 = vadd.f32 %v6116, %v6895
        %v6897 = vpop.f32.mrb[0].mxu0
        %v6898 = vadd.f32 %v6112, %v6897
        %v6899 = vpop.f32.mrb[0].mxu0
        %v6900 = vadd.f32 %v6116, %v6899
        %6901 = vmatprep.mubr.bf16.mxu0 %v5964
        %6902 = vmatmul.mubr.bf16.gmra.mrb[0].mxu0 %v5963
        %v6903 = vpop.f32.mrb[0].mxu0
        %v6904 = vadd.f32 %v6112, %v6903
        %v6905 = vpop.f32.mrb[0].mxu0
        %v6906 = vadd.f32 %v6116, %v6905
        %v6907 = vpop.f32.mrb[0].mxu0
        %v6908 = vadd.f32 %v6112, %v6907
        %v6909 = vpop.f32.mrb[0].mxu0
        %v6910 = vadd.f32 %v6116, %v6909
        %6911 = vmatprep.mubr.bf16.mxu0 %v5966
        %6912 = vmatmul.mubr.bf16.gmra.mrb[0].mxu0 %v5965
        %v6913 = vpop.f32.mrb[0].mxu0
        %v6914 = vadd.f32 %v6112, %v6913
        %v6915 = vpop.f32.mrb[0].mxu0
        %v6916 = vadd.f32 %v6116, %v6915
        %v6917 = vpop.f32.mrb[0].mxu0
        %v6918 = vadd.f32 %v6112, %v6917
        %v6919 = vpop.f32.mrb[0].mxu0
        %v6920 = vadd.f32 %v6116, %v6919
        %6921 = vmatprep.mubr.bf16.mxu0 %v5968
        %6922 = vmatmul.mubr.bf16.gmra.mrb[0].mxu0 %v5967
        %v6923 = vpop.f32.mrb[0].mxu0
        %v6924 = vadd.f32 %v6112, %v6923
        %v6925 = vpop.f32.mrb[0].mxu0
        %v6926 = vadd.f32 %v6116, %v6925
        %v6927 = vpop.f32.mrb[0].mxu0
        %v6928 = vadd.f32 %v6112, %v6927
        %v6929 = vpop.f32.mrb[0].mxu0
        %v6930 = vadd.f32 %v6116, %v6929
        %6931 = vmatprep.mubr.bf16.mxu0 %v5970
        %6932 = vmatmul.mubr.bf16.gmra.mrb[0].mxu0 %v5969
        %v6933 = vpop.f32.mrb[0].mxu0
        %v6934 = vadd.f32 %v6112, %v6933
        %v6935 = vpop.f32.mrb[0].mxu0
        %v6936 = vadd.f32 %v6116, %v6935
        %v6937 = vpop.f32.mrb[0].mxu0
        %v6938 = vadd.f32 %v6112, %v6937
        %v6939 = vpop.f32.mrb[0].mxu0
        %v6940 = vadd.f32 %v6116, %v6939
        %6941 = vmatprep.mubr.bf16.mxu0 %v5972
        %6942 = vmatmul.mubr.bf16.gmra.mrb[0].mxu0 %v5971
        %v6943 = vpop.f32.mrb[0].mxu0
        %v6944 = vadd.f32 %v6112, %v6943
        %v6945 = vpop.f32.mrb[0].mxu0
        %v6946 = vadd.f32 %v6116, %v6945
        %v6947 = vpop.f32.mrb[0].mxu0
        %v6948 = vadd.f32 %v6112, %v6947
        %v6949 = vpop.f32.mrb[0].mxu0
        %v6950 = vadd.f32 %v6116, %v6949
        %6951 = vmatprep.mubr.bf16.mxu0 %v5974
        %6952 = vmatmul.mubr.bf16.gmra.mrb[0].mxu0 %v5973
        %v6953 = vpop.f32.mrb[0].mxu0
        %v6954 = vadd.f32 %v6112, %v6953
        %v6955 = vpop.f32.mrb[0].mxu0
        %v6956 = vadd.f32 %v6116, %v6955
        %v6957 = vpop.f32.mrb[0].mxu0
        %v6958 = vadd.f32 %v6112, %v6957
        %v6959 = vpop.f32.mrb[0].mxu0
        %v6960 = vadd.f32 %v6116, %v6959
        %6961 = vmatprep.mubr.bf16.mxu0 %v5976
        %6962 = vmatmul.mubr.bf16.gmra.mrb[0].mxu0 %v5975
        %v6963 = vpop.f32.mrb[0].mxu0
        %v6964 = vadd.f32 %v6112, %v6963
        %v6965 = vpop.f32.mrb[0].mxu0
        %v6966 = vadd.f32 %v6116, %v6965
        %v6967 = vpop.f32.mrb[0].mxu0
        %v6968 = vadd.f32 %v6112, %v6967
        %v6969 = vpop.f32.mrb[0].mxu0
        %v6970 = vadd.f32 %v6116, %v6969
        %6971 = vmatprep.mubr.bf16.mxu0 %v5978
        %6972 = vmatmul.mubr.bf16.gmra.mrb[0].mxu0 %v5977
        %v6973 = vpop.f32.mrb[0].mxu0
        %v6974 = vadd.f32 %v6112, %v6973
        %v6975 = vpop.f32.mrb[0].mxu0
        %v6976 = vadd.f32 %v6116, %v6975
        %v6977 = vpop.f32.mrb[0].mxu0
        %v6978 = vadd.f32 %v6112, %v6977
        %v6979 = vpop.f32.mrb[0].mxu0
        %v6980 = vadd.f32 %v6116, %v6979
        %6981 = vdwg.mxu0
        %6982 = vmatprep.subr.bf16.mxu0 %v6536
        %6983 = vmatpush1.bf16.msra.mxu0 %v6535
        %6984 = vmatprep.subr.bf16.mxu0 %v6544
        %6985 = vmatpush1.bf16.msra.mxu0 %v6543
        %6986 = vmatprep.subr.bf16.mxu0 %v6552
        %6987 = vmatpush1.bf16.msra.mxu0 %v6551
        %6988 = vmatprep.subr.bf16.mxu0 %v6560
        %6989 = vmatpush1.bf16.msra.mxu0 %v6559
        %6990 = vmatprep.subr.bf16.mxu0 %v6568
        %6991 = vmatpush1.bf16.msra.mxu0 %v6567
        %6992 = vmatprep.subr.bf16.mxu0 %v6576
        %6993 = vmatpush1.bf16.msra.mxu0 %v6575
        %6994 = vmatprep.subr.bf16.mxu0 %v6584
        %6995 = vmatpush1.bf16.msra.mxu0 %v6583
        %6996 = vmatprep.subr.bf16.mxu0 %v6592
        %6997 = vmatpush1.bf16.msra.mxu0 %v6591
        %6998 = vmatprep.subr.bf16.mxu0 %v6600
        %6999 = vmatpush1.bf16.msra.mxu0 %v6599
        %7000 = vmatprep.subr.bf16.mxu0 %v6608
        %7001 = vmatpush1.bf16.msra.mxu0 %v6607
        %7002 = vmatprep.subr.bf16.mxu0 %v6616
        %7003 = vmatpush1.bf16.msra.mxu0 %v6615
        %7004 = vmatprep.subr.bf16.mxu0 %v6624
        %7005 = vmatpush1.bf16.msra.mxu0 %v6623
        %7006 = vmatprep.subr.bf16.mxu0 %v6632
        %7007 = vmatpush1.bf16.msra.mxu0 %v6631
        %7008 = vmatprep.subr.bf16.mxu0 %v6640
        %7009 = vmatpush1.bf16.msra.mxu0 %v6639
        %7010 = vmatprep.subr.bf16.mxu0 %v6648
        %7011 = vmatpush1.bf16.msra.mxu0 %v6647
        %7012 = vmatprep.subr.bf16.mxu0 %v6656
        %7013 = vmatpush1.bf16.msra.mxu0 %v6655
        %7014 = vmatprep.mubr.bf16.mxu0 %v5948
        %7015 = vmatmul.mubr.bf16.gmra.mrb[0].mxu0 %v5947
        %v7016 = vpop.f32.mrb[0].mxu0
        %v7017 = vadd.f32 %v6120, %v7016
        %v7018 = vpop.f32.mrb[0].mxu0
        %v7019 = vadd.f32 %v6124, %v7018
        %v7020 = vpop.f32.mrb[0].mxu0
        %v7021 = vadd.f32 %v6120, %v7020
        %v7022 = vpop.f32.mrb[0].mxu0
        %v7023 = vadd.f32 %v6124, %v7022
        %7024 = vmatprep.mubr.bf16.mxu0 %v5950
        %7025 = vmatmul.mubr.bf16.gmra.mrb[0].mxu0 %v5949
        %v7026 = vpop.f32.mrb[0].mxu0
        %v7027 = vadd.f32 %v6120, %v7026
        %v7028 = vpop.f32.mrb[0].mxu0
        %v7029 = vadd.f32 %v6124, %v7028
        %v7030 = vpop.f32.mrb[0].mxu0
        %v7031 = vadd.f32 %v6120, %v7030
        %v7032 = vpop.f32.mrb[0].mxu0
        %v7033 = vadd.f32 %v6124, %v7032
        %7034 = vmatprep.mubr.bf16.mxu0 %v5952
        %7035 = vmatmul.mubr.bf16.gmra.mrb[0].mxu0 %v5951
        %v7036 = vpop.f32.mrb[0].mxu0
        %v7037 = vadd.f32 %v6120, %v7036
        %v7038 = vpop.f32.mrb[0].mxu0
        %v7039 = vadd.f32 %v6124, %v7038
        %v7040 = vpop.f32.mrb[0].mxu0
        %v7041 = vadd.f32 %v6120, %v7040
        %v7042 = vpop.f32.mrb[0].mxu0
        %v7043 = vadd.f32 %v6124, %v7042
        %7044 = vmatprep.mubr.bf16.mxu0 %v5954
        %7045 = vmatmul.mubr.bf16.gmra.mrb[0].mxu0 %v5953
        %v7046 = vpop.f32.mrb[0].mxu0
        %v7047 = vadd.f32 %v6120, %v7046
        %v7048 = vpop.f32.mrb[0].mxu0
        %v7049 = vadd.f32 %v6124, %v7048
        %v7050 = vpop.f32.mrb[0].mxu0
        %v7051 = vadd.f32 %v6120, %v7050
        %v7052 = vpop.f32.mrb[0].mxu0
        %v7053 = vadd.f32 %v6124, %v7052
        %7054 = vmatprep.mubr.bf16.mxu0 %v5956
        %7055 = vmatmul.mubr.bf16.gmra.mrb[0].mxu0 %v5955
        %v7056 = vpop.f32.mrb[0].mxu0
        %v7057 = vadd.f32 %v6120, %v7056
        %v7058 = vpop.f32.mrb[0].mxu0
        %v7059 = vadd.f32 %v6124, %v7058
        %v7060 = vpop.f32.mrb[0].mxu0
        %v7061 = vadd.f32 %v6120, %v7060
        %v7062 = vpop.f32.mrb[0].mxu0
        %v7063 = vadd.f32 %v6124, %v7062
        %7064 = vmatprep.mubr.bf16.mxu0 %v5958
        %7065 = vmatmul.mubr.bf16.gmra.mrb[0].mxu0 %v5957
        %v7066 = vpop.f32.mrb[0].mxu0
        %v7067 = vadd.f32 %v6120, %v7066
        %v7068 = vpop.f32.mrb[0].mxu0
        %v7069 = vadd.f32 %v6124, %v7068
        %v7070 = vpop.f32.mrb[0].mxu0
        %v7071 = vadd.f32 %v6120, %v7070
        %v7072 = vpop.f32.mrb[0].mxu0
        %v7073 = vadd.f32 %v6124, %v7072
        %7074 = vmatprep.mubr.bf16.mxu0 %v5960
        %7075 = vmatmul.mubr.bf16.gmra.mrb[0].mxu0 %v5959
        %v7076 = vpop.f32.mrb[0].mxu0
        %v7077 = vadd.f32 %v6120, %v7076
        %v7078 = vpop.f32.mrb[0].mxu0
        %v7079 = vadd.f32 %v6124, %v7078
        %v7080 = vpop.f32.mrb[0].mxu0
        %v7081 = vadd.f32 %v6120, %v7080
        %v7082 = vpop.f32.mrb[0].mxu0
        %v7083 = vadd.f32 %v6124, %v7082
        %7084 = vmatprep.mubr.bf16.mxu0 %v5962
        %7085 = vmatmul.mubr.bf16.gmra.mrb[0].mxu0 %v5961
        %v7086 = vpop.f32.mrb[0].mxu0
        %v7087 = vadd.f32 %v6120, %v7086
        %v7088 = vpop.f32.mrb[0].mxu0
        %v7089 = vadd.f32 %v6124, %v7088
        %v7090 = vpop.f32.mrb[0].mxu0
        %v7091 = vadd.f32 %v6120, %v7090
        %v7092 = vpop.f32.mrb[0].mxu0
        %v7093 = vadd.f32 %v6124, %v7092
        %7094 = vmatprep.mubr.bf16.mxu0 %v5964
        %7095 = vmatmul.mubr.bf16.gmra.mrb[0].mxu0 %v5963
        %v7096 = vpop.f32.mrb[0].mxu0
        %v7097 = vadd.f32 %v6120, %v7096
        %v7098 = vpop.f32.mrb[0].mxu0
        %v7099 = vadd.f32 %v6124, %v7098
        %v7100 = vpop.f32.mrb[0].mxu0
        %v7101 = vadd.f32 %v6120, %v7100
        %v7102 = vpop.f32.mrb[0].mxu0
        %v7103 = vadd.f32 %v6124, %v7102
        %7104 = vmatprep.mubr.bf16.mxu0 %v5966
        %7105 = vmatmul.mubr.bf16.gmra.mrb[0].mxu0 %v5965
        %v7106 = vpop.f32.mrb[0].mxu0
        %v7107 = vadd.f32 %v6120, %v7106
        %v7108 = vpop.f32.mrb[0].mxu0
        %v7109 = vadd.f32 %v6124, %v7108
        %v7110 = vpop.f32.mrb[0].mxu0
        %v7111 = vadd.f32 %v6120, %v7110
        %v7112 = vpop.f32.mrb[0].mxu0
        %v7113 = vadd.f32 %v6124, %v7112
        %7114 = vmatprep.mubr.bf16.mxu0 %v5968
        %7115 = vmatmul.mubr.bf16.gmra.mrb[0].mxu0 %v5967
        %v7116 = vpop.f32.mrb[0].mxu0
        %v7117 = vadd.f32 %v6120, %v7116
        %v7118 = vpop.f32.mrb[0].mxu0
        %v7119 = vadd.f32 %v6124, %v7118
        %v7120 = vpop.f32.mrb[0].mxu0
        %v7121 = vadd.f32 %v6120, %v7120
        %v7122 = vpop.f32.mrb[0].mxu0
        %v7123 = vadd.f32 %v6124, %v7122
        %7124 = vmatprep.mubr.bf16.mxu0 %v5970
        %7125 = vmatmul.mubr.bf16.gmra.mrb[0].mxu0 %v5969
        %v7126 = vpop.f32.mrb[0].mxu0
        %v7127 = vadd.f32 %v6120, %v7126
        %v7128 = vpop.f32.mrb[0].mxu0
        %v7129 = vadd.f32 %v6124, %v7128
        %v7130 = vpop.f32.mrb[0].mxu0
        %v7131 = vadd.f32 %v6120, %v7130
        %v7132 = vpop.f32.mrb[0].mxu0
        %v7133 = vadd.f32 %v6124, %v7132
        %7134 = vmatprep.mubr.bf16.mxu0 %v5972
        %7135 = vmatmul.mubr.bf16.gmra.mrb[0].mxu0 %v5971
        %v7136 = vpop.f32.mrb[0].mxu0
        %v7137 = vadd.f32 %v6120, %v7136
        %v7138 = vpop.f32.mrb[0].mxu0
        %v7139 = vadd.f32 %v6124, %v7138
        %v7140 = vpop.f32.mrb[0].mxu0
        %v7141 = vadd.f32 %v6120, %v7140
        %v7142 = vpop.f32.mrb[0].mxu0
        %v7143 = vadd.f32 %v6124, %v7142
        %7144 = vmatprep.mubr.bf16.mxu0 %v5974
        %7145 = vmatmul.mubr.bf16.gmra.mrb[0].mxu0 %v5973
        %v7146 = vpop.f32.mrb[0].mxu0
        %v7147 = vadd.f32 %v6120, %v7146
        %v7148 = vpop.f32.mrb[0].mxu0
        %v7149 = vadd.f32 %v6124, %v7148
        %v7150 = vpop.f32.mrb[0].mxu0
        %v7151 = vadd.f32 %v6120, %v7150
        %v7152 = vpop.f32.mrb[0].mxu0
        %v7153 = vadd.f32 %v6124, %v7152
        %7154 = vmatprep.mubr.bf16.mxu0 %v5976
        %7155 = vmatmul.mubr.bf16.gmra.mrb[0].mxu0 %v5975
        %v7156 = vpop.f32.mrb[0].mxu0
        %v7157 = vadd.f32 %v6120, %v7156
        %v7158 = vpop.f32.mrb[0].mxu0
        %v7159 = vadd.f32 %v6124, %v7158
        %v7160 = vpop.f32.mrb[0].mxu0
        %v7161 = vadd.f32 %v6120, %v7160
        %v7162 = vpop.f32.mrb[0].mxu0
        %v7163 = vadd.f32 %v6124, %v7162
        %7164 = vmatprep.mubr.bf16.mxu0 %v5978
        %7165 = vmatmul.mubr.bf16.gmra.mrb[0].mxu0 %v5977
        %v7166 = vpop.f32.mrb[0].mxu0
        %v7167 = vadd.f32 %v6120, %v7166
        %v7168 = vpop.f32.mrb[0].mxu0
        %v7169 = vadd.f32 %v6124, %v7168
        %v7170 = vpop.f32.mrb[0].mxu0
        %v7171 = vadd.f32 %v6120, %v7170
        %v7172 = vpop.f32.mrb[0].mxu0
        %v7173 = vadd.f32 %v6124, %v7172
        %7174 = vdwg.mxu0
        %7175 = vmatprep.subr.bf16.mxu0 %v6538
        %7176 = vmatpush1.bf16.msra.mxu0 %v6537
        %7177 = vmatprep.subr.bf16.mxu0 %v6546
        %7178 = vmatpush1.bf16.msra.mxu0 %v6545
        %7179 = vmatprep.subr.bf16.mxu0 %v6554
        %7180 = vmatpush1.bf16.msra.mxu0 %v6553
        %7181 = vmatprep.subr.bf16.mxu0 %v6562
        %7182 = vmatpush1.bf16.msra.mxu0 %v6561
        %7183 = vmatprep.subr.bf16.mxu0 %v6570
        %7184 = vmatpush1.bf16.msra.mxu0 %v6569
        %7185 = vmatprep.subr.bf16.mxu0 %v6578
        %7186 = vmatpush1.bf16.msra.mxu0 %v6577
        %7187 = vmatprep.subr.bf16.mxu0 %v6586
        %7188 = vmatpush1.bf16.msra.mxu0 %v6585
        %7189 = vmatprep.subr.bf16.mxu0 %v6594
        %7190 = vmatpush1.bf16.msra.mxu0 %v6593
        %7191 = vmatprep.subr.bf16.mxu0 %v6602
        %7192 = vmatpush1.bf16.msra.mxu0 %v6601
        %7193 = vmatprep.subr.bf16.mxu0 %v6610
        %7194 = vmatpush1.bf16.msra.mxu0 %v6609
        %7195 = vmatprep.subr.bf16.mxu0 %v6618
        %7196 = vmatpush1.bf16.msra.mxu0 %v6617
        %7197 = vmatprep.subr.bf16.mxu0 %v6626
        %7198 = vmatpush1.bf16.msra.mxu0 %v6625
        %7199 = vmatprep.subr.bf16.mxu0 %v6634
        %7200 = vmatpush1.bf16.msra.mxu0 %v6633
        %7201 = vmatprep.subr.bf16.mxu0 %v6642
        %7202 = vmatpush1.bf16.msra.mxu0 %v6641
        %7203 = vmatprep.subr.bf16.mxu0 %v6650
        %7204 = vmatpush1.bf16.msra.mxu0 %v6649
        %7205 = vmatprep.subr.bf16.mxu0 %v6658
        %7206 = vmatpush1.bf16.msra.mxu0 %v6657
        %7207 = vmatprep.mubr.bf16.mxu0 %v5948
        %7208 = vmatmul.mubr.bf16.gmra.mrb[0].mxu0 %v5947
        %v7209 = vpop.f32.mrb[0].mxu0
        %v7210 = vadd.f32 %v6128, %v7209
        %v7211 = vpop.f32.mrb[0].mxu0
        %v7212 = vadd.f32 %v6132, %v7211
        %v7213 = vpop.f32.mrb[0].mxu0
        %v7214 = vadd.f32 %v6128, %v7213
        %v7215 = vpop.f32.mrb[0].mxu0
        %v7216 = vadd.f32 %v6132, %v7215
        %7217 = vmatprep.mubr.bf16.mxu0 %v5950
        %7218 = vmatmul.mubr.bf16.gmra.mrb[0].mxu0 %v5949
        %v7219 = vpop.f32.mrb[0].mxu0
        %v7220 = vadd.f32 %v6128, %v7219
        %v7221 = vpop.f32.mrb[0].mxu0
        %v7222 = vadd.f32 %v6132, %v7221
        %v7223 = vpop.f32.mrb[0].mxu0
        %v7224 = vadd.f32 %v6128, %v7223
        %v7225 = vpop.f32.mrb[0].mxu0
        %v7226 = vadd.f32 %v6132, %v7225
        %7227 = vmatprep.mubr.bf16.mxu0 %v5952
        %7228 = vmatmul.mubr.bf16.gmra.mrb[0].mxu0 %v5951
        %v7229 = vpop.f32.mrb[0].mxu0
        %v7230 = vadd.f32 %v6128, %v7229
        %v7231 = vpop.f32.mrb[0].mxu0
        %v7232 = vadd.f32 %v6132, %v7231
        %v7233 = vpop.f32.mrb[0].mxu0
        %v7234 = vadd.f32 %v6128, %v7233
        %v7235 = vpop.f32.mrb[0].mxu0
        %v7236 = vadd.f32 %v6132, %v7235
        %7237 = vmatprep.mubr.bf16.mxu0 %v5954
        %7238 = vmatmul.mubr.bf16.gmra.mrb[0].mxu0 %v5953
        %v7239 = vpop.f32.mrb[0].mxu0
        %v7240 = vadd.f32 %v6128, %v7239
        %v7241 = vpop.f32.mrb[0].mxu0
        %v7242 = vadd.f32 %v6132, %v7241
        %v7243 = vpop.f32.mrb[0].mxu0
        %v7244 = vadd.f32 %v6128, %v7243
        %v7245 = vpop.f32.mrb[0].mxu0
        %v7246 = vadd.f32 %v6132, %v7245
        %7247 = vmatprep.mubr.bf16.mxu0 %v5956
        %7248 = vmatmul.mubr.bf16.gmra.mrb[0].mxu0 %v5955
        %v7249 = vpop.f32.mrb[0].mxu0
        %v7250 = vadd.f32 %v6128, %v7249
        %v7251 = vpop.f32.mrb[0].mxu0
        %v7252 = vadd.f32 %v6132, %v7251
        %v7253 = vpop.f32.mrb[0].mxu0
        %v7254 = vadd.f32 %v6128, %v7253
        %v7255 = vpop.f32.mrb[0].mxu0
        %v7256 = vadd.f32 %v6132, %v7255
        %7257 = vmatprep.mubr.bf16.mxu0 %v5958
        %7258 = vmatmul.mubr.bf16.gmra.mrb[0].mxu0 %v5957
        %v7259 = vpop.f32.mrb[0].mxu0
        %v7260 = vadd.f32 %v6128, %v7259
        %v7261 = vpop.f32.mrb[0].mxu0
        %v7262 = vadd.f32 %v6132, %v7261
        %v7263 = vpop.f32.mrb[0].mxu0
        %v7264 = vadd.f32 %v6128, %v7263
        %v7265 = vpop.f32.mrb[0].mxu0
        %v7266 = vadd.f32 %v6132, %v7265
        %7267 = vmatprep.mubr.bf16.mxu0 %v5960
        %7268 = vmatmul.mubr.bf16.gmra.mrb[0].mxu0 %v5959
        %v7269 = vpop.f32.mrb[0].mxu0
        %v7270 = vadd.f32 %v6128, %v7269
        %v7271 = vpop.f32.mrb[0].mxu0
        %v7272 = vadd.f32 %v6132, %v7271
        %v7273 = vpop.f32.mrb[0].mxu0
        %v7274 = vadd.f32 %v6128, %v7273
        %v7275 = vpop.f32.mrb[0].mxu0
        %v7276 = vadd.f32 %v6132, %v7275
        %7277 = vmatprep.mubr.bf16.mxu0 %v5962
        %7278 = vmatmul.mubr.bf16.gmra.mrb[0].mxu0 %v5961
        %v7279 = vpop.f32.mrb[0].mxu0
        %v7280 = vadd.f32 %v6128, %v7279
        %v7281 = vpop.f32.mrb[0].mxu0
        %v7282 = vadd.f32 %v6132, %v7281
        %v7283 = vpop.f32.mrb[0].mxu0
        %v7284 = vadd.f32 %v6128, %v7283
        %v7285 = vpop.f32.mrb[0].mxu0
        %v7286 = vadd.f32 %v6132, %v7285
        %7287 = vmatprep.mubr.bf16.mxu0 %v5964
        %7288 = vmatmul.mubr.bf16.gmra.mrb[0].mxu0 %v5963
        %v7289 = vpop.f32.mrb[0].mxu0
        %v7290 = vadd.f32 %v6128, %v7289
        %v7291 = vpop.f32.mrb[0].mxu0
        %v7292 = vadd.f32 %v6132, %v7291
        %v7293 = vpop.f32.mrb[0].mxu0
        %v7294 = vadd.f32 %v6128, %v7293
        %v7295 = vpop.f32.mrb[0].mxu0
        %v7296 = vadd.f32 %v6132, %v7295
        %7297 = vmatprep.mubr.bf16.mxu0 %v5966
        %7298 = vmatmul.mubr.bf16.gmra.mrb[0].mxu0 %v5965
        %v7299 = vpop.f32.mrb[0].mxu0
        %v7300 = vadd.f32 %v6128, %v7299
        %v7301 = vpop.f32.mrb[0].mxu0
        %v7302 = vadd.f32 %v6132, %v7301
        %v7303 = vpop.f32.mrb[0].mxu0
        %v7304 = vadd.f32 %v6128, %v7303
        %v7305 = vpop.f32.mrb[0].mxu0
        %v7306 = vadd.f32 %v6132, %v7305
        %7307 = vmatprep.mubr.bf16.mxu0 %v5968
        %7308 = vmatmul.mubr.bf16.gmra.mrb[0].mxu0 %v5967
        %v7309 = vpop.f32.mrb[0].mxu0
        %v7310 = vadd.f32 %v6128, %v7309
        %v7311 = vpop.f32.mrb[0].mxu0
        %v7312 = vadd.f32 %v6132, %v7311
        %v7313 = vpop.f32.mrb[0].mxu0
        %v7314 = vadd.f32 %v6128, %v7313
        %v7315 = vpop.f32.mrb[0].mxu0
        %v7316 = vadd.f32 %v6132, %v7315
        %7317 = vmatprep.mubr.bf16.mxu0 %v5970
        %7318 = vmatmul.mubr.bf16.gmra.mrb[0].mxu0 %v5969
        %v7319 = vpop.f32.mrb[0].mxu0
        %v7320 = vadd.f32 %v6128, %v7319
        %v7321 = vpop.f32.mrb[0].mxu0
        %v7322 = vadd.f32 %v6132, %v7321
        %v7323 = vpop.f32.mrb[0].mxu0
        %v7324 = vadd.f32 %v6128, %v7323
        %v7325 = vpop.f32.mrb[0].mxu0
        %v7326 = vadd.f32 %v6132, %v7325
        %7327 = vmatprep.mubr.bf16.mxu0 %v5972
        %7328 = vmatmul.mubr.bf16.gmra.mrb[0].mxu0 %v5971
        %v7329 = vpop.f32.mrb[0].mxu0
        %v7330 = vadd.f32 %v6128, %v7329
        %v7331 = vpop.f32.mrb[0].mxu0
        %v7332 = vadd.f32 %v6132, %v7331
        %v7333 = vpop.f32.mrb[0].mxu0
        %v7334 = vadd.f32 %v6128, %v7333
        %v7335 = vpop.f32.mrb[0].mxu0
        %v7336 = vadd.f32 %v6132, %v7335
        %7337 = vmatprep.mubr.bf16.mxu0 %v5974
        %7338 = vmatmul.mubr.bf16.gmra.mrb[0].mxu0 %v5973
        %v7339 = vpop.f32.mrb[0].mxu0
        %v7340 = vadd.f32 %v6128, %v7339
        %v7341 = vpop.f32.mrb[0].mxu0
        %v7342 = vadd.f32 %v6132, %v7341
        %v7343 = vpop.f32.mrb[0].mxu0
        %v7344 = vadd.f32 %v6128, %v7343
        %v7345 = vpop.f32.mrb[0].mxu0
        %v7346 = vadd.f32 %v6132, %v7345
        %7347 = vmatprep.mubr.bf16.mxu0 %v5976
        %7348 = vmatmul.mubr.bf16.gmra.mrb[0].mxu0 %v5975
        %v7349 = vpop.f32.mrb[0].mxu0
        %v7350 = vadd.f32 %v6128, %v7349
        %v7351 = vpop.f32.mrb[0].mxu0
        %v7352 = vadd.f32 %v6132, %v7351
        %v7353 = vpop.f32.mrb[0].mxu0
        %v7354 = vadd.f32 %v6128, %v7353
        %v7355 = vpop.f32.mrb[0].mxu0
        %v7356 = vadd.f32 %v6132, %v7355
        %7357 = vmatprep.mubr.bf16.mxu0 %v5978
        %7358 = vmatmul.mubr.bf16.gmra.mrb[0].mxu0 %v5977
        %v7359 = vpop.f32.mrb[0].mxu0
        %v7360 = vadd.f32 %v6128, %v7359
        %v7361 = vpop.f32.mrb[0].mxu0
        %v7362 = vadd.f32 %v6132, %v7361
        %v7363 = vpop.f32.mrb[0].mxu0
        %v7364 = vadd.f32 %v6128, %v7363
        %v7365 = vpop.f32.mrb[0].mxu0
        %v7366 = vadd.f32 %v6132, %v7365
        %7367 = vdwg.mxu0
        %7368 = vmatprep.subr.bf16.mxu0 %v6540
        %7369 = vmatpush1.bf16.msra.mxu0 %v6539
        %7370 = vmatprep.subr.bf16.mxu0 %v6548
        %7371 = vmatpush1.bf16.msra.mxu0 %v6547
        %7372 = vmatprep.subr.bf16.mxu0 %v6556
        %7373 = vmatpush1.bf16.msra.mxu0 %v6555
        %7374 = vmatprep.subr.bf16.mxu0 %v6564
        %7375 = vmatpush1.bf16.msra.mxu0 %v6563
        %7376 = vmatprep.subr.bf16.mxu0 %v6572
        %7377 = vmatpush1.bf16.msra.mxu0 %v6571
        %7378 = vmatprep.subr.bf16.mxu0 %v6580
        %7379 = vmatpush1.bf16.msra.mxu0 %v6579
        %7380 = vmatprep.subr.bf16.mxu0 %v6588
        %7381 = vmatpush1.bf16.msra.mxu0 %v6587
        %7382 = vmatprep.subr.bf16.mxu0 %v6596
        %7383 = vmatpush1.bf16.msra.mxu0 %v6595
        %7384 = vmatprep.subr.bf16.mxu0 %v6604
        %7385 = vmatpush1.bf16.msra.mxu0 %v6603
        %7386 = vmatprep.subr.bf16.mxu0 %v6612
        %7387 = vmatpush1.bf16.msra.mxu0 %v6611
        %7388 = vmatprep.subr.bf16.mxu0 %v6620
        %7389 = vmatpush1.bf16.msra.mxu0 %v6619
        %7390 = vmatprep.subr.bf16.mxu0 %v6628
        %7391 = vmatpush1.bf16.msra.mxu0 %v6627
        %7392 = vmatprep.subr.bf16.mxu0 %v6636
        %7393 = vmatpush1.bf16.msra.mxu0 %v6635
        %7394 = vmatprep.subr.bf16.mxu0 %v6644
        %7395 = vmatpush1.bf16.msra.mxu0 %v6643
        %7396 = vmatprep.subr.bf16.mxu0 %v6652
        %7397 = vmatpush1.bf16.msra.mxu0 %v6651
        %7398 = vmatprep.subr.bf16.mxu0 %v6660
        %7399 = vmatpush1.bf16.msra.mxu0 %v6659
        %7400 = vmatprep.mubr.bf16.mxu0 %v5948
        %7401 = vmatmul.mubr.bf16.gmra.mrb[0].mxu0 %v5947
        %v7402 = vpop.f32.mrb[0].mxu0
        %v7403 = vadd.f32 %v6136, %v7402
        %v7404 = vpop.f32.mrb[0].mxu0
        %v7405 = vadd.f32 %v6140, %v7404
        %v7406 = vpop.f32.mrb[0].mxu0
        %v7407 = vadd.f32 %v6136, %v7406
        %v7408 = vpop.f32.mrb[0].mxu0
        %v7409 = vadd.f32 %v6140, %v7408
        %7410 = vmatprep.mubr.bf16.mxu0 %v5950
        %7411 = vmatmul.mubr.bf16.gmra.mrb[0].mxu0 %v5949
        %v7412 = vpop.f32.mrb[0].mxu0
        %v7413 = vadd.f32 %v6136, %v7412
        %v7414 = vpop.f32.mrb[0].mxu0
        %v7415 = vadd.f32 %v6140, %v7414
        %v7416 = vpop.f32.mrb[0].mxu0
        %v7417 = vadd.f32 %v6136, %v7416
        %v7418 = vpop.f32.mrb[0].mxu0
        %v7419 = vadd.f32 %v6140, %v7418
        %7420 = vmatprep.mubr.bf16.mxu0 %v5952
        %7421 = vmatmul.mubr.bf16.gmra.mrb[0].mxu0 %v5951
        %v7422 = vpop.f32.mrb[0].mxu0
        %v7423 = vadd.f32 %v6136, %v7422
        %v7424 = vpop.f32.mrb[0].mxu0
        %v7425 = vadd.f32 %v6140, %v7424
        %v7426 = vpop.f32.mrb[0].mxu0
        %v7427 = vadd.f32 %v6136, %v7426
        %v7428 = vpop.f32.mrb[0].mxu0
        %v7429 = vadd.f32 %v6140, %v7428
        %7430 = vmatprep.mubr.bf16.mxu0 %v5954
        %7431 = vmatmul.mubr.bf16.gmra.mrb[0].mxu0 %v5953
        %v7432 = vpop.f32.mrb[0].mxu0
        %v7433 = vadd.f32 %v6136, %v7432
        %v7434 = vpop.f32.mrb[0].mxu0
        %v7435 = vadd.f32 %v6140, %v7434
        %v7436 = vpop.f32.mrb[0].mxu0
        %v7437 = vadd.f32 %v6136, %v7436
        %v7438 = vpop.f32.mrb[0].mxu0
        %v7439 = vadd.f32 %v6140, %v7438
        %7440 = vmatprep.mubr.bf16.mxu0 %v5956
        %7441 = vmatmul.mubr.bf16.gmra.mrb[0].mxu0 %v5955
        %v7442 = vpop.f32.mrb[0].mxu0
        %v7443 = vadd.f32 %v6136, %v7442
        %v7444 = vpop.f32.mrb[0].mxu0
        %v7445 = vadd.f32 %v6140, %v7444
        %v7446 = vpop.f32.mrb[0].mxu0
        %v7447 = vadd.f32 %v6136, %v7446
        %v7448 = vpop.f32.mrb[0].mxu0
        %v7449 = vadd.f32 %v6140, %v7448
        %7450 = vmatprep.mubr.bf16.mxu0 %v5958
        %7451 = vmatmul.mubr.bf16.gmra.mrb[0].mxu0 %v5957
        %v7452 = vpop.f32.mrb[0].mxu0
        %v7453 = vadd.f32 %v6136, %v7452
        %v7454 = vpop.f32.mrb[0].mxu0
        %v7455 = vadd.f32 %v6140, %v7454
        %v7456 = vpop.f32.mrb[0].mxu0
        %v7457 = vadd.f32 %v6136, %v7456
        %v7458 = vpop.f32.mrb[0].mxu0
        %v7459 = vadd.f32 %v6140, %v7458
        %7460 = vmatprep.mubr.bf16.mxu0 %v5960
        %7461 = vmatmul.mubr.bf16.gmra.mrb[0].mxu0 %v5959
        %v7462 = vpop.f32.mrb[0].mxu0
        %v7463 = vadd.f32 %v6136, %v7462
        %v7464 = vpop.f32.mrb[0].mxu0
        %v7465 = vadd.f32 %v6140, %v7464
        %v7466 = vpop.f32.mrb[0].mxu0
        %v7467 = vadd.f32 %v6136, %v7466
        %v7468 = vpop.f32.mrb[0].mxu0
        %v7469 = vadd.f32 %v6140, %v7468
        %7470 = vmatprep.mubr.bf16.mxu0 %v5962
        %7471 = vmatmul.mubr.bf16.gmra.mrb[0].mxu0 %v5961
        %v7472 = vpop.f32.mrb[0].mxu0
        %v7473 = vadd.f32 %v6136, %v7472
        %v7474 = vpop.f32.mrb[0].mxu0
        %v7475 = vadd.f32 %v6140, %v7474
        %v7476 = vpop.f32.mrb[0].mxu0
        %v7477 = vadd.f32 %v6136, %v7476
        %v7478 = vpop.f32.mrb[0].mxu0
        %v7479 = vadd.f32 %v6140, %v7478
        %7480 = vmatprep.mubr.bf16.mxu0 %v5964
        %7481 = vmatmul.mubr.bf16.gmra.mrb[0].mxu0 %v5963
        %v7482 = vpop.f32.mrb[0].mxu0
        %v7483 = vadd.f32 %v6136, %v7482
        %v7484 = vpop.f32.mrb[0].mxu0
        %v7485 = vadd.f32 %v6140, %v7484
        %v7486 = vpop.f32.mrb[0].mxu0
        %v7487 = vadd.f32 %v6136, %v7486
        %v7488 = vpop.f32.mrb[0].mxu0
        %v7489 = vadd.f32 %v6140, %v7488
        %7490 = vmatprep.mubr.bf16.mxu0 %v5966
        %7491 = vmatmul.mubr.bf16.gmra.mrb[0].mxu0 %v5965
        %v7492 = vpop.f32.mrb[0].mxu0
        %v7493 = vadd.f32 %v6136, %v7492
        %v7494 = vpop.f32.mrb[0].mxu0
        %v7495 = vadd.f32 %v6140, %v7494
        %v7496 = vpop.f32.mrb[0].mxu0
        %v7497 = vadd.f32 %v6136, %v7496
        %v7498 = vpop.f32.mrb[0].mxu0
        %v7499 = vadd.f32 %v6140, %v7498
        %7500 = vmatprep.mubr.bf16.mxu0 %v5968
        %7501 = vmatmul.mubr.bf16.gmra.mrb[0].mxu0 %v5967
        %v7502 = vpop.f32.mrb[0].mxu0
        %v7503 = vadd.f32 %v6136, %v7502
        %v7504 = vpop.f32.mrb[0].mxu0
        %v7505 = vadd.f32 %v6140, %v7504
        %v7506 = vpop.f32.mrb[0].mxu0
        %v7507 = vadd.f32 %v6136, %v7506
        %v7508 = vpop.f32.mrb[0].mxu0
        %v7509 = vadd.f32 %v6140, %v7508
        %7510 = vmatprep.mubr.bf16.mxu0 %v5970
        %7511 = vmatmul.mubr.bf16.gmra.mrb[0].mxu0 %v5969
        %v7512 = vpop.f32.mrb[0].mxu0
        %v7513 = vadd.f32 %v6136, %v7512
        %v7514 = vpop.f32.mrb[0].mxu0
        %v7515 = vadd.f32 %v6140, %v7514
        %v7516 = vpop.f32.mrb[0].mxu0
        %v7517 = vadd.f32 %v6136, %v7516
        %v7518 = vpop.f32.mrb[0].mxu0
        %v7519 = vadd.f32 %v6140, %v7518
        %7520 = vmatprep.mubr.bf16.mxu0 %v5972
        %7521 = vmatmul.mubr.bf16.gmra.mrb[0].mxu0 %v5971
        %v7522 = vpop.f32.mrb[0].mxu0
        %v7523 = vadd.f32 %v6136, %v7522
        %v7524 = vpop.f32.mrb[0].mxu0
        %v7525 = vadd.f32 %v6140, %v7524
        %v7526 = vpop.f32.mrb[0].mxu0
        %v7527 = vadd.f32 %v6136, %v7526
        %v7528 = vpop.f32.mrb[0].mxu0
        %v7529 = vadd.f32 %v6140, %v7528
        %7530 = vmatprep.mubr.bf16.mxu0 %v5974
        %7531 = vmatmul.mubr.bf16.gmra.mrb[0].mxu0 %v5973
        %v7532 = vpop.f32.mrb[0].mxu0
        %v7533 = vadd.f32 %v6136, %v7532
        %v7534 = vpop.f32.mrb[0].mxu0
        %v7535 = vadd.f32 %v6140, %v7534
        %v7536 = vpop.f32.mrb[0].mxu0
        %v7537 = vadd.f32 %v6136, %v7536
        %v7538 = vpop.f32.mrb[0].mxu0
        %v7539 = vadd.f32 %v6140, %v7538
        %7540 = vmatprep.mubr.bf16.mxu0 %v5976
        %7541 = vmatmul.mubr.bf16.gmra.mrb[0].mxu0 %v5975
        %v7542 = vpop.f32.mrb[0].mxu0
        %v7543 = vadd.f32 %v6136, %v7542
        %v7544 = vpop.f32.mrb[0].mxu0
        %v7545 = vadd.f32 %v6140, %v7544
        %v7546 = vpop.f32.mrb[0].mxu0
        %v7547 = vadd.f32 %v6136, %v7546
        %v7548 = vpop.f32.mrb[0].mxu0
        %v7549 = vadd.f32 %v6140, %v7548
        %7550 = vmatprep.mubr.bf16.mxu0 %v5978
        %7551 = vmatmul.mubr.bf16.gmra.mrb[0].mxu0 %v5977
        %v7552 = vpop.f32.mrb[0].mxu0
        %v7553 = vadd.f32 %v6136, %v7552
        %v7554 = vpop.f32.mrb[0].mxu0
        %v7555 = vadd.f32 %v6140, %v7554
        %v7556 = vpop.f32.mrb[0].mxu0
        %v7557 = vadd.f32 %v6136, %v7556
        %v7558 = vpop.f32.mrb[0].mxu0
        %v7559 = vadd.f32 %v6140, %v7558
        %7560 = vdwg.mxu0
        %v7561 = vpack.c.bf16 %v6828, %v6824
        %v7562 = vpack.c.bf16 %v6830, %v6826
        %v7563 = vpack.c.bf16 %v7021, %v7017
        %v7564 = vpack.c.bf16 %v7023, %v7019
        %v7565 = vpack.c.bf16 %v7214, %v7210
        %v7566 = vpack.c.bf16 %v7216, %v7212
        %v7567 = vpack.c.bf16 %v7407, %v7403
        %v7568 = vpack.c.bf16 %v7409, %v7405
        %v7569 = vpack.c.bf16 %v6838, %v6834
        %v7570 = vpack.c.bf16 %v6840, %v6836
        %v7571 = vpack.c.bf16 %v7031, %v7027
        %v7572 = vpack.c.bf16 %v7033, %v7029
        %v7573 = vpack.c.bf16 %v7224, %v7220
        %v7574 = vpack.c.bf16 %v7226, %v7222
        %v7575 = vpack.c.bf16 %v7417, %v7413
        %v7576 = vpack.c.bf16 %v7419, %v7415
        %v7577 = vpack.c.bf16 %v6848, %v6844
        %v7578 = vpack.c.bf16 %v6850, %v6846
        %v7579 = vpack.c.bf16 %v7041, %v7037
        %v7580 = vpack.c.bf16 %v7043, %v7039
        %v7581 = vpack.c.bf16 %v7234, %v7230
        %v7582 = vpack.c.bf16 %v7236, %v7232
        %v7583 = vpack.c.bf16 %v7427, %v7423
        %v7584 = vpack.c.bf16 %v7429, %v7425
        %v7585 = vpack.c.bf16 %v6858, %v6854
        %v7586 = vpack.c.bf16 %v6860, %v6856
        %v7587 = vpack.c.bf16 %v7051, %v7047
        %v7588 = vpack.c.bf16 %v7053, %v7049
        %v7589 = vpack.c.bf16 %v7244, %v7240
        %v7590 = vpack.c.bf16 %v7246, %v7242
        %v7591 = vpack.c.bf16 %v7437, %v7433
        %v7592 = vpack.c.bf16 %v7439, %v7435
        %v7593 = vpack.c.bf16 %v6868, %v6864
        %v7594 = vpack.c.bf16 %v6870, %v6866
        %v7595 = vpack.c.bf16 %v7061, %v7057
        %v7596 = vpack.c.bf16 %v7063, %v7059
        %v7597 = vpack.c.bf16 %v7254, %v7250
        %v7598 = vpack.c.bf16 %v7256, %v7252
        %v7599 = vpack.c.bf16 %v7447, %v7443
        %v7600 = vpack.c.bf16 %v7449, %v7445
        %v7601 = vpack.c.bf16 %v6878, %v6874
        %v7602 = vpack.c.bf16 %v6880, %v6876
        %v7603 = vpack.c.bf16 %v7071, %v7067
        %v7604 = vpack.c.bf16 %v7073, %v7069
        %v7605 = vpack.c.bf16 %v7264, %v7260
        %v7606 = vpack.c.bf16 %v7266, %v7262
        %v7607 = vpack.c.bf16 %v7457, %v7453
        %v7608 = vpack.c.bf16 %v7459, %v7455
        %v7609 = vpack.c.bf16 %v6888, %v6884
        %v7610 = vpack.c.bf16 %v6890, %v6886
        %v7611 = vpack.c.bf16 %v7081, %v7077
        %v7612 = vpack.c.bf16 %v7083, %v7079
        %v7613 = vpack.c.bf16 %v7274, %v7270
        %v7614 = vpack.c.bf16 %v7276, %v7272
        %v7615 = vpack.c.bf16 %v7467, %v7463
        %v7616 = vpack.c.bf16 %v7469, %v7465
        %v7617 = vpack.c.bf16 %v6898, %v6894
        %v7618 = vpack.c.bf16 %v6900, %v6896
        %v7619 = vpack.c.bf16 %v7091, %v7087
        %v7620 = vpack.c.bf16 %v7093, %v7089
        %v7621 = vpack.c.bf16 %v7284, %v7280
        %v7622 = vpack.c.bf16 %v7286, %v7282
        %v7623 = vpack.c.bf16 %v7477, %v7473
        %v7624 = vpack.c.bf16 %v7479, %v7475
        %v7625 = vpack.c.bf16 %v6908, %v6904
        %v7626 = vpack.c.bf16 %v6910, %v6906
        %v7627 = vpack.c.bf16 %v7101, %v7097
        %v7628 = vpack.c.bf16 %v7103, %v7099
        %v7629 = vpack.c.bf16 %v7294, %v7290
        %v7630 = vpack.c.bf16 %v7296, %v7292
        %v7631 = vpack.c.bf16 %v7487, %v7483
        %v7632 = vpack.c.bf16 %v7489, %v7485
        %v7633 = vpack.c.bf16 %v6918, %v6914
        %v7634 = vpack.c.bf16 %v6920, %v6916
        %v7635 = vpack.c.bf16 %v7111, %v7107
        %v7636 = vpack.c.bf16 %v7113, %v7109
        %v7637 = vpack.c.bf16 %v7304, %v7300
        %v7638 = vpack.c.bf16 %v7306, %v7302
        %v7639 = vpack.c.bf16 %v7497, %v7493
        %v7640 = vpack.c.bf16 %v7499, %v7495
        %v7641 = vpack.c.bf16 %v6928, %v6924
        %v7642 = vpack.c.bf16 %v6930, %v6926
        %v7643 = vpack.c.bf16 %v7121, %v7117
        %v7644 = vpack.c.bf16 %v7123, %v7119
        %v7645 = vpack.c.bf16 %v7314, %v7310
        %v7646 = vpack.c.bf16 %v7316, %v7312
        %v7647 = vpack.c.bf16 %v7507, %v7503
        %v7648 = vpack.c.bf16 %v7509, %v7505
        %v7649 = vpack.c.bf16 %v6938, %v6934
        %v7650 = vpack.c.bf16 %v6940, %v6936
        %v7651 = vpack.c.bf16 %v7131, %v7127
        %v7652 = vpack.c.bf16 %v7133, %v7129
        %v7653 = vpack.c.bf16 %v7324, %v7320
        %v7654 = vpack.c.bf16 %v7326, %v7322
        %v7655 = vpack.c.bf16 %v7517, %v7513
        %v7656 = vpack.c.bf16 %v7519, %v7515
        %v7657 = vpack.c.bf16 %v6948, %v6944
        %v7658 = vpack.c.bf16 %v6950, %v6946
        %v7659 = vpack.c.bf16 %v7141, %v7137
        %v7660 = vpack.c.bf16 %v7143, %v7139
        %v7661 = vpack.c.bf16 %v7334, %v7330
        %v7662 = vpack.c.bf16 %v7336, %v7332
        %v7663 = vpack.c.bf16 %v7527, %v7523
        %v7664 = vpack.c.bf16 %v7529, %v7525
        %v7665 = vpack.c.bf16 %v6958, %v6954
        %v7666 = vpack.c.bf16 %v6960, %v6956
        %v7667 = vpack.c.bf16 %v7151, %v7147
        %v7668 = vpack.c.bf16 %v7153, %v7149
        %v7669 = vpack.c.bf16 %v7344, %v7340
        %v7670 = vpack.c.bf16 %v7346, %v7342
        %v7671 = vpack.c.bf16 %v7537, %v7533
        %v7672 = vpack.c.bf16 %v7539, %v7535
        %v7673 = vpack.c.bf16 %v6968, %v6964
        %v7674 = vpack.c.bf16 %v6970, %v6966
        %v7675 = vpack.c.bf16 %v7161, %v7157
        %v7676 = vpack.c.bf16 %v7163, %v7159
        %v7677 = vpack.c.bf16 %v7354, %v7350
        %v7678 = vpack.c.bf16 %v7356, %v7352
        %v7679 = vpack.c.bf16 %v7547, %v7543
        %v7680 = vpack.c.bf16 %v7549, %v7545
        %v7681 = vpack.c.bf16 %v6978, %v6974
        %v7682 = vpack.c.bf16 %v6980, %v6976
        %v7683 = vpack.c.bf16 %v7171, %v7167
        %v7684 = vpack.c.bf16 %v7173, %v7169
        %v7685 = vpack.c.bf16 %v7364, %v7360
        %v7686 = vpack.c.bf16 %v7366, %v7362
        %v7687 = vpack.c.bf16 %v7557, %v7553
        %v7688 = vpack.c.bf16 %v7559, %v7555
        %v7689 = vmul.bf16 %v7561, %v7561
        %v7690 = vmul.bf16 %v7562, %v7562
        %v7691 = vmul.bf16 %v7563, %v7563
        %v7692 = vmul.bf16 %v7564, %v7564
        %v7693 = vmul.bf16 %v7565, %v7565
        %v7694 = vmul.bf16 %v7566, %v7566
        %v7695 = vmul.bf16 %v7567, %v7567
        %v7696 = vmul.bf16 %v7568, %v7568
        %v7697 = vmul.bf16 %v7569, %v7569
        %v7698 = vmul.bf16 %v7570, %v7570
        %v7699 = vmul.bf16 %v7571, %v7571
        %v7700 = vmul.bf16 %v7572, %v7572
        %v7701 = vmul.bf16 %v7573, %v7573
        %v7702 = vmul.bf16 %v7574, %v7574
        %v7703 = vmul.bf16 %v7575, %v7575
        %v7704 = vmul.bf16 %v7576, %v7576
        %v7705 = vmul.bf16 %v7577, %v7577
        %v7706 = vmul.bf16 %v7578, %v7578
        %v7707 = vmul.bf16 %v7579, %v7579
        %v7708 = vmul.bf16 %v7580, %v7580
        %v7709 = vmul.bf16 %v7581, %v7581
        %v7710 = vmul.bf16 %v7582, %v7582
        %v7711 = vmul.bf16 %v7583, %v7583
        %v7712 = vmul.bf16 %v7584, %v7584
        %v7713 = vmul.bf16 %v7585, %v7585
        %v7714 = vmul.bf16 %v7586, %v7586
        %v7715 = vmul.bf16 %v7587, %v7587
        %v7716 = vmul.bf16 %v7588, %v7588
        %v7717 = vmul.bf16 %v7589, %v7589
        %v7718 = vmul.bf16 %v7590, %v7590
        %v7719 = vmul.bf16 %v7591, %v7591
        %v7720 = vmul.bf16 %v7592, %v7592
        %v7721 = vmul.bf16 %v7593, %v7593
        %v7722 = vmul.bf16 %v7594, %v7594
        %v7723 = vmul.bf16 %v7595, %v7595
        %v7724 = vmul.bf16 %v7596, %v7596
        %v7725 = vmul.bf16 %v7597, %v7597
        %v7726 = vmul.bf16 %v7598, %v7598
        %v7727 = vmul.bf16 %v7599, %v7599
        %v7728 = vmul.bf16 %v7600, %v7600
        %v7729 = vmul.bf16 %v7601, %v7601
        %v7730 = vmul.bf16 %v7602, %v7602
        %v7731 = vmul.bf16 %v7603, %v7603
        %v7732 = vmul.bf16 %v7604, %v7604
        %v7733 = vmul.bf16 %v7605, %v7605
        %v7734 = vmul.bf16 %v7606, %v7606
        %v7735 = vmul.bf16 %v7607, %v7607
        %v7736 = vmul.bf16 %v7608, %v7608
        %v7737 = vmul.bf16 %v7609, %v7609
        %v7738 = vmul.bf16 %v7610, %v7610
        %v7739 = vmul.bf16 %v7611, %v7611
        %v7740 = vmul.bf16 %v7612, %v7612
        %v7741 = vmul.bf16 %v7613, %v7613
        %v7742 = vmul.bf16 %v7614, %v7614
        %v7743 = vmul.bf16 %v7615, %v7615
        %v7744 = vmul.bf16 %v7616, %v7616
        %v7745 = vmul.bf16 %v7617, %v7617
        %v7746 = vmul.bf16 %v7618, %v7618
        %v7747 = vmul.bf16 %v7619, %v7619
        %v7748 = vmul.bf16 %v7620, %v7620
        %v7749 = vmul.bf16 %v7621, %v7621
        %v7750 = vmul.bf16 %v7622, %v7622
        %v7751 = vmul.bf16 %v7623, %v7623
        %v7752 = vmul.bf16 %v7624, %v7624
        %v7753 = vmul.bf16 %v7625, %v7625
        %v7754 = vmul.bf16 %v7626, %v7626
        %v7755 = vmul.bf16 %v7627, %v7627
        %v7756 = vmul.bf16 %v7628, %v7628
        %v7757 = vmul.bf16 %v7629, %v7629
        %v7758 = vmul.bf16 %v7630, %v7630
        %v7759 = vmul.bf16 %v7631, %v7631
        %v7760 = vmul.bf16 %v7632, %v7632
        %v7761 = vmul.bf16 %v7633, %v7633
        %v7762 = vmul.bf16 %v7634, %v7634
        %v7763 = vmul.bf16 %v7635, %v7635
        %v7764 = vmul.bf16 %v7636, %v7636
        %v7765 = vmul.bf16 %v7637, %v7637
        %v7766 = vmul.bf16 %v7638, %v7638
        %v7767 = vmul.bf16 %v7639, %v7639
        %v7768 = vmul.bf16 %v7640, %v7640
        %v7769 = vmul.bf16 %v7641, %v7641
        %v7770 = vmul.bf16 %v7642, %v7642
        %v7771 = vmul.bf16 %v7643, %v7643
        %v7772 = vmul.bf16 %v7644, %v7644
        %v7773 = vmul.bf16 %v7645, %v7645
        %v7774 = vmul.bf16 %v7646, %v7646
        %v7775 = vmul.bf16 %v7647, %v7647
        %v7776 = vmul.bf16 %v7648, %v7648
        %v7777 = vmul.bf16 %v7649, %v7649
        %v7778 = vmul.bf16 %v7650, %v7650
        %v7779 = vmul.bf16 %v7651, %v7651
        %v7780 = vmul.bf16 %v7652, %v7652
        %v7781 = vmul.bf16 %v7653, %v7653
        %v7782 = vmul.bf16 %v7654, %v7654
        %v7783 = vmul.bf16 %v7655, %v7655
        %v7784 = vmul.bf16 %v7656, %v7656
        %v7785 = vmul.bf16 %v7657, %v7657
        %v7786 = vmul.bf16 %v7658, %v7658
        %v7787 = vmul.bf16 %v7659, %v7659
        %v7788 = vmul.bf16 %v7660, %v7660
        %v7789 = vmul.bf16 %v7661, %v7661
        %v7790 = vmul.bf16 %v7662, %v7662
        %v7791 = vmul.bf16 %v7663, %v7663
        %v7792 = vmul.bf16 %v7664, %v7664
        %v7793 = vmul.bf16 %v7665, %v7665
        %v7794 = vmul.bf16 %v7666, %v7666
        %v7795 = vmul.bf16 %v7667, %v7667
        %v7796 = vmul.bf16 %v7668, %v7668
        %v7797 = vmul.bf16 %v7669, %v7669
        %v7798 = vmul.bf16 %v7670, %v7670
        %v7799 = vmul.bf16 %v7671, %v7671
        %v7800 = vmul.bf16 %v7672, %v7672
        %v7801 = vmul.bf16 %v7673, %v7673
        %v7802 = vmul.bf16 %v7674, %v7674
        %v7803 = vmul.bf16 %v7675, %v7675
        %v7804 = vmul.bf16 %v7676, %v7676
        %v7805 = vmul.bf16 %v7677, %v7677
        %v7806 = vmul.bf16 %v7678, %v7678
        %v7807 = vmul.bf16 %v7679, %v7679
        %v7808 = vmul.bf16 %v7680, %v7680
        %v7809 = vmul.bf16 %v7681, %v7681
        %v7810 = vmul.bf16 %v7682, %v7682
        %v7811 = vmul.bf16 %v7683, %v7683
        %v7812 = vmul.bf16 %v7684, %v7684
        %v7813 = vmul.bf16 %v7685, %v7685
        %v7814 = vmul.bf16 %v7686, %v7686
        %v7815 = vmul.bf16 %v7687, %v7687
        %v7816 = vmul.bf16 %v7688, %v7688
        %v7817 = vmul.bf16 %v7561, %v7689
        %v7818 = vmul.bf16 %v7562, %v7690
        %v7819 = vmul.bf16 %v7563, %v7691
        %v7820 = vmul.bf16 %v7564, %v7692
        %v7821 = vmul.bf16 %v7565, %v7693
        %v7822 = vmul.bf16 %v7566, %v7694
        %v7823 = vmul.bf16 %v7567, %v7695
        %v7824 = vmul.bf16 %v7568, %v7696
        %v7825 = vmul.bf16 %v7569, %v7697
        %v7826 = vmul.bf16 %v7570, %v7698
        %v7827 = vmul.bf16 %v7571, %v7699
        %v7828 = vmul.bf16 %v7572, %v7700
        %v7829 = vmul.bf16 %v7573, %v7701
        %v7830 = vmul.bf16 %v7574, %v7702
        %v7831 = vmul.bf16 %v7575, %v7703
        %v7832 = vmul.bf16 %v7576, %v7704
        %v7833 = vmul.bf16 %v7577, %v7705
        %v7834 = vmul.bf16 %v7578, %v7706
        %v7835 = vmul.bf16 %v7579, %v7707
        %v7836 = vmul.bf16 %v7580, %v7708
        %v7837 = vmul.bf16 %v7581, %v7709
        %v7838 = vmul.bf16 %v7582, %v7710
        %v7839 = vmul.bf16 %v7583, %v7711
        %v7840 = vmul.bf16 %v7584, %v7712
        %v7841 = vmul.bf16 %v7585, %v7713
        %v7842 = vmul.bf16 %v7586, %v7714
        %v7843 = vmul.bf16 %v7587, %v7715
        %v7844 = vmul.bf16 %v7588, %v7716
        %v7845 = vmul.bf16 %v7589, %v7717
        %v7846 = vmul.bf16 %v7590, %v7718
        %v7847 = vmul.bf16 %v7591, %v7719
        %v7848 = vmul.bf16 %v7592, %v7720
        %v7849 = vmul.bf16 %v7593, %v7721
        %v7850 = vmul.bf16 %v7594, %v7722
        %v7851 = vmul.bf16 %v7595, %v7723
        %v7852 = vmul.bf16 %v7596, %v7724
        %v7853 = vmul.bf16 %v7597, %v7725
        %v7854 = vmul.bf16 %v7598, %v7726
        %v7855 = vmul.bf16 %v7599, %v7727
        %v7856 = vmul.bf16 %v7600, %v7728
        %v7857 = vmul.bf16 %v7601, %v7729
        %v7858 = vmul.bf16 %v7602, %v7730
        %v7859 = vmul.bf16 %v7603, %v7731
        %v7860 = vmul.bf16 %v7604, %v7732
        %v7861 = vmul.bf16 %v7605, %v7733
        %v7862 = vmul.bf16 %v7606, %v7734
        %v7863 = vmul.bf16 %v7607, %v7735
        %v7864 = vmul.bf16 %v7608, %v7736
        %v7865 = vmul.bf16 %v7609, %v7737
        %v7866 = vmul.bf16 %v7610, %v7738
        %v7867 = vmul.bf16 %v7611, %v7739
        %v7868 = vmul.bf16 %v7612, %v7740
        %v7869 = vmul.bf16 %v7613, %v7741
        %v7870 = vmul.bf16 %v7614, %v7742
        %v7871 = vmul.bf16 %v7615, %v7743
        %v7872 = vmul.bf16 %v7616, %v7744
        %v7873 = vmul.bf16 %v7617, %v7745
        %v7874 = vmul.bf16 %v7618, %v7746
        %v7875 = vmul.bf16 %v7619, %v7747
        %v7876 = vmul.bf16 %v7620, %v7748
        %v7877 = vmul.bf16 %v7621, %v7749
        %v7878 = vmul.bf16 %v7622, %v7750
        %v7879 = vmul.bf16 %v7623, %v7751
        %v7880 = vmul.bf16 %v7624, %v7752
        %v7881 = vmul.bf16 %v7625, %v7753
        %v7882 = vmul.bf16 %v7626, %v7754
        %v7883 = vmul.bf16 %v7627, %v7755
        %v7884 = vmul.bf16 %v7628, %v7756
        %v7885 = vmul.bf16 %v7629, %v7757
        %v7886 = vmul.bf16 %v7630, %v7758
        %v7887 = vmul.bf16 %v7631, %v7759
        %v7888 = vmul.bf16 %v7632, %v7760
        %v7889 = vmul.bf16 %v7633, %v7761
        %v7890 = vmul.bf16 %v7634, %v7762
        %v7891 = vmul.bf16 %v7635, %v7763
        %v7892 = vmul.bf16 %v7636, %v7764
        %v7893 = vmul.bf16 %v7637, %v7765
        %v7894 = vmul.bf16 %v7638, %v7766
        %v7895 = vmul.bf16 %v7639, %v7767
        %v7896 = vmul.bf16 %v7640, %v7768
        %v7897 = vmul.bf16 %v7641, %v7769
        %v7898 = vmul.bf16 %v7642, %v7770
        %v7899 = vmul.bf16 %v7643, %v7771
        %v7900 = vmul.bf16 %v7644, %v7772
        %v7901 = vmul.bf16 %v7645, %v7773
        %v7902 = vmul.bf16 %v7646, %v7774
        %v7903 = vmul.bf16 %v7647, %v7775
        %v7904 = vmul.bf16 %v7648, %v7776
        %v7905 = vmul.bf16 %v7649, %v7777
        %v7906 = vmul.bf16 %v7650, %v7778
        %v7907 = vmul.bf16 %v7651, %v7779
        %v7908 = vmul.bf16 %v7652, %v7780
        %v7909 = vmul.bf16 %v7653, %v7781
        %v7910 = vmul.bf16 %v7654, %v7782
        %v7911 = vmul.bf16 %v7655, %v7783
        %v7912 = vmul.bf16 %v7656, %v7784
        %v7913 = vmul.bf16 %v7657, %v7785
        %v7914 = vmul.bf16 %v7658, %v7786
        %v7915 = vmul.bf16 %v7659, %v7787
        %v7916 = vmul.bf16 %v7660, %v7788
        %v7917 = vmul.bf16 %v7661, %v7789
        %v7918 = vmul.bf16 %v7662, %v7790
        %v7919 = vmul.bf16 %v7663, %v7791
        %v7920 = vmul.bf16 %v7664, %v7792
        %v7921 = vmul.bf16 %v7665, %v7793
        %v7922 = vmul.bf16 %v7666, %v7794
        %v7923 = vmul.bf16 %v7667, %v7795
        %v7924 = vmul.bf16 %v7668, %v7796
        %v7925 = vmul.bf16 %v7669, %v7797
        %v7926 = vmul.bf16 %v7670, %v7798
        %v7927 = vmul.bf16 %v7671, %v7799
        %v7928 = vmul.bf16 %v7672, %v7800
        %v7929 = vmul.bf16 %v7673, %v7801
        %v7930 = vmul.bf16 %v7674, %v7802
        %v7931 = vmul.bf16 %v7675, %v7803
        %v7932 = vmul.bf16 %v7676, %v7804
        %v7933 = vmul.bf16 %v7677, %v7805
        %v7934 = vmul.bf16 %v7678, %v7806
        %v7935 = vmul.bf16 %v7679, %v7807
        %v7936 = vmul.bf16 %v7680, %v7808
        %v7937 = vmul.bf16 %v7681, %v7809
        %v7938 = vmul.bf16 %v7682, %v7810
        %v7939 = vmul.bf16 %v7683, %v7811
        %v7940 = vmul.bf16 %v7684, %v7812
        %v7941 = vmul.bf16 %v7685, %v7813
        %v7942 = vmul.bf16 %v7686, %v7814
        %v7943 = vmul.bf16 %v7687, %v7815
        %v7944 = vmul.bf16 %v7688, %v7816
        %v7945 = vmul.bf16 %v7817, 1027030327
        %v7946 = vmul.bf16 %v7818, 1027030327
        %v7947 = vmul.bf16 %v7819, 1027030327
        %v7948 = vmul.bf16 %v7820, 1027030327
        %v7949 = vmul.bf16 %v7821, 1027030327
        %v7950 = vmul.bf16 %v7822, 1027030327
        %v7951 = vmul.bf16 %v7823, 1027030327
        %v7952 = vmul.bf16 %v7824, 1027030327
        %v7953 = vmul.bf16 %v7825, 1027030327
        %v7954 = vmul.bf16 %v7826, 1027030327
        %v7955 = vmul.bf16 %v7827, 1027030327
        %v7956 = vmul.bf16 %v7828, 1027030327
        %v7957 = vmul.bf16 %v7829, 1027030327
        %v7958 = vmul.bf16 %v7830, 1027030327
        %v7959 = vmul.bf16 %v7831, 1027030327
        %v7960 = vmul.bf16 %v7832, 1027030327
        %v7961 = vmul.bf16 %v7833, 1027030327
        %v7962 = vmul.bf16 %v7834, 1027030327
        %v7963 = vmul.bf16 %v7835, 1027030327
        %v7964 = vmul.bf16 %v7836, 1027030327
        %v7965 = vmul.bf16 %v7837, 1027030327
        %v7966 = vmul.bf16 %v7838, 1027030327
        %v7967 = vmul.bf16 %v7839, 1027030327
        %v7968 = vmul.bf16 %v7840, 1027030327
        %v7969 = vmul.bf16 %v7841, 1027030327
        %v7970 = vmul.bf16 %v7842, 1027030327
        %v7971 = vmul.bf16 %v7843, 1027030327
        %v7972 = vmul.bf16 %v7844, 1027030327
        %v7973 = vmul.bf16 %v7845, 1027030327
        %v7974 = vmul.bf16 %v7846, 1027030327
        %v7975 = vmul.bf16 %v7847, 1027030327
        %v7976 = vmul.bf16 %v7848, 1027030327
        %v7977 = vmul.bf16 %v7849, 1027030327
        %v7978 = vmul.bf16 %v7850, 1027030327
        %v7979 = vmul.bf16 %v7851, 1027030327
        %v7980 = vmul.bf16 %v7852, 1027030327
        %v7981 = vmul.bf16 %v7853, 1027030327
        %v7982 = vmul.bf16 %v7854, 1027030327
        %v7983 = vmul.bf16 %v7855, 1027030327
        %v7984 = vmul.bf16 %v7856, 1027030327
        %v7985 = vmul.bf16 %v7857, 1027030327
        %v7986 = vmul.bf16 %v7858, 1027030327
        %v7987 = vmul.bf16 %v7859, 1027030327
        %v7988 = vmul.bf16 %v7860, 1027030327
        %v7989 = vmul.bf16 %v7861, 1027030327
        %v7990 = vmul.bf16 %v7862, 1027030327
        %v7991 = vmul.bf16 %v7863, 1027030327
        %v7992 = vmul.bf16 %v7864, 1027030327
        %v7993 = vmul.bf16 %v7865, 1027030327
        %v7994 = vmul.bf16 %v7866, 1027030327
        %v7995 = vmul.bf16 %v7867, 1027030327
        %v7996 = vmul.bf16 %v7868, 1027030327
        %v7997 = vmul.bf16 %v7869, 1027030327
        %v7998 = vmul.bf16 %v7870, 1027030327
        %v7999 = vmul.bf16 %v7871, 1027030327
        %v8000 = vmul.bf16 %v7872, 1027030327
        %v8001 = vmul.bf16 %v7873, 1027030327
        %v8002 = vmul.bf16 %v7874, 1027030327
        %v8003 = vmul.bf16 %v7875, 1027030327
        %v8004 = vmul.bf16 %v7876, 1027030327
        %v8005 = vmul.bf16 %v7877, 1027030327
        %v8006 = vmul.bf16 %v7878, 1027030327
        %v8007 = vmul.bf16 %v7879, 1027030327
        %v8008 = vmul.bf16 %v7880, 1027030327
        %v8009 = vmul.bf16 %v7881, 1027030327
        %v8010 = vmul.bf16 %v7882, 1027030327
        %v8011 = vmul.bf16 %v7883, 1027030327
        %v8012 = vmul.bf16 %v7884, 1027030327
        %v8013 = vmul.bf16 %v7885, 1027030327
        %v8014 = vmul.bf16 %v7886, 1027030327
        %v8015 = vmul.bf16 %v7887, 1027030327
        %v8016 = vmul.bf16 %v7888, 1027030327
        %v8017 = vmul.bf16 %v7889, 1027030327
        %v8018 = vmul.bf16 %v7890, 1027030327
        %v8019 = vmul.bf16 %v7891, 1027030327
        %v8020 = vmul.bf16 %v7892, 1027030327
        %v8021 = vmul.bf16 %v7893, 1027030327
        %v8022 = vmul.bf16 %v7894, 1027030327
        %v8023 = vmul.bf16 %v7895, 1027030327
        %v8024 = vmul.bf16 %v7896, 1027030327
        %v8025 = vmul.bf16 %v7897, 1027030327
        %v8026 = vmul.bf16 %v7898, 1027030327
        %v8027 = vmul.bf16 %v7899, 1027030327
        %v8028 = vmul.bf16 %v7900, 1027030327
        %v8029 = vmul.bf16 %v7901, 1027030327
        %v8030 = vmul.bf16 %v7902, 1027030327
        %v8031 = vmul.bf16 %v7903, 1027030327
        %v8032 = vmul.bf16 %v7904, 1027030327
        %v8033 = vmul.bf16 %v7905, 1027030327
        %v8034 = vmul.bf16 %v7906, 1027030327
        %v8035 = vmul.bf16 %v7907, 1027030327
        %v8036 = vmul.bf16 %v7908, 1027030327
        %v8037 = vmul.bf16 %v7909, 1027030327
        %v8038 = vmul.bf16 %v7910, 1027030327
        %v8039 = vmul.bf16 %v7911, 1027030327
        %v8040 = vmul.bf16 %v7912, 1027030327
        %v8041 = vmul.bf16 %v7913, 1027030327
        %v8042 = vmul.bf16 %v7914, 1027030327
        %v8043 = vmul.bf16 %v7915, 1027030327
        %v8044 = vmul.bf16 %v7916, 1027030327
        %v8045 = vmul.bf16 %v7917, 1027030327
        %v8046 = vmul.bf16 %v7918, 1027030327
        %v8047 = vmul.bf16 %v7919, 1027030327
        %v8048 = vmul.bf16 %v7920, 1027030327
        %v8049 = vmul.bf16 %v7921, 1027030327
        %v8050 = vmul.bf16 %v7922, 1027030327
        %v8051 = vmul.bf16 %v7923, 1027030327
        %v8052 = vmul.bf16 %v7924, 1027030327
        %v8053 = vmul.bf16 %v7925, 1027030327
        %v8054 = vmul.bf16 %v7926, 1027030327
        %v8055 = vmul.bf16 %v7927, 1027030327
        %v8056 = vmul.bf16 %v7928, 1027030327
        %v8057 = vmul.bf16 %v7929, 1027030327
        %v8058 = vmul.bf16 %v7930, 1027030327
        %v8059 = vmul.bf16 %v7931, 1027030327
        %v8060 = vmul.bf16 %v7932, 1027030327
        %v8061 = vmul.bf16 %v7933, 1027030327
        %v8062 = vmul.bf16 %v7934, 1027030327
        %v8063 = vmul.bf16 %v7935, 1027030327
        %v8064 = vmul.bf16 %v7936, 1027030327
        %v8065 = vmul.bf16 %v7937, 1027030327
        %v8066 = vmul.bf16 %v7938, 1027030327
        %v8067 = vmul.bf16 %v7939, 1027030327
        %v8068 = vmul.bf16 %v7940, 1027030327
        %v8069 = vmul.bf16 %v7941, 1027030327
        %v8070 = vmul.bf16 %v7942, 1027030327
        %v8071 = vmul.bf16 %v7943, 1027030327
        %v8072 = vmul.bf16 %v7944, 1027030327
        %v8073 = vadd.bf16 %v7561, %v7945
        %v8074 = vadd.bf16 %v7562, %v7946
        %v8075 = vadd.bf16 %v7563, %v7947
        %v8076 = vadd.bf16 %v7564, %v7948
        %v8077 = vadd.bf16 %v7565, %v7949
        %v8078 = vadd.bf16 %v7566, %v7950
        %v8079 = vadd.bf16 %v7567, %v7951
        %v8080 = vadd.bf16 %v7568, %v7952
        %v8081 = vadd.bf16 %v7569, %v7953
        %v8082 = vadd.bf16 %v7570, %v7954
        %v8083 = vadd.bf16 %v7571, %v7955
        %v8084 = vadd.bf16 %v7572, %v7956
        %v8085 = vadd.bf16 %v7573, %v7957
        %v8086 = vadd.bf16 %v7574, %v7958
        %v8087 = vadd.bf16 %v7575, %v7959
        %v8088 = vadd.bf16 %v7576, %v7960
        %v8089 = vadd.bf16 %v7577, %v7961
        %v8090 = vadd.bf16 %v7578, %v7962
        %v8091 = vadd.bf16 %v7579, %v7963
        %v8092 = vadd.bf16 %v7580, %v7964
        %v8093 = vadd.bf16 %v7581, %v7965
        %v8094 = vadd.bf16 %v7582, %v7966
        %v8095 = vadd.bf16 %v7583, %v7967
        %v8096 = vadd.bf16 %v7584, %v7968
        %v8097 = vadd.bf16 %v7585, %v7969
        %v8098 = vadd.bf16 %v7586, %v7970
        %v8099 = vadd.bf16 %v7587, %v7971
        %v8100 = vadd.bf16 %v7588, %v7972
        %v8101 = vadd.bf16 %v7589, %v7973
        %v8102 = vadd.bf16 %v7590, %v7974
        %v8103 = vadd.bf16 %v7591, %v7975
        %v8104 = vadd.bf16 %v7592, %v7976
        %v8105 = vadd.bf16 %v7593, %v7977
        %v8106 = vadd.bf16 %v7594, %v7978
        %v8107 = vadd.bf16 %v7595, %v7979
        %v8108 = vadd.bf16 %v7596, %v7980
        %v8109 = vadd.bf16 %v7597, %v7981
        %v8110 = vadd.bf16 %v7598, %v7982
        %v8111 = vadd.bf16 %v7599, %v7983
        %v8112 = vadd.bf16 %v7600, %v7984
        %v8113 = vadd.bf16 %v7601, %v7985
        %v8114 = vadd.bf16 %v7602, %v7986
        %v8115 = vadd.bf16 %v7603, %v7987
        %v8116 = vadd.bf16 %v7604, %v7988
        %v8117 = vadd.bf16 %v7605, %v7989
        %v8118 = vadd.bf16 %v7606, %v7990
        %v8119 = vadd.bf16 %v7607, %v7991
        %v8120 = vadd.bf16 %v7608, %v7992
        %v8121 = vadd.bf16 %v7609, %v7993
        %v8122 = vadd.bf16 %v7610, %v7994
        %v8123 = vadd.bf16 %v7611, %v7995
        %v8124 = vadd.bf16 %v7612, %v7996
        %v8125 = vadd.bf16 %v7613, %v7997
        %v8126 = vadd.bf16 %v7614, %v7998
        %v8127 = vadd.bf16 %v7615, %v7999
        %v8128 = vadd.bf16 %v7616, %v8000
        %v8129 = vadd.bf16 %v7617, %v8001
        %v8130 = vadd.bf16 %v7618, %v8002
        %v8131 = vadd.bf16 %v7619, %v8003
        %v8132 = vadd.bf16 %v7620, %v8004
        %v8133 = vadd.bf16 %v7621, %v8005
        %v8134 = vadd.bf16 %v7622, %v8006
        %v8135 = vadd.bf16 %v7623, %v8007
        %v8136 = vadd.bf16 %v7624, %v8008
        %v8137 = vadd.bf16 %v7625, %v8009
        %v8138 = vadd.bf16 %v7626, %v8010
        %v8139 = vadd.bf16 %v7627, %v8011
        %v8140 = vadd.bf16 %v7628, %v8012
        %v8141 = vadd.bf16 %v7629, %v8013
        %v8142 = vadd.bf16 %v7630, %v8014
        %v8143 = vadd.bf16 %v7631, %v8015
        %v8144 = vadd.bf16 %v7632, %v8016
        %v8145 = vadd.bf16 %v7633, %v8017
        %v8146 = vadd.bf16 %v7634, %v8018
        %v8147 = vadd.bf16 %v7635, %v8019
        %v8148 = vadd.bf16 %v7636, %v8020
        %v8149 = vadd.bf16 %v7637, %v8021
        %v8150 = vadd.bf16 %v7638, %v8022
        %v8151 = vadd.bf16 %v7639, %v8023
        %v8152 = vadd.bf16 %v7640, %v8024
        %v8153 = vadd.bf16 %v7641, %v8025
        %v8154 = vadd.bf16 %v7642, %v8026
        %v8155 = vadd.bf16 %v7643, %v8027
        %v8156 = vadd.bf16 %v7644, %v8028
        %v8157 = vadd.bf16 %v7645, %v8029
        %v8158 = vadd.bf16 %v7646, %v8030
        %v8159 = vadd.bf16 %v7647, %v8031
        %v8160 = vadd.bf16 %v7648, %v8032
        %v8161 = vadd.bf16 %v7649, %v8033
        %v8162 = vadd.bf16 %v7650, %v8034
        %v8163 = vadd.bf16 %v7651, %v8035
        %v8164 = vadd.bf16 %v7652, %v8036
        %v8165 = vadd.bf16 %v7653, %v8037
        %v8166 = vadd.bf16 %v7654, %v8038
        %v8167 = vadd.bf16 %v7655, %v8039
        %v8168 = vadd.bf16 %v7656, %v8040
        %v8169 = vadd.bf16 %v7657, %v8041
        %v8170 = vadd.bf16 %v7658, %v8042
        %v8171 = vadd.bf16 %v7659, %v8043
        %v8172 = vadd.bf16 %v7660, %v8044
        %v8173 = vadd.bf16 %v7661, %v8045
        %v8174 = vadd.bf16 %v7662, %v8046
        %v8175 = vadd.bf16 %v7663, %v8047
        %v8176 = vadd.bf16 %v7664, %v8048
        %v8177 = vadd.bf16 %v7665, %v8049
        %v8178 = vadd.bf16 %v7666, %v8050
        %v8179 = vadd.bf16 %v7667, %v8051
        %v8180 = vadd.bf16 %v7668, %v8052
        %v8181 = vadd.bf16 %v7669, %v8053
        %v8182 = vadd.bf16 %v7670, %v8054
        %v8183 = vadd.bf16 %v7671, %v8055
        %v8184 = vadd.bf16 %v7672, %v8056
        %v8185 = vadd.bf16 %v7673, %v8057
        %v8186 = vadd.bf16 %v7674, %v8058
        %v8187 = vadd.bf16 %v7675, %v8059
        %v8188 = vadd.bf16 %v7676, %v8060
        %v8189 = vadd.bf16 %v7677, %v8061
        %v8190 = vadd.bf16 %v7678, %v8062
        %v8191 = vadd.bf16 %v7679, %v8063
        %v8192 = vadd.bf16 %v7680, %v8064
        %v8193 = vadd.bf16 %v7681, %v8065
        %v8194 = vadd.bf16 %v7682, %v8066
        %v8195 = vadd.bf16 %v7683, %v8067
        %v8196 = vadd.bf16 %v7684, %v8068
        %v8197 = vadd.bf16 %v7685, %v8069
        %v8198 = vadd.bf16 %v7686, %v8070
        %v8199 = vadd.bf16 %v7687, %v8071
        %v8200 = vadd.bf16 %v7688, %v8072
        %v8201 = vmul.bf16 %v8073, 1061961548
        %v8202 = vmul.bf16 %v8074, 1061961548
        %v8203 = vmul.bf16 %v8075, 1061961548
        %v8204 = vmul.bf16 %v8076, 1061961548
        %v8205 = vmul.bf16 %v8077, 1061961548
        %v8206 = vmul.bf16 %v8078, 1061961548
        %v8207 = vmul.bf16 %v8079, 1061961548
        %v8208 = vmul.bf16 %v8080, 1061961548
        %v8209 = vmul.bf16 %v8081, 1061961548
        %v8210 = vmul.bf16 %v8082, 1061961548
        %v8211 = vmul.bf16 %v8083, 1061961548
        %v8212 = vmul.bf16 %v8084, 1061961548
        %v8213 = vmul.bf16 %v8085, 1061961548
        %v8214 = vmul.bf16 %v8086, 1061961548
        %v8215 = vmul.bf16 %v8087, 1061961548
        %v8216 = vmul.bf16 %v8088, 1061961548
        %v8217 = vmul.bf16 %v8089, 1061961548
        %v8218 = vmul.bf16 %v8090, 1061961548
        %v8219 = vmul.bf16 %v8091, 1061961548
        %v8220 = vmul.bf16 %v8092, 1061961548
        %v8221 = vmul.bf16 %v8093, 1061961548
        %v8222 = vmul.bf16 %v8094, 1061961548
        %v8223 = vmul.bf16 %v8095, 1061961548
        %v8224 = vmul.bf16 %v8096, 1061961548
        %v8225 = vmul.bf16 %v8097, 1061961548
        %v8226 = vmul.bf16 %v8098, 1061961548
        %v8227 = vmul.bf16 %v8099, 1061961548
        %v8228 = vmul.bf16 %v8100, 1061961548
        %v8229 = vmul.bf16 %v8101, 1061961548
        %v8230 = vmul.bf16 %v8102, 1061961548
        %v8231 = vmul.bf16 %v8103, 1061961548
        %v8232 = vmul.bf16 %v8104, 1061961548
        %v8233 = vmul.bf16 %v8105, 1061961548
        %v8234 = vmul.bf16 %v8106, 1061961548
        %v8235 = vmul.bf16 %v8107, 1061961548
        %v8236 = vmul.bf16 %v8108, 1061961548
        %v8237 = vmul.bf16 %v8109, 1061961548
        %v8238 = vmul.bf16 %v8110, 1061961548
        %v8239 = vmul.bf16 %v8111, 1061961548
        %v8240 = vmul.bf16 %v8112, 1061961548
        %v8241 = vmul.bf16 %v8113, 1061961548
        %v8242 = vmul.bf16 %v8114, 1061961548
        %v8243 = vmul.bf16 %v8115, 1061961548
        %v8244 = vmul.bf16 %v8116, 1061961548
        %v8245 = vmul.bf16 %v8117, 1061961548
        %v8246 = vmul.bf16 %v8118, 1061961548
        %v8247 = vmul.bf16 %v8119, 1061961548
        %v8248 = vmul.bf16 %v8120, 1061961548
        %v8249 = vmul.bf16 %v8121, 1061961548
        %v8250 = vmul.bf16 %v8122, 1061961548
        %v8251 = vmul.bf16 %v8123, 1061961548
        %v8252 = vmul.bf16 %v8124, 1061961548
        %v8253 = vmul.bf16 %v8125, 1061961548
        %v8254 = vmul.bf16 %v8126, 1061961548
        %v8255 = vmul.bf16 %v8127, 1061961548
        %v8256 = vmul.bf16 %v8128, 1061961548
        %v8257 = vmul.bf16 %v8129, 1061961548
        %v8258 = vmul.bf16 %v8130, 1061961548
        %v8259 = vmul.bf16 %v8131, 1061961548
        %v8260 = vmul.bf16 %v8132, 1061961548
        %v8261 = vmul.bf16 %v8133, 1061961548
        %v8262 = vmul.bf16 %v8134, 1061961548
        %v8263 = vmul.bf16 %v8135, 1061961548
        %v8264 = vmul.bf16 %v8136, 1061961548
        %v8265 = vmul.bf16 %v8137, 1061961548
        %v8266 = vmul.bf16 %v8138, 1061961548
        %v8267 = vmul.bf16 %v8139, 1061961548
        %v8268 = vmul.bf16 %v8140, 1061961548
        %v8269 = vmul.bf16 %v8141, 1061961548
        %v8270 = vmul.bf16 %v8142, 1061961548
        %v8271 = vmul.bf16 %v8143, 1061961548
        %v8272 = vmul.bf16 %v8144, 1061961548
        %v8273 = vmul.bf16 %v8145, 1061961548
        %v8274 = vmul.bf16 %v8146, 1061961548
        %v8275 = vmul.bf16 %v8147, 1061961548
        %v8276 = vmul.bf16 %v8148, 1061961548
        %v8277 = vmul.bf16 %v8149, 1061961548
        %v8278 = vmul.bf16 %v8150, 1061961548
        %v8279 = vmul.bf16 %v8151, 1061961548
        %v8280 = vmul.bf16 %v8152, 1061961548
        %v8281 = vmul.bf16 %v8153, 1061961548
        %v8282 = vmul.bf16 %v8154, 1061961548
        %v8283 = vmul.bf16 %v8155, 1061961548
        %v8284 = vmul.bf16 %v8156, 1061961548
        %v8285 = vmul.bf16 %v8157, 1061961548
        %v8286 = vmul.bf16 %v8158, 1061961548
        %v8287 = vmul.bf16 %v8159, 1061961548
        %v8288 = vmul.bf16 %v8160, 1061961548
        %v8289 = vmul.bf16 %v8161, 1061961548
        %v8290 = vmul.bf16 %v8162, 1061961548
        %v8291 = vmul.bf16 %v8163, 1061961548
        %v8292 = vmul.bf16 %v8164, 1061961548
        %v8293 = vmul.bf16 %v8165, 1061961548
        %v8294 = vmul.bf16 %v8166, 1061961548
        %v8295 = vmul.bf16 %v8167, 1061961548
        %v8296 = vmul.bf16 %v8168, 1061961548
        %v8297 = vmul.bf16 %v8169, 1061961548
        %v8298 = vmul.bf16 %v8170, 1061961548
        %v8299 = vmul.bf16 %v8171, 1061961548
        %v8300 = vmul.bf16 %v8172, 1061961548
        %v8301 = vmul.bf16 %v8173, 1061961548
        %v8302 = vmul.bf16 %v8174, 1061961548
        %v8303 = vmul.bf16 %v8175, 1061961548
        %v8304 = vmul.bf16 %v8176, 1061961548
        %v8305 = vmul.bf16 %v8177, 1061961548
        %v8306 = vmul.bf16 %v8178, 1061961548
        %v8307 = vmul.bf16 %v8179, 1061961548
        %v8308 = vmul.bf16 %v8180, 1061961548
        %v8309 = vmul.bf16 %v8181, 1061961548
        %v8310 = vmul.bf16 %v8182, 1061961548
        %v8311 = vmul.bf16 %v8183, 1061961548
        %v8312 = vmul.bf16 %v8184, 1061961548
        %v8313 = vmul.bf16 %v8185, 1061961548
        %v8314 = vmul.bf16 %v8186, 1061961548
        %v8315 = vmul.bf16 %v8187, 1061961548
        %v8316 = vmul.bf16 %v8188, 1061961548
        %v8317 = vmul.bf16 %v8189, 1061961548
        %v8318 = vmul.bf16 %v8190, 1061961548
        %v8319 = vmul.bf16 %v8191, 1061961548
        %v8320 = vmul.bf16 %v8192, 1061961548
        %v8321 = vmul.bf16 %v8193, 1061961548
        %v8322 = vmul.bf16 %v8194, 1061961548
        %v8323 = vmul.bf16 %v8195, 1061961548
        %v8324 = vmul.bf16 %v8196, 1061961548
        %v8325 = vmul.bf16 %v8197, 1061961548
        %v8326 = vmul.bf16 %v8198, 1061961548
        %v8327 = vmul.bf16 %v8199, 1061961548
        %v8328 = vmul.bf16 %v8200, 1061961548
        %v8329 = vtanh.bf16.pop %v8201
        %v8330 = vtanh.bf16.pop %v8202
        %v8331 = vtanh.bf16.pop %v8203
        %v8332 = vtanh.bf16.pop %v8204
        %v8333 = vtanh.bf16.pop %v8205
        %v8334 = vtanh.bf16.pop %v8206
        %v8335 = vtanh.bf16.pop %v8207
        %v8336 = vtanh.bf16.pop %v8208
        %v8337 = vtanh.bf16.pop %v8209
        %v8338 = vtanh.bf16.pop %v8210
        %v8339 = vtanh.bf16.pop %v8211
        %v8340 = vtanh.bf16.pop %v8212
        %v8341 = vtanh.bf16.pop %v8213
        %v8342 = vtanh.bf16.pop %v8214
        %v8343 = vtanh.bf16.pop %v8215
        %v8344 = vtanh.bf16.pop %v8216
        %v8345 = vtanh.bf16.pop %v8217
        %v8346 = vtanh.bf16.pop %v8218
        %v8347 = vtanh.bf16.pop %v8219
        %v8348 = vtanh.bf16.pop %v8220
        %v8349 = vtanh.bf16.pop %v8221
        %v8350 = vtanh.bf16.pop %v8222
        %v8351 = vtanh.bf16.pop %v8223
        %v8352 = vtanh.bf16.pop %v8224
        %v8353 = vtanh.bf16.pop %v8225
        %v8354 = vtanh.bf16.pop %v8226
        %v8355 = vtanh.bf16.pop %v8227
        %v8356 = vtanh.bf16.pop %v8228
        %v8357 = vtanh.bf16.pop %v8229
        %v8358 = vtanh.bf16.pop %v8230
        %v8359 = vtanh.bf16.pop %v8231
        %v8360 = vtanh.bf16.pop %v8232
        %v8361 = vtanh.bf16.pop %v8233
        %v8362 = vtanh.bf16.pop %v8234
        %v8363 = vtanh.bf16.pop %v8235
        %v8364 = vtanh.bf16.pop %v8236
        %v8365 = vtanh.bf16.pop %v8237
        %v8366 = vtanh.bf16.pop %v8238
        %v8367 = vtanh.bf16.pop %v8239
        %v8368 = vtanh.bf16.pop %v8240
        %v8369 = vtanh.bf16.pop %v8241
        %v8370 = vtanh.bf16.pop %v8242
        %v8371 = vtanh.bf16.pop %v8243
        %v8372 = vtanh.bf16.pop %v8244
        %v8373 = vtanh.bf16.pop %v8245
        %v8374 = vtanh.bf16.pop %v8246
        %v8375 = vtanh.bf16.pop %v8247
        %v8376 = vtanh.bf16.pop %v8248
        %v8377 = vtanh.bf16.pop %v8249
        %v8378 = vtanh.bf16.pop %v8250
        %v8379 = vtanh.bf16.pop %v8251
        %v8380 = vtanh.bf16.pop %v8252
        %v8381 = vtanh.bf16.pop %v8253
        %v8382 = vtanh.bf16.pop %v8254
        %v8383 = vtanh.bf16.pop %v8255
        %v8384 = vtanh.bf16.pop %v8256
        %v8385 = vtanh.bf16.pop %v8257
        %v8386 = vtanh.bf16.pop %v8258
        %v8387 = vtanh.bf16.pop %v8259
        %v8388 = vtanh.bf16.pop %v8260
        %v8389 = vtanh.bf16.pop %v8261
        %v8390 = vtanh.bf16.pop %v8262
        %v8391 = vtanh.bf16.pop %v8263
        %v8392 = vtanh.bf16.pop %v8264
        %v8393 = vtanh.bf16.pop %v8265
        %v8394 = vtanh.bf16.pop %v8266
        %v8395 = vtanh.bf16.pop %v8267
        %v8396 = vtanh.bf16.pop %v8268
        %v8397 = vtanh.bf16.pop %v8269
        %v8398 = vtanh.bf16.pop %v8270
        %v8399 = vtanh.bf16.pop %v8271
        %v8400 = vtanh.bf16.pop %v8272
        %v8401 = vtanh.bf16.pop %v8273
        %v8402 = vtanh.bf16.pop %v8274
        %v8403 = vtanh.bf16.pop %v8275
        %v8404 = vtanh.bf16.pop %v8276
        %v8405 = vtanh.bf16.pop %v8277
        %v8406 = vtanh.bf16.pop %v8278
        %v8407 = vtanh.bf16.pop %v8279
        %v8408 = vtanh.bf16.pop %v8280
        %v8409 = vtanh.bf16.pop %v8281
        %v8410 = vtanh.bf16.pop %v8282
        %v8411 = vtanh.bf16.pop %v8283
        %v8412 = vtanh.bf16.pop %v8284
        %v8413 = vtanh.bf16.pop %v8285
        %v8414 = vtanh.bf16.pop %v8286
        %v8415 = vtanh.bf16.pop %v8287
        %v8416 = vtanh.bf16.pop %v8288
        %v8417 = vtanh.bf16.pop %v8289
        %v8418 = vtanh.bf16.pop %v8290
        %v8419 = vtanh.bf16.pop %v8291
        %v8420 = vtanh.bf16.pop %v8292
        %v8421 = vtanh.bf16.pop %v8293
        %v8422 = vtanh.bf16.pop %v8294
        %v8423 = vtanh.bf16.pop %v8295
        %v8424 = vtanh.bf16.pop %v8296
        %v8425 = vtanh.bf16.pop %v8297
        %v8426 = vtanh.bf16.pop %v8298
        %v8427 = vtanh.bf16.pop %v8299
        %v8428 = vtanh.bf16.pop %v8300
        %v8429 = vtanh.bf16.pop %v8301
        %v8430 = vtanh.bf16.pop %v8302
        %v8431 = vtanh.bf16.pop %v8303
        %v8432 = vtanh.bf16.pop %v8304
        %v8433 = vtanh.bf16.pop %v8305
        %v8434 = vtanh.bf16.pop %v8306
        %v8435 = vtanh.bf16.pop %v8307
        %v8436 = vtanh.bf16.pop %v8308
        %v8437 = vtanh.bf16.pop %v8309
        %v8438 = vtanh.bf16.pop %v8310
        %v8439 = vtanh.bf16.pop %v8311
        %v8440 = vtanh.bf16.pop %v8312
        %v8441 = vtanh.bf16.pop %v8313
        %v8442 = vtanh.bf16.pop %v8314
        %v8443 = vtanh.bf16.pop %v8315
        %v8444 = vtanh.bf16.pop %v8316
        %v8445 = vtanh.bf16.pop %v8317
        %v8446 = vtanh.bf16.pop %v8318
        %v8447 = vtanh.bf16.pop %v8319
        %v8448 = vtanh.bf16.pop %v8320
        %v8449 = vtanh.bf16.pop %v8321
        %v8450 = vtanh.bf16.pop %v8322
        %v8451 = vtanh.bf16.pop %v8323
        %v8452 = vtanh.bf16.pop %v8324
        %v8453 = vtanh.bf16.pop %v8325
        %v8454 = vtanh.bf16.pop %v8326
        %v8455 = vtanh.bf16.pop %v8327
        %v8456 = vtanh.bf16.pop %v8328
        %v8457 = vadd.bf16 %v8329, 1065369472
        %v8458 = vadd.bf16 %v8330, 1065369472
        %v8459 = vadd.bf16 %v8331, 1065369472
        %v8460 = vadd.bf16 %v8332, 1065369472
        %v8461 = vadd.bf16 %v8333, 1065369472
        %v8462 = vadd.bf16 %v8334, 1065369472
        %v8463 = vadd.bf16 %v8335, 1065369472
        %v8464 = vadd.bf16 %v8336, 1065369472
        %v8465 = vadd.bf16 %v8337, 1065369472
        %v8466 = vadd.bf16 %v8338, 1065369472
        %v8467 = vadd.bf16 %v8339, 1065369472
        %v8468 = vadd.bf16 %v8340, 1065369472
        %v8469 = vadd.bf16 %v8341, 1065369472
        %v8470 = vadd.bf16 %v8342, 1065369472
        %v8471 = vadd.bf16 %v8343, 1065369472
        %v8472 = vadd.bf16 %v8344, 1065369472
        %v8473 = vadd.bf16 %v8345, 1065369472
        %v8474 = vadd.bf16 %v8346, 1065369472
        %v8475 = vadd.bf16 %v8347, 1065369472
        %v8476 = vadd.bf16 %v8348, 1065369472
        %v8477 = vadd.bf16 %v8349, 1065369472
        %v8478 = vadd.bf16 %v8350, 1065369472
        %v8479 = vadd.bf16 %v8351, 1065369472
        %v8480 = vadd.bf16 %v8352, 1065369472
        %v8481 = vadd.bf16 %v8353, 1065369472
        %v8482 = vadd.bf16 %v8354, 1065369472
        %v8483 = vadd.bf16 %v8355, 1065369472
        %v8484 = vadd.bf16 %v8356, 1065369472
        %v8485 = vadd.bf16 %v8357, 1065369472
        %v8486 = vadd.bf16 %v8358, 1065369472
        %v8487 = vadd.bf16 %v8359, 1065369472
        %v8488 = vadd.bf16 %v8360, 1065369472
        %v8489 = vadd.bf16 %v8361, 1065369472
        %v8490 = vadd.bf16 %v8362, 1065369472
        %v8491 = vadd.bf16 %v8363, 1065369472
        %v8492 = vadd.bf16 %v8364, 1065369472
        %v8493 = vadd.bf16 %v8365, 1065369472
        %v8494 = vadd.bf16 %v8366, 1065369472
        %v8495 = vadd.bf16 %v8367, 1065369472
        %v8496 = vadd.bf16 %v8368, 1065369472
        %v8497 = vadd.bf16 %v8369, 1065369472
        %v8498 = vadd.bf16 %v8370, 1065369472
        %v8499 = vadd.bf16 %v8371, 1065369472
        %v8500 = vadd.bf16 %v8372, 1065369472
        %v8501 = vadd.bf16 %v8373, 1065369472
        %v8502 = vadd.bf16 %v8374, 1065369472
        %v8503 = vadd.bf16 %v8375, 1065369472
        %v8504 = vadd.bf16 %v8376, 1065369472
        %v8505 = vadd.bf16 %v8377, 1065369472
        %v8506 = vadd.bf16 %v8378, 1065369472
        %v8507 = vadd.bf16 %v8379, 1065369472
        %v8508 = vadd.bf16 %v8380, 1065369472
        %v8509 = vadd.bf16 %v8381, 1065369472
        %v8510 = vadd.bf16 %v8382, 1065369472
        %v8511 = vadd.bf16 %v8383, 1065369472
        %v8512 = vadd.bf16 %v8384, 1065369472
        %v8513 = vadd.bf16 %v8385, 1065369472
        %v8514 = vadd.bf16 %v8386, 1065369472
        %v8515 = vadd.bf16 %v8387, 1065369472
        %v8516 = vadd.bf16 %v8388, 1065369472
        %v8517 = vadd.bf16 %v8389, 1065369472
        %v8518 = vadd.bf16 %v8390, 1065369472
        %v8519 = vadd.bf16 %v8391, 1065369472
        %v8520 = vadd.bf16 %v8392, 1065369472
        %v8521 = vadd.bf16 %v8393, 1065369472
        %v8522 = vadd.bf16 %v8394, 1065369472
        %v8523 = vadd.bf16 %v8395, 1065369472
        %v8524 = vadd.bf16 %v8396, 1065369472
        %v8525 = vadd.bf16 %v8397, 1065369472
        %v8526 = vadd.bf16 %v8398, 1065369472
        %v8527 = vadd.bf16 %v8399, 1065369472
        %v8528 = vadd.bf16 %v8400, 1065369472
        %v8529 = vadd.bf16 %v8401, 1065369472
        %v8530 = vadd.bf16 %v8402, 1065369472
        %v8531 = vadd.bf16 %v8403, 1065369472
        %v8532 = vadd.bf16 %v8404, 1065369472
        %v8533 = vadd.bf16 %v8405, 1065369472
        %v8534 = vadd.bf16 %v8406, 1065369472
        %v8535 = vadd.bf16 %v8407, 1065369472
        %v8536 = vadd.bf16 %v8408, 1065369472
        %v8537 = vadd.bf16 %v8409, 1065369472
        %v8538 = vadd.bf16 %v8410, 1065369472
        %v8539 = vadd.bf16 %v8411, 1065369472
        %v8540 = vadd.bf16 %v8412, 1065369472
        %v8541 = vadd.bf16 %v8413, 1065369472
        %v8542 = vadd.bf16 %v8414, 1065369472
        %v8543 = vadd.bf16 %v8415, 1065369472
        %v8544 = vadd.bf16 %v8416, 1065369472
        %v8545 = vadd.bf16 %v8417, 1065369472
        %v8546 = vadd.bf16 %v8418, 1065369472
        %v8547 = vadd.bf16 %v8419, 1065369472
        %v8548 = vadd.bf16 %v8420, 1065369472
        %v8549 = vadd.bf16 %v8421, 1065369472
        %v8550 = vadd.bf16 %v8422, 1065369472
        %v8551 = vadd.bf16 %v8423, 1065369472
        %v8552 = vadd.bf16 %v8424, 1065369472
        %v8553 = vadd.bf16 %v8425, 1065369472
        %v8554 = vadd.bf16 %v8426, 1065369472
        %v8555 = vadd.bf16 %v8427, 1065369472
        %v8556 = vadd.bf16 %v8428, 1065369472
        %v8557 = vadd.bf16 %v8429, 1065369472
        %v8558 = vadd.bf16 %v8430, 1065369472
        %v8559 = vadd.bf16 %v8431, 1065369472
        %v8560 = vadd.bf16 %v8432, 1065369472
        %v8561 = vadd.bf16 %v8433, 1065369472
        %v8562 = vadd.bf16 %v8434, 1065369472
        %v8563 = vadd.bf16 %v8435, 1065369472
        %v8564 = vadd.bf16 %v8436, 1065369472
        %v8565 = vadd.bf16 %v8437, 1065369472
        %v8566 = vadd.bf16 %v8438, 1065369472
        %v8567 = vadd.bf16 %v8439, 1065369472
        %v8568 = vadd.bf16 %v8440, 1065369472
        %v8569 = vadd.bf16 %v8441, 1065369472
        %v8570 = vadd.bf16 %v8442, 1065369472
        %v8571 = vadd.bf16 %v8443, 1065369472
        %v8572 = vadd.bf16 %v8444, 1065369472
        %v8573 = vadd.bf16 %v8445, 1065369472
        %v8574 = vadd.bf16 %v8446, 1065369472
        %v8575 = vadd.bf16 %v8447, 1065369472
        %v8576 = vadd.bf16 %v8448, 1065369472
        %v8577 = vadd.bf16 %v8449, 1065369472
        %v8578 = vadd.bf16 %v8450, 1065369472
        %v8579 = vadd.bf16 %v8451, 1065369472
        %v8580 = vadd.bf16 %v8452, 1065369472
        %v8581 = vadd.bf16 %v8453, 1065369472
        %v8582 = vadd.bf16 %v8454, 1065369472
        %v8583 = vadd.bf16 %v8455, 1065369472
        %v8584 = vadd.bf16 %v8456, 1065369472
        %v8585 = vmul.bf16 %v8457, 1056980736
        %v8586 = vmul.bf16 %v8458, 1056980736
        %v8587 = vmul.bf16 %v8459, 1056980736
        %v8588 = vmul.bf16 %v8460, 1056980736
        %v8589 = vmul.bf16 %v8461, 1056980736
        %v8590 = vmul.bf16 %v8462, 1056980736
        %v8591 = vmul.bf16 %v8463, 1056980736
        %v8592 = vmul.bf16 %v8464, 1056980736
        %v8593 = vmul.bf16 %v8465, 1056980736
        %v8594 = vmul.bf16 %v8466, 1056980736
        %v8595 = vmul.bf16 %v8467, 1056980736
        %v8596 = vmul.bf16 %v8468, 1056980736
        %v8597 = vmul.bf16 %v8469, 1056980736
        %v8598 = vmul.bf16 %v8470, 1056980736
        %v8599 = vmul.bf16 %v8471, 1056980736
        %v8600 = vmul.bf16 %v8472, 1056980736
        %v8601 = vmul.bf16 %v8473, 1056980736
        %v8602 = vmul.bf16 %v8474, 1056980736
        %v8603 = vmul.bf16 %v8475, 1056980736
        %v8604 = vmul.bf16 %v8476, 1056980736
        %v8605 = vmul.bf16 %v8477, 1056980736
        %v8606 = vmul.bf16 %v8478, 1056980736
        %v8607 = vmul.bf16 %v8479, 1056980736
        %v8608 = vmul.bf16 %v8480, 1056980736
        %v8609 = vmul.bf16 %v8481, 1056980736
        %v8610 = vmul.bf16 %v8482, 1056980736
        %v8611 = vmul.bf16 %v8483, 1056980736
        %v8612 = vmul.bf16 %v8484, 1056980736
        %v8613 = vmul.bf16 %v8485, 1056980736
        %v8614 = vmul.bf16 %v8486, 1056980736
        %v8615 = vmul.bf16 %v8487, 1056980736
        %v8616 = vmul.bf16 %v8488, 1056980736
        %v8617 = vmul.bf16 %v8489, 1056980736
        %v8618 = vmul.bf16 %v8490, 1056980736
        %v8619 = vmul.bf16 %v8491, 1056980736
        %v8620 = vmul.bf16 %v8492, 1056980736
        %v8621 = vmul.bf16 %v8493, 1056980736
        %v8622 = vmul.bf16 %v8494, 1056980736
        %v8623 = vmul.bf16 %v8495, 1056980736
        %v8624 = vmul.bf16 %v8496, 1056980736
        %v8625 = vmul.bf16 %v8497, 1056980736
        %v8626 = vmul.bf16 %v8498, 1056980736
        %v8627 = vmul.bf16 %v8499, 1056980736
        %v8628 = vmul.bf16 %v8500, 1056980736
        %v8629 = vmul.bf16 %v8501, 1056980736
        %v8630 = vmul.bf16 %v8502, 1056980736
        %v8631 = vmul.bf16 %v8503, 1056980736
        %v8632 = vmul.bf16 %v8504, 1056980736
        %v8633 = vmul.bf16 %v8505, 1056980736
        %v8634 = vmul.bf16 %v8506, 1056980736
        %v8635 = vmul.bf16 %v8507, 1056980736
        %v8636 = vmul.bf16 %v8508, 1056980736
        %v8637 = vmul.bf16 %v8509, 1056980736
        %v8638 = vmul.bf16 %v8510, 1056980736
        %v8639 = vmul.bf16 %v8511, 1056980736
        %v8640 = vmul.bf16 %v8512, 1056980736
        %v8641 = vmul.bf16 %v8513, 1056980736
        %v8642 = vmul.bf16 %v8514, 1056980736
        %v8643 = vmul.bf16 %v8515, 1056980736
        %v8644 = vmul.bf16 %v8516, 1056980736
        %v8645 = vmul.bf16 %v8517, 1056980736
        %v8646 = vmul.bf16 %v8518, 1056980736
        %v8647 = vmul.bf16 %v8519, 1056980736
        %v8648 = vmul.bf16 %v8520, 1056980736
        %v8649 = vmul.bf16 %v8521, 1056980736
        %v8650 = vmul.bf16 %v8522, 1056980736
        %v8651 = vmul.bf16 %v8523, 1056980736
        %v8652 = vmul.bf16 %v8524, 1056980736
        %v8653 = vmul.bf16 %v8525, 1056980736
        %v8654 = vmul.bf16 %v8526, 1056980736
        %v8655 = vmul.bf16 %v8527, 1056980736
        %v8656 = vmul.bf16 %v8528, 1056980736
        %v8657 = vmul.bf16 %v8529, 1056980736
        %v8658 = vmul.bf16 %v8530, 1056980736
        %v8659 = vmul.bf16 %v8531, 1056980736
        %v8660 = vmul.bf16 %v8532, 1056980736
        %v8661 = vmul.bf16 %v8533, 1056980736
        %v8662 = vmul.bf16 %v8534, 1056980736
        %v8663 = vmul.bf16 %v8535, 1056980736
        %v8664 = vmul.bf16 %v8536, 1056980736
        %v8665 = vmul.bf16 %v8537, 1056980736
        %v8666 = vmul.bf16 %v8538, 1056980736
        %v8667 = vmul.bf16 %v8539, 1056980736
        %v8668 = vmul.bf16 %v8540, 1056980736
        %v8669 = vmul.bf16 %v8541, 1056980736
        %v8670 = vmul.bf16 %v8542, 1056980736
        %v8671 = vmul.bf16 %v8543, 1056980736
        %v8672 = vmul.bf16 %v8544, 1056980736
        %v8673 = vmul.bf16 %v8545, 1056980736
        %v8674 = vmul.bf16 %v8546, 1056980736
        %v8675 = vmul.bf16 %v8547, 1056980736
        %v8676 = vmul.bf16 %v8548, 1056980736
        %v8677 = vmul.bf16 %v8549, 1056980736
        %v8678 = vmul.bf16 %v8550, 1056980736
        %v8679 = vmul.bf16 %v8551, 1056980736
        %v8680 = vmul.bf16 %v8552, 1056980736
        %v8681 = vmul.bf16 %v8553, 1056980736
        %v8682 = vmul.bf16 %v8554, 1056980736
        %v8683 = vmul.bf16 %v8555, 1056980736
        %v8684 = vmul.bf16 %v8556, 1056980736
        %v8685 = vmul.bf16 %v8557, 1056980736
        %v8686 = vmul.bf16 %v8558, 1056980736
        %v8687 = vmul.bf16 %v8559, 1056980736
        %v8688 = vmul.bf16 %v8560, 1056980736
        %v8689 = vmul.bf16 %v8561, 1056980736
        %v8690 = vmul.bf16 %v8562, 1056980736
        %v8691 = vmul.bf16 %v8563, 1056980736
        %v8692 = vmul.bf16 %v8564, 1056980736
        %v8693 = vmul.bf16 %v8565, 1056980736
        %v8694 = vmul.bf16 %v8566, 1056980736
        %v8695 = vmul.bf16 %v8567, 1056980736
        %v8696 = vmul.bf16 %v8568, 1056980736
        %v8697 = vmul.bf16 %v8569, 1056980736
        %v8698 = vmul.bf16 %v8570, 1056980736
        %v8699 = vmul.bf16 %v8571, 1056980736
        %v8700 = vmul.bf16 %v8572, 1056980736
        %v8701 = vmul.bf16 %v8573, 1056980736
        %v8702 = vmul.bf16 %v8574, 1056980736
        %v8703 = vmul.bf16 %v8575, 1056980736
        %v8704 = vmul.bf16 %v8576, 1056980736
        %v8705 = vmul.bf16 %v8577, 1056980736
        %v8706 = vmul.bf16 %v8578, 1056980736
        %v8707 = vmul.bf16 %v8579, 1056980736
        %v8708 = vmul.bf16 %v8580, 1056980736
        %v8709 = vmul.bf16 %v8581, 1056980736
        %v8710 = vmul.bf16 %v8582, 1056980736
        %v8711 = vmul.bf16 %v8583, 1056980736
        %v8712 = vmul.bf16 %v8584, 1056980736
        %v8713 = vmul.bf16 %v7561, %v8585
        %v8714 = vmul.bf16 %v7562, %v8586
        %v8715 = vmul.bf16 %v7563, %v8587
        %v8716 = vmul.bf16 %v7564, %v8588
        %v8717 = vmul.bf16 %v7565, %v8589
        %v8718 = vmul.bf16 %v7566, %v8590
        %v8719 = vmul.bf16 %v7567, %v8591
        %v8720 = vmul.bf16 %v7568, %v8592
        %v8721 = vmul.bf16 %v7569, %v8593
        %v8722 = vmul.bf16 %v7570, %v8594
        %v8723 = vmul.bf16 %v7571, %v8595
        %v8724 = vmul.bf16 %v7572, %v8596
        %v8725 = vmul.bf16 %v7573, %v8597
        %v8726 = vmul.bf16 %v7574, %v8598
        %v8727 = vmul.bf16 %v7575, %v8599
        %v8728 = vmul.bf16 %v7576, %v8600
        %v8729 = vmul.bf16 %v7577, %v8601
        %v8730 = vmul.bf16 %v7578, %v8602
        %v8731 = vmul.bf16 %v7579, %v8603
        %v8732 = vmul.bf16 %v7580, %v8604
        %v8733 = vmul.bf16 %v7581, %v8605
        %v8734 = vmul.bf16 %v7582, %v8606
        %v8735 = vmul.bf16 %v7583, %v8607
        %v8736 = vmul.bf16 %v7584, %v8608
        %v8737 = vmul.bf16 %v7585, %v8609
        %v8738 = vmul.bf16 %v7586, %v8610
        %v8739 = vmul.bf16 %v7587, %v8611
        %v8740 = vmul.bf16 %v7588, %v8612
        %v8741 = vmul.bf16 %v7589, %v8613
        %v8742 = vmul.bf16 %v7590, %v8614
        %v8743 = vmul.bf16 %v7591, %v8615
        %v8744 = vmul.bf16 %v7592, %v8616
        %v8745 = vmul.bf16 %v7593, %v8617
        %v8746 = vmul.bf16 %v7594, %v8618
        %v8747 = vmul.bf16 %v7595, %v8619
        %v8748 = vmul.bf16 %v7596, %v8620
        %v8749 = vmul.bf16 %v7597, %v8621
        %v8750 = vmul.bf16 %v7598, %v8622
        %v8751 = vmul.bf16 %v7599, %v8623
        %v8752 = vmul.bf16 %v7600, %v8624
        %v8753 = vmul.bf16 %v7601, %v8625
        %v8754 = vmul.bf16 %v7602, %v8626
        %v8755 = vmul.bf16 %v7603, %v8627
        %v8756 = vmul.bf16 %v7604, %v8628
        %v8757 = vmul.bf16 %v7605, %v8629
        %v8758 = vmul.bf16 %v7606, %v8630
        %v8759 = vmul.bf16 %v7607, %v8631
        %v8760 = vmul.bf16 %v7608, %v8632
        %v8761 = vmul.bf16 %v7609, %v8633
        %v8762 = vmul.bf16 %v7610, %v8634
        %v8763 = vmul.bf16 %v7611, %v8635
        %v8764 = vmul.bf16 %v7612, %v8636
        %v8765 = vmul.bf16 %v7613, %v8637
        %v8766 = vmul.bf16 %v7614, %v8638
        %v8767 = vmul.bf16 %v7615, %v8639
        %v8768 = vmul.bf16 %v7616, %v8640
        %v8769 = vmul.bf16 %v7617, %v8641
        %v8770 = vmul.bf16 %v7618, %v8642
        %v8771 = vmul.bf16 %v7619, %v8643
        %v8772 = vmul.bf16 %v7620, %v8644
        %v8773 = vmul.bf16 %v7621, %v8645
        %v8774 = vmul.bf16 %v7622, %v8646
        %v8775 = vmul.bf16 %v7623, %v8647
        %v8776 = vmul.bf16 %v7624, %v8648
        %v8777 = vmul.bf16 %v7625, %v8649
        %v8778 = vmul.bf16 %v7626, %v8650
        %v8779 = vmul.bf16 %v7627, %v8651
        %v8780 = vmul.bf16 %v7628, %v8652
        %v8781 = vmul.bf16 %v7629, %v8653
        %v8782 = vmul.bf16 %v7630, %v8654
        %v8783 = vmul.bf16 %v7631, %v8655
        %v8784 = vmul.bf16 %v7632, %v8656
        %v8785 = vmul.bf16 %v7633, %v8657
        %v8786 = vmul.bf16 %v7634, %v8658
        %v8787 = vmul.bf16 %v7635, %v8659
        %v8788 = vmul.bf16 %v7636, %v8660
        %v8789 = vmul.bf16 %v7637, %v8661
        %v8790 = vmul.bf16 %v7638, %v8662
        %v8791 = vmul.bf16 %v7639, %v8663
        %v8792 = vmul.bf16 %v7640, %v8664
        %v8793 = vmul.bf16 %v7641, %v8665
        %v8794 = vmul.bf16 %v7642, %v8666
        %v8795 = vmul.bf16 %v7643, %v8667
        %v8796 = vmul.bf16 %v7644, %v8668
        %v8797 = vmul.bf16 %v7645, %v8669
        %v8798 = vmul.bf16 %v7646, %v8670
        %v8799 = vmul.bf16 %v7647, %v8671
        %v8800 = vmul.bf16 %v7648, %v8672
        %v8801 = vmul.bf16 %v7649, %v8673
        %v8802 = vmul.bf16 %v7650, %v8674
        %v8803 = vmul.bf16 %v7651, %v8675
        %v8804 = vmul.bf16 %v7652, %v8676
        %v8805 = vmul.bf16 %v7653, %v8677
        %v8806 = vmul.bf16 %v7654, %v8678
        %v8807 = vmul.bf16 %v7655, %v8679
        %v8808 = vmul.bf16 %v7656, %v8680
        %v8809 = vmul.bf16 %v7657, %v8681
        %v8810 = vmul.bf16 %v7658, %v8682
        %v8811 = vmul.bf16 %v7659, %v8683
        %v8812 = vmul.bf16 %v7660, %v8684
        %v8813 = vmul.bf16 %v7661, %v8685
        %v8814 = vmul.bf16 %v7662, %v8686
        %v8815 = vmul.bf16 %v7663, %v8687
        %v8816 = vmul.bf16 %v7664, %v8688
        %v8817 = vmul.bf16 %v7665, %v8689
        %v8818 = vmul.bf16 %v7666, %v8690
        %v8819 = vmul.bf16 %v7667, %v8691
        %v8820 = vmul.bf16 %v7668, %v8692
        %v8821 = vmul.bf16 %v7669, %v8693
        %v8822 = vmul.bf16 %v7670, %v8694
        %v8823 = vmul.bf16 %v7671, %v8695
        %v8824 = vmul.bf16 %v7672, %v8696
        %v8825 = vmul.bf16 %v7673, %v8697
        %v8826 = vmul.bf16 %v7674, %v8698
        %v8827 = vmul.bf16 %v7675, %v8699
        %v8828 = vmul.bf16 %v7676, %v8700
        %v8829 = vmul.bf16 %v7677, %v8701
        %v8830 = vmul.bf16 %v7678, %v8702
        %v8831 = vmul.bf16 %v7679, %v8703
        %v8832 = vmul.bf16 %v7680, %v8704
        %v8833 = vmul.bf16 %v7681, %v8705
        %v8834 = vmul.bf16 %v7682, %v8706
        %v8835 = vmul.bf16 %v7683, %v8707
        %v8836 = vmul.bf16 %v7684, %v8708
        %v8837 = vmul.bf16 %v7685, %v8709
        %v8838 = vmul.bf16 %v7686, %v8710
        %v8839 = vmul.bf16 %v7687, %v8711
        %v8840 = vmul.bf16 %v7688, %v8712
        %v8841 = vld [vmem:[%s581] sm:$0xff]
        %v8842 = vld [vmem:[%s581 + $0x8] sm:$0xff]
        %v8843 = vld [vmem:[%s581 + $0x10] sm:$0xff]
        %v8844 = vld [vmem:[%s581 + $0x18] sm:$0xff]
        %v8845 = vld [vmem:[%s581 + $0x20] sm:$0xff]
        %v8846 = vld [vmem:[%s581 + $0x28] sm:$0xff]
        %v8847 = vld [vmem:[%s581 + $0x30] sm:$0xff]
        %v8848 = vld [vmem:[%s581 + $0x38] sm:$0xff]
        %v8849 = vld [vmem:[%s581 + $0x40] sm:$0xff]
        %v8850 = vld [vmem:[%s581 + $0x48] sm:$0xff]
        %v8851 = vld [vmem:[%s581 + $0x50] sm:$0xff]
        %v8852 = vld [vmem:[%s581 + $0x58] sm:$0xff]
        %v8853 = vld [vmem:[%s581 + $0x60] sm:$0xff]
        %v8854 = vld [vmem:[%s581 + $0x68] sm:$0xff]
        %v8855 = vld [vmem:[%s581 + $0x70] sm:$0xff]
        %v8856 = vld [vmem:[%s581 + $0x78] sm:$0xff]
        %v8857 = vld [vmem:[%s581 + $0x80] sm:$0xff]
        %v8858 = vld [vmem:[%s581 + $0x88] sm:$0xff]
        %v8859 = vld [vmem:[%s581 + $0x90] sm:$0xff]
        %v8860 = vld [vmem:[%s581 + $0x98] sm:$0xff]
        %v8861 = vld [vmem:[%s581 + $0xa0] sm:$0xff]
        %v8862 = vld [vmem:[%s581 + $0xa8] sm:$0xff]
        %v8863 = vld [vmem:[%s581 + $0xb0] sm:$0xff]
        %v8864 = vld [vmem:[%s581 + $0xb8] sm:$0xff]
        %v8865 = vld [vmem:[%s581 + $0xc0] sm:$0xff]
        %v8866 = vld [vmem:[%s581 + $0xc8] sm:$0xff]
        %v8867 = vld [vmem:[%s581 + $0xd0] sm:$0xff]
        %v8868 = vld [vmem:[%s581 + $0xd8] sm:$0xff]
        %v8869 = vld [vmem:[%s581 + $0xe0] sm:$0xff]
        %v8870 = vld [vmem:[%s581 + $0xe8] sm:$0xff]
        %v8871 = vld [vmem:[%s581 + $0xf0] sm:$0xff]
        %v8872 = vld [vmem:[%s581 + $0xf8] sm:$0xff]
        %v8873 = vld [vmem:[%s581 + $0x100] sm:$0xff]
        %v8874 = vld [vmem:[%s581 + $0x108] sm:$0xff]
        %v8875 = vld [vmem:[%s581 + $0x110] sm:$0xff]
        %v8876 = vld [vmem:[%s581 + $0x118] sm:$0xff]
        %v8877 = vld [vmem:[%s581 + $0x120] sm:$0xff]
        %v8878 = vld [vmem:[%s581 + $0x128] sm:$0xff]
        %v8879 = vld [vmem:[%s581 + $0x130] sm:$0xff]
        %v8880 = vld [vmem:[%s581 + $0x138] sm:$0xff]
        %v8881 = vld [vmem:[%s581 + $0x140] sm:$0xff]
        %v8882 = vld [vmem:[%s581 + $0x148] sm:$0xff]
        %v8883 = vld [vmem:[%s581 + $0x150] sm:$0xff]
        %v8884 = vld [vmem:[%s581 + $0x158] sm:$0xff]
        %v8885 = vld [vmem:[%s581 + $0x160] sm:$0xff]
        %v8886 = vld [vmem:[%s581 + $0x168] sm:$0xff]
        %v8887 = vld [vmem:[%s581 + $0x170] sm:$0xff]
        %v8888 = vld [vmem:[%s581 + $0x178] sm:$0xff]
        %v8889 = vld [vmem:[%s581 + $0x180] sm:$0xff]
        %v8890 = vld [vmem:[%s581 + $0x188] sm:$0xff]
        %v8891 = vld [vmem:[%s581 + $0x190] sm:$0xff]
        %v8892 = vld [vmem:[%s581 + $0x198] sm:$0xff]
        %v8893 = vld [vmem:[%s581 + $0x1a0] sm:$0xff]
        %v8894 = vld [vmem:[%s581 + $0x1a8] sm:$0xff]
        %v8895 = vld [vmem:[%s581 + $0x1b0] sm:$0xff]
        %v8896 = vld [vmem:[%s581 + $0x1b8] sm:$0xff]
        %v8897 = vld [vmem:[%s581 + $0x1c0] sm:$0xff]
        %v8898 = vld [vmem:[%s581 + $0x1c8] sm:$0xff]
        %v8899 = vld [vmem:[%s581 + $0x1d0] sm:$0xff]
        %v8900 = vld [vmem:[%s581 + $0x1d8] sm:$0xff]
        %v8901 = vld [vmem:[%s581 + $0x1e0] sm:$0xff]
        %v8902 = vld [vmem:[%s581 + $0x1e8] sm:$0xff]
        %v8903 = vld [vmem:[%s581 + $0x1f0] sm:$0xff]
        %v8904 = vld [vmem:[%s581 + $0x1f8] sm:$0xff]
        %v8905 = vld [vmem:[%s581 + $0x200] sm:$0xff]
        %v8906 = vld [vmem:[%s581 + $0x208] sm:$0xff]
        %v8907 = vld [vmem:[%s581 + $0x210] sm:$0xff]
        %v8908 = vld [vmem:[%s581 + $0x218] sm:$0xff]
        %v8909 = vld [vmem:[%s581 + $0x220] sm:$0xff]
        %v8910 = vld [vmem:[%s581 + $0x228] sm:$0xff]
        %v8911 = vld [vmem:[%s581 + $0x230] sm:$0xff]
        %v8912 = vld [vmem:[%s581 + $0x238] sm:$0xff]
        %v8913 = vld [vmem:[%s581 + $0x240] sm:$0xff]
        %v8914 = vld [vmem:[%s581 + $0x248] sm:$0xff]
        %v8915 = vld [vmem:[%s581 + $0x250] sm:$0xff]
        %v8916 = vld [vmem:[%s581 + $0x258] sm:$0xff]
        %v8917 = vld [vmem:[%s581 + $0x260] sm:$0xff]
        %v8918 = vld [vmem:[%s581 + $0x268] sm:$0xff]
        %v8919 = vld [vmem:[%s581 + $0x270] sm:$0xff]
        %v8920 = vld [vmem:[%s581 + $0x278] sm:$0xff]
        %v8921 = vld [vmem:[%s581 + $0x280] sm:$0xff]
        %v8922 = vld [vmem:[%s581 + $0x288] sm:$0xff]
        %v8923 = vld [vmem:[%s581 + $0x290] sm:$0xff]
        %v8924 = vld [vmem:[%s581 + $0x298] sm:$0xff]
        %v8925 = vld [vmem:[%s581 + $0x2a0] sm:$0xff]
        %v8926 = vld [vmem:[%s581 + $0x2a8] sm:$0xff]
        %v8927 = vld [vmem:[%s581 + $0x2b0] sm:$0xff]
        %v8928 = vld [vmem:[%s581 + $0x2b8] sm:$0xff]
        %v8929 = vld [vmem:[%s581 + $0x2c0] sm:$0xff]
        %v8930 = vld [vmem:[%s581 + $0x2c8] sm:$0xff]
        %v8931 = vld [vmem:[%s581 + $0x2d0] sm:$0xff]
        %v8932 = vld [vmem:[%s581 + $0x2d8] sm:$0xff]
        %v8933 = vld [vmem:[%s581 + $0x2e0] sm:$0xff]
        %v8934 = vld [vmem:[%s581 + $0x2e8] sm:$0xff]
        %v8935 = vld [vmem:[%s581 + $0x2f0] sm:$0xff]
        %v8936 = vld [vmem:[%s581 + $0x2f8] sm:$0xff]
        %v8937 = vld [vmem:[%s581 + $0x300] sm:$0xff]
        %v8938 = vld [vmem:[%s581 + $0x308] sm:$0xff]
        %v8939 = vld [vmem:[%s581 + $0x310] sm:$0xff]
        %v8940 = vld [vmem:[%s581 + $0x318] sm:$0xff]
        %v8941 = vld [vmem:[%s581 + $0x320] sm:$0xff]
        %v8942 = vld [vmem:[%s581 + $0x328] sm:$0xff]
        %v8943 = vld [vmem:[%s581 + $0x330] sm:$0xff]
        %v8944 = vld [vmem:[%s581 + $0x338] sm:$0xff]
        %v8945 = vld [vmem:[%s581 + $0x340] sm:$0xff]
        %v8946 = vld [vmem:[%s581 + $0x348] sm:$0xff]
        %v8947 = vld [vmem:[%s581 + $0x350] sm:$0xff]
        %v8948 = vld [vmem:[%s581 + $0x358] sm:$0xff]
        %v8949 = vld [vmem:[%s581 + $0x360] sm:$0xff]
        %v8950 = vld [vmem:[%s581 + $0x368] sm:$0xff]
        %v8951 = vld [vmem:[%s581 + $0x370] sm:$0xff]
        %v8952 = vld [vmem:[%s581 + $0x378] sm:$0xff]
        %v8953 = vld [vmem:[%s581 + $0x380] sm:$0xff]
        %v8954 = vld [vmem:[%s581 + $0x388] sm:$0xff]
        %v8955 = vld [vmem:[%s581 + $0x390] sm:$0xff]
        %v8956 = vld [vmem:[%s581 + $0x398] sm:$0xff]
        %v8957 = vld [vmem:[%s581 + $0x3a0] sm:$0xff]
        %v8958 = vld [vmem:[%s581 + $0x3a8] sm:$0xff]
        %v8959 = vld [vmem:[%s581 + $0x3b0] sm:$0xff]
        %v8960 = vld [vmem:[%s581 + $0x3b8] sm:$0xff]
        %v8961 = vld [vmem:[%s581 + $0x3c0] sm:$0xff]
        %v8962 = vld [vmem:[%s581 + $0x3c8] sm:$0xff]
        %v8963 = vld [vmem:[%s581 + $0x3d0] sm:$0xff]
        %v8964 = vld [vmem:[%s581 + $0x3d8] sm:$0xff]
        %v8965 = vld [vmem:[%s581 + $0x3e0] sm:$0xff]
        %v8966 = vld [vmem:[%s581 + $0x3e8] sm:$0xff]
        %v8967 = vld [vmem:[%s581 + $0x3f0] sm:$0xff]
        %v8968 = vld [vmem:[%s581 + $0x3f8] sm:$0xff]
        %v8969 = vld [vmem:[%s671] sm:$0x3]
        %v8971 = vlaneseq
        %v8972 = vshrl.u32 %v8971, 7
        %v8973 = vsub.s32 0, %v8972
        %v8974 = vrot.slane %v8969, %v8973
        %v8975 = vlaneseq
        %v8976 = vshrl.u32 %v8975, 7
        %v8977 = vsub.s32 1, %v8976
        %v8978 = vrot.slane %v8969, %v8977
        %v9109 = vunpack.c.l.b16 %v8841
        %v9110 = vunpack.c.h.b16 %v8841
        %v9111 = vunpack.c.l.b16 %v8842
        %v9112 = vunpack.c.h.b16 %v8842
        %v9113 = vunpack.c.l.b16 %v8843
        %v9114 = vunpack.c.h.b16 %v8843
        %v9115 = vunpack.c.l.b16 %v8844
        %v9116 = vunpack.c.h.b16 %v8844
        %v9117 = vunpack.c.l.b16 %v8845
        %v9118 = vunpack.c.h.b16 %v8845
        %v9119 = vunpack.c.l.b16 %v8846
        %v9120 = vunpack.c.h.b16 %v8846
        %v9121 = vunpack.c.l.b16 %v8847
        %v9122 = vunpack.c.h.b16 %v8847
        %v9123 = vunpack.c.l.b16 %v8848
        %v9124 = vunpack.c.h.b16 %v8848
        %v9125 = vunpack.c.l.b16 %v8849
        %v9126 = vunpack.c.h.b16 %v8849
        %v9127 = vunpack.c.l.b16 %v8850
        %v9128 = vunpack.c.h.b16 %v8850
        %v9129 = vunpack.c.l.b16 %v8851
        %v9130 = vunpack.c.h.b16 %v8851
        %v9131 = vunpack.c.l.b16 %v8852
        %v9132 = vunpack.c.h.b16 %v8852
        %v9133 = vunpack.c.l.b16 %v8853
        %v9134 = vunpack.c.h.b16 %v8853
        %v9135 = vunpack.c.l.b16 %v8854
        %v9136 = vunpack.c.h.b16 %v8854
        %v9137 = vunpack.c.l.b16 %v8855
        %v9138 = vunpack.c.h.b16 %v8855
        %v9139 = vunpack.c.l.b16 %v8856
        %v9140 = vunpack.c.h.b16 %v8856
        %v9141 = vunpack.c.l.b16 %v8857
        %v9142 = vunpack.c.h.b16 %v8857
        %v9143 = vunpack.c.l.b16 %v8858
        %v9144 = vunpack.c.h.b16 %v8858
        %v9145 = vunpack.c.l.b16 %v8859
        %v9146 = vunpack.c.h.b16 %v8859
        %v9147 = vunpack.c.l.b16 %v8860
        %v9148 = vunpack.c.h.b16 %v8860
        %v9149 = vunpack.c.l.b16 %v8861
        %v9150 = vunpack.c.h.b16 %v8861
        %v9151 = vunpack.c.l.b16 %v8862
        %v9152 = vunpack.c.h.b16 %v8862
        %v9153 = vunpack.c.l.b16 %v8863
        %v9154 = vunpack.c.h.b16 %v8863
        %v9155 = vunpack.c.l.b16 %v8864
        %v9156 = vunpack.c.h.b16 %v8864
        %v9157 = vunpack.c.l.b16 %v8865
        %v9158 = vunpack.c.h.b16 %v8865
        %v9159 = vunpack.c.l.b16 %v8866
        %v9160 = vunpack.c.h.b16 %v8866
        %v9161 = vunpack.c.l.b16 %v8867
        %v9162 = vunpack.c.h.b16 %v8867
        %v9163 = vunpack.c.l.b16 %v8868
        %v9164 = vunpack.c.h.b16 %v8868
        %v9165 = vunpack.c.l.b16 %v8869
        %v9166 = vunpack.c.h.b16 %v8869
        %v9167 = vunpack.c.l.b16 %v8870
        %v9168 = vunpack.c.h.b16 %v8870
        %v9169 = vunpack.c.l.b16 %v8871
        %v9170 = vunpack.c.h.b16 %v8871
        %v9171 = vunpack.c.l.b16 %v8872
        %v9172 = vunpack.c.h.b16 %v8872
        %v9173 = vunpack.c.l.b16 %v8873
        %v9174 = vunpack.c.h.b16 %v8873
        %v9175 = vunpack.c.l.b16 %v8874
        %v9176 = vunpack.c.h.b16 %v8874
        %v9177 = vunpack.c.l.b16 %v8875
        %v9178 = vunpack.c.h.b16 %v8875
        %v9179 = vunpack.c.l.b16 %v8876
        %v9180 = vunpack.c.h.b16 %v8876
        %v9181 = vunpack.c.l.b16 %v8877
        %v9182 = vunpack.c.h.b16 %v8877
        %v9183 = vunpack.c.l.b16 %v8878
        %v9184 = vunpack.c.h.b16 %v8878
        %v9185 = vunpack.c.l.b16 %v8879
        %v9186 = vunpack.c.h.b16 %v8879
        %v9187 = vunpack.c.l.b16 %v8880
        %v9188 = vunpack.c.h.b16 %v8880
        %v9189 = vunpack.c.l.b16 %v8881
        %v9190 = vunpack.c.h.b16 %v8881
        %v9191 = vunpack.c.l.b16 %v8882
        %v9192 = vunpack.c.h.b16 %v8882
        %v9193 = vunpack.c.l.b16 %v8883
        %v9194 = vunpack.c.h.b16 %v8883
        %v9195 = vunpack.c.l.b16 %v8884
        %v9196 = vunpack.c.h.b16 %v8884
        %v9197 = vunpack.c.l.b16 %v8885
        %v9198 = vunpack.c.h.b16 %v8885
        %v9199 = vunpack.c.l.b16 %v8886
        %v9200 = vunpack.c.h.b16 %v8886
        %v9201 = vunpack.c.l.b16 %v8887
        %v9202 = vunpack.c.h.b16 %v8887
        %v9203 = vunpack.c.l.b16 %v8888
        %v9204 = vunpack.c.h.b16 %v8888
        %v9205 = vunpack.c.l.b16 %v8889
        %v9206 = vunpack.c.h.b16 %v8889
        %v9207 = vunpack.c.l.b16 %v8890
        %v9208 = vunpack.c.h.b16 %v8890
        %v9209 = vunpack.c.l.b16 %v8891
        %v9210 = vunpack.c.h.b16 %v8891
        %v9211 = vunpack.c.l.b16 %v8892
        %v9212 = vunpack.c.h.b16 %v8892
        %v9213 = vunpack.c.l.b16 %v8893
        %v9214 = vunpack.c.h.b16 %v8893
        %v9215 = vunpack.c.l.b16 %v8894
        %v9216 = vunpack.c.h.b16 %v8894
        %v9217 = vunpack.c.l.b16 %v8895
        %v9218 = vunpack.c.h.b16 %v8895
        %v9219 = vunpack.c.l.b16 %v8896
        %v9220 = vunpack.c.h.b16 %v8896
        %v9221 = vunpack.c.l.b16 %v8897
        %v9222 = vunpack.c.h.b16 %v8897
        %v9223 = vunpack.c.l.b16 %v8898
        %v9224 = vunpack.c.h.b16 %v8898
        %v9225 = vunpack.c.l.b16 %v8899
        %v9226 = vunpack.c.h.b16 %v8899
        %v9227 = vunpack.c.l.b16 %v8900
        %v9228 = vunpack.c.h.b16 %v8900
        %v9229 = vunpack.c.l.b16 %v8901
        %v9230 = vunpack.c.h.b16 %v8901
        %v9231 = vunpack.c.l.b16 %v8902
        %v9232 = vunpack.c.h.b16 %v8902
        %v9233 = vunpack.c.l.b16 %v8903
        %v9234 = vunpack.c.h.b16 %v8903
        %v9235 = vunpack.c.l.b16 %v8904
        %v9236 = vunpack.c.h.b16 %v8904
        %v9237 = vunpack.c.l.b16 %v8905
        %v9238 = vunpack.c.h.b16 %v8905
        %v9239 = vunpack.c.l.b16 %v8906
        %v9240 = vunpack.c.h.b16 %v8906
        %v9241 = vunpack.c.l.b16 %v8907
        %v9242 = vunpack.c.h.b16 %v8907
        %v9243 = vunpack.c.l.b16 %v8908
        %v9244 = vunpack.c.h.b16 %v8908
        %v9245 = vunpack.c.l.b16 %v8909
        %v9246 = vunpack.c.h.b16 %v8909
        %v9247 = vunpack.c.l.b16 %v8910
        %v9248 = vunpack.c.h.b16 %v8910
        %v9249 = vunpack.c.l.b16 %v8911
        %v9250 = vunpack.c.h.b16 %v8911
        %v9251 = vunpack.c.l.b16 %v8912
        %v9252 = vunpack.c.h.b16 %v8912
        %v9253 = vunpack.c.l.b16 %v8913
        %v9254 = vunpack.c.h.b16 %v8913
        %v9255 = vunpack.c.l.b16 %v8914
        %v9256 = vunpack.c.h.b16 %v8914
        %v9257 = vunpack.c.l.b16 %v8915
        %v9258 = vunpack.c.h.b16 %v8915
        %v9259 = vunpack.c.l.b16 %v8916
        %v9260 = vunpack.c.h.b16 %v8916
        %v9261 = vunpack.c.l.b16 %v8917
        %v9262 = vunpack.c.h.b16 %v8917
        %v9263 = vunpack.c.l.b16 %v8918
        %v9264 = vunpack.c.h.b16 %v8918
        %v9265 = vunpack.c.l.b16 %v8919
        %v9266 = vunpack.c.h.b16 %v8919
        %v9267 = vunpack.c.l.b16 %v8920
        %v9268 = vunpack.c.h.b16 %v8920
        %v9269 = vunpack.c.l.b16 %v8921
        %v9270 = vunpack.c.h.b16 %v8921
        %v9271 = vunpack.c.l.b16 %v8922
        %v9272 = vunpack.c.h.b16 %v8922
        %v9273 = vunpack.c.l.b16 %v8923
        %v9274 = vunpack.c.h.b16 %v8923
        %v9275 = vunpack.c.l.b16 %v8924
        %v9276 = vunpack.c.h.b16 %v8924
        %v9277 = vunpack.c.l.b16 %v8925
        %v9278 = vunpack.c.h.b16 %v8925
        %v9279 = vunpack.c.l.b16 %v8926
        %v9280 = vunpack.c.h.b16 %v8926
        %v9281 = vunpack.c.l.b16 %v8927
        %v9282 = vunpack.c.h.b16 %v8927
        %v9283 = vunpack.c.l.b16 %v8928
        %v9284 = vunpack.c.h.b16 %v8928
        %v9285 = vunpack.c.l.b16 %v8929
        %v9286 = vunpack.c.h.b16 %v8929
        %v9287 = vunpack.c.l.b16 %v8930
        %v9288 = vunpack.c.h.b16 %v8930
        %v9289 = vunpack.c.l.b16 %v8931
        %v9290 = vunpack.c.h.b16 %v8931
        %v9291 = vunpack.c.l.b16 %v8932
        %v9292 = vunpack.c.h.b16 %v8932
        %v9293 = vunpack.c.l.b16 %v8933
        %v9294 = vunpack.c.h.b16 %v8933
        %v9295 = vunpack.c.l.b16 %v8934
        %v9296 = vunpack.c.h.b16 %v8934
        %v9297 = vunpack.c.l.b16 %v8935
        %v9298 = vunpack.c.h.b16 %v8935
        %v9299 = vunpack.c.l.b16 %v8936
        %v9300 = vunpack.c.h.b16 %v8936
        %v9301 = vunpack.c.l.b16 %v8937
        %v9302 = vunpack.c.h.b16 %v8937
        %v9303 = vunpack.c.l.b16 %v8938
        %v9304 = vunpack.c.h.b16 %v8938
        %v9305 = vunpack.c.l.b16 %v8939
        %v9306 = vunpack.c.h.b16 %v8939
        %v9307 = vunpack.c.l.b16 %v8940
        %v9308 = vunpack.c.h.b16 %v8940
        %v9309 = vunpack.c.l.b16 %v8941
        %v9310 = vunpack.c.h.b16 %v8941
        %v9311 = vunpack.c.l.b16 %v8942
        %v9312 = vunpack.c.h.b16 %v8942
        %v9313 = vunpack.c.l.b16 %v8943
        %v9314 = vunpack.c.h.b16 %v8943
        %v9315 = vunpack.c.l.b16 %v8944
        %v9316 = vunpack.c.h.b16 %v8944
        %v9317 = vunpack.c.l.b16 %v8945
        %v9318 = vunpack.c.h.b16 %v8945
        %v9319 = vunpack.c.l.b16 %v8946
        %v9320 = vunpack.c.h.b16 %v8946
        %v9321 = vunpack.c.l.b16 %v8947
        %v9322 = vunpack.c.h.b16 %v8947
        %v9323 = vunpack.c.l.b16 %v8948
        %v9324 = vunpack.c.h.b16 %v8948
        %v9325 = vunpack.c.l.b16 %v8949
        %v9326 = vunpack.c.h.b16 %v8949
        %v9327 = vunpack.c.l.b16 %v8950
        %v9328 = vunpack.c.h.b16 %v8950
        %v9329 = vunpack.c.l.b16 %v8951
        %v9330 = vunpack.c.h.b16 %v8951
        %v9331 = vunpack.c.l.b16 %v8952
        %v9332 = vunpack.c.h.b16 %v8952
        %v9333 = vunpack.c.l.b16 %v8953
        %v9334 = vunpack.c.h.b16 %v8953
        %v9335 = vunpack.c.l.b16 %v8954
        %v9336 = vunpack.c.h.b16 %v8954
        %v9337 = vunpack.c.l.b16 %v8955
        %v9338 = vunpack.c.h.b16 %v8955
        %v9339 = vunpack.c.l.b16 %v8956
        %v9340 = vunpack.c.h.b16 %v8956
        %v9341 = vunpack.c.l.b16 %v8957
        %v9342 = vunpack.c.h.b16 %v8957
        %v9343 = vunpack.c.l.b16 %v8958
        %v9344 = vunpack.c.h.b16 %v8958
        %v9345 = vunpack.c.l.b16 %v8959
        %v9346 = vunpack.c.h.b16 %v8959
        %v9347 = vunpack.c.l.b16 %v8960
        %v9348 = vunpack.c.h.b16 %v8960
        %v9349 = vunpack.c.l.b16 %v8961
        %v9350 = vunpack.c.h.b16 %v8961
        %v9351 = vunpack.c.l.b16 %v8962
        %v9352 = vunpack.c.h.b16 %v8962
        %v9353 = vunpack.c.l.b16 %v8963
        %v9354 = vunpack.c.h.b16 %v8963
        %v9355 = vunpack.c.l.b16 %v8964
        %v9356 = vunpack.c.h.b16 %v8964
        %v9357 = vunpack.c.l.b16 %v8965
        %v9358 = vunpack.c.h.b16 %v8965
        %v9359 = vunpack.c.l.b16 %v8966
        %v9360 = vunpack.c.h.b16 %v8966
        %v9361 = vunpack.c.l.b16 %v8967
        %v9362 = vunpack.c.h.b16 %v8967
        %v9363 = vunpack.c.l.b16 %v8968
        %v9364 = vunpack.c.h.b16 %v8968
        %v9365 = vpack.c.b16 %v9111, %v9109
        %v9366 = vpack.c.b16 %v9112, %v9110
        %v9367 = vpack.c.b16 %v9115, %v9113
        %v9368 = vpack.c.b16 %v9116, %v9114
        %v9369 = vpack.c.b16 %v9119, %v9117
        %v9370 = vpack.c.b16 %v9120, %v9118
        %v9371 = vpack.c.b16 %v9123, %v9121
        %v9372 = vpack.c.b16 %v9124, %v9122
        %v9373 = vpack.c.b16 %v9127, %v9125
        %v9374 = vpack.c.b16 %v9128, %v9126
        %v9375 = vpack.c.b16 %v9131, %v9129
        %v9376 = vpack.c.b16 %v9132, %v9130
        %v9377 = vpack.c.b16 %v9135, %v9133
        %v9378 = vpack.c.b16 %v9136, %v9134
        %v9379 = vpack.c.b16 %v9139, %v9137
        %v9380 = vpack.c.b16 %v9140, %v9138
        %v9381 = vpack.c.b16 %v9143, %v9141
        %v9382 = vpack.c.b16 %v9144, %v9142
        %v9383 = vpack.c.b16 %v9147, %v9145
        %v9384 = vpack.c.b16 %v9148, %v9146
        %v9385 = vpack.c.b16 %v9151, %v9149
        %v9386 = vpack.c.b16 %v9152, %v9150
        %v9387 = vpack.c.b16 %v9155, %v9153
        %v9388 = vpack.c.b16 %v9156, %v9154
        %v9389 = vpack.c.b16 %v9159, %v9157
        %v9390 = vpack.c.b16 %v9160, %v9158
        %v9391 = vpack.c.b16 %v9163, %v9161
        %v9392 = vpack.c.b16 %v9164, %v9162
        %v9393 = vpack.c.b16 %v9167, %v9165
        %v9394 = vpack.c.b16 %v9168, %v9166
        %v9395 = vpack.c.b16 %v9171, %v9169
        %v9396 = vpack.c.b16 %v9172, %v9170
        %v9397 = vpack.c.b16 %v9175, %v9173
        %v9398 = vpack.c.b16 %v9176, %v9174
        %v9399 = vpack.c.b16 %v9179, %v9177
        %v9400 = vpack.c.b16 %v9180, %v9178
        %v9401 = vpack.c.b16 %v9183, %v9181
        %v9402 = vpack.c.b16 %v9184, %v9182
        %v9403 = vpack.c.b16 %v9187, %v9185
        %v9404 = vpack.c.b16 %v9188, %v9186
        %v9405 = vpack.c.b16 %v9191, %v9189
        %v9406 = vpack.c.b16 %v9192, %v9190
        %v9407 = vpack.c.b16 %v9195, %v9193
        %v9408 = vpack.c.b16 %v9196, %v9194
        %v9409 = vpack.c.b16 %v9199, %v9197
        %v9410 = vpack.c.b16 %v9200, %v9198
        %v9411 = vpack.c.b16 %v9203, %v9201
        %v9412 = vpack.c.b16 %v9204, %v9202
        %v9413 = vpack.c.b16 %v9207, %v9205
        %v9414 = vpack.c.b16 %v9208, %v9206
        %v9415 = vpack.c.b16 %v9211, %v9209
        %v9416 = vpack.c.b16 %v9212, %v9210
        %v9417 = vpack.c.b16 %v9215, %v9213
        %v9418 = vpack.c.b16 %v9216, %v9214
        %v9419 = vpack.c.b16 %v9219, %v9217
        %v9420 = vpack.c.b16 %v9220, %v9218
        %v9421 = vpack.c.b16 %v9223, %v9221
        %v9422 = vpack.c.b16 %v9224, %v9222
        %v9423 = vpack.c.b16 %v9227, %v9225
        %v9424 = vpack.c.b16 %v9228, %v9226
        %v9425 = vpack.c.b16 %v9231, %v9229
        %v9426 = vpack.c.b16 %v9232, %v9230
        %v9427 = vpack.c.b16 %v9235, %v9233
        %v9428 = vpack.c.b16 %v9236, %v9234
        %v9429 = vpack.c.b16 %v9239, %v9237
        %v9430 = vpack.c.b16 %v9240, %v9238
        %v9431 = vpack.c.b16 %v9243, %v9241
        %v9432 = vpack.c.b16 %v9244, %v9242
        %v9433 = vpack.c.b16 %v9247, %v9245
        %v9434 = vpack.c.b16 %v9248, %v9246
        %v9435 = vpack.c.b16 %v9251, %v9249
        %v9436 = vpack.c.b16 %v9252, %v9250
        %v9437 = vpack.c.b16 %v9255, %v9253
        %v9438 = vpack.c.b16 %v9256, %v9254
        %v9439 = vpack.c.b16 %v9259, %v9257
        %v9440 = vpack.c.b16 %v9260, %v9258
        %v9441 = vpack.c.b16 %v9263, %v9261
        %v9442 = vpack.c.b16 %v9264, %v9262
        %v9443 = vpack.c.b16 %v9267, %v9265
        %v9444 = vpack.c.b16 %v9268, %v9266
        %v9445 = vpack.c.b16 %v9271, %v9269
        %v9446 = vpack.c.b16 %v9272, %v9270
        %v9447 = vpack.c.b16 %v9275, %v9273
        %v9448 = vpack.c.b16 %v9276, %v9274
        %v9449 = vpack.c.b16 %v9279, %v9277
        %v9450 = vpack.c.b16 %v9280, %v9278
        %v9451 = vpack.c.b16 %v9283, %v9281
        %v9452 = vpack.c.b16 %v9284, %v9282
        %v9453 = vpack.c.b16 %v9287, %v9285
        %v9454 = vpack.c.b16 %v9288, %v9286
        %v9455 = vpack.c.b16 %v9291, %v9289
        %v9456 = vpack.c.b16 %v9292, %v9290
        %v9457 = vpack.c.b16 %v9295, %v9293
        %v9458 = vpack.c.b16 %v9296, %v9294
        %v9459 = vpack.c.b16 %v9299, %v9297
        %v9460 = vpack.c.b16 %v9300, %v9298
        %v9461 = vpack.c.b16 %v9303, %v9301
        %v9462 = vpack.c.b16 %v9304, %v9302
        %v9463 = vpack.c.b16 %v9307, %v9305
        %v9464 = vpack.c.b16 %v9308, %v9306
        %v9465 = vpack.c.b16 %v9311, %v9309
        %v9466 = vpack.c.b16 %v9312, %v9310
        %v9467 = vpack.c.b16 %v9315, %v9313
        %v9468 = vpack.c.b16 %v9316, %v9314
        %v9469 = vpack.c.b16 %v9319, %v9317
        %v9470 = vpack.c.b16 %v9320, %v9318
        %v9471 = vpack.c.b16 %v9323, %v9321
        %v9472 = vpack.c.b16 %v9324, %v9322
        %v9473 = vpack.c.b16 %v9327, %v9325
        %v9474 = vpack.c.b16 %v9328, %v9326
        %v9475 = vpack.c.b16 %v9331, %v9329
        %v9476 = vpack.c.b16 %v9332, %v9330
        %v9477 = vpack.c.b16 %v9335, %v9333
        %v9478 = vpack.c.b16 %v9336, %v9334
        %v9479 = vpack.c.b16 %v9339, %v9337
        %v9480 = vpack.c.b16 %v9340, %v9338
        %v9481 = vpack.c.b16 %v9343, %v9341
        %v9482 = vpack.c.b16 %v9344, %v9342
        %v9483 = vpack.c.b16 %v9347, %v9345
        %v9484 = vpack.c.b16 %v9348, %v9346
        %v9485 = vpack.c.b16 %v9351, %v9349
        %v9486 = vpack.c.b16 %v9352, %v9350
        %v9487 = vpack.c.b16 %v9355, %v9353
        %v9488 = vpack.c.b16 %v9356, %v9354
        %v9489 = vpack.c.b16 %v9359, %v9357
        %v9490 = vpack.c.b16 %v9360, %v9358
        %v9491 = vpack.c.b16 %v9363, %v9361
        %v9492 = vpack.c.b16 %v9364, %v9362
        %9621 = vmatprep.subr.bf16.mxu0 %v9366
        %9622 = vmatpush1.bf16.msra.mxu0 %v9365
        %9623 = vmatprep.subr.bf16.mxu0 %v9368
        %9624 = vmatpush1.bf16.msra.mxu0 %v9367
        %9625 = vmatprep.subr.bf16.mxu0 %v9370
        %9626 = vmatpush1.bf16.msra.mxu0 %v9369
        %9627 = vmatprep.subr.bf16.mxu0 %v9372
        %9628 = vmatpush1.bf16.msra.mxu0 %v9371
        %9629 = vmatprep.subr.bf16.mxu0 %v9374
        %9630 = vmatpush1.bf16.msra.mxu0 %v9373
        %9631 = vmatprep.subr.bf16.mxu0 %v9376
        %9632 = vmatpush1.bf16.msra.mxu0 %v9375
        %9633 = vmatprep.subr.bf16.mxu0 %v9378
        %9634 = vmatpush1.bf16.msra.mxu0 %v9377
        %9635 = vmatprep.subr.bf16.mxu0 %v9380
        %9636 = vmatpush1.bf16.msra.mxu0 %v9379
        %9637 = vmatprep.subr.bf16.mxu0 %v9382
        %9638 = vmatpush1.bf16.msra.mxu0 %v9381
        %9639 = vmatprep.subr.bf16.mxu0 %v9384
        %9640 = vmatpush1.bf16.msra.mxu0 %v9383
        %9641 = vmatprep.subr.bf16.mxu0 %v9386
        %9642 = vmatpush1.bf16.msra.mxu0 %v9385
        %9643 = vmatprep.subr.bf16.mxu0 %v9388
        %9644 = vmatpush1.bf16.msra.mxu0 %v9387
        %9645 = vmatprep.subr.bf16.mxu0 %v9390
        %9646 = vmatpush1.bf16.msra.mxu0 %v9389
        %9647 = vmatprep.subr.bf16.mxu0 %v9392
        %9648 = vmatpush1.bf16.msra.mxu0 %v9391
        %9649 = vmatprep.subr.bf16.mxu0 %v9394
        %9650 = vmatpush1.bf16.msra.mxu0 %v9393
        %9651 = vmatprep.subr.bf16.mxu0 %v9396
        %9652 = vmatpush1.bf16.msra.mxu0 %v9395
        %9653 = vmatprep.mubr.bf16.mxu0 %v8714
        %9654 = vmatmul.mubr.bf16.gmra.mrb[0].mxu0 %v8713
        %v9655 = vpop.f32.mrb[0].mxu0
        %v9656 = vadd.f32 %v8974, %v9655
        %v9657 = vpop.f32.mrb[0].mxu0
        %v9658 = vadd.f32 %v8978, %v9657
        %v9659 = vpop.f32.mrb[0].mxu0
        %v9660 = vadd.f32 %v8974, %v9659
        %v9661 = vpop.f32.mrb[0].mxu0
        %v9662 = vadd.f32 %v8978, %v9661
        %9663 = vmatprep.mubr.bf16.mxu0 %v8722
        %9664 = vmatmul.mubr.bf16.gmra.mrb[0].mxu0 %v8721
        %v9665 = vpop.f32.mrb[0].mxu0
        %v9666 = vadd.f32 %v8974, %v9665
        %v9667 = vpop.f32.mrb[0].mxu0
        %v9668 = vadd.f32 %v8978, %v9667
        %v9669 = vpop.f32.mrb[0].mxu0
        %v9670 = vadd.f32 %v8974, %v9669
        %v9671 = vpop.f32.mrb[0].mxu0
        %v9672 = vadd.f32 %v8978, %v9671
        %9673 = vmatprep.mubr.bf16.mxu0 %v8730
        %9674 = vmatmul.mubr.bf16.gmra.mrb[0].mxu0 %v8729
        %v9675 = vpop.f32.mrb[0].mxu0
        %v9676 = vadd.f32 %v8974, %v9675
        %v9677 = vpop.f32.mrb[0].mxu0
        %v9678 = vadd.f32 %v8978, %v9677
        %v9679 = vpop.f32.mrb[0].mxu0
        %v9680 = vadd.f32 %v8974, %v9679
        %v9681 = vpop.f32.mrb[0].mxu0
        %v9682 = vadd.f32 %v8978, %v9681
        %9683 = vmatprep.mubr.bf16.mxu0 %v8738
        %9684 = vmatmul.mubr.bf16.gmra.mrb[0].mxu0 %v8737
        %v9685 = vpop.f32.mrb[0].mxu0
        %v9686 = vadd.f32 %v8974, %v9685
        %v9687 = vpop.f32.mrb[0].mxu0
        %v9688 = vadd.f32 %v8978, %v9687
        %v9689 = vpop.f32.mrb[0].mxu0
        %v9690 = vadd.f32 %v8974, %v9689
        %v9691 = vpop.f32.mrb[0].mxu0
        %v9692 = vadd.f32 %v8978, %v9691
        %9693 = vmatprep.mubr.bf16.mxu0 %v8746
        %9694 = vmatmul.mubr.bf16.gmra.mrb[0].mxu0 %v8745
        %v9695 = vpop.f32.mrb[0].mxu0
        %v9696 = vadd.f32 %v8974, %v9695
        %v9697 = vpop.f32.mrb[0].mxu0
        %v9698 = vadd.f32 %v8978, %v9697
        %v9699 = vpop.f32.mrb[0].mxu0
        %v9700 = vadd.f32 %v8974, %v9699
        %v9701 = vpop.f32.mrb[0].mxu0
        %v9702 = vadd.f32 %v8978, %v9701
        %9703 = vmatprep.mubr.bf16.mxu0 %v8754
        %9704 = vmatmul.mubr.bf16.gmra.mrb[0].mxu0 %v8753
        %v9705 = vpop.f32.mrb[0].mxu0
        %v9706 = vadd.f32 %v8974, %v9705
        %v9707 = vpop.f32.mrb[0].mxu0
        %v9708 = vadd.f32 %v8978, %v9707
        %v9709 = vpop.f32.mrb[0].mxu0
        %v9710 = vadd.f32 %v8974, %v9709
        %v9711 = vpop.f32.mrb[0].mxu0
        %v9712 = vadd.f32 %v8978, %v9711
        %9713 = vmatprep.mubr.bf16.mxu0 %v8762
        %9714 = vmatmul.mubr.bf16.gmra.mrb[0].mxu0 %v8761
        %v9715 = vpop.f32.mrb[0].mxu0
        %v9716 = vadd.f32 %v8974, %v9715
        %v9717 = vpop.f32.mrb[0].mxu0
        %v9718 = vadd.f32 %v8978, %v9717
        %v9719 = vpop.f32.mrb[0].mxu0
        %v9720 = vadd.f32 %v8974, %v9719
        %v9721 = vpop.f32.mrb[0].mxu0
        %v9722 = vadd.f32 %v8978, %v9721
        %9723 = vmatprep.mubr.bf16.mxu0 %v8770
        %9724 = vmatmul.mubr.bf16.gmra.mrb[0].mxu0 %v8769
        %v9725 = vpop.f32.mrb[0].mxu0
        %v9726 = vadd.f32 %v8974, %v9725
        %v9727 = vpop.f32.mrb[0].mxu0
        %v9728 = vadd.f32 %v8978, %v9727
        %v9729 = vpop.f32.mrb[0].mxu0
        %v9730 = vadd.f32 %v8974, %v9729
        %v9731 = vpop.f32.mrb[0].mxu0
        %v9732 = vadd.f32 %v8978, %v9731
        %9733 = vmatprep.mubr.bf16.mxu0 %v8778
        %9734 = vmatmul.mubr.bf16.gmra.mrb[0].mxu0 %v8777
        %v9735 = vpop.f32.mrb[0].mxu0
        %v9736 = vadd.f32 %v8974, %v9735
        %v9737 = vpop.f32.mrb[0].mxu0
        %v9738 = vadd.f32 %v8978, %v9737
        %v9739 = vpop.f32.mrb[0].mxu0
        %v9740 = vadd.f32 %v8974, %v9739
        %v9741 = vpop.f32.mrb[0].mxu0
        %v9742 = vadd.f32 %v8978, %v9741
        %9743 = vmatprep.mubr.bf16.mxu0 %v8786
        %9744 = vmatmul.mubr.bf16.gmra.mrb[0].mxu0 %v8785
        %v9745 = vpop.f32.mrb[0].mxu0
        %v9746 = vadd.f32 %v8974, %v9745
        %v9747 = vpop.f32.mrb[0].mxu0
        %v9748 = vadd.f32 %v8978, %v9747
        %v9749 = vpop.f32.mrb[0].mxu0
        %v9750 = vadd.f32 %v8974, %v9749
        %v9751 = vpop.f32.mrb[0].mxu0
        %v9752 = vadd.f32 %v8978, %v9751
        %9753 = vmatprep.mubr.bf16.mxu0 %v8794
        %9754 = vmatmul.mubr.bf16.gmra.mrb[0].mxu0 %v8793
        %v9755 = vpop.f32.mrb[0].mxu0
        %v9756 = vadd.f32 %v8974, %v9755
        %v9757 = vpop.f32.mrb[0].mxu0
        %v9758 = vadd.f32 %v8978, %v9757
        %v9759 = vpop.f32.mrb[0].mxu0
        %v9760 = vadd.f32 %v8974, %v9759
        %v9761 = vpop.f32.mrb[0].mxu0
        %v9762 = vadd.f32 %v8978, %v9761
        %9763 = vmatprep.mubr.bf16.mxu0 %v8802
        %9764 = vmatmul.mubr.bf16.gmra.mrb[0].mxu0 %v8801
        %v9765 = vpop.f32.mrb[0].mxu0
        %v9766 = vadd.f32 %v8974, %v9765
        %v9767 = vpop.f32.mrb[0].mxu0
        %v9768 = vadd.f32 %v8978, %v9767
        %v9769 = vpop.f32.mrb[0].mxu0
        %v9770 = vadd.f32 %v8974, %v9769
        %v9771 = vpop.f32.mrb[0].mxu0
        %v9772 = vadd.f32 %v8978, %v9771
        %9773 = vmatprep.mubr.bf16.mxu0 %v8810
        %9774 = vmatmul.mubr.bf16.gmra.mrb[0].mxu0 %v8809
        %v9775 = vpop.f32.mrb[0].mxu0
        %v9776 = vadd.f32 %v8974, %v9775
        %v9777 = vpop.f32.mrb[0].mxu0
        %v9778 = vadd.f32 %v8978, %v9777
        %v9779 = vpop.f32.mrb[0].mxu0
        %v9780 = vadd.f32 %v8974, %v9779
        %v9781 = vpop.f32.mrb[0].mxu0
        %v9782 = vadd.f32 %v8978, %v9781
        %9783 = vmatprep.mubr.bf16.mxu0 %v8818
        %9784 = vmatmul.mubr.bf16.gmra.mrb[0].mxu0 %v8817
        %v9785 = vpop.f32.mrb[0].mxu0
        %v9786 = vadd.f32 %v8974, %v9785
        %v9787 = vpop.f32.mrb[0].mxu0
        %v9788 = vadd.f32 %v8978, %v9787
        %v9789 = vpop.f32.mrb[0].mxu0
        %v9790 = vadd.f32 %v8974, %v9789
        %v9791 = vpop.f32.mrb[0].mxu0
        %v9792 = vadd.f32 %v8978, %v9791
        %9793 = vmatprep.mubr.bf16.mxu0 %v8826
        %9794 = vmatmul.mubr.bf16.gmra.mrb[0].mxu0 %v8825
        %v9795 = vpop.f32.mrb[0].mxu0
        %v9796 = vadd.f32 %v8974, %v9795
        %v9797 = vpop.f32.mrb[0].mxu0
        %v9798 = vadd.f32 %v8978, %v9797
        %v9799 = vpop.f32.mrb[0].mxu0
        %v9800 = vadd.f32 %v8974, %v9799
        %v9801 = vpop.f32.mrb[0].mxu0
        %v9802 = vadd.f32 %v8978, %v9801
        %9803 = vmatprep.mubr.bf16.mxu0 %v8834
        %9804 = vmatmul.mubr.bf16.gmra.mrb[0].mxu0 %v8833
        %v9805 = vpop.f32.mrb[0].mxu0
        %v9806 = vadd.f32 %v8974, %v9805
        %v9807 = vpop.f32.mrb[0].mxu0
        %v9808 = vadd.f32 %v8978, %v9807
        %v9809 = vpop.f32.mrb[0].mxu0
        %v9810 = vadd.f32 %v8974, %v9809
        %v9811 = vpop.f32.mrb[0].mxu0
        %v9812 = vadd.f32 %v8978, %v9811
        %9813 = vdwg.mxu0
        %9814 = vmatprep.subr.bf16.mxu0 %v9398
        %9815 = vmatpush1.bf16.msra.mxu0 %v9397
        %9816 = vmatprep.subr.bf16.mxu0 %v9400
        %9817 = vmatpush1.bf16.msra.mxu0 %v9399
        %9818 = vmatprep.subr.bf16.mxu0 %v9402
        %9819 = vmatpush1.bf16.msra.mxu0 %v9401
        %9820 = vmatprep.subr.bf16.mxu0 %v9404
        %9821 = vmatpush1.bf16.msra.mxu0 %v9403
        %9822 = vmatprep.subr.bf16.mxu0 %v9406
        %9823 = vmatpush1.bf16.msra.mxu0 %v9405
        %9824 = vmatprep.subr.bf16.mxu0 %v9408
        %9825 = vmatpush1.bf16.msra.mxu0 %v9407
        %9826 = vmatprep.subr.bf16.mxu0 %v9410
        %9827 = vmatpush1.bf16.msra.mxu0 %v9409
        %9828 = vmatprep.subr.bf16.mxu0 %v9412
        %9829 = vmatpush1.bf16.msra.mxu0 %v9411
        %9830 = vmatprep.subr.bf16.mxu0 %v9414
        %9831 = vmatpush1.bf16.msra.mxu0 %v9413
        %9832 = vmatprep.subr.bf16.mxu0 %v9416
        %9833 = vmatpush1.bf16.msra.mxu0 %v9415
        %9834 = vmatprep.subr.bf16.mxu0 %v9418
        %9835 = vmatpush1.bf16.msra.mxu0 %v9417
        %9836 = vmatprep.subr.bf16.mxu0 %v9420
        %9837 = vmatpush1.bf16.msra.mxu0 %v9419
        %9838 = vmatprep.subr.bf16.mxu0 %v9422
        %9839 = vmatpush1.bf16.msra.mxu0 %v9421
        %9840 = vmatprep.subr.bf16.mxu0 %v9424
        %9841 = vmatpush1.bf16.msra.mxu0 %v9423
        %9842 = vmatprep.subr.bf16.mxu0 %v9426
        %9843 = vmatpush1.bf16.msra.mxu0 %v9425
        %9844 = vmatprep.subr.bf16.mxu0 %v9428
        %9845 = vmatpush1.bf16.msra.mxu0 %v9427
        %9846 = vmatprep.mubr.bf16.mxu0 %v8716
        %9847 = vmatmul.mubr.bf16.gmra.mrb[0].mxu0 %v8715
        %v9848 = vpop.f32.mrb[0].mxu0
        %v9849 = vadd.f32 %v9656, %v9848
        %v9850 = vpop.f32.mrb[0].mxu0
        %v9851 = vadd.f32 %v9658, %v9850
        %v9852 = vpop.f32.mrb[0].mxu0
        %v9853 = vadd.f32 %v9660, %v9852
        %v9854 = vpop.f32.mrb[0].mxu0
        %v9855 = vadd.f32 %v9662, %v9854
        %9856 = vmatprep.mubr.bf16.mxu0 %v8724
        %9857 = vmatmul.mubr.bf16.gmra.mrb[0].mxu0 %v8723
        %v9858 = vpop.f32.mrb[0].mxu0
        %v9859 = vadd.f32 %v9666, %v9858
        %v9860 = vpop.f32.mrb[0].mxu0
        %v9861 = vadd.f32 %v9668, %v9860
        %v9862 = vpop.f32.mrb[0].mxu0
        %v9863 = vadd.f32 %v9670, %v9862
        %v9864 = vpop.f32.mrb[0].mxu0
        %v9865 = vadd.f32 %v9672, %v9864
        %9866 = vmatprep.mubr.bf16.mxu0 %v8732
        %9867 = vmatmul.mubr.bf16.gmra.mrb[0].mxu0 %v8731
        %v9868 = vpop.f32.mrb[0].mxu0
        %v9869 = vadd.f32 %v9676, %v9868
        %v9870 = vpop.f32.mrb[0].mxu0
        %v9871 = vadd.f32 %v9678, %v9870
        %v9872 = vpop.f32.mrb[0].mxu0
        %v9873 = vadd.f32 %v9680, %v9872
        %v9874 = vpop.f32.mrb[0].mxu0
        %v9875 = vadd.f32 %v9682, %v9874
        %9876 = vmatprep.mubr.bf16.mxu0 %v8740
        %9877 = vmatmul.mubr.bf16.gmra.mrb[0].mxu0 %v8739
        %v9878 = vpop.f32.mrb[0].mxu0
        %v9879 = vadd.f32 %v9686, %v9878
        %v9880 = vpop.f32.mrb[0].mxu0
        %v9881 = vadd.f32 %v9688, %v9880
        %v9882 = vpop.f32.mrb[0].mxu0
        %v9883 = vadd.f32 %v9690, %v9882
        %v9884 = vpop.f32.mrb[0].mxu0
        %v9885 = vadd.f32 %v9692, %v9884
        %9886 = vmatprep.mubr.bf16.mxu0 %v8748
        %9887 = vmatmul.mubr.bf16.gmra.mrb[0].mxu0 %v8747
        %v9888 = vpop.f32.mrb[0].mxu0
        %v9889 = vadd.f32 %v9696, %v9888
        %v9890 = vpop.f32.mrb[0].mxu0
        %v9891 = vadd.f32 %v9698, %v9890
        %v9892 = vpop.f32.mrb[0].mxu0
        %v9893 = vadd.f32 %v9700, %v9892
        %v9894 = vpop.f32.mrb[0].mxu0
        %v9895 = vadd.f32 %v9702, %v9894
        %9896 = vmatprep.mubr.bf16.mxu0 %v8756
        %9897 = vmatmul.mubr.bf16.gmra.mrb[0].mxu0 %v8755
        %v9898 = vpop.f32.mrb[0].mxu0
        %v9899 = vadd.f32 %v9706, %v9898
        %v9900 = vpop.f32.mrb[0].mxu0
        %v9901 = vadd.f32 %v9708, %v9900
        %v9902 = vpop.f32.mrb[0].mxu0
        %v9903 = vadd.f32 %v9710, %v9902
        %v9904 = vpop.f32.mrb[0].mxu0
        %v9905 = vadd.f32 %v9712, %v9904
        %9906 = vmatprep.mubr.bf16.mxu0 %v8764
        %9907 = vmatmul.mubr.bf16.gmra.mrb[0].mxu0 %v8763
        %v9908 = vpop.f32.mrb[0].mxu0
        %v9909 = vadd.f32 %v9716, %v9908
        %v9910 = vpop.f32.mrb[0].mxu0
        %v9911 = vadd.f32 %v9718, %v9910
        %v9912 = vpop.f32.mrb[0].mxu0
        %v9913 = vadd.f32 %v9720, %v9912
        %v9914 = vpop.f32.mrb[0].mxu0
        %v9915 = vadd.f32 %v9722, %v9914
        %9916 = vmatprep.mubr.bf16.mxu0 %v8772
        %9917 = vmatmul.mubr.bf16.gmra.mrb[0].mxu0 %v8771
        %v9918 = vpop.f32.mrb[0].mxu0
        %v9919 = vadd.f32 %v9726, %v9918
        %v9920 = vpop.f32.mrb[0].mxu0
        %v9921 = vadd.f32 %v9728, %v9920
        %v9922 = vpop.f32.mrb[0].mxu0
        %v9923 = vadd.f32 %v9730, %v9922
        %v9924 = vpop.f32.mrb[0].mxu0
        %v9925 = vadd.f32 %v9732, %v9924
        %9926 = vmatprep.mubr.bf16.mxu0 %v8780
        %9927 = vmatmul.mubr.bf16.gmra.mrb[0].mxu0 %v8779
        %v9928 = vpop.f32.mrb[0].mxu0
        %v9929 = vadd.f32 %v9736, %v9928
        %v9930 = vpop.f32.mrb[0].mxu0
        %v9931 = vadd.f32 %v9738, %v9930
        %v9932 = vpop.f32.mrb[0].mxu0
        %v9933 = vadd.f32 %v9740, %v9932
        %v9934 = vpop.f32.mrb[0].mxu0
        %v9935 = vadd.f32 %v9742, %v9934
        %9936 = vmatprep.mubr.bf16.mxu0 %v8788
        %9937 = vmatmul.mubr.bf16.gmra.mrb[0].mxu0 %v8787
        %v9938 = vpop.f32.mrb[0].mxu0
        %v9939 = vadd.f32 %v9746, %v9938
        %v9940 = vpop.f32.mrb[0].mxu0
        %v9941 = vadd.f32 %v9748, %v9940
        %v9942 = vpop.f32.mrb[0].mxu0
        %v9943 = vadd.f32 %v9750, %v9942
        %v9944 = vpop.f32.mrb[0].mxu0
        %v9945 = vadd.f32 %v9752, %v9944
        %9946 = vmatprep.mubr.bf16.mxu0 %v8796
        %9947 = vmatmul.mubr.bf16.gmra.mrb[0].mxu0 %v8795
        %v9948 = vpop.f32.mrb[0].mxu0
        %v9949 = vadd.f32 %v9756, %v9948
        %v9950 = vpop.f32.mrb[0].mxu0
        %v9951 = vadd.f32 %v9758, %v9950
        %v9952 = vpop.f32.mrb[0].mxu0
        %v9953 = vadd.f32 %v9760, %v9952
        %v9954 = vpop.f32.mrb[0].mxu0
        %v9955 = vadd.f32 %v9762, %v9954
        %9956 = vmatprep.mubr.bf16.mxu0 %v8804
        %9957 = vmatmul.mubr.bf16.gmra.mrb[0].mxu0 %v8803
        %v9958 = vpop.f32.mrb[0].mxu0
        %v9959 = vadd.f32 %v9766, %v9958
        %v9960 = vpop.f32.mrb[0].mxu0
        %v9961 = vadd.f32 %v9768, %v9960
        %v9962 = vpop.f32.mrb[0].mxu0
        %v9963 = vadd.f32 %v9770, %v9962
        %v9964 = vpop.f32.mrb[0].mxu0
        %v9965 = vadd.f32 %v9772, %v9964
        %9966 = vmatprep.mubr.bf16.mxu0 %v8812
        %9967 = vmatmul.mubr.bf16.gmra.mrb[0].mxu0 %v8811
        %v9968 = vpop.f32.mrb[0].mxu0
        %v9969 = vadd.f32 %v9776, %v9968
        %v9970 = vpop.f32.mrb[0].mxu0
        %v9971 = vadd.f32 %v9778, %v9970
        %v9972 = vpop.f32.mrb[0].mxu0
        %v9973 = vadd.f32 %v9780, %v9972
        %v9974 = vpop.f32.mrb[0].mxu0
        %v9975 = vadd.f32 %v9782, %v9974
        %9976 = vmatprep.mubr.bf16.mxu0 %v8820
        %9977 = vmatmul.mubr.bf16.gmra.mrb[0].mxu0 %v8819
        %v9978 = vpop.f32.mrb[0].mxu0
        %v9979 = vadd.f32 %v9786, %v9978
        %v9980 = vpop.f32.mrb[0].mxu0
        %v9981 = vadd.f32 %v9788, %v9980
        %v9982 = vpop.f32.mrb[0].mxu0
        %v9983 = vadd.f32 %v9790, %v9982
        %v9984 = vpop.f32.mrb[0].mxu0
        %v9985 = vadd.f32 %v9792, %v9984
        %9986 = vmatprep.mubr.bf16.mxu0 %v8828
        %9987 = vmatmul.mubr.bf16.gmra.mrb[0].mxu0 %v8827
        %v9988 = vpop.f32.mrb[0].mxu0
        %v9989 = vadd.f32 %v9796, %v9988
        %v9990 = vpop.f32.mrb[0].mxu0
        %v9991 = vadd.f32 %v9798, %v9990
        %v9992 = vpop.f32.mrb[0].mxu0
        %v9993 = vadd.f32 %v9800, %v9992
        %v9994 = vpop.f32.mrb[0].mxu0
        %v9995 = vadd.f32 %v9802, %v9994
        %9996 = vmatprep.mubr.bf16.mxu0 %v8836
        %9997 = vmatmul.mubr.bf16.gmra.mrb[0].mxu0 %v8835
        %v9998 = vpop.f32.mrb[0].mxu0
        %v9999 = vadd.f32 %v9806, %v9998
        %v10000 = vpop.f32.mrb[0].mxu0
        %v10001 = vadd.f32 %v9808, %v10000
        %v10002 = vpop.f32.mrb[0].mxu0
        %v10003 = vadd.f32 %v9810, %v10002
        %v10004 = vpop.f32.mrb[0].mxu0
        %v10005 = vadd.f32 %v9812, %v10004
        %10006 = vdwg.mxu0
        %10007 = vmatprep.subr.bf16.mxu0 %v9430
        %10008 = vmatpush1.bf16.msra.mxu0 %v9429
        %10009 = vmatprep.subr.bf16.mxu0 %v9432
        %10010 = vmatpush1.bf16.msra.mxu0 %v9431
        %10011 = vmatprep.subr.bf16.mxu0 %v9434
        %10012 = vmatpush1.bf16.msra.mxu0 %v9433
        %10013 = vmatprep.subr.bf16.mxu0 %v9436
        %10014 = vmatpush1.bf16.msra.mxu0 %v9435
        %10015 = vmatprep.subr.bf16.mxu0 %v9438
        %10016 = vmatpush1.bf16.msra.mxu0 %v9437
        %10017 = vmatprep.subr.bf16.mxu0 %v9440
        %10018 = vmatpush1.bf16.msra.mxu0 %v9439
        %10019 = vmatprep.subr.bf16.mxu0 %v9442
        %10020 = vmatpush1.bf16.msra.mxu0 %v9441
        %10021 = vmatprep.subr.bf16.mxu0 %v9444
        %10022 = vmatpush1.bf16.msra.mxu0 %v9443
        %10023 = vmatprep.subr.bf16.mxu0 %v9446
        %10024 = vmatpush1.bf16.msra.mxu0 %v9445
        %10025 = vmatprep.subr.bf16.mxu0 %v9448
        %10026 = vmatpush1.bf16.msra.mxu0 %v9447
        %10027 = vmatprep.subr.bf16.mxu0 %v9450
        %10028 = vmatpush1.bf16.msra.mxu0 %v9449
        %10029 = vmatprep.subr.bf16.mxu0 %v9452
        %10030 = vmatpush1.bf16.msra.mxu0 %v9451
        %10031 = vmatprep.subr.bf16.mxu0 %v9454
        %10032 = vmatpush1.bf16.msra.mxu0 %v9453
        %10033 = vmatprep.subr.bf16.mxu0 %v9456
        %10034 = vmatpush1.bf16.msra.mxu0 %v9455
        %10035 = vmatprep.subr.bf16.mxu0 %v9458
        %10036 = vmatpush1.bf16.msra.mxu0 %v9457
        %10037 = vmatprep.subr.bf16.mxu0 %v9460
        %10038 = vmatpush1.bf16.msra.mxu0 %v9459
        %10039 = vmatprep.mubr.bf16.mxu0 %v8718
        %10040 = vmatmul.mubr.bf16.gmra.mrb[0].mxu0 %v8717
        %v10041 = vpop.f32.mrb[0].mxu0
        %v10042 = vadd.f32 %v9849, %v10041
        %v10043 = vpop.f32.mrb[0].mxu0
        %v10044 = vadd.f32 %v9851, %v10043
        %v10045 = vpop.f32.mrb[0].mxu0
        %v10046 = vadd.f32 %v9853, %v10045
        %v10047 = vpop.f32.mrb[0].mxu0
        %v10048 = vadd.f32 %v9855, %v10047
        %10049 = vmatprep.mubr.bf16.mxu0 %v8726
        %10050 = vmatmul.mubr.bf16.gmra.mrb[0].mxu0 %v8725
        %v10051 = vpop.f32.mrb[0].mxu0
        %v10052 = vadd.f32 %v9859, %v10051
        %v10053 = vpop.f32.mrb[0].mxu0
        %v10054 = vadd.f32 %v9861, %v10053
        %v10055 = vpop.f32.mrb[0].mxu0
        %v10056 = vadd.f32 %v9863, %v10055
        %v10057 = vpop.f32.mrb[0].mxu0
        %v10058 = vadd.f32 %v9865, %v10057
        %10059 = vmatprep.mubr.bf16.mxu0 %v8734
        %10060 = vmatmul.mubr.bf16.gmra.mrb[0].mxu0 %v8733
        %v10061 = vpop.f32.mrb[0].mxu0
        %v10062 = vadd.f32 %v9869, %v10061
        %v10063 = vpop.f32.mrb[0].mxu0
        %v10064 = vadd.f32 %v9871, %v10063
        %v10065 = vpop.f32.mrb[0].mxu0
        %v10066 = vadd.f32 %v9873, %v10065
        %v10067 = vpop.f32.mrb[0].mxu0
        %v10068 = vadd.f32 %v9875, %v10067
        %10069 = vmatprep.mubr.bf16.mxu0 %v8742
        %10070 = vmatmul.mubr.bf16.gmra.mrb[0].mxu0 %v8741
        %v10071 = vpop.f32.mrb[0].mxu0
        %v10072 = vadd.f32 %v9879, %v10071
        %v10073 = vpop.f32.mrb[0].mxu0
        %v10074 = vadd.f32 %v9881, %v10073
        %v10075 = vpop.f32.mrb[0].mxu0
        %v10076 = vadd.f32 %v9883, %v10075
        %v10077 = vpop.f32.mrb[0].mxu0
        %v10078 = vadd.f32 %v9885, %v10077
        %10079 = vmatprep.mubr.bf16.mxu0 %v8750
        %10080 = vmatmul.mubr.bf16.gmra.mrb[0].mxu0 %v8749
        %v10081 = vpop.f32.mrb[0].mxu0
        %v10082 = vadd.f32 %v9889, %v10081
        %v10083 = vpop.f32.mrb[0].mxu0
        %v10084 = vadd.f32 %v9891, %v10083
        %v10085 = vpop.f32.mrb[0].mxu0
        %v10086 = vadd.f32 %v9893, %v10085
        %v10087 = vpop.f32.mrb[0].mxu0
        %v10088 = vadd.f32 %v9895, %v10087
        %10089 = vmatprep.mubr.bf16.mxu0 %v8758
        %10090 = vmatmul.mubr.bf16.gmra.mrb[0].mxu0 %v8757
        %v10091 = vpop.f32.mrb[0].mxu0
        %v10092 = vadd.f32 %v9899, %v10091
        %v10093 = vpop.f32.mrb[0].mxu0
        %v10094 = vadd.f32 %v9901, %v10093
        %v10095 = vpop.f32.mrb[0].mxu0
        %v10096 = vadd.f32 %v9903, %v10095
        %v10097 = vpop.f32.mrb[0].mxu0
        %v10098 = vadd.f32 %v9905, %v10097
        %10099 = vmatprep.mubr.bf16.mxu0 %v8766
        %10100 = vmatmul.mubr.bf16.gmra.mrb[0].mxu0 %v8765
        %v10101 = vpop.f32.mrb[0].mxu0
        %v10102 = vadd.f32 %v9909, %v10101
        %v10103 = vpop.f32.mrb[0].mxu0
        %v10104 = vadd.f32 %v9911, %v10103
        %v10105 = vpop.f32.mrb[0].mxu0
        %v10106 = vadd.f32 %v9913, %v10105
        %v10107 = vpop.f32.mrb[0].mxu0
        %v10108 = vadd.f32 %v9915, %v10107
        %10109 = vmatprep.mubr.bf16.mxu0 %v8774
        %10110 = vmatmul.mubr.bf16.gmra.mrb[0].mxu0 %v8773
        %v10111 = vpop.f32.mrb[0].mxu0
        %v10112 = vadd.f32 %v9919, %v10111
        %v10113 = vpop.f32.mrb[0].mxu0
        %v10114 = vadd.f32 %v9921, %v10113
        %v10115 = vpop.f32.mrb[0].mxu0
        %v10116 = vadd.f32 %v9923, %v10115
        %v10117 = vpop.f32.mrb[0].mxu0
        %v10118 = vadd.f32 %v9925, %v10117
        %10119 = vmatprep.mubr.bf16.mxu0 %v8782
        %10120 = vmatmul.mubr.bf16.gmra.mrb[0].mxu0 %v8781
        %v10121 = vpop.f32.mrb[0].mxu0
        %v10122 = vadd.f32 %v9929, %v10121
        %v10123 = vpop.f32.mrb[0].mxu0
        %v10124 = vadd.f32 %v9931, %v10123
        %v10125 = vpop.f32.mrb[0].mxu0
        %v10126 = vadd.f32 %v9933, %v10125
        %v10127 = vpop.f32.mrb[0].mxu0
        %v10128 = vadd.f32 %v9935, %v10127
        %10129 = vmatprep.mubr.bf16.mxu0 %v8790
        %10130 = vmatmul.mubr.bf16.gmra.mrb[0].mxu0 %v8789
        %v10131 = vpop.f32.mrb[0].mxu0
        %v10132 = vadd.f32 %v9939, %v10131
        %v10133 = vpop.f32.mrb[0].mxu0
        %v10134 = vadd.f32 %v9941, %v10133
        %v10135 = vpop.f32.mrb[0].mxu0
        %v10136 = vadd.f32 %v9943, %v10135
        %v10137 = vpop.f32.mrb[0].mxu0
        %v10138 = vadd.f32 %v9945, %v10137
        %10139 = vmatprep.mubr.bf16.mxu0 %v8798
        %10140 = vmatmul.mubr.bf16.gmra.mrb[0].mxu0 %v8797
        %v10141 = vpop.f32.mrb[0].mxu0
        %v10142 = vadd.f32 %v9949, %v10141
        %v10143 = vpop.f32.mrb[0].mxu0
        %v10144 = vadd.f32 %v9951, %v10143
        %v10145 = vpop.f32.mrb[0].mxu0
        %v10146 = vadd.f32 %v9953, %v10145
        %v10147 = vpop.f32.mrb[0].mxu0
        %v10148 = vadd.f32 %v9955, %v10147
        %10149 = vmatprep.mubr.bf16.mxu0 %v8806
        %10150 = vmatmul.mubr.bf16.gmra.mrb[0].mxu0 %v8805
        %v10151 = vpop.f32.mrb[0].mxu0
        %v10152 = vadd.f32 %v9959, %v10151
        %v10153 = vpop.f32.mrb[0].mxu0
        %v10154 = vadd.f32 %v9961, %v10153
        %v10155 = vpop.f32.mrb[0].mxu0
        %v10156 = vadd.f32 %v9963, %v10155
        %v10157 = vpop.f32.mrb[0].mxu0
        %v10158 = vadd.f32 %v9965, %v10157
        %10159 = vmatprep.mubr.bf16.mxu0 %v8814
        %10160 = vmatmul.mubr.bf16.gmra.mrb[0].mxu0 %v8813
        %v10161 = vpop.f32.mrb[0].mxu0
        %v10162 = vadd.f32 %v9969, %v10161
        %v10163 = vpop.f32.mrb[0].mxu0
        %v10164 = vadd.f32 %v9971, %v10163
        %v10165 = vpop.f32.mrb[0].mxu0
        %v10166 = vadd.f32 %v9973, %v10165
        %v10167 = vpop.f32.mrb[0].mxu0
        %v10168 = vadd.f32 %v9975, %v10167
        %10169 = vmatprep.mubr.bf16.mxu0 %v8822
        %10170 = vmatmul.mubr.bf16.gmra.mrb[0].mxu0 %v8821
        %v10171 = vpop.f32.mrb[0].mxu0
        %v10172 = vadd.f32 %v9979, %v10171
        %v10173 = vpop.f32.mrb[0].mxu0
        %v10174 = vadd.f32 %v9981, %v10173
        %v10175 = vpop.f32.mrb[0].mxu0
        %v10176 = vadd.f32 %v9983, %v10175
        %v10177 = vpop.f32.mrb[0].mxu0
        %v10178 = vadd.f32 %v9985, %v10177
        %10179 = vmatprep.mubr.bf16.mxu0 %v8830
        %10180 = vmatmul.mubr.bf16.gmra.mrb[0].mxu0 %v8829
        %v10181 = vpop.f32.mrb[0].mxu0
        %v10182 = vadd.f32 %v9989, %v10181
        %v10183 = vpop.f32.mrb[0].mxu0
        %v10184 = vadd.f32 %v9991, %v10183
        %v10185 = vpop.f32.mrb[0].mxu0
        %v10186 = vadd.f32 %v9993, %v10185
        %v10187 = vpop.f32.mrb[0].mxu0
        %v10188 = vadd.f32 %v9995, %v10187
        %10189 = vmatprep.mubr.bf16.mxu0 %v8838
        %10190 = vmatmul.mubr.bf16.gmra.mrb[0].mxu0 %v8837
        %v10191 = vpop.f32.mrb[0].mxu0
        %v10192 = vadd.f32 %v9999, %v10191
        %v10193 = vpop.f32.mrb[0].mxu0
        %v10194 = vadd.f32 %v10001, %v10193
        %v10195 = vpop.f32.mrb[0].mxu0
        %v10196 = vadd.f32 %v10003, %v10195
        %v10197 = vpop.f32.mrb[0].mxu0
        %v10198 = vadd.f32 %v10005, %v10197
        %10199 = vdwg.mxu0
        %10200 = vmatprep.subr.bf16.mxu0 %v9462
        %10201 = vmatpush1.bf16.msra.mxu0 %v9461
        %10202 = vmatprep.subr.bf16.mxu0 %v9464
        %10203 = vmatpush1.bf16.msra.mxu0 %v9463
        %10204 = vmatprep.subr.bf16.mxu0 %v9466
        %10205 = vmatpush1.bf16.msra.mxu0 %v9465
        %10206 = vmatprep.subr.bf16.mxu0 %v9468
        %10207 = vmatpush1.bf16.msra.mxu0 %v9467
        %10208 = vmatprep.subr.bf16.mxu0 %v9470
        %10209 = vmatpush1.bf16.msra.mxu0 %v9469
        %10210 = vmatprep.subr.bf16.mxu0 %v9472
        %10211 = vmatpush1.bf16.msra.mxu0 %v9471
        %10212 = vmatprep.subr.bf16.mxu0 %v9474
        %10213 = vmatpush1.bf16.msra.mxu0 %v9473
        %10214 = vmatprep.subr.bf16.mxu0 %v9476
        %10215 = vmatpush1.bf16.msra.mxu0 %v9475
        %10216 = vmatprep.subr.bf16.mxu0 %v9478
        %10217 = vmatpush1.bf16.msra.mxu0 %v9477
        %10218 = vmatprep.subr.bf16.mxu0 %v9480
        %10219 = vmatpush1.bf16.msra.mxu0 %v9479
        %10220 = vmatprep.subr.bf16.mxu0 %v9482
        %10221 = vmatpush1.bf16.msra.mxu0 %v9481
        %10222 = vmatprep.subr.bf16.mxu0 %v9484
        %10223 = vmatpush1.bf16.msra.mxu0 %v9483
        %10224 = vmatprep.subr.bf16.mxu0 %v9486
        %10225 = vmatpush1.bf16.msra.mxu0 %v9485
        %10226 = vmatprep.subr.bf16.mxu0 %v9488
        %10227 = vmatpush1.bf16.msra.mxu0 %v9487
        %10228 = vmatprep.subr.bf16.mxu0 %v9490
        %10229 = vmatpush1.bf16.msra.mxu0 %v9489
        %10230 = vmatprep.subr.bf16.mxu0 %v9492
        %10231 = vmatpush1.bf16.msra.mxu0 %v9491
        %10232 = vmatprep.mubr.bf16.mxu0 %v8720
        %10233 = vmatmul.mubr.bf16.gmra.mrb[0].mxu0 %v8719
        %v10234 = vpop.f32.mrb[0].mxu0
        %v10235 = vadd.f32 %v10042, %v10234
        %v10236 = vpop.f32.mrb[0].mxu0
        %v10237 = vadd.f32 %v10044, %v10236
        %v10238 = vpop.f32.mrb[0].mxu0
        %v10239 = vadd.f32 %v10046, %v10238
        %v10240 = vpop.f32.mrb[0].mxu0
        %v10241 = vadd.f32 %v10048, %v10240
        %10242 = vmatprep.mubr.bf16.mxu0 %v8728
        %10243 = vmatmul.mubr.bf16.gmra.mrb[0].mxu0 %v8727
        %v10244 = vpop.f32.mrb[0].mxu0
        %v10245 = vadd.f32 %v10052, %v10244
        %v10246 = vpop.f32.mrb[0].mxu0
        %v10247 = vadd.f32 %v10054, %v10246
        %v10248 = vpop.f32.mrb[0].mxu0
        %v10249 = vadd.f32 %v10056, %v10248
        %v10250 = vpop.f32.mrb[0].mxu0
        %v10251 = vadd.f32 %v10058, %v10250
        %10252 = vmatprep.mubr.bf16.mxu0 %v8736
        %10253 = vmatmul.mubr.bf16.gmra.mrb[0].mxu0 %v8735
        %v10254 = vpop.f32.mrb[0].mxu0
        %v10255 = vadd.f32 %v10062, %v10254
        %v10256 = vpop.f32.mrb[0].mxu0
        %v10257 = vadd.f32 %v10064, %v10256
        %v10258 = vpop.f32.mrb[0].mxu0
        %v10259 = vadd.f32 %v10066, %v10258
        %v10260 = vpop.f32.mrb[0].mxu0
        %v10261 = vadd.f32 %v10068, %v10260
        %10262 = vmatprep.mubr.bf16.mxu0 %v8744
        %10263 = vmatmul.mubr.bf16.gmra.mrb[0].mxu0 %v8743
        %v10264 = vpop.f32.mrb[0].mxu0
        %v10265 = vadd.f32 %v10072, %v10264
        %v10266 = vpop.f32.mrb[0].mxu0
        %v10267 = vadd.f32 %v10074, %v10266
        %v10268 = vpop.f32.mrb[0].mxu0
        %v10269 = vadd.f32 %v10076, %v10268
        %v10270 = vpop.f32.mrb[0].mxu0
        %v10271 = vadd.f32 %v10078, %v10270
        %10272 = vmatprep.mubr.bf16.mxu0 %v8752
        %10273 = vmatmul.mubr.bf16.gmra.mrb[0].mxu0 %v8751
        %v10274 = vpop.f32.mrb[0].mxu0
        %v10275 = vadd.f32 %v10082, %v10274
        %v10276 = vpop.f32.mrb[0].mxu0
        %v10277 = vadd.f32 %v10084, %v10276
        %v10278 = vpop.f32.mrb[0].mxu0
        %v10279 = vadd.f32 %v10086, %v10278
        %v10280 = vpop.f32.mrb[0].mxu0
        %v10281 = vadd.f32 %v10088, %v10280
        %10282 = vmatprep.mubr.bf16.mxu0 %v8760
        %10283 = vmatmul.mubr.bf16.gmra.mrb[0].mxu0 %v8759
        %v10284 = vpop.f32.mrb[0].mxu0
        %v10285 = vadd.f32 %v10092, %v10284
        %v10286 = vpop.f32.mrb[0].mxu0
        %v10287 = vadd.f32 %v10094, %v10286
        %v10288 = vpop.f32.mrb[0].mxu0
        %v10289 = vadd.f32 %v10096, %v10288
        %v10290 = vpop.f32.mrb[0].mxu0
        %v10291 = vadd.f32 %v10098, %v10290
        %10292 = vmatprep.mubr.bf16.mxu0 %v8768
        %10293 = vmatmul.mubr.bf16.gmra.mrb[0].mxu0 %v8767
        %v10294 = vpop.f32.mrb[0].mxu0
        %v10295 = vadd.f32 %v10102, %v10294
        %v10296 = vpop.f32.mrb[0].mxu0
        %v10297 = vadd.f32 %v10104, %v10296
        %v10298 = vpop.f32.mrb[0].mxu0
        %v10299 = vadd.f32 %v10106, %v10298
        %v10300 = vpop.f32.mrb[0].mxu0
        %v10301 = vadd.f32 %v10108, %v10300
        %10302 = vmatprep.mubr.bf16.mxu0 %v8776
        %10303 = vmatmul.mubr.bf16.gmra.mrb[0].mxu0 %v8775
        %v10304 = vpop.f32.mrb[0].mxu0
        %v10305 = vadd.f32 %v10112, %v10304
        %v10306 = vpop.f32.mrb[0].mxu0
        %v10307 = vadd.f32 %v10114, %v10306
        %v10308 = vpop.f32.mrb[0].mxu0
        %v10309 = vadd.f32 %v10116, %v10308
        %v10310 = vpop.f32.mrb[0].mxu0
        %v10311 = vadd.f32 %v10118, %v10310
        %10312 = vmatprep.mubr.bf16.mxu0 %v8784
        %10313 = vmatmul.mubr.bf16.gmra.mrb[0].mxu0 %v8783
        %v10314 = vpop.f32.mrb[0].mxu0
        %v10315 = vadd.f32 %v10122, %v10314
        %v10316 = vpop.f32.mrb[0].mxu0
        %v10317 = vadd.f32 %v10124, %v10316
        %v10318 = vpop.f32.mrb[0].mxu0
        %v10319 = vadd.f32 %v10126, %v10318
        %v10320 = vpop.f32.mrb[0].mxu0
        %v10321 = vadd.f32 %v10128, %v10320
        %10322 = vmatprep.mubr.bf16.mxu0 %v8792
        %10323 = vmatmul.mubr.bf16.gmra.mrb[0].mxu0 %v8791
        %v10324 = vpop.f32.mrb[0].mxu0
        %v10325 = vadd.f32 %v10132, %v10324
        %v10326 = vpop.f32.mrb[0].mxu0
        %v10327 = vadd.f32 %v10134, %v10326
        %v10328 = vpop.f32.mrb[0].mxu0
        %v10329 = vadd.f32 %v10136, %v10328
        %v10330 = vpop.f32.mrb[0].mxu0
        %v10331 = vadd.f32 %v10138, %v10330
        %10332 = vmatprep.mubr.bf16.mxu0 %v8800
        %10333 = vmatmul.mubr.bf16.gmra.mrb[0].mxu0 %v8799
        %v10334 = vpop.f32.mrb[0].mxu0
        %v10335 = vadd.f32 %v10142, %v10334
        %v10336 = vpop.f32.mrb[0].mxu0
        %v10337 = vadd.f32 %v10144, %v10336
        %v10338 = vpop.f32.mrb[0].mxu0
        %v10339 = vadd.f32 %v10146, %v10338
        %v10340 = vpop.f32.mrb[0].mxu0
        %v10341 = vadd.f32 %v10148, %v10340
        %10342 = vmatprep.mubr.bf16.mxu0 %v8808
        %10343 = vmatmul.mubr.bf16.gmra.mrb[0].mxu0 %v8807
        %v10344 = vpop.f32.mrb[0].mxu0
        %v10345 = vadd.f32 %v10152, %v10344
        %v10346 = vpop.f32.mrb[0].mxu0
        %v10347 = vadd.f32 %v10154, %v10346
        %v10348 = vpop.f32.mrb[0].mxu0
        %v10349 = vadd.f32 %v10156, %v10348
        %v10350 = vpop.f32.mrb[0].mxu0
        %v10351 = vadd.f32 %v10158, %v10350
        %10352 = vmatprep.mubr.bf16.mxu0 %v8816
        %10353 = vmatmul.mubr.bf16.gmra.mrb[0].mxu0 %v8815
        %v10354 = vpop.f32.mrb[0].mxu0
        %v10355 = vadd.f32 %v10162, %v10354
        %v10356 = vpop.f32.mrb[0].mxu0
        %v10357 = vadd.f32 %v10164, %v10356
        %v10358 = vpop.f32.mrb[0].mxu0
        %v10359 = vadd.f32 %v10166, %v10358
        %v10360 = vpop.f32.mrb[0].mxu0
        %v10361 = vadd.f32 %v10168, %v10360
        %10362 = vmatprep.mubr.bf16.mxu0 %v8824
        %10363 = vmatmul.mubr.bf16.gmra.mrb[0].mxu0 %v8823
        %v10364 = vpop.f32.mrb[0].mxu0
        %v10365 = vadd.f32 %v10172, %v10364
        %v10366 = vpop.f32.mrb[0].mxu0
        %v10367 = vadd.f32 %v10174, %v10366
        %v10368 = vpop.f32.mrb[0].mxu0
        %v10369 = vadd.f32 %v10176, %v10368
        %v10370 = vpop.f32.mrb[0].mxu0
        %v10371 = vadd.f32 %v10178, %v10370
        %10372 = vmatprep.mubr.bf16.mxu0 %v8832
        %10373 = vmatmul.mubr.bf16.gmra.mrb[0].mxu0 %v8831
        %v10374 = vpop.f32.mrb[0].mxu0
        %v10375 = vadd.f32 %v10182, %v10374
        %v10376 = vpop.f32.mrb[0].mxu0
        %v10377 = vadd.f32 %v10184, %v10376
        %v10378 = vpop.f32.mrb[0].mxu0
        %v10379 = vadd.f32 %v10186, %v10378
        %v10380 = vpop.f32.mrb[0].mxu0
        %v10381 = vadd.f32 %v10188, %v10380
        %10382 = vmatprep.mubr.bf16.mxu0 %v8840
        %10383 = vmatmul.mubr.bf16.gmra.mrb[0].mxu0 %v8839
        %v10384 = vpop.f32.mrb[0].mxu0
        %v10385 = vadd.f32 %v10192, %v10384
        %v10386 = vpop.f32.mrb[0].mxu0
        %v10387 = vadd.f32 %v10194, %v10386
        %v10388 = vpop.f32.mrb[0].mxu0
        %v10389 = vadd.f32 %v10196, %v10388
        %v10390 = vpop.f32.mrb[0].mxu0
        %v10391 = vadd.f32 %v10198, %v10390
        %10392 = vdwg.mxu0
        %v10394 = vrot.slane %v874, 2
        %v10395 = vlaneseq
        %v10396 = vshrl.u32 %v10395, 7
        %v10397 = vsub.s32 0, %v10396
        %v10398 = vrot.slane %v10394, %v10397
        %v10399 = vlaneseq
        %v10400 = vshrl.u32 %v10399, 7
        %v10401 = vsub.s32 1, %v10400
        %v10402 = vrot.slane %v10394, %v10401
        %v10405 = vmul.f32 %v10398, %v10235
        %v10406 = vmul.f32 %v10402, %v10237
        %v10407 = vmul.f32 %v10398, %v10239
        %v10408 = vmul.f32 %v10402, %v10241
        %v10409 = vmul.f32 %v10398, %v10245
        %v10410 = vmul.f32 %v10402, %v10247
        %v10411 = vmul.f32 %v10398, %v10249
        %v10412 = vmul.f32 %v10402, %v10251
        %v10413 = vmul.f32 %v10398, %v10255
        %v10414 = vmul.f32 %v10402, %v10257
        %v10415 = vmul.f32 %v10398, %v10259
        %v10416 = vmul.f32 %v10402, %v10261
        %v10417 = vmul.f32 %v10398, %v10265
        %v10418 = vmul.f32 %v10402, %v10267
        %v10419 = vmul.f32 %v10398, %v10269
        %v10420 = vmul.f32 %v10402, %v10271
        %v10421 = vmul.f32 %v10398, %v10275
        %v10422 = vmul.f32 %v10402, %v10277
        %v10423 = vmul.f32 %v10398, %v10279
        %v10424 = vmul.f32 %v10402, %v10281
        %v10425 = vmul.f32 %v10398, %v10285
        %v10426 = vmul.f32 %v10402, %v10287
        %v10427 = vmul.f32 %v10398, %v10289
        %v10428 = vmul.f32 %v10402, %v10291
        %v10429 = vmul.f32 %v10398, %v10295
        %v10430 = vmul.f32 %v10402, %v10297
        %v10431 = vmul.f32 %v10398, %v10299
        %v10432 = vmul.f32 %v10402, %v10301
        %v10433 = vmul.f32 %v10398, %v10305
        %v10434 = vmul.f32 %v10402, %v10307
        %v10435 = vmul.f32 %v10398, %v10309
        %v10436 = vmul.f32 %v10402, %v10311
        %v10437 = vmul.f32 %v10398, %v10315
        %v10438 = vmul.f32 %v10402, %v10317
        %v10439 = vmul.f32 %v10398, %v10319
        %v10440 = vmul.f32 %v10402, %v10321
        %v10441 = vmul.f32 %v10398, %v10325
        %v10442 = vmul.f32 %v10402, %v10327
        %v10443 = vmul.f32 %v10398, %v10329
        %v10444 = vmul.f32 %v10402, %v10331
        %v10445 = vmul.f32 %v10398, %v10335
        %v10446 = vmul.f32 %v10402, %v10337
        %v10447 = vmul.f32 %v10398, %v10339
        %v10448 = vmul.f32 %v10402, %v10341
        %v10449 = vmul.f32 %v10398, %v10345
        %v10450 = vmul.f32 %v10402, %v10347
        %v10451 = vmul.f32 %v10398, %v10349
        %v10452 = vmul.f32 %v10402, %v10351
        %v10453 = vmul.f32 %v10398, %v10355
        %v10454 = vmul.f32 %v10402, %v10357
        %v10455 = vmul.f32 %v10398, %v10359
        %v10456 = vmul.f32 %v10402, %v10361
        %v10457 = vmul.f32 %v10398, %v10365
        %v10458 = vmul.f32 %v10402, %v10367
        %v10459 = vmul.f32 %v10398, %v10369
        %v10460 = vmul.f32 %v10402, %v10371
        %v10461 = vmul.f32 %v10398, %v10375
        %v10462 = vmul.f32 %v10402, %v10377
        %v10463 = vmul.f32 %v10398, %v10379
        %v10464 = vmul.f32 %v10402, %v10381
        %v10465 = vmul.f32 %v10398, %v10385
        %v10466 = vmul.f32 %v10402, %v10387
        %v10467 = vmul.f32 %v10398, %v10389
        %v10468 = vmul.f32 %v10402, %v10391
        %v10469 = vadd.f32 %v5220, %v10405
        %v10470 = vadd.f32 %v5221, %v10406
        %v10471 = vadd.f32 %v5222, %v10407
        %v10472 = vadd.f32 %v5223, %v10408
        %v10473 = vadd.f32 %v5224, %v10409
        %v10474 = vadd.f32 %v5225, %v10410
        %v10475 = vadd.f32 %v5226, %v10411
        %v10476 = vadd.f32 %v5227, %v10412
        %v10477 = vadd.f32 %v5228, %v10413
        %v10478 = vadd.f32 %v5229, %v10414
        %v10479 = vadd.f32 %v5230, %v10415
        %v10480 = vadd.f32 %v5231, %v10416
        %v10481 = vadd.f32 %v5232, %v10417
        %v10482 = vadd.f32 %v5233, %v10418
        %v10483 = vadd.f32 %v5234, %v10419
        %v10484 = vadd.f32 %v5235, %v10420
        %v10485 = vadd.f32 %v5236, %v10421
        %v10486 = vadd.f32 %v5237, %v10422
        %v10487 = vadd.f32 %v5238, %v10423
        %v10488 = vadd.f32 %v5239, %v10424
        %v10489 = vadd.f32 %v5240, %v10425
        %v10490 = vadd.f32 %v5241, %v10426
        %v10491 = vadd.f32 %v5242, %v10427
        %v10492 = vadd.f32 %v5243, %v10428
        %v10493 = vadd.f32 %v5244, %v10429
        %v10494 = vadd.f32 %v5245, %v10430
        %v10495 = vadd.f32 %v5246, %v10431
        %v10496 = vadd.f32 %v5247, %v10432
        %v10497 = vadd.f32 %v5248, %v10433
        %v10498 = vadd.f32 %v5249, %v10434
        %v10499 = vadd.f32 %v5250, %v10435
        %v10500 = vadd.f32 %v5251, %v10436
        %v10501 = vadd.f32 %v5252, %v10437
        %v10502 = vadd.f32 %v5253, %v10438
        %v10503 = vadd.f32 %v5254, %v10439
        %v10504 = vadd.f32 %v5255, %v10440
        %v10505 = vadd.f32 %v5256, %v10441
        %v10506 = vadd.f32 %v5257, %v10442
        %v10507 = vadd.f32 %v5258, %v10443
        %v10508 = vadd.f32 %v5259, %v10444
        %v10509 = vadd.f32 %v5260, %v10445
        %v10510 = vadd.f32 %v5261, %v10446
        %v10511 = vadd.f32 %v5262, %v10447
        %v10512 = vadd.f32 %v5263, %v10448
        %v10513 = vadd.f32 %v5264, %v10449
        %v10514 = vadd.f32 %v5265, %v10450
        %v10515 = vadd.f32 %v5266, %v10451
        %v10516 = vadd.f32 %v5267, %v10452
        %v10517 = vadd.f32 %v5268, %v10453
        %v10518 = vadd.f32 %v5269, %v10454
        %v10519 = vadd.f32 %v5270, %v10455
        %v10520 = vadd.f32 %v5271, %v10456
        %v10521 = vadd.f32 %v5272, %v10457
        %v10522 = vadd.f32 %v5273, %v10458
        %v10523 = vadd.f32 %v5274, %v10459
        %v10524 = vadd.f32 %v5275, %v10460
        %v10525 = vadd.f32 %v5276, %v10461
        %v10526 = vadd.f32 %v5277, %v10462
        %v10527 = vadd.f32 %v5278, %v10463
        %v10528 = vadd.f32 %v5279, %v10464
        %v10529 = vadd.f32 %v5280, %v10465
        %v10530 = vadd.f32 %v5281, %v10466
        %v10531 = vadd.f32 %v5282, %v10467
        %v10532 = vadd.f32 %v5283, %v10468
        %10533 = vst [vmem:[#allocation2] sm:$0xff] %v10469
        %10534 = vst [vmem:[#allocation2 + $0x8] sm:$0xff] %v10470
        %10535 = vst [vmem:[#allocation2 + $0x10] sm:$0xff] %v10471
        %10536 = vst [vmem:[#allocation2 + $0x18] sm:$0xff] %v10472
        %10537 = vst [vmem:[#allocation2 + $0x20] sm:$0xff] %v10473
        %10538 = vst [vmem:[#allocation2 + $0x28] sm:$0xff] %v10474
        %10539 = vst [vmem:[#allocation2 + $0x30] sm:$0xff] %v10475
        %10540 = vst [vmem:[#allocation2 + $0x38] sm:$0xff] %v10476
        %10541 = vst [vmem:[#allocation2 + $0x40] sm:$0xff] %v10477
        %10542 = vst [vmem:[#allocation2 + $0x48] sm:$0xff] %v10478
        %10543 = vst [vmem:[#allocation2 + $0x50] sm:$0xff] %v10479
        %10544 = vst [vmem:[#allocation2 + $0x58] sm:$0xff] %v10480
        %10545 = vst [vmem:[#allocation2 + $0x60] sm:$0xff] %v10481
        %10546 = vst [vmem:[#allocation2 + $0x68] sm:$0xff] %v10482
        %10547 = vst [vmem:[#allocation2 + $0x70] sm:$0xff] %v10483
        %10548 = vst [vmem:[#allocation2 + $0x78] sm:$0xff] %v10484
        %10549 = vst [vmem:[#allocation2 + $0x80] sm:$0xff] %v10485
        %10550 = vst [vmem:[#allocation2 + $0x88] sm:$0xff] %v10486
        %10551 = vst [vmem:[#allocation2 + $0x90] sm:$0xff] %v10487
        %10552 = vst [vmem:[#allocation2 + $0x98] sm:$0xff] %v10488
        %10553 = vst [vmem:[#allocation2 + $0xa0] sm:$0xff] %v10489
        %10554 = vst [vmem:[#allocation2 + $0xa8] sm:$0xff] %v10490
        %10555 = vst [vmem:[#allocation2 + $0xb0] sm:$0xff] %v10491
        %10556 = vst [vmem:[#allocation2 + $0xb8] sm:$0xff] %v10492
        %10557 = vst [vmem:[#allocation2 + $0xc0] sm:$0xff] %v10493
        %10558 = vst [vmem:[#allocation2 + $0xc8] sm:$0xff] %v10494
        %10559 = vst [vmem:[#allocation2 + $0xd0] sm:$0xff] %v10495
        %10560 = vst [vmem:[#allocation2 + $0xd8] sm:$0xff] %v10496
        %10561 = vst [vmem:[#allocation2 + $0xe0] sm:$0xff] %v10497
        %10562 = vst [vmem:[#allocation2 + $0xe8] sm:$0xff] %v10498
        %10563 = vst [vmem:[#allocation2 + $0xf0] sm:$0xff] %v10499
        %10564 = vst [vmem:[#allocation2 + $0xf8] sm:$0xff] %v10500
        %10565 = vst [vmem:[#allocation2 + $0x100] sm:$0xff] %v10501
        %10566 = vst [vmem:[#allocation2 + $0x108] sm:$0xff] %v10502
        %10567 = vst [vmem:[#allocation2 + $0x110] sm:$0xff] %v10503
        %10568 = vst [vmem:[#allocation2 + $0x118] sm:$0xff] %v10504
        %10569 = vst [vmem:[#allocation2 + $0x120] sm:$0xff] %v10505
        %10570 = vst [vmem:[#allocation2 + $0x128] sm:$0xff] %v10506
        %10571 = vst [vmem:[#allocation2 + $0x130] sm:$0xff] %v10507
        %10572 = vst [vmem:[#allocation2 + $0x138] sm:$0xff] %v10508
        %10573 = vst [vmem:[#allocation2 + $0x140] sm:$0xff] %v10509
        %10574 = vst [vmem:[#allocation2 + $0x148] sm:$0xff] %v10510
        %10575 = vst [vmem:[#allocation2 + $0x150] sm:$0xff] %v10511
        %10576 = vst [vmem:[#allocation2 + $0x158] sm:$0xff] %v10512
        %10577 = vst [vmem:[#allocation2 + $0x160] sm:$0xff] %v10513
        %10578 = vst [vmem:[#allocation2 + $0x168] sm:$0xff] %v10514
        %10579 = vst [vmem:[#allocation2 + $0x170] sm:$0xff] %v10515
        %10580 = vst [vmem:[#allocation2 + $0x178] sm:$0xff] %v10516
        %10581 = vst [vmem:[#allocation2 + $0x180] sm:$0xff] %v10517
        %10582 = vst [vmem:[#allocation2 + $0x188] sm:$0xff] %v10518
        %10583 = vst [vmem:[#allocation2 + $0x190] sm:$0xff] %v10519
        %10584 = vst [vmem:[#allocation2 + $0x198] sm:$0xff] %v10520
        %10585 = vst [vmem:[#allocation2 + $0x1a0] sm:$0xff] %v10521
        %10586 = vst [vmem:[#allocation2 + $0x1a8] sm:$0xff] %v10522
        %10587 = vst [vmem:[#allocation2 + $0x1b0] sm:$0xff] %v10523
        %10588 = vst [vmem:[#allocation2 + $0x1b8] sm:$0xff] %v10524
        %10589 = vst [vmem:[#allocation2 + $0x1c0] sm:$0xff] %v10525
        %10590 = vst [vmem:[#allocation2 + $0x1c8] sm:$0xff] %v10526
        %10591 = vst [vmem:[#allocation2 + $0x1d0] sm:$0xff] %v10527
        %10592 = vst [vmem:[#allocation2 + $0x1d8] sm:$0xff] %v10528
        %10593 = vst [vmem:[#allocation2 + $0x1e0] sm:$0xff] %v10529
        %10594 = vst [vmem:[#allocation2 + $0x1e8] sm:$0xff] %v10530
        %10595 = vst [vmem:[#allocation2 + $0x1f0] sm:$0xff] %v10531
        %10596 = vst [vmem:[#allocation2 + $0x1f8] sm:$0xff] %v10532
        %p10597 = scmp.eq.s32.totalorder %s41, 1
        // Predicated region
        $region93: #{tpu_custom_call.1} parent=59 // pred_check
          %p10598 = pneg %p10597
        $region94: #{tpu_custom_call.1} parent=59 // pred_check_branch
          %10600 = sbr.rel (%p10598) target = $region96
        $region95: #{tpu_custom_call.1} parent=59 // pred_region
          %10601 = vst [vmem:[%s659] sm:$0xff] %v10469
          %10602 = vst [vmem:[%s659 + $0x8] sm:$0xff] %v10470
          %10603 = vst [vmem:[%s659 + $0x10] sm:$0xff] %v10471
          %10604 = vst [vmem:[%s659 + $0x18] sm:$0xff] %v10472
          %10605 = vst [vmem:[%s659 + $0x20] sm:$0xff] %v10473
          %10606 = vst [vmem:[%s659 + $0x28] sm:$0xff] %v10474
          %10607 = vst [vmem:[%s659 + $0x30] sm:$0xff] %v10475
          %10608 = vst [vmem:[%s659 + $0x38] sm:$0xff] %v10476
          %10609 = vst [vmem:[%s659 + $0x40] sm:$0xff] %v10477
          %10610 = vst [vmem:[%s659 + $0x48] sm:$0xff] %v10478
          %10611 = vst [vmem:[%s659 + $0x50] sm:$0xff] %v10479
          %10612 = vst [vmem:[%s659 + $0x58] sm:$0xff] %v10480
          %10613 = vst [vmem:[%s659 + $0x60] sm:$0xff] %v10481
          %10614 = vst [vmem:[%s659 + $0x68] sm:$0xff] %v10482
          %10615 = vst [vmem:[%s659 + $0x70] sm:$0xff] %v10483
          %10616 = vst [vmem:[%s659 + $0x78] sm:$0xff] %v10484
          %10617 = vst [vmem:[%s659 + $0x80] sm:$0xff] %v10485
          %10618 = vst [vmem:[%s659 + $0x88] sm:$0xff] %v10486
          %10619 = vst [vmem:[%s659 + $0x90] sm:$0xff] %v10487
          %10620 = vst [vmem:[%s659 + $0x98] sm:$0xff] %v10488
          %10621 = vst [vmem:[%s659 + $0xa0] sm:$0xff] %v10489
          %10622 = vst [vmem:[%s659 + $0xa8] sm:$0xff] %v10490
          %10623 = vst [vmem:[%s659 + $0xb0] sm:$0xff] %v10491
          %10624 = vst [vmem:[%s659 + $0xb8] sm:$0xff] %v10492
          %10625 = vst [vmem:[%s659 + $0xc0] sm:$0xff] %v10493
          %10626 = vst [vmem:[%s659 + $0xc8] sm:$0xff] %v10494
          %10627 = vst [vmem:[%s659 + $0xd0] sm:$0xff] %v10495
          %10628 = vst [vmem:[%s659 + $0xd8] sm:$0xff] %v10496
          %10629 = vst [vmem:[%s659 + $0xe0] sm:$0xff] %v10497
          %10630 = vst [vmem:[%s659 + $0xe8] sm:$0xff] %v10498
          %10631 = vst [vmem:[%s659 + $0xf0] sm:$0xff] %v10499
          %10632 = vst [vmem:[%s659 + $0xf8] sm:$0xff] %v10500
          %10633 = vst [vmem:[%s659 + $0x100] sm:$0xff] %v10501
          %10634 = vst [vmem:[%s659 + $0x108] sm:$0xff] %v10502
          %10635 = vst [vmem:[%s659 + $0x110] sm:$0xff] %v10503
          %10636 = vst [vmem:[%s659 + $0x118] sm:$0xff] %v10504
          %10637 = vst [vmem:[%s659 + $0x120] sm:$0xff] %v10505
          %10638 = vst [vmem:[%s659 + $0x128] sm:$0xff] %v10506
          %10639 = vst [vmem:[%s659 + $0x130] sm:$0xff] %v10507
          %10640 = vst [vmem:[%s659 + $0x138] sm:$0xff] %v10508
          %10641 = vst [vmem:[%s659 + $0x140] sm:$0xff] %v10509
          %10642 = vst [vmem:[%s659 + $0x148] sm:$0xff] %v10510
          %10643 = vst [vmem:[%s659 + $0x150] sm:$0xff] %v10511
          %10644 = vst [vmem:[%s659 + $0x158] sm:$0xff] %v10512
          %10645 = vst [vmem:[%s659 + $0x160] sm:$0xff] %v10513
          %10646 = vst [vmem:[%s659 + $0x168] sm:$0xff] %v10514
          %10647 = vst [vmem:[%s659 + $0x170] sm:$0xff] %v10515
          %10648 = vst [vmem:[%s659 + $0x178] sm:$0xff] %v10516
          %10649 = vst [vmem:[%s659 + $0x180] sm:$0xff] %v10517
          %10650 = vst [vmem:[%s659 + $0x188] sm:$0xff] %v10518
          %10651 = vst [vmem:[%s659 + $0x190] sm:$0xff] %v10519
          %10652 = vst [vmem:[%s659 + $0x198] sm:$0xff] %v10520
          %10653 = vst [vmem:[%s659 + $0x1a0] sm:$0xff] %v10521
          %10654 = vst [vmem:[%s659 + $0x1a8] sm:$0xff] %v10522
          %10655 = vst [vmem:[%s659 + $0x1b0] sm:$0xff] %v10523
          %10656 = vst [vmem:[%s659 + $0x1b8] sm:$0xff] %v10524
          %10657 = vst [vmem:[%s659 + $0x1c0] sm:$0xff] %v10525
          %10658 = vst [vmem:[%s659 + $0x1c8] sm:$0xff] %v10526
          %10659 = vst [vmem:[%s659 + $0x1d0] sm:$0xff] %v10527
          %10660 = vst [vmem:[%s659 + $0x1d8] sm:$0xff] %v10528
          %10661 = vst [vmem:[%s659 + $0x1e0] sm:$0xff] %v10529
          %10662 = vst [vmem:[%s659 + $0x1e8] sm:$0xff] %v10530
          %10663 = vst [vmem:[%s659 + $0x1f0] sm:$0xff] %v10531
          %10664 = vst [vmem:[%s659 + $0x1f8] sm:$0xff] %v10532
        $region96: #{tpu_custom_call.1} parent=59 // pred_fallthru
          _
        %s10665 = sand.u32 %s318, 1
        %s10666 = scalar_lea.sflag [#allocation6], %s10665
        %s10667 = sand.u32 %s318, 1
        %s10668 = smul.addr %s10667, 512
        %s10669 = scalar_lea.vmem [#allocation16], %s10668
        // Predicated region
        $region97: #{tpu_custom_call.1} parent=59 // pred_check
          %p10670 = pneg %p328
        $region98: #{tpu_custom_call.1} parent=59 // pred_check_branch
          %10672 = sbr.rel (%p10670) target = $region100
        $region99: #{tpu_custom_call.1} parent=59 // pred_region
          %s10674 = ssub.s32 8192, 8192
          %10675 = vsyncadd %s10666, %s10674
          %s10676 = smul.addr %s40, 64
          %s10677 = smul.addr %s10676, 128
          %s10678 = scalar_lea.hbm %s10, %s10677
          %s10679 = sshll.u32 %s10669, 4
          %s10680 = int_to_ptr.vmem [resolvable:$true] %s10679
          %10685 = dma.vmem_to_hbm [thread:$0]  %s10680, 8192, %s10678, %s10666, 256, 256, 16
        $region100: #{tpu_custom_call.1} parent=59 // pred_fallthru
          _
      $region60: #{tpu_custom_call.1} parent=5 // pred_fallthru
        _
      %p10686 = scmp.le.s32.totalorder 2, %s31
      // Predicated region
      $region101: #{tpu_custom_call.1} parent=5 // pred_check
        %p10687 = pneg %p10686
      $region102: #{tpu_custom_call.1} parent=5 // pred_check_branch
        %10689 = sbr.rel (%p10687) target = $region104
      $region103: #{tpu_custom_call.1} parent=5 // pred_region
        %s10690 = ssub.s32 %s31, 2
        // Predicated region
        $region105: #{tpu_custom_call.1} parent=103 // pred_check
          %p10691 = pneg %p334
        $region106: #{tpu_custom_call.1} parent=103 // pred_check_branch
          %10693 = sbr.rel (%p10691) target = $region108
        $region107: #{tpu_custom_call.1} parent=103 // pred_region
          %s10694 = sand.u32 %s319, 1
          %s10695 = scalar_lea.sflag [#allocation6], %s10694
          %s10696 = sand.u32 %s319, 1
          %s10697 = smul.addr %s10696, 512
          %s10698 = scalar_lea.vmem [#allocation16], %s10697
          %10699 = dma.done %s10695, 8192
        $region108: #{tpu_custom_call.1} parent=103 // pred_fallthru
          _
      $region104: #{tpu_custom_call.1} parent=5 // pred_fallthru
        _
    $region6: #{tpu_custom_call.1} parent=1 // loop_footer
      %s35 = sadd.s32 1, %s31
    $region7: #{tpu_custom_call.1} parent=1 // loop_footer_branch
      %30 = sbr.rel target = $region3
    $region8: #{tpu_custom_call.1} parent=1 // loop_exit
      _
    %10700 = vsyncpa [#allocation5], 1
    %s10701 = scalar_lea.sflag [#allocation5], 1
    %10702 = vsyncpa %s10701, 1
    %10703 = vsyncpa [#allocation8], 1
    %s10704 = scalar_lea.sflag [#allocation8], 1
    %10705 = vsyncpa %s10704, 1
    %10706 = vsyncpa [#allocation11], 1
    %s10707 = scalar_lea.sflag [#allocation11], 1
    %10708 = vsyncpa %s10707, 1
    %10709 = vsyncpa [#allocation14], 1
    %s10710 = scalar_lea.sflag [#allocation14], 1
    %10711 = vsyncpa %s10710, 1
    %10712 = vsyncpa [#allocation6], 1
    %s10713 = scalar_lea.sflag [#allocation6], 1
    %10714 = vsyncpa %s10713, 1

</llo_original>
